<compile_context>
chip_gen: v5e
topology: v5e:2x2
jax: 0.10.0
libtpu: 0.0.40
codegen_flags: <defaults>
</compile_context>

<pallas_src>
import jax
import jax.numpy as jnp
from jax.experimental import pallas as pl
from jax.experimental.pallas import tpu as pltpu


# ----------------------------------------------------------------------------
# Fused kernel factory (static geometry captured by closure)
# ----------------------------------------------------------------------------
def _make_kernel(H, W, CP, F, PAD):
    Wp = W + 2 * PAD                  # padded row width of the flat slab
    M = (H - 1) * Wp + W              # flat frame length covering all valid px
    p0 = PAD * Wp + PAD               # flat index of output pixel (0, 0)
    PAD2 = Wp + 8                     # zero halo for the platlayer slab

    def kernel(a_ref, x_ref, e_ref,
               wfe_ref, bfe_ref, wpl_ref, bpl_ref,
               wfc_ref, bfc_ref, wcf_ref, bcf_ref,
               out_ref, act_scr):
        a = a_ref[0]                                          # PReLU slope

        # ---- stage 1: four dilated 3x3 convs as 36 MXU dots ----------------
        dcat = jnp.zeros((F, M), jnp.float32)
        t = 0
        for g, d in enumerate((1, 2, 4, 8)):
            for ky in range(3):
                for kx in range(3):
                    s = (ky - 1) * d * Wp + (kx - 1) * d      # flat tap shift
                    w_t = wfe_ref[:, t * CP:(t + 1) * CP]     # (F, CP)
                    x_s = x_ref[0, :, p0 + s:p0 + s + M]      # (CP, M)
                    dcat = dcat + jnp.dot(
                        w_t, x_s, preferred_element_type=jnp.float32)
                    t += 1
        dcat = dcat + bfe_ref[:, :]
        act = jnp.where(dcat >= 0.0, dcat, a * dcat)          # PReLU (scalar)

        # zero the junk columns (horizontal-pad positions of the flat frame)
        col = jax.lax.broadcasted_iota(jnp.int32, (F, M), 1)
        act = jnp.where((col % Wp) < W, act, 0.0)

        # ---- stage 2: platlayer 3x3 conv via zero-haloed VMEM slab ---------
        act_scr[:, :] = jnp.zeros((F, 2 * PAD2 + M), jnp.float32)
        act_scr[:, PAD2:PAD2 + M] = act
        plat = jnp.zeros((F, M), jnp.float32)
        for t2 in range(9):
            ky, kx = t2 // 3, t2 % 3
            s = (ky - 1) * Wp + (kx - 1)
            w_t = wpl_ref[:, t2 * F:(t2 + 1) * F]             # (F, F)
            a_s = act_scr[:, PAD2 + s:PAD2 + s + M]           # (F, M)
            plat = plat + jnp.dot(
                w_t, a_s, preferred_element_type=jnp.float32)
        plat = plat + bpl_ref[:, :]

        # ---- stage 3: feat2ch 1x1 (F -> C, rows zero-padded to CP) ---------
        dout = jnp.dot(wfc_ref[:, :], plat,
                       preferred_element_type=jnp.float32) + bfc_ref[:, :]

        # ---- stage 4: ch4feat 1x1 on cat([x, e, x+e, dout]) ----------------
        xs = x_ref[0, :, p0:p0 + M]                           # (CP, M)
        es = e_ref[0, :, p0:p0 + M]
        out = jnp.dot(wcf_ref[:, 0 * CP:1 * CP], xs,
                      preferred_element_type=jnp.float32)
        out = out + jnp.dot(wcf_ref[:, 1 * CP:2 * CP], es,
                            preferred_element_type=jnp.float32)
        out = out + jnp.dot(wcf_ref[:, 2 * CP:3 * CP], xs + es,
                            preferred_element_type=jnp.float32)
        out = out + jnp.dot(wcf_ref[:, 3 * CP:4 * CP], dout,
                            preferred_element_type=jnp.float32)
        out = out + bcf_ref[:, :]                              # (F, M)

        # ---- compact valid columns into the lane-dense (F, H*W) block ------
        for h in range(H):
            out_ref[0, :, h * W:(h + 1) * W] = out[:, h * Wp:h * Wp + W]

    return kernel, M, PAD2


# ----------------------------------------------------------------------------
# Parameter packing: natural per-layer params -> dense (F, K) kernel matrices
# ----------------------------------------------------------------------------
def _pack_params(p, C, F, CP):
    F4 = F // 4

    # four dilated convs: 36 taps, each an (F, CP) block with the group's
    # (F4, C) weights embedded (rest zero -> channel padding is free).
    blocks = []
    for g, d in enumerate((1, 2, 4, 8)):
        wg = p['w%d' % d]                                    # (3,3,C,F4) HWIO
        for ky in range(3):
            for kx in range(3):
                blk = jnp.zeros((F, CP), jnp.float32)
                blk = blk.at[g * F4:(g + 1) * F4, 0:C].set(wg[ky, kx].T)
                blocks.append(blk)
    w_feat = jnp.concatenate(blocks, axis=1)                 # (F, 36*CP)
    b_feat = jnp.concatenate([p['b1'], p['b2'], p['b4'], p['b8']],
                             axis=1).reshape(F, 1)

    # platlayer 3x3 conv: 9 taps, each (Fout, Fin)
    wp_blocks = [p['w_plat'][ky, kx].T for ky in range(3) for kx in range(3)]
    w_plat = jnp.concatenate(wp_blocks, axis=1)              # (F, 9*F)
    b_plat = p['b_plat'].reshape(F, 1)

    # feat2ch 1x1 (F -> C), output rows zero-padded to CP
    w_f2c = jnp.zeros((CP, F), jnp.float32).at[0:C, :].set(p['w_f2c'].T)
    b_f2c = jnp.zeros((CP, 1), jnp.float32).at[0:C, 0].set(p['b_f2c'][0])

    # ch4feat 1x1 on cat([x, e, x+e, dout]): 4 pieces, each (F, CP)
    wc_blocks = []
    for k in range(4):
        blk = jnp.zeros((F, CP), jnp.float32)
        blk = blk.at[:, 0:C].set(p['w_c4f'][k * C:(k + 1) * C, :].T)
        wc_blocks.append(blk)
    w_c4f = jnp.concatenate(wc_blocks, axis=1)               # (F, 4*CP)
    b_c4f = p['b_c4f'].reshape(F, 1)

    return w_feat, b_feat, w_plat, b_plat, w_f2c, b_f2c, w_c4f, b_c4f


# ----------------------------------------------------------------------------
# Wrapper (NCHW in -> NCHW out, no transposes: only pads + free reshapes)
# ----------------------------------------------------------------------------
def sksak_feat2_forward(x_nchw, edge_nchw, p):
    x = x_nchw.astype(jnp.float32)
    e = edge_nchw.astype(jnp.float32)
    N, C, H, W = x.shape
    F = p['w_plat'].shape[3]
    CP = 16                      # padded input-channel count (K of every dot)
    PAD = 8                      # max dilation
    assert C <= CP and F % 4 == 0
    Hp, Wp = H + 2 * PAD, W + 2 * PAD

    kernel, M, PAD2 = _make_kernel(H, W, CP, F, PAD)

    # zero-pad channels to CP and spatial by PAD, flatten spatial (NCHW-native)
    xpad = jnp.pad(x, ((0, 0), (0, CP - C), (PAD, PAD), (PAD, PAD))
                   ).reshape(N, CP, Hp * Wp)
    epad = jnp.pad(e, ((0, 0), (0, CP - C), (PAD, PAD), (PAD, PAD))
                   ).reshape(N, CP, Hp * Wp)

    (w_feat, b_feat, w_plat, b_plat,
     w_f2c, b_f2c, w_c4f, b_c4f) = _pack_params(p, C, F, CP)

    def full_spec(arr):
        nd = arr.ndim
        return pl.BlockSpec(arr.shape, lambda n, _nd=nd: (0,) * _nd)

    out_flat = pl.pallas_call(
        kernel,
        grid=(N,),
        in_specs=[
            pl.BlockSpec(memory_space=pltpu.MemorySpace.SMEM),      # PReLU a
            pl.BlockSpec((1, CP, Hp * Wp), lambda n: (n, 0, 0)),    # x slab
            pl.BlockSpec((1, CP, Hp * Wp), lambda n: (n, 0, 0)),    # edge slab
            full_spec(w_feat), full_spec(b_feat),
            full_spec(w_plat), full_spec(b_plat),
            full_spec(w_f2c), full_spec(b_f2c),
            full_spec(w_c4f), full_spec(b_c4f),
        ],
        out_specs=pl.BlockSpec((1, F, H * W), lambda n: (n, 0, 0)),
        out_shape=jax.ShapeDtypeStruct((N, F, H * W), jnp.float32),
        scratch_shapes=[pltpu.VMEM((F, 2 * PAD2 + M), jnp.float32)],
        compiler_params=pltpu.CompilerParams(
            dimension_semantics=("parallel",)),
    )(p['a'], xpad, epad, w_feat, b_feat, w_plat, b_plat,
      w_f2c, b_f2c, w_c4f, b_c4f)

    return out_flat.reshape(N, F, H, W)                      # free reshape


# ----------------------------------------------------------------------------
# Deterministic parameter init (synthetic; shapes match the nn.Module)
# ----------------------------------------------------------------------------
def init_params(key, channels=4, features=16):
    F4 = features // 4
    ks = jax.random.split(key, 14)

    def w(k, shape):
        return jax.random.normal(k, shape, jnp.float32) * 0.1

    # NOTE: self.prelu and self.feat2feat exist in __init__ but are unused in
    # forward(); nn.PReLU() default is a single scalar slope (0.25).
    return {
        'w1': w(ks[0], (3, 3, channels, F4)), 'b1': w(ks[1], (1, F4)),
        'w2': w(ks[2], (3, 3, channels, F4)), 'b2': w(ks[3], (1, F4)),
        'w4': w(ks[4], (3, 3, channels, F4)), 'b4': w(ks[5], (1, F4)),
        'w8': w(ks[6], (3, 3, channels, F4)), 'b8': w(ks[7], (1, F4)),
        'a': jnp.full((1,), 0.25, jnp.float32),
        'w_plat': w(ks[8], (3, 3, features, features)), 'b_plat': w(ks[9], (1, features)),
        'w_f2c': w(ks[10], (features, channels)), 'b_f2c': w(ks[11], (1, channels)),
        'w_c4f': w(ks[12], (4 * channels, features)), 'b_c4f': w(ks[13], (1, features)),
    }


# ----------------------------------------------------------------------------
# Pure-JAX reference (for correctness check)
# ----------------------------------------------------------------------------
def reference(x_nchw, edge_nchw, p):
    x = jnp.transpose(x_nchw, (0, 2, 3, 1)).astype(jnp.float32)
    e = jnp.transpose(edge_nchw, (0, 2, 3, 1)).astype(jnp.float32)

    def conv(inp, w, b, dil):
        o = jax.lax.conv_general_dilated(
            inp, w, window_strides=(1, 1),
            padding=((dil, dil), (dil, dil)), rhs_dilation=(dil, dil),
            dimension_numbers=('NHWC', 'HWIO', 'NHWC'))
        return o + b.reshape(1, 1, 1, -1)

    d1 = conv(x, p['w1'], p['b1'], 1)
    d2 = conv(x, p['w2'], p['b2'], 2)
    d4 = conv(x, p['w4'], p['b4'], 4)
    d8 = conv(x, p['w8'], p['b8'], 8)
    dcat = jnp.concatenate([d1, d2, d4, d8], axis=-1)
    a = p['a'][0]
    act = jnp.where(dcat >= 0, dcat, a * dcat)
    plat = conv(act, p['w_plat'], p['b_plat'], 1)
    dout = jnp.einsum('nhwf,fc->nhwc', plat, p['w_f2c']) + p['b_f2c'].reshape(1, 1, 1, -1)
    cat = jnp.concatenate([x, e, x + e, dout], axis=-1)
    out = jnp.einsum('nhwc,cf->nhwf', cat, p['w_c4f']) + p['b_c4f'].reshape(1, 1, 1, -1)
    return jnp.transpose(out, (0, 3, 1, 2))


if __name__ == "__main__":
    key = jax.random.PRNGKey(0)
    kx, ke, kp = jax.random.split(key, 3)
    channels, features = 4, 16
    N, H, W = 2, 16, 16

    x = jax.random.normal(kx, (N, channels, H, W), jnp.float32)
    edge = jax.random.normal(ke, (N, channels, H, W), jnp.float32)
    params = init_params(kp, channels, features)

    out = sksak_feat2_forward(x, edge, params)
    out = jax.block_until_ready(out)
    assert out.shape == (N, features, H, W)

    ref = reference(x, edge, params)
    max_err = jnp.max(jnp.abs(out - ref))
    if not bool(max_err < 2e-3):
        raise AssertionError(f"kernel/reference mismatch, max abs err = {max_err}")

    print("KERNEL_OK")
</pallas_src>

<mosaic_0001>
module attributes {stable_mosaic.version = 11 : i64} {
  func.func @kernel(%arg0: i32, %arg1: memref<1xf32, #tpu.memory_space<smem>>, %arg2: memref<1x16x1024xf32, #tpu.memory_space<vmem>>, %arg3: memref<1x16x1024xf32, #tpu.memory_space<vmem>>, %arg4: memref<16x576xf32, #tpu.memory_space<vmem>>, %arg5: memref<16x1xf32, #tpu.memory_space<vmem>>, %arg6: memref<16x144xf32, #tpu.memory_space<vmem>>, %arg7: memref<16x1xf32, #tpu.memory_space<vmem>>, %arg8: memref<16x16xf32, #tpu.memory_space<vmem>>, %arg9: memref<16x1xf32, #tpu.memory_space<vmem>>, %arg10: memref<16x64xf32, #tpu.memory_space<vmem>>, %arg11: memref<16x1xf32, #tpu.memory_space<vmem>>, %arg12: memref<1x16x256xf32, #tpu.memory_space<vmem>>, %arg13: memref<16x576xf32, #tpu.memory_space<vmem>>) attributes {dimension_semantics = [#tpu.dimension_semantics<parallel>], iteration_bounds = array<i64: 2>, scalar_prefetch = 0 : i64, scratch_operands = 1 : i64, tpu.core_type = #tpu.core_type<tc>, window_params = [{transform_indices = @transform_0, window_bounds = array<i64: 1>}, {transform_indices = @transform_1, window_bounds = array<i64: 1, 16, 1024>}, {transform_indices = @transform_2, window_bounds = array<i64: 1, 16, 1024>}, {pipeline_mode = #tpu.pipeline_mode<synchronous>, transform_indices = @transform_3, window_bounds = array<i64: 16, 576>}, {pipeline_mode = #tpu.pipeline_mode<synchronous>, transform_indices = @transform_4, window_bounds = array<i64: 16, 1>}, {pipeline_mode = #tpu.pipeline_mode<synchronous>, transform_indices = @transform_5, window_bounds = array<i64: 16, 144>}, {pipeline_mode = #tpu.pipeline_mode<synchronous>, transform_indices = @transform_6, window_bounds = array<i64: 16, 1>}, {pipeline_mode = #tpu.pipeline_mode<synchronous>, transform_indices = @transform_7, window_bounds = array<i64: 16, 16>}, {pipeline_mode = #tpu.pipeline_mode<synchronous>, transform_indices = @transform_8, window_bounds = array<i64: 16, 1>}, {pipeline_mode = #tpu.pipeline_mode<synchronous>, transform_indices = @transform_9, window_bounds = array<i64: 16, 64>}, {pipeline_mode = #tpu.pipeline_mode<synchronous>, transform_indices = @transform_10, window_bounds = array<i64: 16, 1>}, {transform_indices = @transform_11, window_bounds = array<i64: 1, 16, 256>}]} {
    %c0 = arith.constant 0 : index
    %0 = memref.load %arg1[%c0] : memref<1xf32, #tpu.memory_space<smem>>
    %cst = arith.constant 0.000000e+00 : f32
    %1 = vector.broadcast %cst : f32 to vector<16x496xf32>
    %c0_0 = arith.constant 0 : index
    %c0_1 = arith.constant 0 : index
    %2 = vector.load %arg4[%c0_0, %c0_1] : memref<16x576xf32, #tpu.memory_space<vmem>>, vector<16x16xf32>
    %c0_2 = arith.constant 0 : index
    %c0_3 = arith.constant 0 : index
    %c231 = arith.constant 231 : index
    %3 = vector.load %arg2[%c0_2, %c0_3, %c231] : memref<1x16x1024xf32, #tpu.memory_space<vmem>>, vector<1x16x496xf32>
    %4 = vector.shape_cast %3 : vector<1x16x496xf32> to vector<16x496xf32>
    %cst_4 = arith.constant dense<0.000000e+00> : vector<16x496xf32>
    %5 = tpu.matmul %2, %4, %cst_4 {dimension_numbers = #tpu.dot_dimension_numbers<[1], [0], [0], [1], [0, 0, 1, 1], [], []>} : vector<16x16xf32>, vector<16x496xf32>, vector<16x496xf32> -> vector<16x496xf32>
    %6 = arith.addf %1, %5 : vector<16x496xf32>
    %c0_5 = arith.constant 0 : index
    %c16 = arith.constant 16 : index
    %7 = vector.load %arg4[%c0_5, %c16] : memref<16x576xf32, #tpu.memory_space<vmem>>, vector<16x16xf32>
    %c0_6 = arith.constant 0 : index
    %c0_7 = arith.constant 0 : index
    %c232 = arith.constant 232 : index
    %8 = vector.load %arg2[%c0_6, %c0_7, %c232] : memref<1x16x1024xf32, #tpu.memory_space<vmem>>, vector<1x16x496xf32>
    %9 = vector.shape_cast %8 : vector<1x16x496xf32> to vector<16x496xf32>
    %cst_8 = arith.constant dense<0.000000e+00> : vector<16x496xf32>
    %10 = tpu.matmul %7, %9, %cst_8 {dimension_numbers = #tpu.dot_dimension_numbers<[1], [0], [0], [1], [0, 0, 1, 1], [], []>} : vector<16x16xf32>, vector<16x496xf32>, vector<16x496xf32> -> vector<16x496xf32>
    %11 = arith.addf %6, %10 : vector<16x496xf32>
    %c0_9 = arith.constant 0 : index
    %c32 = arith.constant 32 : index
    %12 = vector.load %arg4[%c0_9, %c32] : memref<16x576xf32, #tpu.memory_space<vmem>>, vector<16x16xf32>
    %c0_10 = arith.constant 0 : index
    %c0_11 = arith.constant 0 : index
    %c233 = arith.constant 233 : index
    %13 = vector.load %arg2[%c0_10, %c0_11, %c233] : memref<1x16x1024xf32, #tpu.memory_space<vmem>>, vector<1x16x496xf32>
    %14 = vector.shape_cast %13 : vector<1x16x496xf32> to vector<16x496xf32>
    %cst_12 = arith.constant dense<0.000000e+00> : vector<16x496xf32>
    %15 = tpu.matmul %12, %14, %cst_12 {dimension_numbers = #tpu.dot_dimension_numbers<[1], [0], [0], [1], [0, 0, 1, 1], [], []>} : vector<16x16xf32>, vector<16x496xf32>, vector<16x496xf32> -> vector<16x496xf32>
    %16 = arith.addf %11, %15 : vector<16x496xf32>
    %c0_13 = arith.constant 0 : index
    %c48 = arith.constant 48 : index
    %17 = vector.load %arg4[%c0_13, %c48] : memref<16x576xf32, #tpu.memory_space<vmem>>, vector<16x16xf32>
    %c0_14 = arith.constant 0 : index
    %c0_15 = arith.constant 0 : index
    %c263 = arith.constant 263 : index
    %18 = vector.load %arg2[%c0_14, %c0_15, %c263] : memref<1x16x1024xf32, #tpu.memory_space<vmem>>, vector<1x16x496xf32>
    %19 = vector.shape_cast %18 : vector<1x16x496xf32> to vector<16x496xf32>
    %cst_16 = arith.constant dense<0.000000e+00> : vector<16x496xf32>
    %20 = tpu.matmul %17, %19, %cst_16 {dimension_numbers = #tpu.dot_dimension_numbers<[1], [0], [0], [1], [0, 0, 1, 1], [], []>} : vector<16x16xf32>, vector<16x496xf32>, vector<16x496xf32> -> vector<16x496xf32>
    %21 = arith.addf %16, %20 : vector<16x496xf32>
    %c0_17 = arith.constant 0 : index
    %c64 = arith.constant 64 : index
    %22 = vector.load %arg4[%c0_17, %c64] : memref<16x576xf32, #tpu.memory_space<vmem>>, vector<16x16xf32>
    %c0_18 = arith.constant 0 : index
    %c0_19 = arith.constant 0 : index
    %c264 = arith.constant 264 : index
    %23 = vector.load %arg2[%c0_18, %c0_19, %c264] : memref<1x16x1024xf32, #tpu.memory_space<vmem>>, vector<1x16x496xf32>
    %24 = vector.shape_cast %23 : vector<1x16x496xf32> to vector<16x496xf32>
    %cst_20 = arith.constant dense<0.000000e+00> : vector<16x496xf32>
    %25 = tpu.matmul %22, %24, %cst_20 {dimension_numbers = #tpu.dot_dimension_numbers<[1], [0], [0], [1], [0, 0, 1, 1], [], []>} : vector<16x16xf32>, vector<16x496xf32>, vector<16x496xf32> -> vector<16x496xf32>
    %26 = arith.addf %21, %25 : vector<16x496xf32>
    %c0_21 = arith.constant 0 : index
    %c80 = arith.constant 80 : index
    %27 = vector.load %arg4[%c0_21, %c80] : memref<16x576xf32, #tpu.memory_space<vmem>>, vector<16x16xf32>
    %c0_22 = arith.constant 0 : index
    %c0_23 = arith.constant 0 : index
    %c265 = arith.constant 265 : index
    %28 = vector.load %arg2[%c0_22, %c0_23, %c265] : memref<1x16x1024xf32, #tpu.memory_space<vmem>>, vector<1x16x496xf32>
    %29 = vector.shape_cast %28 : vector<1x16x496xf32> to vector<16x496xf32>
    %cst_24 = arith.constant dense<0.000000e+00> : vector<16x496xf32>
    %30 = tpu.matmul %27, %29, %cst_24 {dimension_numbers = #tpu.dot_dimension_numbers<[1], [0], [0], [1], [0, 0, 1, 1], [], []>} : vector<16x16xf32>, vector<16x496xf32>, vector<16x496xf32> -> vector<16x496xf32>
    %31 = arith.addf %26, %30 : vector<16x496xf32>
    %c0_25 = arith.constant 0 : index
    %c96 = arith.constant 96 : index
    %32 = vector.load %arg4[%c0_25, %c96] : memref<16x576xf32, #tpu.memory_space<vmem>>, vector<16x16xf32>
    %c0_26 = arith.constant 0 : index
    %c0_27 = arith.constant 0 : index
    %c295 = arith.constant 295 : index
    %33 = vector.load %arg2[%c0_26, %c0_27, %c295] : memref<1x16x1024xf32, #tpu.memory_space<vmem>>, vector<1x16x496xf32>
    %34 = vector.shape_cast %33 : vector<1x16x496xf32> to vector<16x496xf32>
    %cst_28 = arith.constant dense<0.000000e+00> : vector<16x496xf32>
    %35 = tpu.matmul %32, %34, %cst_28 {dimension_numbers = #tpu.dot_dimension_numbers<[1], [0], [0], [1], [0, 0, 1, 1], [], []>} : vector<16x16xf32>, vector<16x496xf32>, vector<16x496xf32> -> vector<16x496xf32>
    %36 = arith.addf %31, %35 : vector<16x496xf32>
    %c0_29 = arith.constant 0 : index
    %c112 = arith.constant 112 : index
    %37 = vector.load %arg4[%c0_29, %c112] : memref<16x576xf32, #tpu.memory_space<vmem>>, vector<16x16xf32>
    %c0_30 = arith.constant 0 : index
    %c0_31 = arith.constant 0 : index
    %c296 = arith.constant 296 : index
    %38 = vector.load %arg2[%c0_30, %c0_31, %c296] : memref<1x16x1024xf32, #tpu.memory_space<vmem>>, vector<1x16x496xf32>
    %39 = vector.shape_cast %38 : vector<1x16x496xf32> to vector<16x496xf32>
    %cst_32 = arith.constant dense<0.000000e+00> : vector<16x496xf32>
    %40 = tpu.matmul %37, %39, %cst_32 {dimension_numbers = #tpu.dot_dimension_numbers<[1], [0], [0], [1], [0, 0, 1, 1], [], []>} : vector<16x16xf32>, vector<16x496xf32>, vector<16x496xf32> -> vector<16x496xf32>
    %41 = arith.addf %36, %40 : vector<16x496xf32>
    %c0_33 = arith.constant 0 : index
    %c128 = arith.constant 128 : index
    %42 = vector.load %arg4[%c0_33, %c128] : memref<16x576xf32, #tpu.memory_space<vmem>>, vector<16x16xf32>
    %c0_34 = arith.constant 0 : index
    %c0_35 = arith.constant 0 : index
    %c297 = arith.constant 297 : index
    %43 = vector.load %arg2[%c0_34, %c0_35, %c297] : memref<1x16x1024xf32, #tpu.memory_space<vmem>>, vector<1x16x496xf32>
    %44 = vector.shape_cast %43 : vector<1x16x496xf32> to vector<16x496xf32>
    %cst_36 = arith.constant dense<0.000000e+00> : vector<16x496xf32>
    %45 = tpu.matmul %42, %44, %cst_36 {dimension_numbers = #tpu.dot_dimension_numbers<[1], [0], [0], [1], [0, 0, 1, 1], [], []>} : vector<16x16xf32>, vector<16x496xf32>, vector<16x496xf32> -> vector<16x496xf32>
    %46 = arith.addf %41, %45 : vector<16x496xf32>
    %c0_37 = arith.constant 0 : index
    %c144 = arith.constant 144 : index
    %47 = vector.load %arg4[%c0_37, %c144] : memref<16x576xf32, #tpu.memory_space<vmem>>, vector<16x16xf32>
    %c0_38 = arith.constant 0 : index
    %c0_39 = arith.constant 0 : index
    %c198 = arith.constant 198 : index
    %48 = vector.load %arg2[%c0_38, %c0_39, %c198] : memref<1x16x1024xf32, #tpu.memory_space<vmem>>, vector<1x16x496xf32>
    %49 = vector.shape_cast %48 : vector<1x16x496xf32> to vector<16x496xf32>
    %cst_40 = arith.constant dense<0.000000e+00> : vector<16x496xf32>
    %50 = tpu.matmul %47, %49, %cst_40 {dimension_numbers = #tpu.dot_dimension_numbers<[1], [0], [0], [1], [0, 0, 1, 1], [], []>} : vector<16x16xf32>, vector<16x496xf32>, vector<16x496xf32> -> vector<16x496xf32>
    %51 = arith.addf %46, %50 : vector<16x496xf32>
    %c0_41 = arith.constant 0 : index
    %c160 = arith.constant 160 : index
    %52 = vector.load %arg4[%c0_41, %c160] : memref<16x576xf32, #tpu.memory_space<vmem>>, vector<16x16xf32>
    %c0_42 = arith.constant 0 : index
    %c0_43 = arith.constant 0 : index
    %c200 = arith.constant 200 : index
    %53 = vector.load %arg2[%c0_42, %c0_43, %c200] : memref<1x16x1024xf32, #tpu.memory_space<vmem>>, vector<1x16x496xf32>
    %54 = vector.shape_cast %53 : vector<1x16x496xf32> to vector<16x496xf32>
    %cst_44 = arith.constant dense<0.000000e+00> : vector<16x496xf32>
    %55 = tpu.matmul %52, %54, %cst_44 {dimension_numbers = #tpu.dot_dimension_numbers<[1], [0], [0], [1], [0, 0, 1, 1], [], []>} : vector<16x16xf32>, vector<16x496xf32>, vector<16x496xf32> -> vector<16x496xf32>
    %56 = arith.addf %51, %55 : vector<16x496xf32>
    %c0_45 = arith.constant 0 : index
    %c176 = arith.constant 176 : index
    %57 = vector.load %arg4[%c0_45, %c176] : memref<16x576xf32, #tpu.memory_space<vmem>>, vector<16x16xf32>
    %c0_46 = arith.constant 0 : index
    %c0_47 = arith.constant 0 : index
    %c202 = arith.constant 202 : index
    %58 = vector.load %arg2[%c0_46, %c0_47, %c202] : memref<1x16x1024xf32, #tpu.memory_space<vmem>>, vector<1x16x496xf32>
    %59 = vector.shape_cast %58 : vector<1x16x496xf32> to vector<16x496xf32>
    %cst_48 = arith.constant dense<0.000000e+00> : vector<16x496xf32>
    %60 = tpu.matmul %57, %59, %cst_48 {dimension_numbers = #tpu.dot_dimension_numbers<[1], [0], [0], [1], [0, 0, 1, 1], [], []>} : vector<16x16xf32>, vector<16x496xf32>, vector<16x496xf32> -> vector<16x496xf32>
    %61 = arith.addf %56, %60 : vector<16x496xf32>
    %c0_49 = arith.constant 0 : index
    %c192 = arith.constant 192 : index
    %62 = vector.load %arg4[%c0_49, %c192] : memref<16x576xf32, #tpu.memory_space<vmem>>, vector<16x16xf32>
    %c0_50 = arith.constant 0 : index
    %c0_51 = arith.constant 0 : index
    %c262 = arith.constant 262 : index
    %63 = vector.load %arg2[%c0_50, %c0_51, %c262] : memref<1x16x1024xf32, #tpu.memory_space<vmem>>, vector<1x16x496xf32>
    %64 = vector.shape_cast %63 : vector<1x16x496xf32> to vector<16x496xf32>
    %cst_52 = arith.constant dense<0.000000e+00> : vector<16x496xf32>
    %65 = tpu.matmul %62, %64, %cst_52 {dimension_numbers = #tpu.dot_dimension_numbers<[1], [0], [0], [1], [0, 0, 1, 1], [], []>} : vector<16x16xf32>, vector<16x496xf32>, vector<16x496xf32> -> vector<16x496xf32>
    %66 = arith.addf %61, %65 : vector<16x496xf32>
    %c0_53 = arith.constant 0 : index
    %c208 = arith.constant 208 : index
    %67 = vector.load %arg4[%c0_53, %c208] : memref<16x576xf32, #tpu.memory_space<vmem>>, vector<16x16xf32>
    %c0_54 = arith.constant 0 : index
    %c0_55 = arith.constant 0 : index
    %c264_56 = arith.constant 264 : index
    %68 = vector.load %arg2[%c0_54, %c0_55, %c264_56] : memref<1x16x1024xf32, #tpu.memory_space<vmem>>, vector<1x16x496xf32>
    %69 = vector.shape_cast %68 : vector<1x16x496xf32> to vector<16x496xf32>
    %cst_57 = arith.constant dense<0.000000e+00> : vector<16x496xf32>
    %70 = tpu.matmul %67, %69, %cst_57 {dimension_numbers = #tpu.dot_dimension_numbers<[1], [0], [0], [1], [0, 0, 1, 1], [], []>} : vector<16x16xf32>, vector<16x496xf32>, vector<16x496xf32> -> vector<16x496xf32>
    %71 = arith.addf %66, %70 : vector<16x496xf32>
    %c0_58 = arith.constant 0 : index
    %c224 = arith.constant 224 : index
    %72 = vector.load %arg4[%c0_58, %c224] : memref<16x576xf32, #tpu.memory_space<vmem>>, vector<16x16xf32>
    %c0_59 = arith.constant 0 : index
    %c0_60 = arith.constant 0 : index
    %c266 = arith.constant 266 : index
    %73 = vector.load %arg2[%c0_59, %c0_60, %c266] : memref<1x16x1024xf32, #tpu.memory_space<vmem>>, vector<1x16x496xf32>
    %74 = vector.shape_cast %73 : vector<1x16x496xf32> to vector<16x496xf32>
    %cst_61 = arith.constant dense<0.000000e+00> : vector<16x496xf32>
    %75 = tpu.matmul %72, %74, %cst_61 {dimension_numbers = #tpu.dot_dimension_numbers<[1], [0], [0], [1], [0, 0, 1, 1], [], []>} : vector<16x16xf32>, vector<16x496xf32>, vector<16x496xf32> -> vector<16x496xf32>
    %76 = arith.addf %71, %75 : vector<16x496xf32>
    %c0_62 = arith.constant 0 : index
    %c240 = arith.constant 240 : index
    %77 = vector.load %arg4[%c0_62, %c240] : memref<16x576xf32, #tpu.memory_space<vmem>>, vector<16x16xf32>
    %c0_63 = arith.constant 0 : index
    %c0_64 = arith.constant 0 : index
    %c326 = arith.constant 326 : index
    %78 = vector.load %arg2[%c0_63, %c0_64, %c326] : memref<1x16x1024xf32, #tpu.memory_space<vmem>>, vector<1x16x496xf32>
    %79 = vector.shape_cast %78 : vector<1x16x496xf32> to vector<16x496xf32>
    %cst_65 = arith.constant dense<0.000000e+00> : vector<16x496xf32>
    %80 = tpu.matmul %77, %79, %cst_65 {dimension_numbers = #tpu.dot_dimension_numbers<[1], [0], [0], [1], [0, 0, 1, 1], [], []>} : vector<16x16xf32>, vector<16x496xf32>, vector<16x496xf32> -> vector<16x496xf32>
    %81 = arith.addf %76, %80 : vector<16x496xf32>
    %c0_66 = arith.constant 0 : index
    %c256 = arith.constant 256 : index
    %82 = vector.load %arg4[%c0_66, %c256] : memref<16x576xf32, #tpu.memory_space<vmem>>, vector<16x16xf32>
    %c0_67 = arith.constant 0 : index
    %c0_68 = arith.constant 0 : index
    %c328 = arith.constant 328 : index
    %83 = vector.load %arg2[%c0_67, %c0_68, %c328] : memref<1x16x1024xf32, #tpu.memory_space<vmem>>, vector<1x16x496xf32>
    %84 = vector.shape_cast %83 : vector<1x16x496xf32> to vector<16x496xf32>
    %cst_69 = arith.constant dense<0.000000e+00> : vector<16x496xf32>
    %85 = tpu.matmul %82, %84, %cst_69 {dimension_numbers = #tpu.dot_dimension_numbers<[1], [0], [0], [1], [0, 0, 1, 1], [], []>} : vector<16x16xf32>, vector<16x496xf32>, vector<16x496xf32> -> vector<16x496xf32>
    %86 = arith.addf %81, %85 : vector<16x496xf32>
    %c0_70 = arith.constant 0 : index
    %c272 = arith.constant 272 : index
    %87 = vector.load %arg4[%c0_70, %c272] : memref<16x576xf32, #tpu.memory_space<vmem>>, vector<16x16xf32>
    %c0_71 = arith.constant 0 : index
    %c0_72 = arith.constant 0 : index
    %c330 = arith.constant 330 : index
    %88 = vector.load %arg2[%c0_71, %c0_72, %c330] : memref<1x16x1024xf32, #tpu.memory_space<vmem>>, vector<1x16x496xf32>
    %89 = vector.shape_cast %88 : vector<1x16x496xf32> to vector<16x496xf32>
    %cst_73 = arith.constant dense<0.000000e+00> : vector<16x496xf32>
    %90 = tpu.matmul %87, %89, %cst_73 {dimension_numbers = #tpu.dot_dimension_numbers<[1], [0], [0], [1], [0, 0, 1, 1], [], []>} : vector<16x16xf32>, vector<16x496xf32>, vector<16x496xf32> -> vector<16x496xf32>
    %91 = arith.addf %86, %90 : vector<16x496xf32>
    %c0_74 = arith.constant 0 : index
    %c288 = arith.constant 288 : index
    %92 = vector.load %arg4[%c0_74, %c288] : memref<16x576xf32, #tpu.memory_space<vmem>>, vector<16x16xf32>
    %c0_75 = arith.constant 0 : index
    %c0_76 = arith.constant 0 : index
    %c132 = arith.constant 132 : index
    %93 = vector.load %arg2[%c0_75, %c0_76, %c132] : memref<1x16x1024xf32, #tpu.memory_space<vmem>>, vector<1x16x496xf32>
    %94 = vector.shape_cast %93 : vector<1x16x496xf32> to vector<16x496xf32>
    %cst_77 = arith.constant dense<0.000000e+00> : vector<16x496xf32>
    %95 = tpu.matmul %92, %94, %cst_77 {dimension_numbers = #tpu.dot_dimension_numbers<[1], [0], [0], [1], [0, 0, 1, 1], [], []>} : vector<16x16xf32>, vector<16x496xf32>, vector<16x496xf32> -> vector<16x496xf32>
    %96 = arith.addf %91, %95 : vector<16x496xf32>
    %c0_78 = arith.constant 0 : index
    %c304 = arith.constant 304 : index
    %97 = vector.load %arg4[%c0_78, %c304] : memref<16x576xf32, #tpu.memory_space<vmem>>, vector<16x16xf32>
    %c0_79 = arith.constant 0 : index
    %c0_80 = arith.constant 0 : index
    %c136 = arith.constant 136 : index
    %98 = vector.load %arg2[%c0_79, %c0_80, %c136] : memref<1x16x1024xf32, #tpu.memory_space<vmem>>, vector<1x16x496xf32>
    %99 = vector.shape_cast %98 : vector<1x16x496xf32> to vector<16x496xf32>
    %cst_81 = arith.constant dense<0.000000e+00> : vector<16x496xf32>
    %100 = tpu.matmul %97, %99, %cst_81 {dimension_numbers = #tpu.dot_dimension_numbers<[1], [0], [0], [1], [0, 0, 1, 1], [], []>} : vector<16x16xf32>, vector<16x496xf32>, vector<16x496xf32> -> vector<16x496xf32>
    %101 = arith.addf %96, %100 : vector<16x496xf32>
    %c0_82 = arith.constant 0 : index
    %c320 = arith.constant 320 : index
    %102 = vector.load %arg4[%c0_82, %c320] : memref<16x576xf32, #tpu.memory_space<vmem>>, vector<16x16xf32>
    %c0_83 = arith.constant 0 : index
    %c0_84 = arith.constant 0 : index
    %c140 = arith.constant 140 : index
    %103 = vector.load %arg2[%c0_83, %c0_84, %c140] : memref<1x16x1024xf32, #tpu.memory_space<vmem>>, vector<1x16x496xf32>
    %104 = vector.shape_cast %103 : vector<1x16x496xf32> to vector<16x496xf32>
    %cst_85 = arith.constant dense<0.000000e+00> : vector<16x496xf32>
    %105 = tpu.matmul %102, %104, %cst_85 {dimension_numbers = #tpu.dot_dimension_numbers<[1], [0], [0], [1], [0, 0, 1, 1], [], []>} : vector<16x16xf32>, vector<16x496xf32>, vector<16x496xf32> -> vector<16x496xf32>
    %106 = arith.addf %101, %105 : vector<16x496xf32>
    %c0_86 = arith.constant 0 : index
    %c336 = arith.constant 336 : index
    %107 = vector.load %arg4[%c0_86, %c336] : memref<16x576xf32, #tpu.memory_space<vmem>>, vector<16x16xf32>
    %c0_87 = arith.constant 0 : index
    %c0_88 = arith.constant 0 : index
    %c260 = arith.constant 260 : index
    %108 = vector.load %arg2[%c0_87, %c0_88, %c260] : memref<1x16x1024xf32, #tpu.memory_space<vmem>>, vector<1x16x496xf32>
    %109 = vector.shape_cast %108 : vector<1x16x496xf32> to vector<16x496xf32>
    %cst_89 = arith.constant dense<0.000000e+00> : vector<16x496xf32>
    %110 = tpu.matmul %107, %109, %cst_89 {dimension_numbers = #tpu.dot_dimension_numbers<[1], [0], [0], [1], [0, 0, 1, 1], [], []>} : vector<16x16xf32>, vector<16x496xf32>, vector<16x496xf32> -> vector<16x496xf32>
    %111 = arith.addf %106, %110 : vector<16x496xf32>
    %c0_90 = arith.constant 0 : index
    %c352 = arith.constant 352 : index
    %112 = vector.load %arg4[%c0_90, %c352] : memref<16x576xf32, #tpu.memory_space<vmem>>, vector<16x16xf32>
    %c0_91 = arith.constant 0 : index
    %c0_92 = arith.constant 0 : index
    %c264_93 = arith.constant 264 : index
    %113 = vector.load %arg2[%c0_91, %c0_92, %c264_93] : memref<1x16x1024xf32, #tpu.memory_space<vmem>>, vector<1x16x496xf32>
    %114 = vector.shape_cast %113 : vector<1x16x496xf32> to vector<16x496xf32>
    %cst_94 = arith.constant dense<0.000000e+00> : vector<16x496xf32>
    %115 = tpu.matmul %112, %114, %cst_94 {dimension_numbers = #tpu.dot_dimension_numbers<[1], [0], [0], [1], [0, 0, 1, 1], [], []>} : vector<16x16xf32>, vector<16x496xf32>, vector<16x496xf32> -> vector<16x496xf32>
    %116 = arith.addf %111, %115 : vector<16x496xf32>
    %c0_95 = arith.constant 0 : index
    %c368 = arith.constant 368 : index
    %117 = vector.load %arg4[%c0_95, %c368] : memref<16x576xf32, #tpu.memory_space<vmem>>, vector<16x16xf32>
    %c0_96 = arith.constant 0 : index
    %c0_97 = arith.constant 0 : index
    %c268 = arith.constant 268 : index
    %118 = vector.load %arg2[%c0_96, %c0_97, %c268] : memref<1x16x1024xf32, #tpu.memory_space<vmem>>, vector<1x16x496xf32>
    %119 = vector.shape_cast %118 : vector<1x16x496xf32> to vector<16x496xf32>
    %cst_98 = arith.constant dense<0.000000e+00> : vector<16x496xf32>
    %120 = tpu.matmul %117, %119, %cst_98 {dimension_numbers = #tpu.dot_dimension_numbers<[1], [0], [0], [1], [0, 0, 1, 1], [], []>} : vector<16x16xf32>, vector<16x496xf32>, vector<16x496xf32> -> vector<16x496xf32>
    %121 = arith.addf %116, %120 : vector<16x496xf32>
    %c0_99 = arith.constant 0 : index
    %c384 = arith.constant 384 : index
    %122 = vector.load %arg4[%c0_99, %c384] : memref<16x576xf32, #tpu.memory_space<vmem>>, vector<16x16xf32>
    %c0_100 = arith.constant 0 : index
    %c0_101 = arith.constant 0 : index
    %c388 = arith.constant 388 : index
    %123 = vector.load %arg2[%c0_100, %c0_101, %c388] : memref<1x16x1024xf32, #tpu.memory_space<vmem>>, vector<1x16x496xf32>
    %124 = vector.shape_cast %123 : vector<1x16x496xf32> to vector<16x496xf32>
    %cst_102 = arith.constant dense<0.000000e+00> : vector<16x496xf32>
    %125 = tpu.matmul %122, %124, %cst_102 {dimension_numbers = #tpu.dot_dimension_numbers<[1], [0], [0], [1], [0, 0, 1, 1], [], []>} : vector<16x16xf32>, vector<16x496xf32>, vector<16x496xf32> -> vector<16x496xf32>
    %126 = arith.addf %121, %125 : vector<16x496xf32>
    %c0_103 = arith.constant 0 : index
    %c400 = arith.constant 400 : index
    %127 = vector.load %arg4[%c0_103, %c400] : memref<16x576xf32, #tpu.memory_space<vmem>>, vector<16x16xf32>
    %c0_104 = arith.constant 0 : index
    %c0_105 = arith.constant 0 : index
    %c392 = arith.constant 392 : index
    %128 = vector.load %arg2[%c0_104, %c0_105, %c392] : memref<1x16x1024xf32, #tpu.memory_space<vmem>>, vector<1x16x496xf32>
    %129 = vector.shape_cast %128 : vector<1x16x496xf32> to vector<16x496xf32>
    %cst_106 = arith.constant dense<0.000000e+00> : vector<16x496xf32>
    %130 = tpu.matmul %127, %129, %cst_106 {dimension_numbers = #tpu.dot_dimension_numbers<[1], [0], [0], [1], [0, 0, 1, 1], [], []>} : vector<16x16xf32>, vector<16x496xf32>, vector<16x496xf32> -> vector<16x496xf32>
    %131 = arith.addf %126, %130 : vector<16x496xf32>
    %c0_107 = arith.constant 0 : index
    %c416 = arith.constant 416 : index
    %132 = vector.load %arg4[%c0_107, %c416] : memref<16x576xf32, #tpu.memory_space<vmem>>, vector<16x16xf32>
    %c0_108 = arith.constant 0 : index
    %c0_109 = arith.constant 0 : index
    %c396 = arith.constant 396 : index
    %133 = vector.load %arg2[%c0_108, %c0_109, %c396] : memref<1x16x1024xf32, #tpu.memory_space<vmem>>, vector<1x16x496xf32>
    %134 = vector.shape_cast %133 : vector<1x16x496xf32> to vector<16x496xf32>
    %cst_110 = arith.constant dense<0.000000e+00> : vector<16x496xf32>
    %135 = tpu.matmul %132, %134, %cst_110 {dimension_numbers = #tpu.dot_dimension_numbers<[1], [0], [0], [1], [0, 0, 1, 1], [], []>} : vector<16x16xf32>, vector<16x496xf32>, vector<16x496xf32> -> vector<16x496xf32>
    %136 = arith.addf %131, %135 : vector<16x496xf32>
    %c0_111 = arith.constant 0 : index
    %c432 = arith.constant 432 : index
    %137 = vector.load %arg4[%c0_111, %c432] : memref<16x576xf32, #tpu.memory_space<vmem>>, vector<16x16xf32>
    %c0_112 = arith.constant 0 : index
    %c0_113 = arith.constant 0 : index
    %c0_114 = arith.constant 0 : index
    %138 = vector.load %arg2[%c0_112, %c0_113, %c0_114] : memref<1x16x1024xf32, #tpu.memory_space<vmem>>, vector<1x16x496xf32>
    %139 = vector.shape_cast %138 : vector<1x16x496xf32> to vector<16x496xf32>
    %cst_115 = arith.constant dense<0.000000e+00> : vector<16x496xf32>
    %140 = tpu.matmul %137, %139, %cst_115 {dimension_numbers = #tpu.dot_dimension_numbers<[1], [0], [0], [1], [0, 0, 1, 1], [], []>} : vector<16x16xf32>, vector<16x496xf32>, vector<16x496xf32> -> vector<16x496xf32>
    %141 = arith.addf %136, %140 : vector<16x496xf32>
    %c0_116 = arith.constant 0 : index
    %c448 = arith.constant 448 : index
    %142 = vector.load %arg4[%c0_116, %c448] : memref<16x576xf32, #tpu.memory_space<vmem>>, vector<16x16xf32>
    %c0_117 = arith.constant 0 : index
    %c0_118 = arith.constant 0 : index
    %c8 = arith.constant 8 : index
    %143 = vector.load %arg2[%c0_117, %c0_118, %c8] : memref<1x16x1024xf32, #tpu.memory_space<vmem>>, vector<1x16x496xf32>
    %144 = vector.shape_cast %143 : vector<1x16x496xf32> to vector<16x496xf32>
    %cst_119 = arith.constant dense<0.000000e+00> : vector<16x496xf32>
    %145 = tpu.matmul %142, %144, %cst_119 {dimension_numbers = #tpu.dot_dimension_numbers<[1], [0], [0], [1], [0, 0, 1, 1], [], []>} : vector<16x16xf32>, vector<16x496xf32>, vector<16x496xf32> -> vector<16x496xf32>
    %146 = arith.addf %141, %145 : vector<16x496xf32>
    %c0_120 = arith.constant 0 : index
    %c464 = arith.constant 464 : index
    %147 = vector.load %arg4[%c0_120, %c464] : memref<16x576xf32, #tpu.memory_space<vmem>>, vector<16x16xf32>
    %c0_121 = arith.constant 0 : index
    %c0_122 = arith.constant 0 : index
    %c16_123 = arith.constant 16 : index
    %148 = vector.load %arg2[%c0_121, %c0_122, %c16_123] : memref<1x16x1024xf32, #tpu.memory_space<vmem>>, vector<1x16x496xf32>
    %149 = vector.shape_cast %148 : vector<1x16x496xf32> to vector<16x496xf32>
    %cst_124 = arith.constant dense<0.000000e+00> : vector<16x496xf32>
    %150 = tpu.matmul %147, %149, %cst_124 {dimension_numbers = #tpu.dot_dimension_numbers<[1], [0], [0], [1], [0, 0, 1, 1], [], []>} : vector<16x16xf32>, vector<16x496xf32>, vector<16x496xf32> -> vector<16x496xf32>
    %151 = arith.addf %146, %150 : vector<16x496xf32>
    %c0_125 = arith.constant 0 : index
    %c480 = arith.constant 480 : index
    %152 = vector.load %arg4[%c0_125, %c480] : memref<16x576xf32, #tpu.memory_space<vmem>>, vector<16x16xf32>
    %c0_126 = arith.constant 0 : index
    %c0_127 = arith.constant 0 : index
    %c256_128 = arith.constant 256 : index
    %153 = vector.load %arg2[%c0_126, %c0_127, %c256_128] : memref<1x16x1024xf32, #tpu.memory_space<vmem>>, vector<1x16x496xf32>
    %154 = vector.shape_cast %153 : vector<1x16x496xf32> to vector<16x496xf32>
    %cst_129 = arith.constant dense<0.000000e+00> : vector<16x496xf32>
    %155 = tpu.matmul %152, %154, %cst_129 {dimension_numbers = #tpu.dot_dimension_numbers<[1], [0], [0], [1], [0, 0, 1, 1], [], []>} : vector<16x16xf32>, vector<16x496xf32>, vector<16x496xf32> -> vector<16x496xf32>
    %156 = arith.addf %151, %155 : vector<16x496xf32>
    %c0_130 = arith.constant 0 : index
    %c496 = arith.constant 496 : index
    %157 = vector.load %arg4[%c0_130, %c496] : memref<16x576xf32, #tpu.memory_space<vmem>>, vector<16x16xf32>
    %c0_131 = arith.constant 0 : index
    %c0_132 = arith.constant 0 : index
    %c264_133 = arith.constant 264 : index
    %158 = vector.load %arg2[%c0_131, %c0_132, %c264_133] : memref<1x16x1024xf32, #tpu.memory_space<vmem>>, vector<1x16x496xf32>
    %159 = vector.shape_cast %158 : vector<1x16x496xf32> to vector<16x496xf32>
    %cst_134 = arith.constant dense<0.000000e+00> : vector<16x496xf32>
    %160 = tpu.matmul %157, %159, %cst_134 {dimension_numbers = #tpu.dot_dimension_numbers<[1], [0], [0], [1], [0, 0, 1, 1], [], []>} : vector<16x16xf32>, vector<16x496xf32>, vector<16x496xf32> -> vector<16x496xf32>
    %161 = arith.addf %156, %160 : vector<16x496xf32>
    %c0_135 = arith.constant 0 : index
    %c512 = arith.constant 512 : index
    %162 = vector.load %arg4[%c0_135, %c512] : memref<16x576xf32, #tpu.memory_space<vmem>>, vector<16x16xf32>
    %c0_136 = arith.constant 0 : index
    %c0_137 = arith.constant 0 : index
    %c272_138 = arith.constant 272 : index
    %163 = vector.load %arg2[%c0_136, %c0_137, %c272_138] : memref<1x16x1024xf32, #tpu.memory_space<vmem>>, vector<1x16x496xf32>
    %164 = vector.shape_cast %163 : vector<1x16x496xf32> to vector<16x496xf32>
    %cst_139 = arith.constant dense<0.000000e+00> : vector<16x496xf32>
    %165 = tpu.matmul %162, %164, %cst_139 {dimension_numbers = #tpu.dot_dimension_numbers<[1], [0], [0], [1], [0, 0, 1, 1], [], []>} : vector<16x16xf32>, vector<16x496xf32>, vector<16x496xf32> -> vector<16x496xf32>
    %166 = arith.addf %161, %165 : vector<16x496xf32>
    %c0_140 = arith.constant 0 : index
    %c528 = arith.constant 528 : index
    %167 = vector.load %arg4[%c0_140, %c528] : memref<16x576xf32, #tpu.memory_space<vmem>>, vector<16x16xf32>
    %c0_141 = arith.constant 0 : index
    %c0_142 = arith.constant 0 : index
    %c512_143 = arith.constant 512 : index
    %168 = vector.load %arg2[%c0_141, %c0_142, %c512_143] : memref<1x16x1024xf32, #tpu.memory_space<vmem>>, vector<1x16x496xf32>
    %169 = vector.shape_cast %168 : vector<1x16x496xf32> to vector<16x496xf32>
    %cst_144 = arith.constant dense<0.000000e+00> : vector<16x496xf32>
    %170 = tpu.matmul %167, %169, %cst_144 {dimension_numbers = #tpu.dot_dimension_numbers<[1], [0], [0], [1], [0, 0, 1, 1], [], []>} : vector<16x16xf32>, vector<16x496xf32>, vector<16x496xf32> -> vector<16x496xf32>
    %171 = arith.addf %166, %170 : vector<16x496xf32>
    %c0_145 = arith.constant 0 : index
    %c544 = arith.constant 544 : index
    %172 = vector.load %arg4[%c0_145, %c544] : memref<16x576xf32, #tpu.memory_space<vmem>>, vector<16x16xf32>
    %c0_146 = arith.constant 0 : index
    %c0_147 = arith.constant 0 : index
    %c520 = arith.constant 520 : index
    %173 = vector.load %arg2[%c0_146, %c0_147, %c520] : memref<1x16x1024xf32, #tpu.memory_space<vmem>>, vector<1x16x496xf32>
    %174 = vector.shape_cast %173 : vector<1x16x496xf32> to vector<16x496xf32>
    %cst_148 = arith.constant dense<0.000000e+00> : vector<16x496xf32>
    %175 = tpu.matmul %172, %174, %cst_148 {dimension_numbers = #tpu.dot_dimension_numbers<[1], [0], [0], [1], [0, 0, 1, 1], [], []>} : vector<16x16xf32>, vector<16x496xf32>, vector<16x496xf32> -> vector<16x496xf32>
    %176 = arith.addf %171, %175 : vector<16x496xf32>
    %c0_149 = arith.constant 0 : index
    %c560 = arith.constant 560 : index
    %177 = vector.load %arg4[%c0_149, %c560] : memref<16x576xf32, #tpu.memory_space<vmem>>, vector<16x16xf32>
    %c0_150 = arith.constant 0 : index
    %c0_151 = arith.constant 0 : index
    %c528_152 = arith.constant 528 : index
    %178 = vector.load %arg2[%c0_150, %c0_151, %c528_152] : memref<1x16x1024xf32, #tpu.memory_space<vmem>>, vector<1x16x496xf32>
    %179 = vector.shape_cast %178 : vector<1x16x496xf32> to vector<16x496xf32>
    %cst_153 = arith.constant dense<0.000000e+00> : vector<16x496xf32>
    %180 = tpu.matmul %177, %179, %cst_153 {dimension_numbers = #tpu.dot_dimension_numbers<[1], [0], [0], [1], [0, 0, 1, 1], [], []>} : vector<16x16xf32>, vector<16x496xf32>, vector<16x496xf32> -> vector<16x496xf32>
    %181 = arith.addf %176, %180 : vector<16x496xf32>
    %c0_154 = arith.constant 0 : index
    %c0_155 = arith.constant 0 : index
    %182 = vector.load %arg5[%c0_154, %c0_155] : memref<16x1xf32, #tpu.memory_space<vmem>>, vector<16x1xf32>
    %183 = vector.broadcast %182 : vector<16x1xf32> to vector<16x496xf32>
    %184 = arith.addf %181, %183 : vector<16x496xf32>
    %cst_156 = arith.constant 0.000000e+00 : f32
    %185 = vector.broadcast %cst_156 : f32 to vector<16x496xf32>
    %186 = arith.cmpf oge, %184, %185 : vector<16x496xf32>
    %187 = vector.broadcast %0 : f32 to vector<16x496xf32>
    %188 = arith.mulf %187, %184 : vector<16x496xf32>
    %189 = arith.select %186, %184, %188 : vector<16x496xi1>, vector<16x496xf32>
    %190 = tpu.iota {dimensions = array<i32: 1>} : vector<16x496xi32>
    %c32_i32 = arith.constant 32 : i32
    %c0_i32 = arith.constant 0 : i32
    %191 = arith.cmpi eq, %c32_i32, %c0_i32 : i32
    %c1_i32 = arith.constant 1 : i32
    %192 = arith.select %191, %c1_i32, %c32_i32 : i32
    %193 = vector.broadcast %192 : i32 to vector<16x496xi32>
    %194 = arith.remsi %190, %193 : vector<16x496xi32>
    %c0_i32_157 = arith.constant 0 : i32
    %195 = vector.broadcast %c0_i32_157 : i32 to vector<16x496xi32>
    %196 = arith.cmpi ne, %194, %195 : vector<16x496xi32>
    %c0_i32_158 = arith.constant 0 : i32
    %197 = vector.broadcast %c0_i32_158 : i32 to vector<16x496xi32>
    %198 = arith.cmpi slt, %194, %197 : vector<16x496xi32>
    %c0_i32_159 = arith.constant 0 : i32
    %199 = arith.cmpi slt, %192, %c0_i32_159 : i32
    %200 = vector.broadcast %199 : i1 to vector<16x496xi1>
    %201 = vector.broadcast %200 : vector<16x496xi1> to vector<16x496xi1>
    %202 = arith.xori %198, %201 : vector<16x496xi1>
    %203 = arith.andi %202, %196 : vector<16x496xi1>
    %204 = vector.broadcast %192 : i32 to vector<16x496xi32>
    %205 = arith.addi %194, %204 : vector<16x496xi32>
    %206 = arith.select %203, %205, %194 : vector<16x496xi1>, vector<16x496xi32>
    %c16_i32 = arith.constant 16 : i32
    %207 = vector.broadcast %c16_i32 : i32 to vector<16x496xi32>
    %208 = arith.cmpi slt, %206, %207 : vector<16x496xi32>
    %cst_160 = arith.constant 0.000000e+00 : f32
    %209 = vector.broadcast %cst_160 : f32 to vector<16x496xf32>
    %210 = arith.select %208, %189, %209 : vector<16x496xi1>, vector<16x496xf32>
    %cst_161 = arith.constant 0.000000e+00 : f32
    %211 = vector.broadcast %cst_161 : f32 to vector<16x576xf32>
    %c0_162 = arith.constant 0 : index
    %c0_163 = arith.constant 0 : index
    %212 = vector.load %arg13[%c0_162, %c0_163] : memref<16x576xf32, #tpu.memory_space<vmem>>, vector<16x576xf32>
    tpu.vector_store %arg13[%c0_162, %c0_163], %211 {strides = array<i32>} : memref<16x576xf32, #tpu.memory_space<vmem>>, vector<16x576xf32>,
    %c0_164 = arith.constant 0 : index
    %c40 = arith.constant 40 : index
    %213 = vector.load %arg13[%c0_164, %c40] : memref<16x576xf32, #tpu.memory_space<vmem>>, vector<16x496xf32>
    tpu.vector_store %arg13[%c0_164, %c40], %210 {strides = array<i32>} : memref<16x576xf32, #tpu.memory_space<vmem>>, vector<16x496xf32>,
    %cst_165 = arith.constant 0.000000e+00 : f32
    %214 = vector.broadcast %cst_165 : f32 to vector<16x496xf32>
    %c0_166 = arith.constant 0 : index
    %c0_167 = arith.constant 0 : index
    %215 = vector.load %arg6[%c0_166, %c0_167] : memref<16x144xf32, #tpu.memory_space<vmem>>, vector<16x16xf32>
    %c0_168 = arith.constant 0 : index
    %c7 = arith.constant 7 : index
    %216 = vector.load %arg13[%c0_168, %c7] : memref<16x576xf32, #tpu.memory_space<vmem>>, vector<16x496xf32>
    %cst_169 = arith.constant dense<0.000000e+00> : vector<16x496xf32>
    %217 = tpu.matmul %215, %216, %cst_169 {dimension_numbers = #tpu.dot_dimension_numbers<[1], [0], [0], [1], [0, 0, 1, 1], [], []>} : vector<16x16xf32>, vector<16x496xf32>, vector<16x496xf32> -> vector<16x496xf32>
    %218 = arith.addf %214, %217 : vector<16x496xf32>
    %c0_170 = arith.constant 0 : index
    %c16_171 = arith.constant 16 : index
    %219 = vector.load %arg6[%c0_170, %c16_171] : memref<16x144xf32, #tpu.memory_space<vmem>>, vector<16x16xf32>
    %c0_172 = arith.constant 0 : index
    %c8_173 = arith.constant 8 : index
    %220 = vector.load %arg13[%c0_172, %c8_173] : memref<16x576xf32, #tpu.memory_space<vmem>>, vector<16x496xf32>
    %cst_174 = arith.constant dense<0.000000e+00> : vector<16x496xf32>
    %221 = tpu.matmul %219, %220, %cst_174 {dimension_numbers = #tpu.dot_dimension_numbers<[1], [0], [0], [1], [0, 0, 1, 1], [], []>} : vector<16x16xf32>, vector<16x496xf32>, vector<16x496xf32> -> vector<16x496xf32>
    %222 = arith.addf %218, %221 : vector<16x496xf32>
    %c0_175 = arith.constant 0 : index
    %c32_176 = arith.constant 32 : index
    %223 = vector.load %arg6[%c0_175, %c32_176] : memref<16x144xf32, #tpu.memory_space<vmem>>, vector<16x16xf32>
    %c0_177 = arith.constant 0 : index
    %c9 = arith.constant 9 : index
    %224 = vector.load %arg13[%c0_177, %c9] : memref<16x576xf32, #tpu.memory_space<vmem>>, vector<16x496xf32>
    %cst_178 = arith.constant dense<0.000000e+00> : vector<16x496xf32>
    %225 = tpu.matmul %223, %224, %cst_178 {dimension_numbers = #tpu.dot_dimension_numbers<[1], [0], [0], [1], [0, 0, 1, 1], [], []>} : vector<16x16xf32>, vector<16x496xf32>, vector<16x496xf32> -> vector<16x496xf32>
    %226 = arith.addf %222, %225 : vector<16x496xf32>
    %c0_179 = arith.constant 0 : index
    %c48_180 = arith.constant 48 : index
    %227 = vector.load %arg6[%c0_179, %c48_180] : memref<16x144xf32, #tpu.memory_space<vmem>>, vector<16x16xf32>
    %c0_181 = arith.constant 0 : index
    %c39 = arith.constant 39 : index
    %228 = vector.load %arg13[%c0_181, %c39] : memref<16x576xf32, #tpu.memory_space<vmem>>, vector<16x496xf32>
    %cst_182 = arith.constant dense<0.000000e+00> : vector<16x496xf32>
    %229 = tpu.matmul %227, %228, %cst_182 {dimension_numbers = #tpu.dot_dimension_numbers<[1], [0], [0], [1], [0, 0, 1, 1], [], []>} : vector<16x16xf32>, vector<16x496xf32>, vector<16x496xf32> -> vector<16x496xf32>
    %230 = arith.addf %226, %229 : vector<16x496xf32>
    %c0_183 = arith.constant 0 : index
    %c64_184 = arith.constant 64 : index
    %231 = vector.load %arg6[%c0_183, %c64_184] : memref<16x144xf32, #tpu.memory_space<vmem>>, vector<16x16xf32>
    %c0_185 = arith.constant 0 : index
    %c40_186 = arith.constant 40 : index
    %232 = vector.load %arg13[%c0_185, %c40_186] : memref<16x576xf32, #tpu.memory_space<vmem>>, vector<16x496xf32>
    %cst_187 = arith.constant dense<0.000000e+00> : vector<16x496xf32>
    %233 = tpu.matmul %231, %232, %cst_187 {dimension_numbers = #tpu.dot_dimension_numbers<[1], [0], [0], [1], [0, 0, 1, 1], [], []>} : vector<16x16xf32>, vector<16x496xf32>, vector<16x496xf32> -> vector<16x496xf32>
    %234 = arith.addf %230, %233 : vector<16x496xf32>
    %c0_188 = arith.constant 0 : index
    %c80_189 = arith.constant 80 : index
    %235 = vector.load %arg6[%c0_188, %c80_189] : memref<16x144xf32, #tpu.memory_space<vmem>>, vector<16x16xf32>
    %c0_190 = arith.constant 0 : index
    %c41 = arith.constant 41 : index
    %236 = vector.load %arg13[%c0_190, %c41] : memref<16x576xf32, #tpu.memory_space<vmem>>, vector<16x496xf32>
    %cst_191 = arith.constant dense<0.000000e+00> : vector<16x496xf32>
    %237 = tpu.matmul %235, %236, %cst_191 {dimension_numbers = #tpu.dot_dimension_numbers<[1], [0], [0], [1], [0, 0, 1, 1], [], []>} : vector<16x16xf32>, vector<16x496xf32>, vector<16x496xf32> -> vector<16x496xf32>
    %238 = arith.addf %234, %237 : vector<16x496xf32>
    %c0_192 = arith.constant 0 : index
    %c96_193 = arith.constant 96 : index
    %239 = vector.load %arg6[%c0_192, %c96_193] : memref<16x144xf32, #tpu.memory_space<vmem>>, vector<16x16xf32>
    %c0_194 = arith.constant 0 : index
    %c71 = arith.constant 71 : index
    %240 = vector.load %arg13[%c0_194, %c71] : memref<16x576xf32, #tpu.memory_space<vmem>>, vector<16x496xf32>
    %cst_195 = arith.constant dense<0.000000e+00> : vector<16x496xf32>
    %241 = tpu.matmul %239, %240, %cst_195 {dimension_numbers = #tpu.dot_dimension_numbers<[1], [0], [0], [1], [0, 0, 1, 1], [], []>} : vector<16x16xf32>, vector<16x496xf32>, vector<16x496xf32> -> vector<16x496xf32>
    %242 = arith.addf %238, %241 : vector<16x496xf32>
    %c0_196 = arith.constant 0 : index
    %c112_197 = arith.constant 112 : index
    %243 = vector.load %arg6[%c0_196, %c112_197] : memref<16x144xf32, #tpu.memory_space<vmem>>, vector<16x16xf32>
    %c0_198 = arith.constant 0 : index
    %c72 = arith.constant 72 : index
    %244 = vector.load %arg13[%c0_198, %c72] : memref<16x576xf32, #tpu.memory_space<vmem>>, vector<16x496xf32>
    %cst_199 = arith.constant dense<0.000000e+00> : vector<16x496xf32>
    %245 = tpu.matmul %243, %244, %cst_199 {dimension_numbers = #tpu.dot_dimension_numbers<[1], [0], [0], [1], [0, 0, 1, 1], [], []>} : vector<16x16xf32>, vector<16x496xf32>, vector<16x496xf32> -> vector<16x496xf32>
    %246 = arith.addf %242, %245 : vector<16x496xf32>
    %c0_200 = arith.constant 0 : index
    %c128_201 = arith.constant 128 : index
    %247 = vector.load %arg6[%c0_200, %c128_201] : memref<16x144xf32, #tpu.memory_space<vmem>>, vector<16x16xf32>
    %c0_202 = arith.constant 0 : index
    %c73 = arith.constant 73 : index
    %248 = vector.load %arg13[%c0_202, %c73] : memref<16x576xf32, #tpu.memory_space<vmem>>, vector<16x496xf32>
    %cst_203 = arith.constant dense<0.000000e+00> : vector<16x496xf32>
    %249 = tpu.matmul %247, %248, %cst_203 {dimension_numbers = #tpu.dot_dimension_numbers<[1], [0], [0], [1], [0, 0, 1, 1], [], []>} : vector<16x16xf32>, vector<16x496xf32>, vector<16x496xf32> -> vector<16x496xf32>
    %250 = arith.addf %246, %249 : vector<16x496xf32>
    %c0_204 = arith.constant 0 : index
    %c0_205 = arith.constant 0 : index
    %251 = vector.load %arg7[%c0_204, %c0_205] : memref<16x1xf32, #tpu.memory_space<vmem>>, vector<16x1xf32>
    %252 = vector.broadcast %251 : vector<16x1xf32> to vector<16x496xf32>
    %253 = arith.addf %250, %252 : vector<16x496xf32>
    %c0_206 = arith.constant 0 : index
    %c0_207 = arith.constant 0 : index
    %254 = vector.load %arg8[%c0_206, %c0_207] : memref<16x16xf32, #tpu.memory_space<vmem>>, vector<16x16xf32>
    %cst_208 = arith.constant dense<0.000000e+00> : vector<16x496xf32>
    %255 = tpu.matmul %254, %253, %cst_208 {dimension_numbers = #tpu.dot_dimension_numbers<[1], [0], [0], [1], [0, 0, 1, 1], [], []>} : vector<16x16xf32>, vector<16x496xf32>, vector<16x496xf32> -> vector<16x496xf32>
    %c0_209 = arith.constant 0 : index
    %c0_210 = arith.constant 0 : index
    %256 = vector.load %arg9[%c0_209, %c0_210] : memref<16x1xf32, #tpu.memory_space<vmem>>, vector<16x1xf32>
    %257 = vector.broadcast %256 : vector<16x1xf32> to vector<16x496xf32>
    %258 = arith.addf %255, %257 : vector<16x496xf32>
    %c0_211 = arith.constant 0 : index
    %c0_212 = arith.constant 0 : index
    %c264_213 = arith.constant 264 : index
    %259 = vector.load %arg2[%c0_211, %c0_212, %c264_213] : memref<1x16x1024xf32, #tpu.memory_space<vmem>>, vector<1x16x496xf32>
    %260 = vector.shape_cast %259 : vector<1x16x496xf32> to vector<16x496xf32>
    %c0_214 = arith.constant 0 : index
    %c0_215 = arith.constant 0 : index
    %c264_216 = arith.constant 264 : index
    %261 = vector.load %arg3[%c0_214, %c0_215, %c264_216] : memref<1x16x1024xf32, #tpu.memory_space<vmem>>, vector<1x16x496xf32>
    %262 = vector.shape_cast %261 : vector<1x16x496xf32> to vector<16x496xf32>
    %c0_217 = arith.constant 0 : index
    %c0_218 = arith.constant 0 : index
    %263 = vector.load %arg10[%c0_217, %c0_218] : memref<16x64xf32, #tpu.memory_space<vmem>>, vector<16x16xf32>
    %cst_219 = arith.constant dense<0.000000e+00> : vector<16x496xf32>
    %264 = tpu.matmul %263, %260, %cst_219 {dimension_numbers = #tpu.dot_dimension_numbers<[1], [0], [0], [1], [0, 0, 1, 1], [], []>} : vector<16x16xf32>, vector<16x496xf32>, vector<16x496xf32> -> vector<16x496xf32>
    %c0_220 = arith.constant 0 : index
    %c16_221 = arith.constant 16 : index
    %265 = vector.load %arg10[%c0_220, %c16_221] : memref<16x64xf32, #tpu.memory_space<vmem>>, vector<16x16xf32>
    %cst_222 = arith.constant dense<0.000000e+00> : vector<16x496xf32>
    %266 = tpu.matmul %265, %262, %cst_222 {dimension_numbers = #tpu.dot_dimension_numbers<[1], [0], [0], [1], [0, 0, 1, 1], [], []>} : vector<16x16xf32>, vector<16x496xf32>, vector<16x496xf32> -> vector<16x496xf32>
    %267 = arith.addf %264, %266 : vector<16x496xf32>
    %c0_223 = arith.constant 0 : index
    %c32_224 = arith.constant 32 : index
    %268 = vector.load %arg10[%c0_223, %c32_224] : memref<16x64xf32, #tpu.memory_space<vmem>>, vector<16x16xf32>
    %269 = arith.addf %260, %262 : vector<16x496xf32>
    %cst_225 = arith.constant dense<0.000000e+00> : vector<16x496xf32>
    %270 = tpu.matmul %268, %269, %cst_225 {dimension_numbers = #tpu.dot_dimension_numbers<[1], [0], [0], [1], [0, 0, 1, 1], [], []>} : vector<16x16xf32>, vector<16x496xf32>, vector<16x496xf32> -> vector<16x496xf32>
    %271 = arith.addf %267, %270 : vector<16x496xf32>
    %c0_226 = arith.constant 0 : index
    %c48_227 = arith.constant 48 : index
    %272 = vector.load %arg10[%c0_226, %c48_227] : memref<16x64xf32, #tpu.memory_space<vmem>>, vector<16x16xf32>
    %cst_228 = arith.constant dense<0.000000e+00> : vector<16x496xf32>
    %273 = tpu.matmul %272, %258, %cst_228 {dimension_numbers = #tpu.dot_dimension_numbers<[1], [0], [0], [1], [0, 0, 1, 1], [], []>} : vector<16x16xf32>, vector<16x496xf32>, vector<16x496xf32> -> vector<16x496xf32>
    %274 = arith.addf %271, %273 : vector<16x496xf32>
    %c0_229 = arith.constant 0 : index
    %c0_230 = arith.constant 0 : index
    %275 = vector.load %arg11[%c0_229, %c0_230] : memref<16x1xf32, #tpu.memory_space<vmem>>, vector<16x1xf32>
    %276 = vector.broadcast %275 : vector<16x1xf32> to vector<16x496xf32>
    %277 = arith.addf %274, %276 : vector<16x496xf32>
    %278 = vector.extract_strided_slice %277 {offsets = [0, 0], sizes = [16, 16], strides = [1, 1]} : vector<16x496xf32> to vector<16x16xf32>
    %c0_231 = arith.constant 0 : index
    %c0_232 = arith.constant 0 : index
    %c0_233 = arith.constant 0 : index
    %279 = vector.load %arg12[%c0_231, %c0_232, %c0_233] : memref<1x16x256xf32, #tpu.memory_space<vmem>>, vector<1x16x16xf32>
    %280 = vector.shape_cast %279 : vector<1x16x16xf32> to vector<16x16xf32>
    %281 = vector.shape_cast %278 : vector<16x16xf32> to vector<1x16x16xf32>
    tpu.vector_store %arg12[%c0_231, %c0_232, %c0_233], %281 {strides = array<i32>} : memref<1x16x256xf32, #tpu.memory_space<vmem>>, vector<1x16x16xf32>,
    %282 = vector.extract_strided_slice %277 {offsets = [0, 32], sizes = [16, 16], strides = [1, 1]} : vector<16x496xf32> to vector<16x16xf32>
    %c0_234 = arith.constant 0 : index
    %c0_235 = arith.constant 0 : index
    %c16_236 = arith.constant 16 : index
    %283 = vector.load %arg12[%c0_234, %c0_235, %c16_236] : memref<1x16x256xf32, #tpu.memory_space<vmem>>, vector<1x16x16xf32>
    %284 = vector.shape_cast %283 : vector<1x16x16xf32> to vector<16x16xf32>
    %285 = vector.shape_cast %282 : vector<16x16xf32> to vector<1x16x16xf32>
    tpu.vector_store %arg12[%c0_234, %c0_235, %c16_236], %285 {strides = array<i32>} : memref<1x16x256xf32, #tpu.memory_space<vmem>>, vector<1x16x16xf32>,
    %286 = vector.extract_strided_slice %277 {offsets = [0, 64], sizes = [16, 16], strides = [1, 1]} : vector<16x496xf32> to vector<16x16xf32>
    %c0_237 = arith.constant 0 : index
    %c0_238 = arith.constant 0 : index
    %c32_239 = arith.constant 32 : index
    %287 = vector.load %arg12[%c0_237, %c0_238, %c32_239] : memref<1x16x256xf32, #tpu.memory_space<vmem>>, vector<1x16x16xf32>
    %288 = vector.shape_cast %287 : vector<1x16x16xf32> to vector<16x16xf32>
    %289 = vector.shape_cast %286 : vector<16x16xf32> to vector<1x16x16xf32>
    tpu.vector_store %arg12[%c0_237, %c0_238, %c32_239], %289 {strides = array<i32>} : memref<1x16x256xf32, #tpu.memory_space<vmem>>, vector<1x16x16xf32>,
    %290 = vector.extract_strided_slice %277 {offsets = [0, 96], sizes = [16, 16], strides = [1, 1]} : vector<16x496xf32> to vector<16x16xf32>
    %c0_240 = arith.constant 0 : index
    %c0_241 = arith.constant 0 : index
    %c48_242 = arith.constant 48 : index
    %291 = vector.load %arg12[%c0_240, %c0_241, %c48_242] : memref<1x16x256xf32, #tpu.memory_space<vmem>>, vector<1x16x16xf32>
    %292 = vector.shape_cast %291 : vector<1x16x16xf32> to vector<16x16xf32>
    %293 = vector.shape_cast %290 : vector<16x16xf32> to vector<1x16x16xf32>
    tpu.vector_store %arg12[%c0_240, %c0_241, %c48_242], %293 {strides = array<i32>} : memref<1x16x256xf32, #tpu.memory_space<vmem>>, vector<1x16x16xf32>,
    %294 = vector.extract_strided_slice %277 {offsets = [0, 128], sizes = [16, 16], strides = [1, 1]} : vector<16x496xf32> to vector<16x16xf32>
    %c0_243 = arith.constant 0 : index
    %c0_244 = arith.constant 0 : index
    %c64_245 = arith.constant 64 : index
    %295 = vector.load %arg12[%c0_243, %c0_244, %c64_245] : memref<1x16x256xf32, #tpu.memory_space<vmem>>, vector<1x16x16xf32>
    %296 = vector.shape_cast %295 : vector<1x16x16xf32> to vector<16x16xf32>
    %297 = vector.shape_cast %294 : vector<16x16xf32> to vector<1x16x16xf32>
    tpu.vector_store %arg12[%c0_243, %c0_244, %c64_245], %297 {strides = array<i32>} : memref<1x16x256xf32, #tpu.memory_space<vmem>>, vector<1x16x16xf32>,
    %298 = vector.extract_strided_slice %277 {offsets = [0, 160], sizes = [16, 16], strides = [1, 1]} : vector<16x496xf32> to vector<16x16xf32>
    %c0_246 = arith.constant 0 : index
    %c0_247 = arith.constant 0 : index
    %c80_248 = arith.constant 80 : index
    %299 = vector.load %arg12[%c0_246, %c0_247, %c80_248] : memref<1x16x256xf32, #tpu.memory_space<vmem>>, vector<1x16x16xf32>
    %300 = vector.shape_cast %299 : vector<1x16x16xf32> to vector<16x16xf32>
    %301 = vector.shape_cast %298 : vector<16x16xf32> to vector<1x16x16xf32>
    tpu.vector_store %arg12[%c0_246, %c0_247, %c80_248], %301 {strides = array<i32>} : memref<1x16x256xf32, #tpu.memory_space<vmem>>, vector<1x16x16xf32>,
    %302 = vector.extract_strided_slice %277 {offsets = [0, 192], sizes = [16, 16], strides = [1, 1]} : vector<16x496xf32> to vector<16x16xf32>
    %c0_249 = arith.constant 0 : index
    %c0_250 = arith.constant 0 : index
    %c96_251 = arith.constant 96 : index
    %303 = vector.load %arg12[%c0_249, %c0_250, %c96_251] : memref<1x16x256xf32, #tpu.memory_space<vmem>>, vector<1x16x16xf32>
    %304 = vector.shape_cast %303 : vector<1x16x16xf32> to vector<16x16xf32>
    %305 = vector.shape_cast %302 : vector<16x16xf32> to vector<1x16x16xf32>
    tpu.vector_store %arg12[%c0_249, %c0_250, %c96_251], %305 {strides = array<i32>} : memref<1x16x256xf32, #tpu.memory_space<vmem>>, vector<1x16x16xf32>,
    %306 = vector.extract_strided_slice %277 {offsets = [0, 224], sizes = [16, 16], strides = [1, 1]} : vector<16x496xf32> to vector<16x16xf32>
    %c0_252 = arith.constant 0 : index
    %c0_253 = arith.constant 0 : index
    %c112_254 = arith.constant 112 : index
    %307 = vector.load %arg12[%c0_252, %c0_253, %c112_254] : memref<1x16x256xf32, #tpu.memory_space<vmem>>, vector<1x16x16xf32>
    %308 = vector.shape_cast %307 : vector<1x16x16xf32> to vector<16x16xf32>
    %309 = vector.shape_cast %306 : vector<16x16xf32> to vector<1x16x16xf32>
    tpu.vector_store %arg12[%c0_252, %c0_253, %c112_254], %309 {strides = array<i32>} : memref<1x16x256xf32, #tpu.memory_space<vmem>>, vector<1x16x16xf32>,
    %310 = vector.extract_strided_slice %277 {offsets = [0, 256], sizes = [16, 16], strides = [1, 1]} : vector<16x496xf32> to vector<16x16xf32>
    %c0_255 = arith.constant 0 : index
    %c0_256 = arith.constant 0 : index
    %c128_257 = arith.constant 128 : index
    %311 = vector.load %arg12[%c0_255, %c0_256, %c128_257] : memref<1x16x256xf32, #tpu.memory_space<vmem>>, vector<1x16x16xf32>
    %312 = vector.shape_cast %311 : vector<1x16x16xf32> to vector<16x16xf32>
    %313 = vector.shape_cast %310 : vector<16x16xf32> to vector<1x16x16xf32>
    tpu.vector_store %arg12[%c0_255, %c0_256, %c128_257], %313 {strides = array<i32>} : memref<1x16x256xf32, #tpu.memory_space<vmem>>, vector<1x16x16xf32>,
    %314 = vector.extract_strided_slice %277 {offsets = [0, 288], sizes = [16, 16], strides = [1, 1]} : vector<16x496xf32> to vector<16x16xf32>
    %c0_258 = arith.constant 0 : index
    %c0_259 = arith.constant 0 : index
    %c144_260 = arith.constant 144 : index
    %315 = vector.load %arg12[%c0_258, %c0_259, %c144_260] : memref<1x16x256xf32, #tpu.memory_space<vmem>>, vector<1x16x16xf32>
    %316 = vector.shape_cast %315 : vector<1x16x16xf32> to vector<16x16xf32>
    %317 = vector.shape_cast %314 : vector<16x16xf32> to vector<1x16x16xf32>
    tpu.vector_store %arg12[%c0_258, %c0_259, %c144_260], %317 {strides = array<i32>} : memref<1x16x256xf32, #tpu.memory_space<vmem>>, vector<1x16x16xf32>,
    %318 = vector.extract_strided_slice %277 {offsets = [0, 320], sizes = [16, 16], strides = [1, 1]} : vector<16x496xf32> to vector<16x16xf32>
    %c0_261 = arith.constant 0 : index
    %c0_262 = arith.constant 0 : index
    %c160_263 = arith.constant 160 : index
    %319 = vector.load %arg12[%c0_261, %c0_262, %c160_263] : memref<1x16x256xf32, #tpu.memory_space<vmem>>, vector<1x16x16xf32>
    %320 = vector.shape_cast %319 : vector<1x16x16xf32> to vector<16x16xf32>
    %321 = vector.shape_cast %318 : vector<16x16xf32> to vector<1x16x16xf32>
    tpu.vector_store %arg12[%c0_261, %c0_262, %c160_263], %321 {strides = array<i32>} : memref<1x16x256xf32, #tpu.memory_space<vmem>>, vector<1x16x16xf32>,
    %322 = vector.extract_strided_slice %277 {offsets = [0, 352], sizes = [16, 16], strides = [1, 1]} : vector<16x496xf32> to vector<16x16xf32>
    %c0_264 = arith.constant 0 : index
    %c0_265 = arith.constant 0 : index
    %c176_266 = arith.constant 176 : index
    %323 = vector.load %arg12[%c0_264, %c0_265, %c176_266] : memref<1x16x256xf32, #tpu.memory_space<vmem>>, vector<1x16x16xf32>
    %324 = vector.shape_cast %323 : vector<1x16x16xf32> to vector<16x16xf32>
    %325 = vector.shape_cast %322 : vector<16x16xf32> to vector<1x16x16xf32>
    tpu.vector_store %arg12[%c0_264, %c0_265, %c176_266], %325 {strides = array<i32>} : memref<1x16x256xf32, #tpu.memory_space<vmem>>, vector<1x16x16xf32>,
    %326 = vector.extract_strided_slice %277 {offsets = [0, 384], sizes = [16, 16], strides = [1, 1]} : vector<16x496xf32> to vector<16x16xf32>
    %c0_267 = arith.constant 0 : index
    %c0_268 = arith.constant 0 : index
    %c192_269 = arith.constant 192 : index
    %327 = vector.load %arg12[%c0_267, %c0_268, %c192_269] : memref<1x16x256xf32, #tpu.memory_space<vmem>>, vector<1x16x16xf32>
    %328 = vector.shape_cast %327 : vector<1x16x16xf32> to vector<16x16xf32>
    %329 = vector.shape_cast %326 : vector<16x16xf32> to vector<1x16x16xf32>
    tpu.vector_store %arg12[%c0_267, %c0_268, %c192_269], %329 {strides = array<i32>} : memref<1x16x256xf32, #tpu.memory_space<vmem>>, vector<1x16x16xf32>,
    %330 = vector.extract_strided_slice %277 {offsets = [0, 416], sizes = [16, 16], strides = [1, 1]} : vector<16x496xf32> to vector<16x16xf32>
    %c0_270 = arith.constant 0 : index
    %c0_271 = arith.constant 0 : index
    %c208_272 = arith.constant 208 : index
    %331 = vector.load %arg12[%c0_270, %c0_271, %c208_272] : memref<1x16x256xf32, #tpu.memory_space<vmem>>, vector<1x16x16xf32>
    %332 = vector.shape_cast %331 : vector<1x16x16xf32> to vector<16x16xf32>
    %333 = vector.shape_cast %330 : vector<16x16xf32> to vector<1x16x16xf32>
    tpu.vector_store %arg12[%c0_270, %c0_271, %c208_272], %333 {strides = array<i32>} : memref<1x16x256xf32, #tpu.memory_space<vmem>>, vector<1x16x16xf32>,
    %334 = vector.extract_strided_slice %277 {offsets = [0, 448], sizes = [16, 16], strides = [1, 1]} : vector<16x496xf32> to vector<16x16xf32>
    %c0_273 = arith.constant 0 : index
    %c0_274 = arith.constant 0 : index
    %c224_275 = arith.constant 224 : index
    %335 = vector.load %arg12[%c0_273, %c0_274, %c224_275] : memref<1x16x256xf32, #tpu.memory_space<vmem>>, vector<1x16x16xf32>
    %336 = vector.shape_cast %335 : vector<1x16x16xf32> to vector<16x16xf32>
    %337 = vector.shape_cast %334 : vector<16x16xf32> to vector<1x16x16xf32>
    tpu.vector_store %arg12[%c0_273, %c0_274, %c224_275], %337 {strides = array<i32>} : memref<1x16x256xf32, #tpu.memory_space<vmem>>, vector<1x16x16xf32>,
    %338 = vector.extract_strided_slice %277 {offsets = [0, 480], sizes = [16, 16], strides = [1, 1]} : vector<16x496xf32> to vector<16x16xf32>
    %c0_276 = arith.constant 0 : index
    %c0_277 = arith.constant 0 : index
    %c240_278 = arith.constant 240 : index
    %339 = vector.load %arg12[%c0_276, %c0_277, %c240_278] : memref<1x16x256xf32, #tpu.memory_space<vmem>>, vector<1x16x16xf32>
    %340 = vector.shape_cast %339 : vector<1x16x16xf32> to vector<16x16xf32>
    %341 = vector.shape_cast %338 : vector<16x16xf32> to vector<1x16x16xf32>
    tpu.vector_store %arg12[%c0_276, %c0_277, %c240_278], %341 {strides = array<i32>} : memref<1x16x256xf32, #tpu.memory_space<vmem>>, vector<1x16x16xf32>,
    return
  }
  func.func @transform_0(%arg0: i32) -> i32 {
    %c0_i32 = arith.constant 0 : i32
    %c0_i32_0 = arith.constant 0 : i32
    return %c0_i32 : i32
  }
  func.func @transform_1(%arg0: i32) -> (i32, i32, i32) {
    %c0_i32 = arith.constant 0 : i32
    %c0_i32_0 = arith.constant 0 : i32
    %c0_i32_1 = arith.constant 0 : i32
    return %arg0, %c0_i32, %c0_i32_0 : i32, i32, i32
  }
  func.func @transform_2(%arg0: i32) -> (i32, i32, i32) {
    %c0_i32 = arith.constant 0 : i32
    %c0_i32_0 = arith.constant 0 : i32
    %c0_i32_1 = arith.constant 0 : i32
    return %arg0, %c0_i32, %c0_i32_0 : i32, i32, i32
  }
  func.func @transform_3(%arg0: i32) -> (i32, i32) {
    %c0_i32 = arith.constant 0 : i32
    %c0_i32_0 = arith.constant 0 : i32
    %c0_i32_1 = arith.constant 0 : i32
    return %c0_i32, %c0_i32_0 : i32, i32
  }
  func.func @transform_4(%arg0: i32) -> (i32, i32) {
    %c0_i32 = arith.constant 0 : i32
    %c0_i32_0 = arith.constant 0 : i32
    %c0_i32_1 = arith.constant 0 : i32
    return %c0_i32, %c0_i32_0 : i32, i32
  }
  func.func @transform_5(%arg0: i32) -> (i32, i32) {
    %c0_i32 = arith.constant 0 : i32
    %c0_i32_0 = arith.constant 0 : i32
    %c0_i32_1 = arith.constant 0 : i32
    return %c0_i32, %c0_i32_0 : i32, i32
  }
  func.func @transform_6(%arg0: i32) -> (i32, i32) {
    %c0_i32 = arith.constant 0 : i32
    %c0_i32_0 = arith.constant 0 : i32
    %c0_i32_1 = arith.constant 0 : i32
    return %c0_i32, %c0_i32_0 : i32, i32
  }
  func.func @transform_7(%arg0: i32) -> (i32, i32) {
    %c0_i32 = arith.constant 0 : i32
    %c0_i32_0 = arith.constant 0 : i32
    %c0_i32_1 = arith.constant 0 : i32
    return %c0_i32, %c0_i32_0 : i32, i32
  }
  func.func @transform_8(%arg0: i32) -> (i32, i32) {
    %c0_i32 = arith.constant 0 : i32
    %c0_i32_0 = arith.constant 0 : i32
    %c0_i32_1 = arith.constant 0 : i32
    return %c0_i32, %c0_i32_0 : i32, i32
  }
  func.func @transform_9(%arg0: i32) -> (i32, i32) {
    %c0_i32 = arith.constant 0 : i32
    %c0_i32_0 = arith.constant 0 : i32
    %c0_i32_1 = arith.constant 0 : i32
    return %c0_i32, %c0_i32_0 : i32, i32
  }
  func.func @transform_10(%arg0: i32) -> (i32, i32) {
    %c0_i32 = arith.constant 0 : i32
    %c0_i32_0 = arith.constant 0 : i32
    %c0_i32_1 = arith.constant 0 : i32
    return %c0_i32, %c0_i32_0 : i32, i32
  }
  func.func @transform_11(%arg0: i32) -> (i32, i32, i32) {
    %c0_i32 = arith.constant 0 : i32
    %c0_i32_0 = arith.constant 0 : i32
    %c0_i32_1 = arith.constant 0 : i32
    return %arg0, %c0_i32, %c0_i32_0 : i32, i32, i32
  }
}

</mosaic_0001>

<llo_original>
// kernel: tpu_custom_call.1
$region0: #{tpu_custom_call.1}
  #allocation0 [shape = 'u32[]', space=smem, size = 0x4, offset = 0x4, fixed_abs, tag = 'smem constant byte address 0x4 - core index']
  #allocation1 [shape = 'u32[72,128]{1,0:T(1,128)}', space=vmem, size = 0x9000, scoped, tag = 'internal scratch']
  #allocation2 [shape = 'f32[16,576]{1,0:T(8,128)}', space=vmem, size = 0xa000, scoped, tag = 'scratch operand']
  #allocation3 [shape = 'f32[1]{0:T(128)S(6)}', space=smem, size = 0x200, scoped, tag = 'scoped memory for tpu_custom_call.1']
  %s0 = inlined_call_operand.<no memory space> [shape: f32[1], index: 0, kind: input, shape index: {}]
  %s1 = inlined_call_operand.hbm [shape: f32[2,16,1024], index: 1, kind: input, shape index: {}]
  %s2 = inlined_call_operand.hbm [shape: f32[2,16,1024], index: 2, kind: input, shape index: {}]
  %s3 = inlined_call_operand.hbm [shape: f32[16,576], index: 3, kind: input, shape index: {}]
  %s4 = inlined_call_operand.vmem [shape: f32[16,1], index: 4, kind: input, shape index: {}]
  %s5 = inlined_call_operand.vmem [shape: f32[16,144], index: 5, kind: input, shape index: {}]
  %s6 = inlined_call_operand.vmem [shape: f32[16,1], index: 6, kind: input, shape index: {}]
  %s7 = inlined_call_operand.vmem [shape: f32[16,16], index: 7, kind: input, shape index: {}]
  %s8 = inlined_call_operand.vmem [shape: f32[16,1], index: 8, kind: input, shape index: {}]
  %s9 = inlined_call_operand.vmem [shape: f32[16,64], index: 9, kind: input, shape index: {}]
  %s10 = inlined_call_operand.vmem [shape: f32[16,1], index: 10, kind: input, shape index: {}]
  %s11 = inlined_call_operand.hbm [shape: f32[2,16,256], index: 11, kind: output, shape index: {}]
  %s12 = sld [smem:[#allocation0]]
  $region89: #{tpu_custom_call.1} parent=0
    _
  %s14 = ssub.s32 1, %s12
  %s15 = scalar_select 0, %s14, %s12
  %16 = sst [smem:[#allocation3]] %s0
  $region1: #{tpu_custom_call.1} parent=0
    #allocation4 [shape = 'u8[131072]{0}', space=vmem, size = 0x20000, scoped, tag = 'input window, operand 1']
    #allocation5 [shape = 's32[2]{0}', space=sflag, size = 0x8, scoped, tag = 'scoped memory for tpu_custom_call.1']
    #allocation6 [shape = 's32[2]{0}', space=sflag, size = 0x8, scoped, tag = 'scoped memory for tpu_custom_call.1']
    #allocation7 [shape = 'u8[131072]{0}', space=vmem, size = 0x20000, scoped, tag = 'input window, operand 2']
    #allocation8 [shape = 's32[2]{0}', space=sflag, size = 0x8, scoped, tag = 'scoped memory for tpu_custom_call.1']
    #allocation9 [shape = 'u8[40960]{0}', space=vmem, size = 0xa000, scoped, tag = 'input window, operand 3, single buffered']
    #allocation10 [shape = 'u8[32768]{0}', space=vmem, size = 0x8000, scoped, tag = 'output window, operand 0']
    %17 = vsyncpa [#allocation5], 0
    %s18 = scalar_lea.sflag [#allocation5], 1
    %19 = vsyncpa %s18, 0
    %20 = vsyncpa [#allocation8], 0
    %s21 = scalar_lea.sflag [#allocation8], 1
    %22 = vsyncpa %s21, 0
    %23 = vsyncpa [#allocation6], 0
    %s24 = scalar_lea.sflag [#allocation6], 1
    %25 = vsyncpa %s24, 0
    loop: start=0, step=1, limit=4
    $region2: #{tpu_custom_call.1} parent=1 // loop_pre_header
      _
    $region3: #{tpu_custom_call.1} parent=1 // loop_header
      %s27 = sphi 0, %s31
      %p28 = scmp.ge.s32.totalorder %s27, 4
      %s35 = sphi 0, %s35
      %s37 = sphi 0, %s35
      %s38 = sphi 0, %s37
      %s52 = sphi 0, %s38
      %s58 = sphi 0, %s60
      %s61 = sphi 0, %s58
      %s62 = sphi 0, %s61
      %s78 = sphi 0, %s62
      %s84 = sphi 0, %s86
      %s87 = sphi 0, %s84
      %s88 = sphi 0, %s87
      %s104 = sphi 0, %s88
      %s108 = sphi 0, %s108
      %s110 = sphi 0, %s108
      %s111 = sphi 0, %s110
      %s125 = sphi 0, %s111
      %s129 = sphi 0, %s129
      %s131 = sphi 0, %s129
      %s132 = sphi 0, %s131
      %s146 = sphi 0, %s132
      %s150 = sphi 0, %s150
      %s152 = sphi 0, %s150
      %s153 = sphi 0, %s152
      %s167 = sphi 0, %s153
      %s171 = sphi 0, %s171
      %s173 = sphi 0, %s171
      %s174 = sphi 0, %s173
      %s188 = sphi 0, %s174
      %s192 = sphi 0, %s192
      %s194 = sphi 0, %s192
      %s195 = sphi 0, %s194
      %s209 = sphi 0, %s195
      %s213 = sphi 0, %s213
      %s215 = sphi 0, %s213
      %s216 = sphi 0, %s215
      %s230 = sphi 0, %s216
      %s234 = sphi 0, %s234
      %s236 = sphi 0, %s234
      %s237 = sphi 0, %s236
      %s251 = sphi 0, %s237
      %s255 = sphi 0, %s255
      %s257 = sphi 0, %s255
      %s258 = sphi 0, %s257
      %s272 = sphi 0, %s258
      %s278 = sphi 0, %s280
      %s281 = sphi 0, %s278
      %s282 = sphi 0, %s281
      %s298 = sphi 0, %s282
    $region4: #{tpu_custom_call.1} parent=1 // loop_header_branch
      %30 = sbr.rel (%p28) target = $region8
    $region5: #{tpu_custom_call.1} parent=1 // loop_body
      %s32 = ssub.s32 %s27, 1
      %s33 = ssub.s32 %s27, 2
      %s34 = sadd.s32 %s27, 1
      %s36 = sadd.s32 %s35, 1
      %p39 = scmp.eq.s32.totalorder %s27, 1
      %p40 = scmp.ne.s32.totalorder %s35, %s37
      %p41 = scmp.eq.s32.totalorder %s27, 0
      %p42 = por %p40, %p41
      %p43 = scmp.ne.s32.totalorder %s35, %s37
      %p44 = scmp.eq.s32.totalorder %s32, 1
      %p45 = por %p43, %p44
      %p46 = scmp.ne.s32.totalorder %s37, %s38
      %p47 = scmp.eq.s32.totalorder %s32, 0
      %p48 = por %p46, %p47
      %p49 = scmp.ne.s32.totalorder %s37, %s38
      %p50 = scmp.eq.s32.totalorder %s33, 1
      %p51 = por %p49, %p50
      %p53 = scmp.ne.s32.totalorder %s38, %s52
      %p54 = scmp.eq.s32.totalorder %s33, 0
      %p55 = por %p53, %p54
      %s56 = ssub.s32 %s27, %s34
      %p57 = scmp.eq.s32.totalorder %s56, 0
      %s59 = sadd.s32 %s58, 1
      %s60 = scalar_select %p57, %s58, %s59
      %p63 = pneg %p57
      %p64 = scmp.eq.s32.totalorder %s27, 1
      %p65 = por %p63, %p64
      %p66 = scmp.ne.s32.totalorder %s58, %s61
      %p67 = scmp.eq.s32.totalorder %s27, 0
      %p68 = por %p66, %p67
      %p69 = scmp.ne.s32.totalorder %s58, %s61
      %p70 = scmp.eq.s32.totalorder %s32, 1
      %p71 = por %p69, %p70
      %p72 = scmp.ne.s32.totalorder %s61, %s62
      %p73 = scmp.eq.s32.totalorder %s32, 0
      %p74 = por %p72, %p73
      %p75 = scmp.ne.s32.totalorder %s61, %s62
      %p76 = scmp.eq.s32.totalorder %s33, 1
      %p77 = por %p75, %p76
      %p79 = scmp.ne.s32.totalorder %s62, %s78
      %p80 = scmp.eq.s32.totalorder %s33, 0
      %p81 = por %p79, %p80
      %s82 = ssub.s32 %s27, %s34
      %p83 = scmp.eq.s32.totalorder %s82, 0
      %s85 = sadd.s32 %s84, 1
      %s86 = scalar_select %p83, %s84, %s85
      %p89 = pneg %p83
      %p90 = scmp.eq.s32.totalorder %s27, 1
      %p91 = por %p89, %p90
      %p92 = scmp.ne.s32.totalorder %s84, %s87
      %p93 = scmp.eq.s32.totalorder %s27, 0
      %p94 = por %p92, %p93
      %p95 = scmp.ne.s32.totalorder %s84, %s87
      %p96 = scmp.eq.s32.totalorder %s32, 1
      %p97 = por %p95, %p96
      %p98 = scmp.ne.s32.totalorder %s87, %s88
      %p99 = scmp.eq.s32.totalorder %s32, 0
      %p100 = por %p98, %p99
      %p101 = scmp.ne.s32.totalorder %s87, %s88
      %p102 = scmp.eq.s32.totalorder %s33, 1
      %p103 = por %p101, %p102
      %p105 = scmp.ne.s32.totalorder %s88, %s104
      %p106 = scmp.eq.s32.totalorder %s33, 0
      %p107 = por %p105, %p106
      %s109 = sadd.s32 %s108, 1
      %p112 = scmp.eq.s32.totalorder %s27, 1
      %p113 = scmp.ne.s32.totalorder %s108, %s110
      %p114 = scmp.eq.s32.totalorder %s27, 0
      %p115 = por %p113, %p114
      %p116 = scmp.ne.s32.totalorder %s108, %s110
      %p117 = scmp.eq.s32.totalorder %s32, 1
      %p118 = por %p116, %p117
      %p119 = scmp.ne.s32.totalorder %s110, %s111
      %p120 = scmp.eq.s32.totalorder %s32, 0
      %p121 = por %p119, %p120
      %p122 = scmp.ne.s32.totalorder %s110, %s111
      %p123 = scmp.eq.s32.totalorder %s33, 1
      %p124 = por %p122, %p123
      %p126 = scmp.ne.s32.totalorder %s111, %s125
      %p127 = scmp.eq.s32.totalorder %s33, 0
      %p128 = por %p126, %p127
      %s130 = sadd.s32 %s129, 1
      %p133 = scmp.eq.s32.totalorder %s27, 1
      %p134 = scmp.ne.s32.totalorder %s129, %s131
      %p135 = scmp.eq.s32.totalorder %s27, 0
      %p136 = por %p134, %p135
      %p137 = scmp.ne.s32.totalorder %s129, %s131
      %p138 = scmp.eq.s32.totalorder %s32, 1
      %p139 = por %p137, %p138
      %p140 = scmp.ne.s32.totalorder %s131, %s132
      %p141 = scmp.eq.s32.totalorder %s32, 0
      %p142 = por %p140, %p141
      %p143 = scmp.ne.s32.totalorder %s131, %s132
      %p144 = scmp.eq.s32.totalorder %s33, 1
      %p145 = por %p143, %p144
      %p147 = scmp.ne.s32.totalorder %s132, %s146
      %p148 = scmp.eq.s32.totalorder %s33, 0
      %p149 = por %p147, %p148
      %s151 = sadd.s32 %s150, 1
      %p154 = scmp.eq.s32.totalorder %s27, 1
      %p155 = scmp.ne.s32.totalorder %s150, %s152
      %p156 = scmp.eq.s32.totalorder %s27, 0
      %p157 = por %p155, %p156
      %p158 = scmp.ne.s32.totalorder %s150, %s152
      %p159 = scmp.eq.s32.totalorder %s32, 1
      %p160 = por %p158, %p159
      %p161 = scmp.ne.s32.totalorder %s152, %s153
      %p162 = scmp.eq.s32.totalorder %s32, 0
      %p163 = por %p161, %p162
      %p164 = scmp.ne.s32.totalorder %s152, %s153
      %p165 = scmp.eq.s32.totalorder %s33, 1
      %p166 = por %p164, %p165
      %p168 = scmp.ne.s32.totalorder %s153, %s167
      %p169 = scmp.eq.s32.totalorder %s33, 0
      %p170 = por %p168, %p169
      %s172 = sadd.s32 %s171, 1
      %p175 = scmp.eq.s32.totalorder %s27, 1
      %p176 = scmp.ne.s32.totalorder %s171, %s173
      %p177 = scmp.eq.s32.totalorder %s27, 0
      %p178 = por %p176, %p177
      %p179 = scmp.ne.s32.totalorder %s171, %s173
      %p180 = scmp.eq.s32.totalorder %s32, 1
      %p181 = por %p179, %p180
      %p182 = scmp.ne.s32.totalorder %s173, %s174
      %p183 = scmp.eq.s32.totalorder %s32, 0
      %p184 = por %p182, %p183
      %p185 = scmp.ne.s32.totalorder %s173, %s174
      %p186 = scmp.eq.s32.totalorder %s33, 1
      %p187 = por %p185, %p186
      %p189 = scmp.ne.s32.totalorder %s174, %s188
      %p190 = scmp.eq.s32.totalorder %s33, 0
      %p191 = por %p189, %p190
      %s193 = sadd.s32 %s192, 1
      %p196 = scmp.eq.s32.totalorder %s27, 1
      %p197 = scmp.ne.s32.totalorder %s192, %s194
      %p198 = scmp.eq.s32.totalorder %s27, 0
      %p199 = por %p197, %p198
      %p200 = scmp.ne.s32.totalorder %s192, %s194
      %p201 = scmp.eq.s32.totalorder %s32, 1
      %p202 = por %p200, %p201
      %p203 = scmp.ne.s32.totalorder %s194, %s195
      %p204 = scmp.eq.s32.totalorder %s32, 0
      %p205 = por %p203, %p204
      %p206 = scmp.ne.s32.totalorder %s194, %s195
      %p207 = scmp.eq.s32.totalorder %s33, 1
      %p208 = por %p206, %p207
      %p210 = scmp.ne.s32.totalorder %s195, %s209
      %p211 = scmp.eq.s32.totalorder %s33, 0
      %p212 = por %p210, %p211
      %s214 = sadd.s32 %s213, 1
      %p217 = scmp.eq.s32.totalorder %s27, 1
      %p218 = scmp.ne.s32.totalorder %s213, %s215
      %p219 = scmp.eq.s32.totalorder %s27, 0
      %p220 = por %p218, %p219
      %p221 = scmp.ne.s32.totalorder %s213, %s215
      %p222 = scmp.eq.s32.totalorder %s32, 1
      %p223 = por %p221, %p222
      %p224 = scmp.ne.s32.totalorder %s215, %s216
      %p225 = scmp.eq.s32.totalorder %s32, 0
      %p226 = por %p224, %p225
      %p227 = scmp.ne.s32.totalorder %s215, %s216
      %p228 = scmp.eq.s32.totalorder %s33, 1
      %p229 = por %p227, %p228
      %p231 = scmp.ne.s32.totalorder %s216, %s230
      %p232 = scmp.eq.s32.totalorder %s33, 0
      %p233 = por %p231, %p232
      %s235 = sadd.s32 %s234, 1
      %p238 = scmp.eq.s32.totalorder %s27, 1
      %p239 = scmp.ne.s32.totalorder %s234, %s236
      %p240 = scmp.eq.s32.totalorder %s27, 0
      %p241 = por %p239, %p240
      %p242 = scmp.ne.s32.totalorder %s234, %s236
      %p243 = scmp.eq.s32.totalorder %s32, 1
      %p244 = por %p242, %p243
      %p245 = scmp.ne.s32.totalorder %s236, %s237
      %p246 = scmp.eq.s32.totalorder %s32, 0
      %p247 = por %p245, %p246
      %p248 = scmp.ne.s32.totalorder %s236, %s237
      %p249 = scmp.eq.s32.totalorder %s33, 1
      %p250 = por %p248, %p249
      %p252 = scmp.ne.s32.totalorder %s237, %s251
      %p253 = scmp.eq.s32.totalorder %s33, 0
      %p254 = por %p252, %p253
      %s256 = sadd.s32 %s255, 1
      %p259 = scmp.eq.s32.totalorder %s27, 1
      %p260 = scmp.ne.s32.totalorder %s255, %s257
      %p261 = scmp.eq.s32.totalorder %s27, 0
      %p262 = por %p260, %p261
      %p263 = scmp.ne.s32.totalorder %s255, %s257
      %p264 = scmp.eq.s32.totalorder %s32, 1
      %p265 = por %p263, %p264
      %p266 = scmp.ne.s32.totalorder %s257, %s258
      %p267 = scmp.eq.s32.totalorder %s32, 0
      %p268 = por %p266, %p267
      %p269 = scmp.ne.s32.totalorder %s257, %s258
      %p270 = scmp.eq.s32.totalorder %s33, 1
      %p271 = por %p269, %p270
      %p273 = scmp.ne.s32.totalorder %s258, %s272
      %p274 = scmp.eq.s32.totalorder %s33, 0
      %p275 = por %p273, %p274
      %s276 = ssub.s32 %s27, %s34
      %p277 = scmp.eq.s32.totalorder %s276, 0
      %s279 = sadd.s32 %s278, 1
      %s280 = scalar_select %p277, %s278, %s279
      %p283 = pneg %p277
      %p284 = scmp.eq.s32.totalorder %s27, 1
      %p285 = por %p283, %p284
      %p286 = scmp.ne.s32.totalorder %s278, %s281
      %p287 = scmp.eq.s32.totalorder %s27, 0
      %p288 = por %p286, %p287
      %p289 = scmp.ne.s32.totalorder %s278, %s281
      %p290 = scmp.eq.s32.totalorder %s32, 1
      %p291 = por %p289, %p290
      %p292 = scmp.ne.s32.totalorder %s281, %s282
      %p293 = scmp.eq.s32.totalorder %s32, 0
      %p294 = por %p292, %p293
      %p295 = scmp.ne.s32.totalorder %s281, %s282
      %p296 = scmp.eq.s32.totalorder %s33, 1
      %p297 = por %p295, %p296
      %p299 = scmp.ne.s32.totalorder %s282, %s298
      %p300 = scmp.eq.s32.totalorder %s33, 0
      %p301 = por %p299, %p300
      %p302 = scmp.le.s32.totalorder 1, %s27
      %p303 = scmp.lt.s32.totalorder %s27, 3
      %p304 = pnand %p302, %p303
      %p305 = pneg %p304
      // Predicated region
      $region9: #{tpu_custom_call.1} parent=5 // pred_check
        _
      $region10: #{tpu_custom_call.1} parent=5 // pred_check_branch
        %307 = sbr.rel (%p304) target = $region12
      $region11: #{tpu_custom_call.1} parent=5 // pred_region
        %s308 = ssub.s32 %s27, 1
        // Predicated region
        $region13: #{tpu_custom_call.1} parent=11 // pred_check
          %p309 = pneg %p48
        $region14: #{tpu_custom_call.1} parent=11 // pred_check_branch
          %311 = sbr.rel (%p309) target = $region16
        $region15: #{tpu_custom_call.1} parent=11 // pred_region
          _
        $region16: #{tpu_custom_call.1} parent=11 // pred_fallthru
          _
        // Predicated region
        $region17: #{tpu_custom_call.1} parent=11 // pred_check
          %p312 = pneg %p121
        $region18: #{tpu_custom_call.1} parent=11 // pred_check_branch
          %314 = sbr.rel (%p312) target = $region20
        $region19: #{tpu_custom_call.1} parent=11 // pred_region
          %316 = vsyncadd [#allocation8], 0
          %s317 = sshll.u32 %s3, 4
          %s318 = int_to_ptr.hbm [resolvable:$true] %s317
          %s319 = sshll.u32 [#allocation9], 4
          %s320 = int_to_ptr.vmem [resolvable:$true] %s319
          %325 = dma.hbm_to_vmem [thread:$0]  %s318, 1280, %s320, [#allocation8], 640, 640, 40
        $region20: #{tpu_custom_call.1} parent=11 // pred_fallthru
          _
        // Predicated region
        $region21: #{tpu_custom_call.1} parent=11 // pred_check
          %p326 = pneg %p142
        $region22: #{tpu_custom_call.1} parent=11 // pred_check_branch
          %328 = sbr.rel (%p326) target = $region24
        $region23: #{tpu_custom_call.1} parent=11 // pred_region
          _
        $region24: #{tpu_custom_call.1} parent=11 // pred_fallthru
          _
        // Predicated region
        $region25: #{tpu_custom_call.1} parent=11 // pred_check
          %p329 = pneg %p163
        $region26: #{tpu_custom_call.1} parent=11 // pred_check_branch
          %331 = sbr.rel (%p329) target = $region28
        $region27: #{tpu_custom_call.1} parent=11 // pred_region
          _
        $region28: #{tpu_custom_call.1} parent=11 // pred_fallthru
          _
        // Predicated region
        $region29: #{tpu_custom_call.1} parent=11 // pred_check
          %p332 = pneg %p184
        $region30: #{tpu_custom_call.1} parent=11 // pred_check_branch
          %334 = sbr.rel (%p332) target = $region32
        $region31: #{tpu_custom_call.1} parent=11 // pred_region
          _
        $region32: #{tpu_custom_call.1} parent=11 // pred_fallthru
          _
        // Predicated region
        $region33: #{tpu_custom_call.1} parent=11 // pred_check
          %p335 = pneg %p205
        $region34: #{tpu_custom_call.1} parent=11 // pred_check_branch
          %337 = sbr.rel (%p335) target = $region36
        $region35: #{tpu_custom_call.1} parent=11 // pred_region
          _
        $region36: #{tpu_custom_call.1} parent=11 // pred_fallthru
          _
        // Predicated region
        $region37: #{tpu_custom_call.1} parent=11 // pred_check
          %p338 = pneg %p226
        $region38: #{tpu_custom_call.1} parent=11 // pred_check_branch
          %340 = sbr.rel (%p338) target = $region40
        $region39: #{tpu_custom_call.1} parent=11 // pred_region
          _
        $region40: #{tpu_custom_call.1} parent=11 // pred_fallthru
          _
        // Predicated region
        $region41: #{tpu_custom_call.1} parent=11 // pred_check
          %p341 = pneg %p247
        $region42: #{tpu_custom_call.1} parent=11 // pred_check_branch
          %343 = sbr.rel (%p341) target = $region44
        $region43: #{tpu_custom_call.1} parent=11 // pred_region
          _
        $region44: #{tpu_custom_call.1} parent=11 // pred_fallthru
          _
        // Predicated region
        $region45: #{tpu_custom_call.1} parent=11 // pred_check
          %p344 = pneg %p268
        $region46: #{tpu_custom_call.1} parent=11 // pred_check_branch
          %346 = sbr.rel (%p344) target = $region48
        $region47: #{tpu_custom_call.1} parent=11 // pred_region
          _
        $region48: #{tpu_custom_call.1} parent=11 // pred_fallthru
          _
      $region12: #{tpu_custom_call.1} parent=5 // pred_fallthru
        _
      %p347 = scmp.lt.s32.totalorder %s27, 2
      // Predicated region
      $region49: #{tpu_custom_call.1} parent=5 // pred_check
        %p348 = pneg %p347
      $region50: #{tpu_custom_call.1} parent=5 // pred_check_branch
        %350 = sbr.rel (%p348) target = $region52
      $region51: #{tpu_custom_call.1} parent=5 // pred_region
        // Predicated region
        $region53: #{tpu_custom_call.1} parent=51 // pred_check
          %p351 = pneg %p68
        $region54: #{tpu_custom_call.1} parent=51 // pred_check_branch
          %353 = sbr.rel (%p351) target = $region56
        $region55: #{tpu_custom_call.1} parent=51 // pred_region
          %s354 = sand.u32 %s58, 1
          %s355 = scalar_lea.sflag [#allocation5], %s354
          %s356 = sand.u32 %s58, 1
          %s357 = smul.addr %s356, 128
          %s358 = scalar_lea.vmem [#allocation4], %s357
          %360 = vsyncadd %s355, 0
          %s361 = smul.addr %s27, 16
          %s362 = smul.addr %s361, 8
          %s363 = scalar_lea.hbm %s1, %s362
          %s364 = sshll.u32 %s363, 4
          %s365 = int_to_ptr.hbm [resolvable:$true] %s364
          %s366 = sshll.u32 %s358, 4
          %s367 = int_to_ptr.vmem [resolvable:$true] %s366
          %372 = dma.hbm_to_vmem [thread:$0]  %s365, 2048, %s367, %s355, 1024, 1024, 64
        $region56: #{tpu_custom_call.1} parent=51 // pred_fallthru
          _
        // Predicated region
        $region57: #{tpu_custom_call.1} parent=51 // pred_check
          %p373 = pneg %p94
        $region58: #{tpu_custom_call.1} parent=51 // pred_check_branch
          %375 = sbr.rel (%p373) target = $region60
        $region59: #{tpu_custom_call.1} parent=51 // pred_region
          %s376 = sand.u32 %s27, 1
          %s377 = scalar_lea.sflag [#allocation8], %s376
          %s378 = sand.u32 %s84, 1
          %s379 = smul.addr %s378, 128
          %s380 = scalar_lea.vmem [#allocation7], %s379
          %382 = vsyncadd %s377, 0
          %s383 = smul.addr %s27, 16
          %s384 = smul.addr %s383, 8
          %s385 = scalar_lea.hbm %s2, %s384
          %s386 = sshll.u32 %s385, 4
          %s387 = int_to_ptr.hbm [resolvable:$true] %s386
          %s388 = sshll.u32 %s380, 4
          %s389 = int_to_ptr.vmem [resolvable:$true] %s388
          %394 = dma.hbm_to_vmem [thread:$0]  %s387, 2048, %s389, %s377, 1024, 1024, 64
        $region60: #{tpu_custom_call.1} parent=51 // pred_fallthru
          _
      $region52: #{tpu_custom_call.1} parent=5 // pred_fallthru
        _
      %p395 = scmp.le.s32.totalorder 1, %s27
      %p396 = scmp.lt.s32.totalorder %s27, 3
      %p397 = pnand %p395, %p396
      %p398 = pneg %p397
      // Predicated region
      $region61: #{tpu_custom_call.1} parent=5 // pred_check
        _
      $region62: #{tpu_custom_call.1} parent=5 // pred_check_branch
        %400 = sbr.rel (%p397) target = $region64
      $region63: #{tpu_custom_call.1} parent=5 // pred_region
        %s401 = ssub.s32 %s27, 1
        %s402 = sand.u32 %s61, 1
        %s403 = scalar_lea.sflag [#allocation5], %s402
        %s404 = sand.u32 %s61, 1
        %s405 = smul.addr %s404, 128
        %s406 = scalar_lea.vmem [#allocation4], %s405
        // Predicated region
        $region65: #{tpu_custom_call.1} parent=63 // pred_check
          %p407 = pneg %p74
        $region66: #{tpu_custom_call.1} parent=63 // pred_check_branch
          %409 = sbr.rel (%p407) target = $region68
        $region67: #{tpu_custom_call.1} parent=63 // pred_region
          %411 = dma.done %s403, 2048
        $region68: #{tpu_custom_call.1} parent=63 // pred_fallthru
          _
        %s412 = sand.u32 %s32, 1
        %s413 = scalar_lea.sflag [#allocation8], %s412
        %s414 = sand.u32 %s87, 1
        %s415 = smul.addr %s414, 128
        %s416 = scalar_lea.vmem [#allocation7], %s415
        // Predicated region
        $region69: #{tpu_custom_call.1} parent=63 // pred_check
          %p417 = pneg %p100
        $region70: #{tpu_custom_call.1} parent=63 // pred_check_branch
          %419 = sbr.rel (%p417) target = $region72
        $region71: #{tpu_custom_call.1} parent=63 // pred_region
          %421 = dma.done %s413, 2048
        $region72: #{tpu_custom_call.1} parent=63 // pred_fallthru
          _
        // Predicated region
        $region73: #{tpu_custom_call.1} parent=63 // pred_check
          %p422 = pneg %p121
        $region74: #{tpu_custom_call.1} parent=63 // pred_check_branch
          %424 = sbr.rel (%p422) target = $region76
        $region75: #{tpu_custom_call.1} parent=63 // pred_region
          %426 = dma.done [#allocation8], 1280
        $region76: #{tpu_custom_call.1} parent=63 // pred_fallthru
          _
        %p427 = pneg %p48
        %p428 = pneg %p45
        %s429 = sand.u32 %s61, 1
        %s430 = scalar_lea.sflag [#allocation5], %s429
        %s431 = sand.u32 %s61, 1
        %s432 = smul.addr %s431, 128
        %s433 = scalar_lea.vmem [#allocation4], %s432
        %p434 = pneg %p74
        %p435 = pneg %p71
        %s436 = sand.u32 %s32, 1
        %s437 = scalar_lea.sflag [#allocation8], %s436
        %s438 = sand.u32 %s87, 1
        %s439 = smul.addr %s438, 128
        %s440 = scalar_lea.vmem [#allocation7], %s439
        %p441 = pneg %p100
        %p442 = pneg %p97
        %p443 = pneg %p121
        %p444 = pneg %p118
        %p445 = pneg %p142
        %p446 = pneg %p139
        %p447 = pneg %p163
        %p448 = pneg %p160
        %p449 = pneg %p184
        %p450 = pneg %p181
        %p451 = pneg %p205
        %p452 = pneg %p202
        %p453 = pneg %p226
        %p454 = pneg %p223
        %p455 = pneg %p247
        %p456 = pneg %p244
        %p457 = pneg %p268
        %p458 = pneg %p265
        %p459 = pneg %p294
        %p460 = pneg %p291
        %s461 = sand.u32 %s281, 1
        %s462 = scalar_lea.sflag [#allocation6], %s461
        %s463 = sand.u32 %s281, 1
        %s464 = smul.addr %s463, 32
        %s465 = scalar_lea.vmem [#allocation10], %s464
        %s466 = sld [smem:[#allocation3]]
        %v467 = vld [vmem:[#allocation9] sm:$0xff]
        %v468 = vld [vmem:[#allocation9 + $0x28] sm:$0xff]
        %v469 = vld [vmem:[%s406 + $0x8] sm:$0xff]
        %v470 = vld [vmem:[%s406 + $0x10] sm:$0xff]
        %v471 = vld [vmem:[%s406 + $0x18] sm:$0xff]
        %v472 = vld [vmem:[%s406 + $0x20] sm:$0xff]
        %v473 = vld [vmem:[%s406 + $0x28] sm:$0xff]
        %v474 = vld [vmem:[%s406 + $0x48] sm:$0xff]
        %v475 = vld [vmem:[%s406 + $0x50] sm:$0xff]
        %v476 = vld [vmem:[%s406 + $0x58] sm:$0xff]
        %v477 = vld [vmem:[%s406 + $0x60] sm:$0xff]
        %v478 = vld [vmem:[%s406 + $0x68] sm:$0xff]
        %481 = vrot.lane.b32.xlu0 %v467, 112
        %v482 = vpop.permute.xlu0 %481
        %483 = vrot.lane.b32.xlu0 %v468, 112
        %v484 = vpop.permute.xlu0 %483
        %495 = vrot.lane.b32.xlu0 %v469, 24
        %v496 = vpop.permute.xlu0 %495
        %497 = vrot.lane.b32.xlu0 %v470, 24
        %v498 = vpop.permute.xlu0 %497
        %499 = vrot.lane.b32.xlu0 %v471, 24
        %v500 = vpop.permute.xlu0 %499
        %501 = vrot.lane.b32.xlu0 %v472, 24
        %v502 = vpop.permute.xlu0 %501
        %503 = vrot.lane.b32.xlu0 %v473, 24
        %v504 = vpop.permute.xlu0 %503
        %505 = vrot.lane.b32.xlu0 %v474, 24
        %v506 = vpop.permute.xlu0 %505
        %507 = vrot.lane.b32.xlu0 %v475, 24
        %v508 = vpop.permute.xlu0 %507
        %509 = vrot.lane.b32.xlu0 %v476, 24
        %v510 = vpop.permute.xlu0 %509
        %511 = vrot.lane.b32.xlu0 %v477, 24
        %v512 = vpop.permute.xlu0 %511
        %513 = vrot.lane.b32.xlu0 %v478, 24
        %v514 = vpop.permute.xlu0 %513
        %vm515 = vcmask 195584
        %v516 = vsel %vm515, %v496, %v498
        %v517 = vsel %vm515, %v498, %v500
        %v518 = vsel %vm515, %v500, %v502
        %v519 = vsel %vm515, %v502, %v504
        %v520 = vsel %vm515, %v506, %v508
        %v521 = vsel %vm515, %v508, %v510
        %v522 = vsel %vm515, %v510, %v512
        %v523 = vsel %vm515, %v512, %v514
        %vm532 = vcmask 130048
        %v533 = vsel %vm532, %v482, 0
        %v535 = vsel %vm532, %v484, 0
        %537 = vmatpush.msra.mxu0 0.0
        %538 = vmatpush.msra.mxu0 0.0
        %539 = vmatpush.msra.mxu0 0.0
        %540 = vmatpush.msra.mxu0 0.0
        %541 = vmatpush.msra.mxu0 0.0
        %542 = vmatpush.msra.mxu0 0.0
        %543 = vmatpush.msra.mxu0 0.0
        %544 = vmatpush.msra.mxu0 0.0
        %545 = vmatpush.msra.mxu0 0.0
        %546 = vmatpush.msra.mxu0 0.0
        %547 = vmatpush.msra.mxu0 0.0
        %548 = vmatpush.msra.mxu0 0.0
        %549 = vmatpush.msra.mxu0 0.0
        %550 = vmatpush.msra.mxu0 0.0
        %551 = vmatpush.msra.mxu0 %v520
        %552 = vmatpush.msra.mxu0 %v516
        %553 = vmatmul.f32.gmra.mxu0 %v533
        %v554 = vpop.f32.mrf.mxu0
        %v555 = vadd.f32 0.0, %v554
        %556 = vmatmul.f32.gmra.mxu0 %v535
        %v557 = vpop.f32.mrf.mxu0
        %v558 = vadd.f32 0.0, %v557
        %559 = vdwg.mxu0
        %560 = vmatpush.msra.mxu0 0.0
        %561 = vmatpush.msra.mxu0 0.0
        %562 = vmatpush.msra.mxu0 0.0
        %563 = vmatpush.msra.mxu0 0.0
        %564 = vmatpush.msra.mxu0 0.0
        %565 = vmatpush.msra.mxu0 0.0
        %566 = vmatpush.msra.mxu0 0.0
        %567 = vmatpush.msra.mxu0 0.0
        %568 = vmatpush.msra.mxu0 0.0
        %569 = vmatpush.msra.mxu0 0.0
        %570 = vmatpush.msra.mxu0 0.0
        %571 = vmatpush.msra.mxu0 0.0
        %572 = vmatpush.msra.mxu0 0.0
        %573 = vmatpush.msra.mxu0 0.0
        %574 = vmatpush.msra.mxu0 %v521
        %575 = vmatpush.msra.mxu0 %v517
        %576 = vmatmul.f32.gmra.mxu0 %v533
        %v577 = vpop.f32.mrf.mxu0
        %v578 = vadd.f32 0.0, %v577
        %579 = vmatmul.f32.gmra.mxu0 %v535
        %v580 = vpop.f32.mrf.mxu0
        %v581 = vadd.f32 0.0, %v580
        %582 = vdwg.mxu0
        %583 = vmatpush.msra.mxu0 0.0
        %584 = vmatpush.msra.mxu0 0.0
        %585 = vmatpush.msra.mxu0 0.0
        %586 = vmatpush.msra.mxu0 0.0
        %587 = vmatpush.msra.mxu0 0.0
        %588 = vmatpush.msra.mxu0 0.0
        %589 = vmatpush.msra.mxu0 0.0
        %590 = vmatpush.msra.mxu0 0.0
        %591 = vmatpush.msra.mxu0 0.0
        %592 = vmatpush.msra.mxu0 0.0
        %593 = vmatpush.msra.mxu0 0.0
        %594 = vmatpush.msra.mxu0 0.0
        %595 = vmatpush.msra.mxu0 0.0
        %596 = vmatpush.msra.mxu0 0.0
        %597 = vmatpush.msra.mxu0 %v522
        %598 = vmatpush.msra.mxu0 %v518
        %599 = vmatmul.f32.gmra.mxu0 %v533
        %v600 = vpop.f32.mrf.mxu0
        %v601 = vadd.f32 0.0, %v600
        %602 = vmatmul.f32.gmra.mxu0 %v535
        %v603 = vpop.f32.mrf.mxu0
        %v604 = vadd.f32 0.0, %v603
        %605 = vdwg.mxu0
        %606 = vmatpush.msra.mxu0 0.0
        %607 = vmatpush.msra.mxu0 0.0
        %608 = vmatpush.msra.mxu0 0.0
        %609 = vmatpush.msra.mxu0 0.0
        %610 = vmatpush.msra.mxu0 0.0
        %611 = vmatpush.msra.mxu0 0.0
        %612 = vmatpush.msra.mxu0 0.0
        %613 = vmatpush.msra.mxu0 0.0
        %614 = vmatpush.msra.mxu0 0.0
        %615 = vmatpush.msra.mxu0 0.0
        %616 = vmatpush.msra.mxu0 0.0
        %617 = vmatpush.msra.mxu0 0.0
        %618 = vmatpush.msra.mxu0 0.0
        %619 = vmatpush.msra.mxu0 0.0
        %620 = vmatpush.msra.mxu0 %v523
        %621 = vmatpush.msra.mxu0 %v519
        %622 = vmatmul.f32.gmra.mxu0 %v533
        %v623 = vpop.f32.mrf.mxu0
        %v624 = vadd.f32 0.0, %v623
        %625 = vmatmul.f32.gmra.mxu0 %v535
        %v626 = vpop.f32.mrf.mxu0
        %v627 = vadd.f32 0.0, %v626
        %628 = vdwg.mxu0
        %629 = vrot.lane.b32.xlu0 %v469, 25
        %v630 = vpop.permute.xlu0 %629
        %631 = vrot.lane.b32.xlu0 %v470, 25
        %v632 = vpop.permute.xlu0 %631
        %633 = vrot.lane.b32.xlu0 %v471, 25
        %v634 = vpop.permute.xlu0 %633
        %635 = vrot.lane.b32.xlu0 %v472, 25
        %v636 = vpop.permute.xlu0 %635
        %637 = vrot.lane.b32.xlu0 %v473, 25
        %v638 = vpop.permute.xlu0 %637
        %639 = vrot.lane.b32.xlu0 %v474, 25
        %v640 = vpop.permute.xlu0 %639
        %641 = vrot.lane.b32.xlu0 %v475, 25
        %v642 = vpop.permute.xlu0 %641
        %643 = vrot.lane.b32.xlu0 %v476, 25
        %v644 = vpop.permute.xlu0 %643
        %645 = vrot.lane.b32.xlu0 %v477, 25
        %v646 = vpop.permute.xlu0 %645
        %647 = vrot.lane.b32.xlu0 %v478, 25
        %v648 = vpop.permute.xlu0 %647
        %vm649 = vcmask 203776
        %v650 = vsel %vm649, %v630, %v632
        %v651 = vsel %vm649, %v632, %v634
        %v652 = vsel %vm649, %v634, %v636
        %v653 = vsel %vm649, %v636, %v638
        %v654 = vsel %vm649, %v640, %v642
        %v655 = vsel %vm649, %v642, %v644
        %v656 = vsel %vm649, %v644, %v646
        %v657 = vsel %vm649, %v646, %v648
        %v666 = vsel %vm532, %v467, 0
        %v668 = vsel %vm532, %v468, 0
        %670 = vmatpush.msra.mxu0 0.0
        %671 = vmatpush.msra.mxu0 0.0
        %672 = vmatpush.msra.mxu0 0.0
        %673 = vmatpush.msra.mxu0 0.0
        %674 = vmatpush.msra.mxu0 0.0
        %675 = vmatpush.msra.mxu0 0.0
        %676 = vmatpush.msra.mxu0 0.0
        %677 = vmatpush.msra.mxu0 0.0
        %678 = vmatpush.msra.mxu0 0.0
        %679 = vmatpush.msra.mxu0 0.0
        %680 = vmatpush.msra.mxu0 0.0
        %681 = vmatpush.msra.mxu0 0.0
        %682 = vmatpush.msra.mxu0 0.0
        %683 = vmatpush.msra.mxu0 0.0
        %684 = vmatpush.msra.mxu0 %v654
        %685 = vmatpush.msra.mxu0 %v650
        %686 = vmatmul.f32.gmra.mxu0 %v666
        %v687 = vpop.f32.mrf.mxu0
        %v688 = vadd.f32 %v555, %v687
        %689 = vmatmul.f32.gmra.mxu0 %v668
        %v690 = vpop.f32.mrf.mxu0
        %v691 = vadd.f32 %v558, %v690
        %692 = vdwg.mxu0
        %693 = vmatpush.msra.mxu0 0.0
        %694 = vmatpush.msra.mxu0 0.0
        %695 = vmatpush.msra.mxu0 0.0
        %696 = vmatpush.msra.mxu0 0.0
        %697 = vmatpush.msra.mxu0 0.0
        %698 = vmatpush.msra.mxu0 0.0
        %699 = vmatpush.msra.mxu0 0.0
        %700 = vmatpush.msra.mxu0 0.0
        %701 = vmatpush.msra.mxu0 0.0
        %702 = vmatpush.msra.mxu0 0.0
        %703 = vmatpush.msra.mxu0 0.0
        %704 = vmatpush.msra.mxu0 0.0
        %705 = vmatpush.msra.mxu0 0.0
        %706 = vmatpush.msra.mxu0 0.0
        %707 = vmatpush.msra.mxu0 %v655
        %708 = vmatpush.msra.mxu0 %v651
        %709 = vmatmul.f32.gmra.mxu0 %v666
        %v710 = vpop.f32.mrf.mxu0
        %v711 = vadd.f32 %v578, %v710
        %712 = vmatmul.f32.gmra.mxu0 %v668
        %v713 = vpop.f32.mrf.mxu0
        %v714 = vadd.f32 %v581, %v713
        %715 = vdwg.mxu0
        %716 = vmatpush.msra.mxu0 0.0
        %717 = vmatpush.msra.mxu0 0.0
        %718 = vmatpush.msra.mxu0 0.0
        %719 = vmatpush.msra.mxu0 0.0
        %720 = vmatpush.msra.mxu0 0.0
        %721 = vmatpush.msra.mxu0 0.0
        %722 = vmatpush.msra.mxu0 0.0
        %723 = vmatpush.msra.mxu0 0.0
        %724 = vmatpush.msra.mxu0 0.0
        %725 = vmatpush.msra.mxu0 0.0
        %726 = vmatpush.msra.mxu0 0.0
        %727 = vmatpush.msra.mxu0 0.0
        %728 = vmatpush.msra.mxu0 0.0
        %729 = vmatpush.msra.mxu0 0.0
        %730 = vmatpush.msra.mxu0 %v656
        %731 = vmatpush.msra.mxu0 %v652
        %732 = vmatmul.f32.gmra.mxu0 %v666
        %v733 = vpop.f32.mrf.mxu0
        %v734 = vadd.f32 %v601, %v733
        %735 = vmatmul.f32.gmra.mxu0 %v668
        %v736 = vpop.f32.mrf.mxu0
        %v737 = vadd.f32 %v604, %v736
        %738 = vdwg.mxu0
        %739 = vmatpush.msra.mxu0 0.0
        %740 = vmatpush.msra.mxu0 0.0
        %741 = vmatpush.msra.mxu0 0.0
        %742 = vmatpush.msra.mxu0 0.0
        %743 = vmatpush.msra.mxu0 0.0
        %744 = vmatpush.msra.mxu0 0.0
        %745 = vmatpush.msra.mxu0 0.0
        %746 = vmatpush.msra.mxu0 0.0
        %747 = vmatpush.msra.mxu0 0.0
        %748 = vmatpush.msra.mxu0 0.0
        %749 = vmatpush.msra.mxu0 0.0
        %750 = vmatpush.msra.mxu0 0.0
        %751 = vmatpush.msra.mxu0 0.0
        %752 = vmatpush.msra.mxu0 0.0
        %753 = vmatpush.msra.mxu0 %v657
        %754 = vmatpush.msra.mxu0 %v653
        %755 = vmatmul.f32.gmra.mxu0 %v666
        %v756 = vpop.f32.mrf.mxu0
        %v757 = vadd.f32 %v624, %v756
        %758 = vmatmul.f32.gmra.mxu0 %v668
        %v759 = vpop.f32.mrf.mxu0
        %v760 = vadd.f32 %v627, %v759
        %761 = vdwg.mxu0
        %762 = vrot.lane.b32.xlu0 %v467, 96
        %v763 = vpop.permute.xlu0 %762
        %764 = vrot.lane.b32.xlu0 %v468, 96
        %v765 = vpop.permute.xlu0 %764
        %766 = vrot.lane.b32.xlu0 %v469, 23
        %v767 = vpop.permute.xlu0 %766
        %768 = vrot.lane.b32.xlu0 %v470, 23
        %v769 = vpop.permute.xlu0 %768
        %770 = vrot.lane.b32.xlu0 %v471, 23
        %v771 = vpop.permute.xlu0 %770
        %772 = vrot.lane.b32.xlu0 %v472, 23
        %v773 = vpop.permute.xlu0 %772
        %774 = vrot.lane.b32.xlu0 %v473, 23
        %v775 = vpop.permute.xlu0 %774
        %776 = vrot.lane.b32.xlu0 %v474, 23
        %v777 = vpop.permute.xlu0 %776
        %778 = vrot.lane.b32.xlu0 %v475, 23
        %v779 = vpop.permute.xlu0 %778
        %780 = vrot.lane.b32.xlu0 %v476, 23
        %v781 = vpop.permute.xlu0 %780
        %782 = vrot.lane.b32.xlu0 %v477, 23
        %v783 = vpop.permute.xlu0 %782
        %784 = vrot.lane.b32.xlu0 %v478, 23
        %v785 = vpop.permute.xlu0 %784
        %vm786 = vcmask 187392
        %v787 = vsel %vm786, %v767, %v769
        %v788 = vsel %vm786, %v769, %v771
        %v789 = vsel %vm786, %v771, %v773
        %v790 = vsel %vm786, %v773, %v775
        %v791 = vsel %vm786, %v777, %v779
        %v792 = vsel %vm786, %v779, %v781
        %v793 = vsel %vm786, %v781, %v783
        %v794 = vsel %vm786, %v783, %v785
        %v803 = vsel %vm532, %v763, 0
        %v805 = vsel %vm532, %v765, 0
        %807 = vmatpush.msra.mxu0 0.0
        %808 = vmatpush.msra.mxu0 0.0
        %809 = vmatpush.msra.mxu0 0.0
        %810 = vmatpush.msra.mxu0 0.0
        %811 = vmatpush.msra.mxu0 0.0
        %812 = vmatpush.msra.mxu0 0.0
        %813 = vmatpush.msra.mxu0 0.0
        %814 = vmatpush.msra.mxu0 0.0
        %815 = vmatpush.msra.mxu0 0.0
        %816 = vmatpush.msra.mxu0 0.0
        %817 = vmatpush.msra.mxu0 0.0
        %818 = vmatpush.msra.mxu0 0.0
        %819 = vmatpush.msra.mxu0 0.0
        %820 = vmatpush.msra.mxu0 0.0
        %821 = vmatpush.msra.mxu0 %v791
        %822 = vmatpush.msra.mxu0 %v787
        %823 = vmatmul.f32.gmra.mxu0 %v803
        %v824 = vpop.f32.mrf.mxu0
        %v825 = vadd.f32 0.0, %v824
        %826 = vmatmul.f32.gmra.mxu0 %v805
        %v827 = vpop.f32.mrf.mxu0
        %v828 = vadd.f32 0.0, %v827
        %829 = vdwg.mxu0
        %830 = vmatpush.msra.mxu0 0.0
        %831 = vmatpush.msra.mxu0 0.0
        %832 = vmatpush.msra.mxu0 0.0
        %833 = vmatpush.msra.mxu0 0.0
        %834 = vmatpush.msra.mxu0 0.0
        %835 = vmatpush.msra.mxu0 0.0
        %836 = vmatpush.msra.mxu0 0.0
        %837 = vmatpush.msra.mxu0 0.0
        %838 = vmatpush.msra.mxu0 0.0
        %839 = vmatpush.msra.mxu0 0.0
        %840 = vmatpush.msra.mxu0 0.0
        %841 = vmatpush.msra.mxu0 0.0
        %842 = vmatpush.msra.mxu0 0.0
        %843 = vmatpush.msra.mxu0 0.0
        %844 = vmatpush.msra.mxu0 %v792
        %845 = vmatpush.msra.mxu0 %v788
        %846 = vmatmul.f32.gmra.mxu0 %v803
        %v847 = vpop.f32.mrf.mxu0
        %v848 = vadd.f32 0.0, %v847
        %849 = vmatmul.f32.gmra.mxu0 %v805
        %v850 = vpop.f32.mrf.mxu0
        %v851 = vadd.f32 0.0, %v850
        %852 = vdwg.mxu0
        %853 = vmatpush.msra.mxu0 0.0
        %854 = vmatpush.msra.mxu0 0.0
        %855 = vmatpush.msra.mxu0 0.0
        %856 = vmatpush.msra.mxu0 0.0
        %857 = vmatpush.msra.mxu0 0.0
        %858 = vmatpush.msra.mxu0 0.0
        %859 = vmatpush.msra.mxu0 0.0
        %860 = vmatpush.msra.mxu0 0.0
        %861 = vmatpush.msra.mxu0 0.0
        %862 = vmatpush.msra.mxu0 0.0
        %863 = vmatpush.msra.mxu0 0.0
        %864 = vmatpush.msra.mxu0 0.0
        %865 = vmatpush.msra.mxu0 0.0
        %866 = vmatpush.msra.mxu0 0.0
        %867 = vmatpush.msra.mxu0 %v793
        %868 = vmatpush.msra.mxu0 %v789
        %869 = vmatmul.f32.gmra.mxu0 %v803
        %v870 = vpop.f32.mrf.mxu0
        %v871 = vadd.f32 0.0, %v870
        %872 = vmatmul.f32.gmra.mxu0 %v805
        %v873 = vpop.f32.mrf.mxu0
        %v874 = vadd.f32 0.0, %v873
        %875 = vdwg.mxu0
        %876 = vmatpush.msra.mxu0 0.0
        %877 = vmatpush.msra.mxu0 0.0
        %878 = vmatpush.msra.mxu0 0.0
        %879 = vmatpush.msra.mxu0 0.0
        %880 = vmatpush.msra.mxu0 0.0
        %881 = vmatpush.msra.mxu0 0.0
        %882 = vmatpush.msra.mxu0 0.0
        %883 = vmatpush.msra.mxu0 0.0
        %884 = vmatpush.msra.mxu0 0.0
        %885 = vmatpush.msra.mxu0 0.0
        %886 = vmatpush.msra.mxu0 0.0
        %887 = vmatpush.msra.mxu0 0.0
        %888 = vmatpush.msra.mxu0 0.0
        %889 = vmatpush.msra.mxu0 0.0
        %890 = vmatpush.msra.mxu0 %v794
        %891 = vmatpush.msra.mxu0 %v790
        %892 = vmatmul.f32.gmra.mxu0 %v803
        %v893 = vpop.f32.mrf.mxu0
        %v894 = vadd.f32 0.0, %v893
        %895 = vmatmul.f32.gmra.mxu0 %v805
        %v896 = vpop.f32.mrf.mxu0
        %v897 = vadd.f32 0.0, %v896
        %898 = vdwg.mxu0
        %v899 = vadd.f32 %v688, %v825
        %v900 = vadd.f32 %v711, %v848
        %v901 = vadd.f32 %v734, %v871
        %v902 = vadd.f32 %v757, %v894
        %v903 = vadd.f32 %v691, %v828
        %v904 = vadd.f32 %v714, %v851
        %v905 = vadd.f32 %v737, %v874
        %v906 = vadd.f32 %v760, %v897
        %907 = vrot.lane.b32.xlu0 %v467, 80
        %v908 = vpop.permute.xlu0 %907
        %909 = vrot.lane.b32.xlu0 %v468, 80
        %v910 = vpop.permute.xlu0 %909
        %911 = vrot.lane.b32.xlu0 %v470, 121
        %v912 = vpop.permute.xlu0 %911
        %913 = vrot.lane.b32.xlu0 %v471, 121
        %v914 = vpop.permute.xlu0 %913
        %915 = vrot.lane.b32.xlu0 %v472, 121
        %v916 = vpop.permute.xlu0 %915
        %917 = vrot.lane.b32.xlu0 %v473, 121
        %v918 = vpop.permute.xlu0 %917
        %919 = vrot.lane.b32.xlu0 %v475, 121
        %v920 = vpop.permute.xlu0 %919
        %921 = vrot.lane.b32.xlu0 %v476, 121
        %v922 = vpop.permute.xlu0 %921
        %923 = vrot.lane.b32.xlu0 %v477, 121
        %v924 = vpop.permute.xlu0 %923
        %925 = vrot.lane.b32.xlu0 %v478, 121
        %v926 = vpop.permute.xlu0 %925
        %vm927 = vcmask 990208
        %v928 = vsel %vm927, %v912, %v914
        %v929 = vsel %vm927, %v914, %v916
        %v930 = vsel %vm927, %v916, %v918
        %v931 = vsel %vm927, %v920, %v922
        %v932 = vsel %vm927, %v922, %v924
        %v933 = vsel %vm927, %v924, %v926
        %v942 = vsel %vm532, %v908, 0
        %v944 = vsel %vm532, %v910, 0
        %946 = vmatpush.msra.mxu0 0.0
        %947 = vmatpush.msra.mxu0 0.0
        %948 = vmatpush.msra.mxu0 0.0
        %949 = vmatpush.msra.mxu0 0.0
        %950 = vmatpush.msra.mxu0 0.0
        %951 = vmatpush.msra.mxu0 0.0
        %952 = vmatpush.msra.mxu0 0.0
        %953 = vmatpush.msra.mxu0 0.0
        %954 = vmatpush.msra.mxu0 0.0
        %955 = vmatpush.msra.mxu0 0.0
        %956 = vmatpush.msra.mxu0 0.0
        %957 = vmatpush.msra.mxu0 0.0
        %958 = vmatpush.msra.mxu0 0.0
        %959 = vmatpush.msra.mxu0 0.0
        %960 = vmatpush.msra.mxu0 %v931
        %961 = vmatpush.msra.mxu0 %v928
        %962 = vmatmul.f32.gmra.mxu0 %v942
        %v963 = vpop.f32.mrf.mxu0
        %v964 = vadd.f32 0.0, %v963
        %965 = vmatmul.f32.gmra.mxu0 %v944
        %v966 = vpop.f32.mrf.mxu0
        %v967 = vadd.f32 0.0, %v966
        %968 = vdwg.mxu0
        %969 = vmatpush.msra.mxu0 0.0
        %970 = vmatpush.msra.mxu0 0.0
        %971 = vmatpush.msra.mxu0 0.0
        %972 = vmatpush.msra.mxu0 0.0
        %973 = vmatpush.msra.mxu0 0.0
        %974 = vmatpush.msra.mxu0 0.0
        %975 = vmatpush.msra.mxu0 0.0
        %976 = vmatpush.msra.mxu0 0.0
        %977 = vmatpush.msra.mxu0 0.0
        %978 = vmatpush.msra.mxu0 0.0
        %979 = vmatpush.msra.mxu0 0.0
        %980 = vmatpush.msra.mxu0 0.0
        %981 = vmatpush.msra.mxu0 0.0
        %982 = vmatpush.msra.mxu0 0.0
        %983 = vmatpush.msra.mxu0 %v932
        %984 = vmatpush.msra.mxu0 %v929
        %985 = vmatmul.f32.gmra.mxu0 %v942
        %v986 = vpop.f32.mrf.mxu0
        %v987 = vadd.f32 0.0, %v986
        %988 = vmatmul.f32.gmra.mxu0 %v944
        %v989 = vpop.f32.mrf.mxu0
        %v990 = vadd.f32 0.0, %v989
        %991 = vdwg.mxu0
        %992 = vmatpush.msra.mxu0 0.0
        %993 = vmatpush.msra.mxu0 0.0
        %994 = vmatpush.msra.mxu0 0.0
        %995 = vmatpush.msra.mxu0 0.0
        %996 = vmatpush.msra.mxu0 0.0
        %997 = vmatpush.msra.mxu0 0.0
        %998 = vmatpush.msra.mxu0 0.0
        %999 = vmatpush.msra.mxu0 0.0
        %1000 = vmatpush.msra.mxu0 0.0
        %1001 = vmatpush.msra.mxu0 0.0
        %1002 = vmatpush.msra.mxu0 0.0
        %1003 = vmatpush.msra.mxu0 0.0
        %1004 = vmatpush.msra.mxu0 0.0
        %1005 = vmatpush.msra.mxu0 0.0
        %1006 = vmatpush.msra.mxu0 %v933
        %1007 = vmatpush.msra.mxu0 %v930
        %1008 = vmatmul.f32.gmra.mxu0 %v942
        %v1009 = vpop.f32.mrf.mxu0
        %v1010 = vadd.f32 0.0, %v1009
        %1011 = vmatmul.f32.gmra.mxu0 %v944
        %v1012 = vpop.f32.mrf.mxu0
        %v1013 = vadd.f32 0.0, %v1012
        %1014 = vdwg.mxu0
        %1015 = vmatpush.msra.mxu0 0.0
        %1016 = vmatpush.msra.mxu0 0.0
        %1017 = vmatpush.msra.mxu0 0.0
        %1018 = vmatpush.msra.mxu0 0.0
        %1019 = vmatpush.msra.mxu0 0.0
        %1020 = vmatpush.msra.mxu0 0.0
        %1021 = vmatpush.msra.mxu0 0.0
        %1022 = vmatpush.msra.mxu0 0.0
        %1023 = vmatpush.msra.mxu0 0.0
        %1024 = vmatpush.msra.mxu0 0.0
        %1025 = vmatpush.msra.mxu0 0.0
        %1026 = vmatpush.msra.mxu0 0.0
        %1027 = vmatpush.msra.mxu0 0.0
        %1028 = vmatpush.msra.mxu0 0.0
        %1029 = vmatpush.msra.mxu0 %v926
        %1030 = vmatpush.msra.mxu0 %v918
        %1031 = vmatmul.f32.gmra.mxu0 %v942
        %v1032 = vpop.f32.mrf.mxu0
        %v1033 = vadd.f32 0.0, %v1032
        %1034 = vmatmul.f32.gmra.mxu0 %v944
        %v1035 = vpop.f32.mrf.mxu0
        %v1036 = vadd.f32 0.0, %v1035
        %1037 = vdwg.mxu0
        %v1038 = vadd.f32 %v899, %v964
        %v1039 = vadd.f32 %v900, %v987
        %v1040 = vadd.f32 %v901, %v1010
        %v1041 = vadd.f32 %v902, %v1033
        %v1042 = vadd.f32 %v903, %v967
        %v1043 = vadd.f32 %v904, %v990
        %v1044 = vadd.f32 %v905, %v1013
        %v1045 = vadd.f32 %v906, %v1036
        %1046 = vrot.lane.b32.xlu0 %v467, 64
        %v1047 = vpop.permute.xlu0 %1046
        %1048 = vrot.lane.b32.xlu0 %v468, 64
        %v1049 = vpop.permute.xlu0 %1048
        %1050 = vrot.lane.b32.xlu0 %v470, 120
        %v1051 = vpop.permute.xlu0 %1050
        %1052 = vrot.lane.b32.xlu0 %v471, 120
        %v1053 = vpop.permute.xlu0 %1052
        %1054 = vrot.lane.b32.xlu0 %v472, 120
        %v1055 = vpop.permute.xlu0 %1054
        %1056 = vrot.lane.b32.xlu0 %v473, 120
        %v1057 = vpop.permute.xlu0 %1056
        %1058 = vrot.lane.b32.xlu0 %v475, 120
        %v1059 = vpop.permute.xlu0 %1058
        %1060 = vrot.lane.b32.xlu0 %v476, 120
        %v1061 = vpop.permute.xlu0 %1060
        %1062 = vrot.lane.b32.xlu0 %v477, 120
        %v1063 = vpop.permute.xlu0 %1062
        %1064 = vrot.lane.b32.xlu0 %v478, 120
        %v1065 = vpop.permute.xlu0 %1064
        %vm1066 = vcmask 982016
        %v1067 = vsel %vm1066, %v1051, %v1053
        %v1068 = vsel %vm1066, %v1053, %v1055
        %v1069 = vsel %vm1066, %v1055, %v1057
        %v1070 = vsel %vm1066, %v1059, %v1061
        %v1071 = vsel %vm1066, %v1061, %v1063
        %v1072 = vsel %vm1066, %v1063, %v1065
        %v1081 = vsel %vm532, %v1047, 0
        %v1083 = vsel %vm532, %v1049, 0
        %1085 = vmatpush.msra.mxu0 0.0
        %1086 = vmatpush.msra.mxu0 0.0
        %1087 = vmatpush.msra.mxu0 0.0
        %1088 = vmatpush.msra.mxu0 0.0
        %1089 = vmatpush.msra.mxu0 0.0
        %1090 = vmatpush.msra.mxu0 0.0
        %1091 = vmatpush.msra.mxu0 0.0
        %1092 = vmatpush.msra.mxu0 0.0
        %1093 = vmatpush.msra.mxu0 0.0
        %1094 = vmatpush.msra.mxu0 0.0
        %1095 = vmatpush.msra.mxu0 0.0
        %1096 = vmatpush.msra.mxu0 0.0
        %1097 = vmatpush.msra.mxu0 0.0
        %1098 = vmatpush.msra.mxu0 0.0
        %1099 = vmatpush.msra.mxu0 %v1070
        %1100 = vmatpush.msra.mxu0 %v1067
        %1101 = vmatmul.f32.gmra.mxu0 %v1081
        %v1102 = vpop.f32.mrf.mxu0
        %v1103 = vadd.f32 0.0, %v1102
        %1104 = vmatmul.f32.gmra.mxu0 %v1083
        %v1105 = vpop.f32.mrf.mxu0
        %v1106 = vadd.f32 0.0, %v1105
        %1107 = vdwg.mxu0
        %1108 = vmatpush.msra.mxu0 0.0
        %1109 = vmatpush.msra.mxu0 0.0
        %1110 = vmatpush.msra.mxu0 0.0
        %1111 = vmatpush.msra.mxu0 0.0
        %1112 = vmatpush.msra.mxu0 0.0
        %1113 = vmatpush.msra.mxu0 0.0
        %1114 = vmatpush.msra.mxu0 0.0
        %1115 = vmatpush.msra.mxu0 0.0
        %1116 = vmatpush.msra.mxu0 0.0
        %1117 = vmatpush.msra.mxu0 0.0
        %1118 = vmatpush.msra.mxu0 0.0
        %1119 = vmatpush.msra.mxu0 0.0
        %1120 = vmatpush.msra.mxu0 0.0
        %1121 = vmatpush.msra.mxu0 0.0
        %1122 = vmatpush.msra.mxu0 %v1071
        %1123 = vmatpush.msra.mxu0 %v1068
        %1124 = vmatmul.f32.gmra.mxu0 %v1081
        %v1125 = vpop.f32.mrf.mxu0
        %v1126 = vadd.f32 0.0, %v1125
        %1127 = vmatmul.f32.gmra.mxu0 %v1083
        %v1128 = vpop.f32.mrf.mxu0
        %v1129 = vadd.f32 0.0, %v1128
        %1130 = vdwg.mxu0
        %1131 = vmatpush.msra.mxu0 0.0
        %1132 = vmatpush.msra.mxu0 0.0
        %1133 = vmatpush.msra.mxu0 0.0
        %1134 = vmatpush.msra.mxu0 0.0
        %1135 = vmatpush.msra.mxu0 0.0
        %1136 = vmatpush.msra.mxu0 0.0
        %1137 = vmatpush.msra.mxu0 0.0
        %1138 = vmatpush.msra.mxu0 0.0
        %1139 = vmatpush.msra.mxu0 0.0
        %1140 = vmatpush.msra.mxu0 0.0
        %1141 = vmatpush.msra.mxu0 0.0
        %1142 = vmatpush.msra.mxu0 0.0
        %1143 = vmatpush.msra.mxu0 0.0
        %1144 = vmatpush.msra.mxu0 0.0
        %1145 = vmatpush.msra.mxu0 %v1072
        %1146 = vmatpush.msra.mxu0 %v1069
        %1147 = vmatmul.f32.gmra.mxu0 %v1081
        %v1148 = vpop.f32.mrf.mxu0
        %v1149 = vadd.f32 0.0, %v1148
        %1150 = vmatmul.f32.gmra.mxu0 %v1083
        %v1151 = vpop.f32.mrf.mxu0
        %v1152 = vadd.f32 0.0, %v1151
        %1153 = vdwg.mxu0
        %1154 = vmatpush.msra.mxu0 0.0
        %1155 = vmatpush.msra.mxu0 0.0
        %1156 = vmatpush.msra.mxu0 0.0
        %1157 = vmatpush.msra.mxu0 0.0
        %1158 = vmatpush.msra.mxu0 0.0
        %1159 = vmatpush.msra.mxu0 0.0
        %1160 = vmatpush.msra.mxu0 0.0
        %1161 = vmatpush.msra.mxu0 0.0
        %1162 = vmatpush.msra.mxu0 0.0
        %1163 = vmatpush.msra.mxu0 0.0
        %1164 = vmatpush.msra.mxu0 0.0
        %1165 = vmatpush.msra.mxu0 0.0
        %1166 = vmatpush.msra.mxu0 0.0
        %1167 = vmatpush.msra.mxu0 0.0
        %1168 = vmatpush.msra.mxu0 %v1065
        %1169 = vmatpush.msra.mxu0 %v1057
        %1170 = vmatmul.f32.gmra.mxu0 %v1081
        %v1171 = vpop.f32.mrf.mxu0
        %v1172 = vadd.f32 0.0, %v1171
        %1173 = vmatmul.f32.gmra.mxu0 %v1083
        %v1174 = vpop.f32.mrf.mxu0
        %v1175 = vadd.f32 0.0, %v1174
        %1176 = vdwg.mxu0
        %v1177 = vadd.f32 %v1038, %v1103
        %v1178 = vadd.f32 %v1039, %v1126
        %v1179 = vadd.f32 %v1040, %v1149
        %v1180 = vadd.f32 %v1041, %v1172
        %v1181 = vadd.f32 %v1042, %v1106
        %v1182 = vadd.f32 %v1043, %v1129
        %v1183 = vadd.f32 %v1044, %v1152
        %v1184 = vadd.f32 %v1045, %v1175
        %1185 = vrot.lane.b32.xlu0 %v467, 48
        %v1186 = vpop.permute.xlu0 %1185
        %1187 = vrot.lane.b32.xlu0 %v468, 48
        %v1188 = vpop.permute.xlu0 %1187
        %1189 = vrot.lane.b32.xlu0 %v470, 119
        %v1190 = vpop.permute.xlu0 %1189
        %1191 = vrot.lane.b32.xlu0 %v471, 119
        %v1192 = vpop.permute.xlu0 %1191
        %1193 = vrot.lane.b32.xlu0 %v472, 119
        %v1194 = vpop.permute.xlu0 %1193
        %1195 = vrot.lane.b32.xlu0 %v473, 119
        %v1196 = vpop.permute.xlu0 %1195
        %1197 = vrot.lane.b32.xlu0 %v475, 119
        %v1198 = vpop.permute.xlu0 %1197
        %1199 = vrot.lane.b32.xlu0 %v476, 119
        %v1200 = vpop.permute.xlu0 %1199
        %1201 = vrot.lane.b32.xlu0 %v477, 119
        %v1202 = vpop.permute.xlu0 %1201
        %1203 = vrot.lane.b32.xlu0 %v478, 119
        %v1204 = vpop.permute.xlu0 %1203
        %vm1205 = vcmask 973824
        %v1206 = vsel %vm1205, %v1190, %v1192
        %v1207 = vsel %vm1205, %v1192, %v1194
        %v1208 = vsel %vm1205, %v1194, %v1196
        %v1209 = vsel %vm1205, %v1198, %v1200
        %v1210 = vsel %vm1205, %v1200, %v1202
        %v1211 = vsel %vm1205, %v1202, %v1204
        %v1220 = vsel %vm532, %v1186, 0
        %v1222 = vsel %vm532, %v1188, 0
        %1224 = vmatpush.msra.mxu0 0.0
        %1225 = vmatpush.msra.mxu0 0.0
        %1226 = vmatpush.msra.mxu0 0.0
        %1227 = vmatpush.msra.mxu0 0.0
        %1228 = vmatpush.msra.mxu0 0.0
        %1229 = vmatpush.msra.mxu0 0.0
        %1230 = vmatpush.msra.mxu0 0.0
        %1231 = vmatpush.msra.mxu0 0.0
        %1232 = vmatpush.msra.mxu0 0.0
        %1233 = vmatpush.msra.mxu0 0.0
        %1234 = vmatpush.msra.mxu0 0.0
        %1235 = vmatpush.msra.mxu0 0.0
        %1236 = vmatpush.msra.mxu0 0.0
        %1237 = vmatpush.msra.mxu0 0.0
        %1238 = vmatpush.msra.mxu0 %v1209
        %1239 = vmatpush.msra.mxu0 %v1206
        %1240 = vmatmul.f32.gmra.mxu0 %v1220
        %v1241 = vpop.f32.mrf.mxu0
        %v1242 = vadd.f32 0.0, %v1241
        %1243 = vmatmul.f32.gmra.mxu0 %v1222
        %v1244 = vpop.f32.mrf.mxu0
        %v1245 = vadd.f32 0.0, %v1244
        %1246 = vdwg.mxu0
        %1247 = vmatpush.msra.mxu0 0.0
        %1248 = vmatpush.msra.mxu0 0.0
        %1249 = vmatpush.msra.mxu0 0.0
        %1250 = vmatpush.msra.mxu0 0.0
        %1251 = vmatpush.msra.mxu0 0.0
        %1252 = vmatpush.msra.mxu0 0.0
        %1253 = vmatpush.msra.mxu0 0.0
        %1254 = vmatpush.msra.mxu0 0.0
        %1255 = vmatpush.msra.mxu0 0.0
        %1256 = vmatpush.msra.mxu0 0.0
        %1257 = vmatpush.msra.mxu0 0.0
        %1258 = vmatpush.msra.mxu0 0.0
        %1259 = vmatpush.msra.mxu0 0.0
        %1260 = vmatpush.msra.mxu0 0.0
        %1261 = vmatpush.msra.mxu0 %v1210
        %1262 = vmatpush.msra.mxu0 %v1207
        %1263 = vmatmul.f32.gmra.mxu0 %v1220
        %v1264 = vpop.f32.mrf.mxu0
        %v1265 = vadd.f32 0.0, %v1264
        %1266 = vmatmul.f32.gmra.mxu0 %v1222
        %v1267 = vpop.f32.mrf.mxu0
        %v1268 = vadd.f32 0.0, %v1267
        %1269 = vdwg.mxu0
        %1270 = vmatpush.msra.mxu0 0.0
        %1271 = vmatpush.msra.mxu0 0.0
        %1272 = vmatpush.msra.mxu0 0.0
        %1273 = vmatpush.msra.mxu0 0.0
        %1274 = vmatpush.msra.mxu0 0.0
        %1275 = vmatpush.msra.mxu0 0.0
        %1276 = vmatpush.msra.mxu0 0.0
        %1277 = vmatpush.msra.mxu0 0.0
        %1278 = vmatpush.msra.mxu0 0.0
        %1279 = vmatpush.msra.mxu0 0.0
        %1280 = vmatpush.msra.mxu0 0.0
        %1281 = vmatpush.msra.mxu0 0.0
        %1282 = vmatpush.msra.mxu0 0.0
        %1283 = vmatpush.msra.mxu0 0.0
        %1284 = vmatpush.msra.mxu0 %v1211
        %1285 = vmatpush.msra.mxu0 %v1208
        %1286 = vmatmul.f32.gmra.mxu0 %v1220
        %v1287 = vpop.f32.mrf.mxu0
        %v1288 = vadd.f32 0.0, %v1287
        %1289 = vmatmul.f32.gmra.mxu0 %v1222
        %v1290 = vpop.f32.mrf.mxu0
        %v1291 = vadd.f32 0.0, %v1290
        %1292 = vdwg.mxu0
        %1293 = vmatpush.msra.mxu0 0.0
        %1294 = vmatpush.msra.mxu0 0.0
        %1295 = vmatpush.msra.mxu0 0.0
        %1296 = vmatpush.msra.mxu0 0.0
        %1297 = vmatpush.msra.mxu0 0.0
        %1298 = vmatpush.msra.mxu0 0.0
        %1299 = vmatpush.msra.mxu0 0.0
        %1300 = vmatpush.msra.mxu0 0.0
        %1301 = vmatpush.msra.mxu0 0.0
        %1302 = vmatpush.msra.mxu0 0.0
        %1303 = vmatpush.msra.mxu0 0.0
        %1304 = vmatpush.msra.mxu0 0.0
        %1305 = vmatpush.msra.mxu0 0.0
        %1306 = vmatpush.msra.mxu0 0.0
        %1307 = vmatpush.msra.mxu0 %v1204
        %1308 = vmatpush.msra.mxu0 %v1196
        %1309 = vmatmul.f32.gmra.mxu0 %v1220
        %v1310 = vpop.f32.mrf.mxu0
        %v1311 = vadd.f32 0.0, %v1310
        %1312 = vmatmul.f32.gmra.mxu0 %v1222
        %v1313 = vpop.f32.mrf.mxu0
        %v1314 = vadd.f32 0.0, %v1313
        %1315 = vdwg.mxu0
        %v1316 = vadd.f32 %v1177, %v1242
        %v1317 = vadd.f32 %v1178, %v1265
        %v1318 = vadd.f32 %v1179, %v1288
        %v1319 = vadd.f32 %v1180, %v1311
        %v1320 = vadd.f32 %v1181, %v1245
        %v1321 = vadd.f32 %v1182, %v1268
        %v1322 = vadd.f32 %v1183, %v1291
        %v1323 = vadd.f32 %v1184, %v1314
        %v1324 = vld [vmem:[%s406 + $0x10] sm:$0xff]
        %v1325 = vld [vmem:[%s406 + $0x18] sm:$0xff]
        %v1326 = vld [vmem:[%s406 + $0x20] sm:$0xff]
        %v1327 = vld [vmem:[%s406 + $0x28] sm:$0xff]
        %v1328 = vld [vmem:[%s406 + $0x30] sm:$0xff]
        %v1329 = vld [vmem:[%s406 + $0x50] sm:$0xff]
        %v1330 = vld [vmem:[%s406 + $0x58] sm:$0xff]
        %v1331 = vld [vmem:[%s406 + $0x60] sm:$0xff]
        %v1332 = vld [vmem:[%s406 + $0x68] sm:$0xff]
        %v1333 = vld [vmem:[%s406 + $0x70] sm:$0xff]
        %1334 = vrot.lane.b32.xlu0 %v467, 32
        %v1335 = vpop.permute.xlu0 %1334
        %1336 = vrot.lane.b32.xlu0 %v468, 32
        %v1337 = vpop.permute.xlu0 %1336
        %1348 = vrot.lane.b32.xlu0 %v1324, 89
        %v1349 = vpop.permute.xlu0 %1348
        %1350 = vrot.lane.b32.xlu0 %v1325, 89
        %v1351 = vpop.permute.xlu0 %1350
        %1352 = vrot.lane.b32.xlu0 %v1326, 89
        %v1353 = vpop.permute.xlu0 %1352
        %1354 = vrot.lane.b32.xlu0 %v1327, 89
        %v1355 = vpop.permute.xlu0 %1354
        %1356 = vrot.lane.b32.xlu0 %v1328, 89
        %v1357 = vpop.permute.xlu0 %1356
        %1358 = vrot.lane.b32.xlu0 %v1329, 89
        %v1359 = vpop.permute.xlu0 %1358
        %1360 = vrot.lane.b32.xlu0 %v1330, 89
        %v1361 = vpop.permute.xlu0 %1360
        %1362 = vrot.lane.b32.xlu0 %v1331, 89
        %v1363 = vpop.permute.xlu0 %1362
        %1364 = vrot.lane.b32.xlu0 %v1332, 89
        %v1365 = vpop.permute.xlu0 %1364
        %1366 = vrot.lane.b32.xlu0 %v1333, 89
        %v1367 = vpop.permute.xlu0 %1366
        %vm1368 = vcmask 728064
        %v1369 = vsel %vm1368, %v1349, %v1351
        %v1370 = vsel %vm1368, %v1351, %v1353
        %v1371 = vsel %vm1368, %v1353, %v1355
        %v1372 = vsel %vm1368, %v1355, %v1357
        %v1373 = vsel %vm1368, %v1359, %v1361
        %v1374 = vsel %vm1368, %v1361, %v1363
        %v1375 = vsel %vm1368, %v1363, %v1365
        %v1376 = vsel %vm1368, %v1365, %v1367
        %v1385 = vsel %vm532, %v1335, 0
        %v1387 = vsel %vm532, %v1337, 0
        %1389 = vmatpush.msra.mxu0 0.0
        %1390 = vmatpush.msra.mxu0 0.0
        %1391 = vmatpush.msra.mxu0 0.0
        %1392 = vmatpush.msra.mxu0 0.0
        %1393 = vmatpush.msra.mxu0 0.0
        %1394 = vmatpush.msra.mxu0 0.0
        %1395 = vmatpush.msra.mxu0 0.0
        %1396 = vmatpush.msra.mxu0 0.0
        %1397 = vmatpush.msra.mxu0 0.0
        %1398 = vmatpush.msra.mxu0 0.0
        %1399 = vmatpush.msra.mxu0 0.0
        %1400 = vmatpush.msra.mxu0 0.0
        %1401 = vmatpush.msra.mxu0 0.0
        %1402 = vmatpush.msra.mxu0 0.0
        %1403 = vmatpush.msra.mxu0 %v1373
        %1404 = vmatpush.msra.mxu0 %v1369
        %1405 = vmatmul.f32.gmra.mxu0 %v1385
        %v1406 = vpop.f32.mrf.mxu0
        %v1407 = vadd.f32 0.0, %v1406
        %1408 = vmatmul.f32.gmra.mxu0 %v1387
        %v1409 = vpop.f32.mrf.mxu0
        %v1410 = vadd.f32 0.0, %v1409
        %1411 = vdwg.mxu0
        %1412 = vmatpush.msra.mxu0 0.0
        %1413 = vmatpush.msra.mxu0 0.0
        %1414 = vmatpush.msra.mxu0 0.0
        %1415 = vmatpush.msra.mxu0 0.0
        %1416 = vmatpush.msra.mxu0 0.0
        %1417 = vmatpush.msra.mxu0 0.0
        %1418 = vmatpush.msra.mxu0 0.0
        %1419 = vmatpush.msra.mxu0 0.0
        %1420 = vmatpush.msra.mxu0 0.0
        %1421 = vmatpush.msra.mxu0 0.0
        %1422 = vmatpush.msra.mxu0 0.0
        %1423 = vmatpush.msra.mxu0 0.0
        %1424 = vmatpush.msra.mxu0 0.0
        %1425 = vmatpush.msra.mxu0 0.0
        %1426 = vmatpush.msra.mxu0 %v1374
        %1427 = vmatpush.msra.mxu0 %v1370
        %1428 = vmatmul.f32.gmra.mxu0 %v1385
        %v1429 = vpop.f32.mrf.mxu0
        %v1430 = vadd.f32 0.0, %v1429
        %1431 = vmatmul.f32.gmra.mxu0 %v1387
        %v1432 = vpop.f32.mrf.mxu0
        %v1433 = vadd.f32 0.0, %v1432
        %1434 = vdwg.mxu0
        %1435 = vmatpush.msra.mxu0 0.0
        %1436 = vmatpush.msra.mxu0 0.0
        %1437 = vmatpush.msra.mxu0 0.0
        %1438 = vmatpush.msra.mxu0 0.0
        %1439 = vmatpush.msra.mxu0 0.0
        %1440 = vmatpush.msra.mxu0 0.0
        %1441 = vmatpush.msra.mxu0 0.0
        %1442 = vmatpush.msra.mxu0 0.0
        %1443 = vmatpush.msra.mxu0 0.0
        %1444 = vmatpush.msra.mxu0 0.0
        %1445 = vmatpush.msra.mxu0 0.0
        %1446 = vmatpush.msra.mxu0 0.0
        %1447 = vmatpush.msra.mxu0 0.0
        %1448 = vmatpush.msra.mxu0 0.0
        %1449 = vmatpush.msra.mxu0 %v1375
        %1450 = vmatpush.msra.mxu0 %v1371
        %1451 = vmatmul.f32.gmra.mxu0 %v1385
        %v1452 = vpop.f32.mrf.mxu0
        %v1453 = vadd.f32 0.0, %v1452
        %1454 = vmatmul.f32.gmra.mxu0 %v1387
        %v1455 = vpop.f32.mrf.mxu0
        %v1456 = vadd.f32 0.0, %v1455
        %1457 = vdwg.mxu0
        %1458 = vmatpush.msra.mxu0 0.0
        %1459 = vmatpush.msra.mxu0 0.0
        %1460 = vmatpush.msra.mxu0 0.0
        %1461 = vmatpush.msra.mxu0 0.0
        %1462 = vmatpush.msra.mxu0 0.0
        %1463 = vmatpush.msra.mxu0 0.0
        %1464 = vmatpush.msra.mxu0 0.0
        %1465 = vmatpush.msra.mxu0 0.0
        %1466 = vmatpush.msra.mxu0 0.0
        %1467 = vmatpush.msra.mxu0 0.0
        %1468 = vmatpush.msra.mxu0 0.0
        %1469 = vmatpush.msra.mxu0 0.0
        %1470 = vmatpush.msra.mxu0 0.0
        %1471 = vmatpush.msra.mxu0 0.0
        %1472 = vmatpush.msra.mxu0 %v1376
        %1473 = vmatpush.msra.mxu0 %v1372
        %1474 = vmatmul.f32.gmra.mxu0 %v1385
        %v1475 = vpop.f32.mrf.mxu0
        %v1476 = vadd.f32 0.0, %v1475
        %1477 = vmatmul.f32.gmra.mxu0 %v1387
        %v1478 = vpop.f32.mrf.mxu0
        %v1479 = vadd.f32 0.0, %v1478
        %1480 = vdwg.mxu0
        %v1481 = vadd.f32 %v1316, %v1407
        %v1482 = vadd.f32 %v1317, %v1430
        %v1483 = vadd.f32 %v1318, %v1453
        %v1484 = vadd.f32 %v1319, %v1476
        %v1485 = vadd.f32 %v1320, %v1410
        %v1486 = vadd.f32 %v1321, %v1433
        %v1487 = vadd.f32 %v1322, %v1456
        %v1488 = vadd.f32 %v1323, %v1479
        %1489 = vrot.lane.b32.xlu0 %v467, 16
        %v1490 = vpop.permute.xlu0 %1489
        %1491 = vrot.lane.b32.xlu0 %v468, 16
        %v1492 = vpop.permute.xlu0 %1491
        %1493 = vrot.lane.b32.xlu0 %v1324, 88
        %v1494 = vpop.permute.xlu0 %1493
        %1495 = vrot.lane.b32.xlu0 %v1325, 88
        %v1496 = vpop.permute.xlu0 %1495
        %1497 = vrot.lane.b32.xlu0 %v1326, 88
        %v1498 = vpop.permute.xlu0 %1497
        %1499 = vrot.lane.b32.xlu0 %v1327, 88
        %v1500 = vpop.permute.xlu0 %1499
        %1501 = vrot.lane.b32.xlu0 %v1328, 88
        %v1502 = vpop.permute.xlu0 %1501
        %1503 = vrot.lane.b32.xlu0 %v1329, 88
        %v1504 = vpop.permute.xlu0 %1503
        %1505 = vrot.lane.b32.xlu0 %v1330, 88
        %v1506 = vpop.permute.xlu0 %1505
        %1507 = vrot.lane.b32.xlu0 %v1331, 88
        %v1508 = vpop.permute.xlu0 %1507
        %1509 = vrot.lane.b32.xlu0 %v1332, 88
        %v1510 = vpop.permute.xlu0 %1509
        %1511 = vrot.lane.b32.xlu0 %v1333, 88
        %v1512 = vpop.permute.xlu0 %1511
        %vm1513 = vcmask 719872
        %v1514 = vsel %vm1513, %v1494, %v1496
        %v1515 = vsel %vm1513, %v1496, %v1498
        %v1516 = vsel %vm1513, %v1498, %v1500
        %v1517 = vsel %vm1513, %v1500, %v1502
        %v1518 = vsel %vm1513, %v1504, %v1506
        %v1519 = vsel %vm1513, %v1506, %v1508
        %v1520 = vsel %vm1513, %v1508, %v1510
        %v1521 = vsel %vm1513, %v1510, %v1512
        %v1530 = vsel %vm532, %v1490, 0
        %v1532 = vsel %vm532, %v1492, 0
        %1534 = vmatpush.msra.mxu0 0.0
        %1535 = vmatpush.msra.mxu0 0.0
        %1536 = vmatpush.msra.mxu0 0.0
        %1537 = vmatpush.msra.mxu0 0.0
        %1538 = vmatpush.msra.mxu0 0.0
        %1539 = vmatpush.msra.mxu0 0.0
        %1540 = vmatpush.msra.mxu0 0.0
        %1541 = vmatpush.msra.mxu0 0.0
        %1542 = vmatpush.msra.mxu0 0.0
        %1543 = vmatpush.msra.mxu0 0.0
        %1544 = vmatpush.msra.mxu0 0.0
        %1545 = vmatpush.msra.mxu0 0.0
        %1546 = vmatpush.msra.mxu0 0.0
        %1547 = vmatpush.msra.mxu0 0.0
        %1548 = vmatpush.msra.mxu0 %v1518
        %1549 = vmatpush.msra.mxu0 %v1514
        %1550 = vmatmul.f32.gmra.mxu0 %v1530
        %v1551 = vpop.f32.mrf.mxu0
        %v1552 = vadd.f32 0.0, %v1551
        %1553 = vmatmul.f32.gmra.mxu0 %v1532
        %v1554 = vpop.f32.mrf.mxu0
        %v1555 = vadd.f32 0.0, %v1554
        %1556 = vdwg.mxu0
        %1557 = vmatpush.msra.mxu0 0.0
        %1558 = vmatpush.msra.mxu0 0.0
        %1559 = vmatpush.msra.mxu0 0.0
        %1560 = vmatpush.msra.mxu0 0.0
        %1561 = vmatpush.msra.mxu0 0.0
        %1562 = vmatpush.msra.mxu0 0.0
        %1563 = vmatpush.msra.mxu0 0.0
        %1564 = vmatpush.msra.mxu0 0.0
        %1565 = vmatpush.msra.mxu0 0.0
        %1566 = vmatpush.msra.mxu0 0.0
        %1567 = vmatpush.msra.mxu0 0.0
        %1568 = vmatpush.msra.mxu0 0.0
        %1569 = vmatpush.msra.mxu0 0.0
        %1570 = vmatpush.msra.mxu0 0.0
        %1571 = vmatpush.msra.mxu0 %v1519
        %1572 = vmatpush.msra.mxu0 %v1515
        %1573 = vmatmul.f32.gmra.mxu0 %v1530
        %v1574 = vpop.f32.mrf.mxu0
        %v1575 = vadd.f32 0.0, %v1574
        %1576 = vmatmul.f32.gmra.mxu0 %v1532
        %v1577 = vpop.f32.mrf.mxu0
        %v1578 = vadd.f32 0.0, %v1577
        %1579 = vdwg.mxu0
        %1580 = vmatpush.msra.mxu0 0.0
        %1581 = vmatpush.msra.mxu0 0.0
        %1582 = vmatpush.msra.mxu0 0.0
        %1583 = vmatpush.msra.mxu0 0.0
        %1584 = vmatpush.msra.mxu0 0.0
        %1585 = vmatpush.msra.mxu0 0.0
        %1586 = vmatpush.msra.mxu0 0.0
        %1587 = vmatpush.msra.mxu0 0.0
        %1588 = vmatpush.msra.mxu0 0.0
        %1589 = vmatpush.msra.mxu0 0.0
        %1590 = vmatpush.msra.mxu0 0.0
        %1591 = vmatpush.msra.mxu0 0.0
        %1592 = vmatpush.msra.mxu0 0.0
        %1593 = vmatpush.msra.mxu0 0.0
        %1594 = vmatpush.msra.mxu0 %v1520
        %1595 = vmatpush.msra.mxu0 %v1516
        %1596 = vmatmul.f32.gmra.mxu0 %v1530
        %v1597 = vpop.f32.mrf.mxu0
        %v1598 = vadd.f32 0.0, %v1597
        %1599 = vmatmul.f32.gmra.mxu0 %v1532
        %v1600 = vpop.f32.mrf.mxu0
        %v1601 = vadd.f32 0.0, %v1600
        %1602 = vdwg.mxu0
        %1603 = vmatpush.msra.mxu0 0.0
        %1604 = vmatpush.msra.mxu0 0.0
        %1605 = vmatpush.msra.mxu0 0.0
        %1606 = vmatpush.msra.mxu0 0.0
        %1607 = vmatpush.msra.mxu0 0.0
        %1608 = vmatpush.msra.mxu0 0.0
        %1609 = vmatpush.msra.mxu0 0.0
        %1610 = vmatpush.msra.mxu0 0.0
        %1611 = vmatpush.msra.mxu0 0.0
        %1612 = vmatpush.msra.mxu0 0.0
        %1613 = vmatpush.msra.mxu0 0.0
        %1614 = vmatpush.msra.mxu0 0.0
        %1615 = vmatpush.msra.mxu0 0.0
        %1616 = vmatpush.msra.mxu0 0.0
        %1617 = vmatpush.msra.mxu0 %v1521
        %1618 = vmatpush.msra.mxu0 %v1517
        %1619 = vmatmul.f32.gmra.mxu0 %v1530
        %v1620 = vpop.f32.mrf.mxu0
        %v1621 = vadd.f32 0.0, %v1620
        %1622 = vmatmul.f32.gmra.mxu0 %v1532
        %v1623 = vpop.f32.mrf.mxu0
        %v1624 = vadd.f32 0.0, %v1623
        %1625 = vdwg.mxu0
        %v1626 = vadd.f32 %v1481, %v1552
        %v1627 = vadd.f32 %v1482, %v1575
        %v1628 = vadd.f32 %v1483, %v1598
        %v1629 = vadd.f32 %v1484, %v1621
        %v1630 = vadd.f32 %v1485, %v1555
        %v1631 = vadd.f32 %v1486, %v1578
        %v1632 = vadd.f32 %v1487, %v1601
        %v1633 = vadd.f32 %v1488, %v1624
        %v1634 = vld [vmem:[#allocation9 + $0x8] sm:$0xff]
        %v1635 = vld [vmem:[#allocation9 + $0x30] sm:$0xff]
        %1636 = vrot.lane.b32.xlu0 %v1324, 87
        %v1637 = vpop.permute.xlu0 %1636
        %1638 = vrot.lane.b32.xlu0 %v1325, 87
        %v1639 = vpop.permute.xlu0 %1638
        %1640 = vrot.lane.b32.xlu0 %v1326, 87
        %v1641 = vpop.permute.xlu0 %1640
        %1642 = vrot.lane.b32.xlu0 %v1327, 87
        %v1643 = vpop.permute.xlu0 %1642
        %1644 = vrot.lane.b32.xlu0 %v1328, 87
        %v1645 = vpop.permute.xlu0 %1644
        %1646 = vrot.lane.b32.xlu0 %v1329, 87
        %v1647 = vpop.permute.xlu0 %1646
        %1648 = vrot.lane.b32.xlu0 %v1330, 87
        %v1649 = vpop.permute.xlu0 %1648
        %1650 = vrot.lane.b32.xlu0 %v1331, 87
        %v1651 = vpop.permute.xlu0 %1650
        %1652 = vrot.lane.b32.xlu0 %v1332, 87
        %v1653 = vpop.permute.xlu0 %1652
        %1654 = vrot.lane.b32.xlu0 %v1333, 87
        %v1655 = vpop.permute.xlu0 %1654
        %vm1656 = vcmask 711680
        %v1657 = vsel %vm1656, %v1637, %v1639
        %v1658 = vsel %vm1656, %v1639, %v1641
        %v1659 = vsel %vm1656, %v1641, %v1643
        %v1660 = vsel %vm1656, %v1643, %v1645
        %v1661 = vsel %vm1656, %v1647, %v1649
        %v1662 = vsel %vm1656, %v1649, %v1651
        %v1663 = vsel %vm1656, %v1651, %v1653
        %v1664 = vsel %vm1656, %v1653, %v1655
        %v1674 = vsel %vm532, %v1634, 0
        %v1677 = vsel %vm532, %v1635, 0
        %1679 = vmatpush.msra.mxu0 0.0
        %1680 = vmatpush.msra.mxu0 0.0
        %1681 = vmatpush.msra.mxu0 0.0
        %1682 = vmatpush.msra.mxu0 0.0
        %1683 = vmatpush.msra.mxu0 0.0
        %1684 = vmatpush.msra.mxu0 0.0
        %1685 = vmatpush.msra.mxu0 0.0
        %1686 = vmatpush.msra.mxu0 0.0
        %1687 = vmatpush.msra.mxu0 0.0
        %1688 = vmatpush.msra.mxu0 0.0
        %1689 = vmatpush.msra.mxu0 0.0
        %1690 = vmatpush.msra.mxu0 0.0
        %1691 = vmatpush.msra.mxu0 0.0
        %1692 = vmatpush.msra.mxu0 0.0
        %1693 = vmatpush.msra.mxu0 %v1661
        %1694 = vmatpush.msra.mxu0 %v1657
        %1695 = vmatmul.f32.gmra.mxu0 %v1674
        %v1696 = vpop.f32.mrf.mxu0
        %v1697 = vadd.f32 0.0, %v1696
        %1698 = vmatmul.f32.gmra.mxu0 %v1677
        %v1699 = vpop.f32.mrf.mxu0
        %v1700 = vadd.f32 0.0, %v1699
        %1701 = vdwg.mxu0
        %1702 = vmatpush.msra.mxu0 0.0
        %1703 = vmatpush.msra.mxu0 0.0
        %1704 = vmatpush.msra.mxu0 0.0
        %1705 = vmatpush.msra.mxu0 0.0
        %1706 = vmatpush.msra.mxu0 0.0
        %1707 = vmatpush.msra.mxu0 0.0
        %1708 = vmatpush.msra.mxu0 0.0
        %1709 = vmatpush.msra.mxu0 0.0
        %1710 = vmatpush.msra.mxu0 0.0
        %1711 = vmatpush.msra.mxu0 0.0
        %1712 = vmatpush.msra.mxu0 0.0
        %1713 = vmatpush.msra.mxu0 0.0
        %1714 = vmatpush.msra.mxu0 0.0
        %1715 = vmatpush.msra.mxu0 0.0
        %1716 = vmatpush.msra.mxu0 %v1662
        %1717 = vmatpush.msra.mxu0 %v1658
        %1718 = vmatmul.f32.gmra.mxu0 %v1674
        %v1719 = vpop.f32.mrf.mxu0
        %v1720 = vadd.f32 0.0, %v1719
        %1721 = vmatmul.f32.gmra.mxu0 %v1677
        %v1722 = vpop.f32.mrf.mxu0
        %v1723 = vadd.f32 0.0, %v1722
        %1724 = vdwg.mxu0
        %1725 = vmatpush.msra.mxu0 0.0
        %1726 = vmatpush.msra.mxu0 0.0
        %1727 = vmatpush.msra.mxu0 0.0
        %1728 = vmatpush.msra.mxu0 0.0
        %1729 = vmatpush.msra.mxu0 0.0
        %1730 = vmatpush.msra.mxu0 0.0
        %1731 = vmatpush.msra.mxu0 0.0
        %1732 = vmatpush.msra.mxu0 0.0
        %1733 = vmatpush.msra.mxu0 0.0
        %1734 = vmatpush.msra.mxu0 0.0
        %1735 = vmatpush.msra.mxu0 0.0
        %1736 = vmatpush.msra.mxu0 0.0
        %1737 = vmatpush.msra.mxu0 0.0
        %1738 = vmatpush.msra.mxu0 0.0
        %1739 = vmatpush.msra.mxu0 %v1663
        %1740 = vmatpush.msra.mxu0 %v1659
        %1741 = vmatmul.f32.gmra.mxu0 %v1674
        %v1742 = vpop.f32.mrf.mxu0
        %v1743 = vadd.f32 0.0, %v1742
        %1744 = vmatmul.f32.gmra.mxu0 %v1677
        %v1745 = vpop.f32.mrf.mxu0
        %v1746 = vadd.f32 0.0, %v1745
        %1747 = vdwg.mxu0
        %1748 = vmatpush.msra.mxu0 0.0
        %1749 = vmatpush.msra.mxu0 0.0
        %1750 = vmatpush.msra.mxu0 0.0
        %1751 = vmatpush.msra.mxu0 0.0
        %1752 = vmatpush.msra.mxu0 0.0
        %1753 = vmatpush.msra.mxu0 0.0
        %1754 = vmatpush.msra.mxu0 0.0
        %1755 = vmatpush.msra.mxu0 0.0
        %1756 = vmatpush.msra.mxu0 0.0
        %1757 = vmatpush.msra.mxu0 0.0
        %1758 = vmatpush.msra.mxu0 0.0
        %1759 = vmatpush.msra.mxu0 0.0
        %1760 = vmatpush.msra.mxu0 0.0
        %1761 = vmatpush.msra.mxu0 0.0
        %1762 = vmatpush.msra.mxu0 %v1664
        %1763 = vmatpush.msra.mxu0 %v1660
        %1764 = vmatmul.f32.gmra.mxu0 %v1674
        %v1765 = vpop.f32.mrf.mxu0
        %v1766 = vadd.f32 0.0, %v1765
        %1767 = vmatmul.f32.gmra.mxu0 %v1677
        %v1768 = vpop.f32.mrf.mxu0
        %v1769 = vadd.f32 0.0, %v1768
        %1770 = vdwg.mxu0
        %v1771 = vadd.f32 %v1626, %v1697
        %v1772 = vadd.f32 %v1627, %v1720
        %v1773 = vadd.f32 %v1628, %v1743
        %v1774 = vadd.f32 %v1629, %v1766
        %v1775 = vadd.f32 %v1630, %v1700
        %v1776 = vadd.f32 %v1631, %v1723
        %v1777 = vadd.f32 %v1632, %v1746
        %v1778 = vadd.f32 %v1633, %v1769
        %1779 = vrot.lane.b32.xlu0 %v1634, 112
        %v1780 = vpop.permute.xlu0 %1779
        %1781 = vrot.lane.b32.xlu0 %v1635, 112
        %v1782 = vpop.permute.xlu0 %1781
        %1783 = vrot.lane.b32.xlu0 %v469, 58
        %v1784 = vpop.permute.xlu0 %1783
        %1785 = vrot.lane.b32.xlu0 %v470, 58
        %v1786 = vpop.permute.xlu0 %1785
        %1787 = vrot.lane.b32.xlu0 %v471, 58
        %v1788 = vpop.permute.xlu0 %1787
        %1789 = vrot.lane.b32.xlu0 %v472, 58
        %v1790 = vpop.permute.xlu0 %1789
        %1791 = vrot.lane.b32.xlu0 %v473, 58
        %v1792 = vpop.permute.xlu0 %1791
        %1793 = vrot.lane.b32.xlu0 %v474, 58
        %v1794 = vpop.permute.xlu0 %1793
        %1795 = vrot.lane.b32.xlu0 %v475, 58
        %v1796 = vpop.permute.xlu0 %1795
        %1797 = vrot.lane.b32.xlu0 %v476, 58
        %v1798 = vpop.permute.xlu0 %1797
        %1799 = vrot.lane.b32.xlu0 %v477, 58
        %v1800 = vpop.permute.xlu0 %1799
        %1801 = vrot.lane.b32.xlu0 %v478, 58
        %v1802 = vpop.permute.xlu0 %1801
        %vm1803 = vcmask 474112
        %v1804 = vsel %vm1803, %v1784, %v1786
        %v1805 = vsel %vm1803, %v1786, %v1788
        %v1806 = vsel %vm1803, %v1788, %v1790
        %v1807 = vsel %vm1803, %v1790, %v1792
        %v1808 = vsel %vm1803, %v1794, %v1796
        %v1809 = vsel %vm1803, %v1796, %v1798
        %v1810 = vsel %vm1803, %v1798, %v1800
        %v1811 = vsel %vm1803, %v1800, %v1802
        %v1820 = vsel %vm532, %v1780, 0
        %v1822 = vsel %vm532, %v1782, 0
        %1824 = vmatpush.msra.mxu0 0.0
        %1825 = vmatpush.msra.mxu0 0.0
        %1826 = vmatpush.msra.mxu0 0.0
        %1827 = vmatpush.msra.mxu0 0.0
        %1828 = vmatpush.msra.mxu0 0.0
        %1829 = vmatpush.msra.mxu0 0.0
        %1830 = vmatpush.msra.mxu0 0.0
        %1831 = vmatpush.msra.mxu0 0.0
        %1832 = vmatpush.msra.mxu0 0.0
        %1833 = vmatpush.msra.mxu0 0.0
        %1834 = vmatpush.msra.mxu0 0.0
        %1835 = vmatpush.msra.mxu0 0.0
        %1836 = vmatpush.msra.mxu0 0.0
        %1837 = vmatpush.msra.mxu0 0.0
        %1838 = vmatpush.msra.mxu0 %v1808
        %1839 = vmatpush.msra.mxu0 %v1804
        %1840 = vmatmul.f32.gmra.mxu0 %v1820
        %v1841 = vpop.f32.mrf.mxu0
        %v1842 = vadd.f32 0.0, %v1841
        %1843 = vmatmul.f32.gmra.mxu0 %v1822
        %v1844 = vpop.f32.mrf.mxu0
        %v1845 = vadd.f32 0.0, %v1844
        %1846 = vdwg.mxu0
        %1847 = vmatpush.msra.mxu0 0.0
        %1848 = vmatpush.msra.mxu0 0.0
        %1849 = vmatpush.msra.mxu0 0.0
        %1850 = vmatpush.msra.mxu0 0.0
        %1851 = vmatpush.msra.mxu0 0.0
        %1852 = vmatpush.msra.mxu0 0.0
        %1853 = vmatpush.msra.mxu0 0.0
        %1854 = vmatpush.msra.mxu0 0.0
        %1855 = vmatpush.msra.mxu0 0.0
        %1856 = vmatpush.msra.mxu0 0.0
        %1857 = vmatpush.msra.mxu0 0.0
        %1858 = vmatpush.msra.mxu0 0.0
        %1859 = vmatpush.msra.mxu0 0.0
        %1860 = vmatpush.msra.mxu0 0.0
        %1861 = vmatpush.msra.mxu0 %v1809
        %1862 = vmatpush.msra.mxu0 %v1805
        %1863 = vmatmul.f32.gmra.mxu0 %v1820
        %v1864 = vpop.f32.mrf.mxu0
        %v1865 = vadd.f32 0.0, %v1864
        %1866 = vmatmul.f32.gmra.mxu0 %v1822
        %v1867 = vpop.f32.mrf.mxu0
        %v1868 = vadd.f32 0.0, %v1867
        %1869 = vdwg.mxu0
        %1870 = vmatpush.msra.mxu0 0.0
        %1871 = vmatpush.msra.mxu0 0.0
        %1872 = vmatpush.msra.mxu0 0.0
        %1873 = vmatpush.msra.mxu0 0.0
        %1874 = vmatpush.msra.mxu0 0.0
        %1875 = vmatpush.msra.mxu0 0.0
        %1876 = vmatpush.msra.mxu0 0.0
        %1877 = vmatpush.msra.mxu0 0.0
        %1878 = vmatpush.msra.mxu0 0.0
        %1879 = vmatpush.msra.mxu0 0.0
        %1880 = vmatpush.msra.mxu0 0.0
        %1881 = vmatpush.msra.mxu0 0.0
        %1882 = vmatpush.msra.mxu0 0.0
        %1883 = vmatpush.msra.mxu0 0.0
        %1884 = vmatpush.msra.mxu0 %v1810
        %1885 = vmatpush.msra.mxu0 %v1806
        %1886 = vmatmul.f32.gmra.mxu0 %v1820
        %v1887 = vpop.f32.mrf.mxu0
        %v1888 = vadd.f32 0.0, %v1887
        %1889 = vmatmul.f32.gmra.mxu0 %v1822
        %v1890 = vpop.f32.mrf.mxu0
        %v1891 = vadd.f32 0.0, %v1890
        %1892 = vdwg.mxu0
        %1893 = vmatpush.msra.mxu0 0.0
        %1894 = vmatpush.msra.mxu0 0.0
        %1895 = vmatpush.msra.mxu0 0.0
        %1896 = vmatpush.msra.mxu0 0.0
        %1897 = vmatpush.msra.mxu0 0.0
        %1898 = vmatpush.msra.mxu0 0.0
        %1899 = vmatpush.msra.mxu0 0.0
        %1900 = vmatpush.msra.mxu0 0.0
        %1901 = vmatpush.msra.mxu0 0.0
        %1902 = vmatpush.msra.mxu0 0.0
        %1903 = vmatpush.msra.mxu0 0.0
        %1904 = vmatpush.msra.mxu0 0.0
        %1905 = vmatpush.msra.mxu0 0.0
        %1906 = vmatpush.msra.mxu0 0.0
        %1907 = vmatpush.msra.mxu0 %v1811
        %1908 = vmatpush.msra.mxu0 %v1807
        %1909 = vmatmul.f32.gmra.mxu0 %v1820
        %v1910 = vpop.f32.mrf.mxu0
        %v1911 = vadd.f32 0.0, %v1910
        %1912 = vmatmul.f32.gmra.mxu0 %v1822
        %v1913 = vpop.f32.mrf.mxu0
        %v1914 = vadd.f32 0.0, %v1913
        %1915 = vdwg.mxu0
        %v1916 = vadd.f32 %v1771, %v1842
        %v1917 = vadd.f32 %v1772, %v1865
        %v1918 = vadd.f32 %v1773, %v1888
        %v1919 = vadd.f32 %v1774, %v1911
        %v1920 = vadd.f32 %v1775, %v1845
        %v1921 = vadd.f32 %v1776, %v1868
        %v1922 = vadd.f32 %v1777, %v1891
        %v1923 = vadd.f32 %v1778, %v1914
        %1924 = vrot.lane.b32.xlu0 %v1634, 96
        %v1925 = vpop.permute.xlu0 %1924
        %1926 = vrot.lane.b32.xlu0 %v1635, 96
        %v1927 = vpop.permute.xlu0 %1926
        %1928 = vrot.lane.b32.xlu0 %v469, 56
        %v1929 = vpop.permute.xlu0 %1928
        %1930 = vrot.lane.b32.xlu0 %v470, 56
        %v1931 = vpop.permute.xlu0 %1930
        %1932 = vrot.lane.b32.xlu0 %v471, 56
        %v1933 = vpop.permute.xlu0 %1932
        %1934 = vrot.lane.b32.xlu0 %v472, 56
        %v1935 = vpop.permute.xlu0 %1934
        %1936 = vrot.lane.b32.xlu0 %v473, 56
        %v1937 = vpop.permute.xlu0 %1936
        %1938 = vrot.lane.b32.xlu0 %v474, 56
        %v1939 = vpop.permute.xlu0 %1938
        %1940 = vrot.lane.b32.xlu0 %v475, 56
        %v1941 = vpop.permute.xlu0 %1940
        %1942 = vrot.lane.b32.xlu0 %v476, 56
        %v1943 = vpop.permute.xlu0 %1942
        %1944 = vrot.lane.b32.xlu0 %v477, 56
        %v1945 = vpop.permute.xlu0 %1944
        %1946 = vrot.lane.b32.xlu0 %v478, 56
        %v1947 = vpop.permute.xlu0 %1946
        %vm1948 = vcmask 457728
        %v1949 = vsel %vm1948, %v1929, %v1931
        %v1950 = vsel %vm1948, %v1931, %v1933
        %v1951 = vsel %vm1948, %v1933, %v1935
        %v1952 = vsel %vm1948, %v1935, %v1937
        %v1953 = vsel %vm1948, %v1939, %v1941
        %v1954 = vsel %vm1948, %v1941, %v1943
        %v1955 = vsel %vm1948, %v1943, %v1945
        %v1956 = vsel %vm1948, %v1945, %v1947
        %v1965 = vsel %vm532, %v1925, 0
        %v1967 = vsel %vm532, %v1927, 0
        %1969 = vmatpush.msra.mxu0 0.0
        %1970 = vmatpush.msra.mxu0 0.0
        %1971 = vmatpush.msra.mxu0 0.0
        %1972 = vmatpush.msra.mxu0 0.0
        %1973 = vmatpush.msra.mxu0 0.0
        %1974 = vmatpush.msra.mxu0 0.0
        %1975 = vmatpush.msra.mxu0 0.0
        %1976 = vmatpush.msra.mxu0 0.0
        %1977 = vmatpush.msra.mxu0 0.0
        %1978 = vmatpush.msra.mxu0 0.0
        %1979 = vmatpush.msra.mxu0 0.0
        %1980 = vmatpush.msra.mxu0 0.0
        %1981 = vmatpush.msra.mxu0 0.0
        %1982 = vmatpush.msra.mxu0 0.0
        %1983 = vmatpush.msra.mxu0 %v1953
        %1984 = vmatpush.msra.mxu0 %v1949
        %1985 = vmatmul.f32.gmra.mxu0 %v1965
        %v1986 = vpop.f32.mrf.mxu0
        %v1987 = vadd.f32 0.0, %v1986
        %1988 = vmatmul.f32.gmra.mxu0 %v1967
        %v1989 = vpop.f32.mrf.mxu0
        %v1990 = vadd.f32 0.0, %v1989
        %1991 = vdwg.mxu0
        %1992 = vmatpush.msra.mxu0 0.0
        %1993 = vmatpush.msra.mxu0 0.0
        %1994 = vmatpush.msra.mxu0 0.0
        %1995 = vmatpush.msra.mxu0 0.0
        %1996 = vmatpush.msra.mxu0 0.0
        %1997 = vmatpush.msra.mxu0 0.0
        %1998 = vmatpush.msra.mxu0 0.0
        %1999 = vmatpush.msra.mxu0 0.0
        %2000 = vmatpush.msra.mxu0 0.0
        %2001 = vmatpush.msra.mxu0 0.0
        %2002 = vmatpush.msra.mxu0 0.0
        %2003 = vmatpush.msra.mxu0 0.0
        %2004 = vmatpush.msra.mxu0 0.0
        %2005 = vmatpush.msra.mxu0 0.0
        %2006 = vmatpush.msra.mxu0 %v1954
        %2007 = vmatpush.msra.mxu0 %v1950
        %2008 = vmatmul.f32.gmra.mxu0 %v1965
        %v2009 = vpop.f32.mrf.mxu0
        %v2010 = vadd.f32 0.0, %v2009
        %2011 = vmatmul.f32.gmra.mxu0 %v1967
        %v2012 = vpop.f32.mrf.mxu0
        %v2013 = vadd.f32 0.0, %v2012
        %2014 = vdwg.mxu0
        %2015 = vmatpush.msra.mxu0 0.0
        %2016 = vmatpush.msra.mxu0 0.0
        %2017 = vmatpush.msra.mxu0 0.0
        %2018 = vmatpush.msra.mxu0 0.0
        %2019 = vmatpush.msra.mxu0 0.0
        %2020 = vmatpush.msra.mxu0 0.0
        %2021 = vmatpush.msra.mxu0 0.0
        %2022 = vmatpush.msra.mxu0 0.0
        %2023 = vmatpush.msra.mxu0 0.0
        %2024 = vmatpush.msra.mxu0 0.0
        %2025 = vmatpush.msra.mxu0 0.0
        %2026 = vmatpush.msra.mxu0 0.0
        %2027 = vmatpush.msra.mxu0 0.0
        %2028 = vmatpush.msra.mxu0 0.0
        %2029 = vmatpush.msra.mxu0 %v1955
        %2030 = vmatpush.msra.mxu0 %v1951
        %2031 = vmatmul.f32.gmra.mxu0 %v1965
        %v2032 = vpop.f32.mrf.mxu0
        %v2033 = vadd.f32 0.0, %v2032
        %2034 = vmatmul.f32.gmra.mxu0 %v1967
        %v2035 = vpop.f32.mrf.mxu0
        %v2036 = vadd.f32 0.0, %v2035
        %2037 = vdwg.mxu0
        %2038 = vmatpush.msra.mxu0 0.0
        %2039 = vmatpush.msra.mxu0 0.0
        %2040 = vmatpush.msra.mxu0 0.0
        %2041 = vmatpush.msra.mxu0 0.0
        %2042 = vmatpush.msra.mxu0 0.0
        %2043 = vmatpush.msra.mxu0 0.0
        %2044 = vmatpush.msra.mxu0 0.0
        %2045 = vmatpush.msra.mxu0 0.0
        %2046 = vmatpush.msra.mxu0 0.0
        %2047 = vmatpush.msra.mxu0 0.0
        %2048 = vmatpush.msra.mxu0 0.0
        %2049 = vmatpush.msra.mxu0 0.0
        %2050 = vmatpush.msra.mxu0 0.0
        %2051 = vmatpush.msra.mxu0 0.0
        %2052 = vmatpush.msra.mxu0 %v1956
        %2053 = vmatpush.msra.mxu0 %v1952
        %2054 = vmatmul.f32.gmra.mxu0 %v1965
        %v2055 = vpop.f32.mrf.mxu0
        %v2056 = vadd.f32 0.0, %v2055
        %2057 = vmatmul.f32.gmra.mxu0 %v1967
        %v2058 = vpop.f32.mrf.mxu0
        %v2059 = vadd.f32 0.0, %v2058
        %2060 = vdwg.mxu0
        %v2061 = vadd.f32 %v1916, %v1987
        %v2062 = vadd.f32 %v1917, %v2010
        %v2063 = vadd.f32 %v1918, %v2033
        %v2064 = vadd.f32 %v1919, %v2056
        %v2065 = vadd.f32 %v1920, %v1990
        %v2066 = vadd.f32 %v1921, %v2013
        %v2067 = vadd.f32 %v1922, %v2036
        %v2068 = vadd.f32 %v1923, %v2059
        %2069 = vrot.lane.b32.xlu0 %v1634, 80
        %v2070 = vpop.permute.xlu0 %2069
        %2071 = vrot.lane.b32.xlu0 %v1635, 80
        %v2072 = vpop.permute.xlu0 %2071
        %2073 = vrot.lane.b32.xlu0 %v469, 54
        %v2074 = vpop.permute.xlu0 %2073
        %2075 = vrot.lane.b32.xlu0 %v470, 54
        %v2076 = vpop.permute.xlu0 %2075
        %2077 = vrot.lane.b32.xlu0 %v471, 54
        %v2078 = vpop.permute.xlu0 %2077
        %2079 = vrot.lane.b32.xlu0 %v472, 54
        %v2080 = vpop.permute.xlu0 %2079
        %2081 = vrot.lane.b32.xlu0 %v473, 54
        %v2082 = vpop.permute.xlu0 %2081
        %2083 = vrot.lane.b32.xlu0 %v474, 54
        %v2084 = vpop.permute.xlu0 %2083
        %2085 = vrot.lane.b32.xlu0 %v475, 54
        %v2086 = vpop.permute.xlu0 %2085
        %2087 = vrot.lane.b32.xlu0 %v476, 54
        %v2088 = vpop.permute.xlu0 %2087
        %2089 = vrot.lane.b32.xlu0 %v477, 54
        %v2090 = vpop.permute.xlu0 %2089
        %2091 = vrot.lane.b32.xlu0 %v478, 54
        %v2092 = vpop.permute.xlu0 %2091
        %vm2093 = vcmask 441344
        %v2094 = vsel %vm2093, %v2074, %v2076
        %v2095 = vsel %vm2093, %v2076, %v2078
        %v2096 = vsel %vm2093, %v2078, %v2080
        %v2097 = vsel %vm2093, %v2080, %v2082
        %v2098 = vsel %vm2093, %v2084, %v2086
        %v2099 = vsel %vm2093, %v2086, %v2088
        %v2100 = vsel %vm2093, %v2088, %v2090
        %v2101 = vsel %vm2093, %v2090, %v2092
        %v2110 = vsel %vm532, %v2070, 0
        %v2112 = vsel %vm532, %v2072, 0
        %2114 = vmatpush.msra.mxu0 0.0
        %2115 = vmatpush.msra.mxu0 0.0
        %2116 = vmatpush.msra.mxu0 0.0
        %2117 = vmatpush.msra.mxu0 0.0
        %2118 = vmatpush.msra.mxu0 0.0
        %2119 = vmatpush.msra.mxu0 0.0
        %2120 = vmatpush.msra.mxu0 0.0
        %2121 = vmatpush.msra.mxu0 0.0
        %2122 = vmatpush.msra.mxu0 0.0
        %2123 = vmatpush.msra.mxu0 0.0
        %2124 = vmatpush.msra.mxu0 0.0
        %2125 = vmatpush.msra.mxu0 0.0
        %2126 = vmatpush.msra.mxu0 0.0
        %2127 = vmatpush.msra.mxu0 0.0
        %2128 = vmatpush.msra.mxu0 %v2098
        %2129 = vmatpush.msra.mxu0 %v2094
        %2130 = vmatmul.f32.gmra.mxu0 %v2110
        %v2131 = vpop.f32.mrf.mxu0
        %v2132 = vadd.f32 0.0, %v2131
        %2133 = vmatmul.f32.gmra.mxu0 %v2112
        %v2134 = vpop.f32.mrf.mxu0
        %v2135 = vadd.f32 0.0, %v2134
        %2136 = vdwg.mxu0
        %2137 = vmatpush.msra.mxu0 0.0
        %2138 = vmatpush.msra.mxu0 0.0
        %2139 = vmatpush.msra.mxu0 0.0
        %2140 = vmatpush.msra.mxu0 0.0
        %2141 = vmatpush.msra.mxu0 0.0
        %2142 = vmatpush.msra.mxu0 0.0
        %2143 = vmatpush.msra.mxu0 0.0
        %2144 = vmatpush.msra.mxu0 0.0
        %2145 = vmatpush.msra.mxu0 0.0
        %2146 = vmatpush.msra.mxu0 0.0
        %2147 = vmatpush.msra.mxu0 0.0
        %2148 = vmatpush.msra.mxu0 0.0
        %2149 = vmatpush.msra.mxu0 0.0
        %2150 = vmatpush.msra.mxu0 0.0
        %2151 = vmatpush.msra.mxu0 %v2099
        %2152 = vmatpush.msra.mxu0 %v2095
        %2153 = vmatmul.f32.gmra.mxu0 %v2110
        %v2154 = vpop.f32.mrf.mxu0
        %v2155 = vadd.f32 0.0, %v2154
        %2156 = vmatmul.f32.gmra.mxu0 %v2112
        %v2157 = vpop.f32.mrf.mxu0
        %v2158 = vadd.f32 0.0, %v2157
        %2159 = vdwg.mxu0
        %2160 = vmatpush.msra.mxu0 0.0
        %2161 = vmatpush.msra.mxu0 0.0
        %2162 = vmatpush.msra.mxu0 0.0
        %2163 = vmatpush.msra.mxu0 0.0
        %2164 = vmatpush.msra.mxu0 0.0
        %2165 = vmatpush.msra.mxu0 0.0
        %2166 = vmatpush.msra.mxu0 0.0
        %2167 = vmatpush.msra.mxu0 0.0
        %2168 = vmatpush.msra.mxu0 0.0
        %2169 = vmatpush.msra.mxu0 0.0
        %2170 = vmatpush.msra.mxu0 0.0
        %2171 = vmatpush.msra.mxu0 0.0
        %2172 = vmatpush.msra.mxu0 0.0
        %2173 = vmatpush.msra.mxu0 0.0
        %2174 = vmatpush.msra.mxu0 %v2100
        %2175 = vmatpush.msra.mxu0 %v2096
        %2176 = vmatmul.f32.gmra.mxu0 %v2110
        %v2177 = vpop.f32.mrf.mxu0
        %v2178 = vadd.f32 0.0, %v2177
        %2179 = vmatmul.f32.gmra.mxu0 %v2112
        %v2180 = vpop.f32.mrf.mxu0
        %v2181 = vadd.f32 0.0, %v2180
        %2182 = vdwg.mxu0
        %2183 = vmatpush.msra.mxu0 0.0
        %2184 = vmatpush.msra.mxu0 0.0
        %2185 = vmatpush.msra.mxu0 0.0
        %2186 = vmatpush.msra.mxu0 0.0
        %2187 = vmatpush.msra.mxu0 0.0
        %2188 = vmatpush.msra.mxu0 0.0
        %2189 = vmatpush.msra.mxu0 0.0
        %2190 = vmatpush.msra.mxu0 0.0
        %2191 = vmatpush.msra.mxu0 0.0
        %2192 = vmatpush.msra.mxu0 0.0
        %2193 = vmatpush.msra.mxu0 0.0
        %2194 = vmatpush.msra.mxu0 0.0
        %2195 = vmatpush.msra.mxu0 0.0
        %2196 = vmatpush.msra.mxu0 0.0
        %2197 = vmatpush.msra.mxu0 %v2101
        %2198 = vmatpush.msra.mxu0 %v2097
        %2199 = vmatmul.f32.gmra.mxu0 %v2110
        %v2200 = vpop.f32.mrf.mxu0
        %v2201 = vadd.f32 0.0, %v2200
        %2202 = vmatmul.f32.gmra.mxu0 %v2112
        %v2203 = vpop.f32.mrf.mxu0
        %v2204 = vadd.f32 0.0, %v2203
        %2205 = vdwg.mxu0
        %v2206 = vadd.f32 %v2061, %v2132
        %v2207 = vadd.f32 %v2062, %v2155
        %v2208 = vadd.f32 %v2063, %v2178
        %v2209 = vadd.f32 %v2064, %v2201
        %v2210 = vadd.f32 %v2065, %v2135
        %v2211 = vadd.f32 %v2066, %v2158
        %v2212 = vadd.f32 %v2067, %v2181
        %v2213 = vadd.f32 %v2068, %v2204
        %2214 = vrot.lane.b32.xlu0 %v1634, 64
        %v2215 = vpop.permute.xlu0 %2214
        %2216 = vrot.lane.b32.xlu0 %v1635, 64
        %v2217 = vpop.permute.xlu0 %2216
        %2218 = vrot.lane.b32.xlu0 %v470, 122
        %v2219 = vpop.permute.xlu0 %2218
        %2220 = vrot.lane.b32.xlu0 %v471, 122
        %v2221 = vpop.permute.xlu0 %2220
        %2222 = vrot.lane.b32.xlu0 %v472, 122
        %v2223 = vpop.permute.xlu0 %2222
        %2224 = vrot.lane.b32.xlu0 %v473, 122
        %v2225 = vpop.permute.xlu0 %2224
        %2226 = vrot.lane.b32.xlu0 %v475, 122
        %v2227 = vpop.permute.xlu0 %2226
        %2228 = vrot.lane.b32.xlu0 %v476, 122
        %v2229 = vpop.permute.xlu0 %2228
        %2230 = vrot.lane.b32.xlu0 %v477, 122
        %v2231 = vpop.permute.xlu0 %2230
        %2232 = vrot.lane.b32.xlu0 %v478, 122
        %v2233 = vpop.permute.xlu0 %2232
        %vm2234 = vcmask 998400
        %v2235 = vsel %vm2234, %v2219, %v2221
        %v2236 = vsel %vm2234, %v2221, %v2223
        %v2237 = vsel %vm2234, %v2223, %v2225
        %v2238 = vsel %vm2234, %v2227, %v2229
        %v2239 = vsel %vm2234, %v2229, %v2231
        %v2240 = vsel %vm2234, %v2231, %v2233
        %v2249 = vsel %vm532, %v2215, 0
        %v2251 = vsel %vm532, %v2217, 0
        %2253 = vmatpush.msra.mxu0 0.0
        %2254 = vmatpush.msra.mxu0 0.0
        %2255 = vmatpush.msra.mxu0 0.0
        %2256 = vmatpush.msra.mxu0 0.0
        %2257 = vmatpush.msra.mxu0 0.0
        %2258 = vmatpush.msra.mxu0 0.0
        %2259 = vmatpush.msra.mxu0 0.0
        %2260 = vmatpush.msra.mxu0 0.0
        %2261 = vmatpush.msra.mxu0 0.0
        %2262 = vmatpush.msra.mxu0 0.0
        %2263 = vmatpush.msra.mxu0 0.0
        %2264 = vmatpush.msra.mxu0 0.0
        %2265 = vmatpush.msra.mxu0 0.0
        %2266 = vmatpush.msra.mxu0 0.0
        %2267 = vmatpush.msra.mxu0 %v2238
        %2268 = vmatpush.msra.mxu0 %v2235
        %2269 = vmatmul.f32.gmra.mxu0 %v2249
        %v2270 = vpop.f32.mrf.mxu0
        %v2271 = vadd.f32 0.0, %v2270
        %2272 = vmatmul.f32.gmra.mxu0 %v2251
        %v2273 = vpop.f32.mrf.mxu0
        %v2274 = vadd.f32 0.0, %v2273
        %2275 = vdwg.mxu0
        %2276 = vmatpush.msra.mxu0 0.0
        %2277 = vmatpush.msra.mxu0 0.0
        %2278 = vmatpush.msra.mxu0 0.0
        %2279 = vmatpush.msra.mxu0 0.0
        %2280 = vmatpush.msra.mxu0 0.0
        %2281 = vmatpush.msra.mxu0 0.0
        %2282 = vmatpush.msra.mxu0 0.0
        %2283 = vmatpush.msra.mxu0 0.0
        %2284 = vmatpush.msra.mxu0 0.0
        %2285 = vmatpush.msra.mxu0 0.0
        %2286 = vmatpush.msra.mxu0 0.0
        %2287 = vmatpush.msra.mxu0 0.0
        %2288 = vmatpush.msra.mxu0 0.0
        %2289 = vmatpush.msra.mxu0 0.0
        %2290 = vmatpush.msra.mxu0 %v2239
        %2291 = vmatpush.msra.mxu0 %v2236
        %2292 = vmatmul.f32.gmra.mxu0 %v2249
        %v2293 = vpop.f32.mrf.mxu0
        %v2294 = vadd.f32 0.0, %v2293
        %2295 = vmatmul.f32.gmra.mxu0 %v2251
        %v2296 = vpop.f32.mrf.mxu0
        %v2297 = vadd.f32 0.0, %v2296
        %2298 = vdwg.mxu0
        %2299 = vmatpush.msra.mxu0 0.0
        %2300 = vmatpush.msra.mxu0 0.0
        %2301 = vmatpush.msra.mxu0 0.0
        %2302 = vmatpush.msra.mxu0 0.0
        %2303 = vmatpush.msra.mxu0 0.0
        %2304 = vmatpush.msra.mxu0 0.0
        %2305 = vmatpush.msra.mxu0 0.0
        %2306 = vmatpush.msra.mxu0 0.0
        %2307 = vmatpush.msra.mxu0 0.0
        %2308 = vmatpush.msra.mxu0 0.0
        %2309 = vmatpush.msra.mxu0 0.0
        %2310 = vmatpush.msra.mxu0 0.0
        %2311 = vmatpush.msra.mxu0 0.0
        %2312 = vmatpush.msra.mxu0 0.0
        %2313 = vmatpush.msra.mxu0 %v2240
        %2314 = vmatpush.msra.mxu0 %v2237
        %2315 = vmatmul.f32.gmra.mxu0 %v2249
        %v2316 = vpop.f32.mrf.mxu0
        %v2317 = vadd.f32 0.0, %v2316
        %2318 = vmatmul.f32.gmra.mxu0 %v2251
        %v2319 = vpop.f32.mrf.mxu0
        %v2320 = vadd.f32 0.0, %v2319
        %2321 = vdwg.mxu0
        %2322 = vmatpush.msra.mxu0 0.0
        %2323 = vmatpush.msra.mxu0 0.0
        %2324 = vmatpush.msra.mxu0 0.0
        %2325 = vmatpush.msra.mxu0 0.0
        %2326 = vmatpush.msra.mxu0 0.0
        %2327 = vmatpush.msra.mxu0 0.0
        %2328 = vmatpush.msra.mxu0 0.0
        %2329 = vmatpush.msra.mxu0 0.0
        %2330 = vmatpush.msra.mxu0 0.0
        %2331 = vmatpush.msra.mxu0 0.0
        %2332 = vmatpush.msra.mxu0 0.0
        %2333 = vmatpush.msra.mxu0 0.0
        %2334 = vmatpush.msra.mxu0 0.0
        %2335 = vmatpush.msra.mxu0 0.0
        %2336 = vmatpush.msra.mxu0 %v2233
        %2337 = vmatpush.msra.mxu0 %v2225
        %2338 = vmatmul.f32.gmra.mxu0 %v2249
        %v2339 = vpop.f32.mrf.mxu0
        %v2340 = vadd.f32 0.0, %v2339
        %2341 = vmatmul.f32.gmra.mxu0 %v2251
        %v2342 = vpop.f32.mrf.mxu0
        %v2343 = vadd.f32 0.0, %v2342
        %2344 = vdwg.mxu0
        %v2345 = vadd.f32 %v2206, %v2271
        %v2346 = vadd.f32 %v2207, %v2294
        %v2347 = vadd.f32 %v2208, %v2317
        %v2348 = vadd.f32 %v2209, %v2340
        %v2349 = vadd.f32 %v2210, %v2274
        %v2350 = vadd.f32 %v2211, %v2297
        %v2351 = vadd.f32 %v2212, %v2320
        %v2352 = vadd.f32 %v2213, %v2343
        %2353 = vrot.lane.b32.xlu0 %v1634, 48
        %v2354 = vpop.permute.xlu0 %2353
        %2355 = vrot.lane.b32.xlu0 %v1635, 48
        %v2356 = vpop.permute.xlu0 %2355
        %v2357 = vsel %vm532, %v2354, 0
        %v2359 = vsel %vm532, %v2356, 0
        %2361 = vmatpush.msra.mxu0 0.0
        %2362 = vmatpush.msra.mxu0 0.0
        %2363 = vmatpush.msra.mxu0 0.0
        %2364 = vmatpush.msra.mxu0 0.0
        %2365 = vmatpush.msra.mxu0 0.0
        %2366 = vmatpush.msra.mxu0 0.0
        %2367 = vmatpush.msra.mxu0 0.0
        %2368 = vmatpush.msra.mxu0 0.0
        %2369 = vmatpush.msra.mxu0 0.0
        %2370 = vmatpush.msra.mxu0 0.0
        %2371 = vmatpush.msra.mxu0 0.0
        %2372 = vmatpush.msra.mxu0 0.0
        %2373 = vmatpush.msra.mxu0 0.0
        %2374 = vmatpush.msra.mxu0 0.0
        %2375 = vmatpush.msra.mxu0 %v1070
        %2376 = vmatpush.msra.mxu0 %v1067
        %2377 = vmatmul.f32.gmra.mxu0 %v2357
        %v2378 = vpop.f32.mrf.mxu0
        %v2379 = vadd.f32 0.0, %v2378
        %2380 = vmatmul.f32.gmra.mxu0 %v2359
        %v2381 = vpop.f32.mrf.mxu0
        %v2382 = vadd.f32 0.0, %v2381
        %2383 = vdwg.mxu0
        %2384 = vmatpush.msra.mxu0 0.0
        %2385 = vmatpush.msra.mxu0 0.0
        %2386 = vmatpush.msra.mxu0 0.0
        %2387 = vmatpush.msra.mxu0 0.0
        %2388 = vmatpush.msra.mxu0 0.0
        %2389 = vmatpush.msra.mxu0 0.0
        %2390 = vmatpush.msra.mxu0 0.0
        %2391 = vmatpush.msra.mxu0 0.0
        %2392 = vmatpush.msra.mxu0 0.0
        %2393 = vmatpush.msra.mxu0 0.0
        %2394 = vmatpush.msra.mxu0 0.0
        %2395 = vmatpush.msra.mxu0 0.0
        %2396 = vmatpush.msra.mxu0 0.0
        %2397 = vmatpush.msra.mxu0 0.0
        %2398 = vmatpush.msra.mxu0 %v1071
        %2399 = vmatpush.msra.mxu0 %v1068
        %2400 = vmatmul.f32.gmra.mxu0 %v2357
        %v2401 = vpop.f32.mrf.mxu0
        %v2402 = vadd.f32 0.0, %v2401
        %2403 = vmatmul.f32.gmra.mxu0 %v2359
        %v2404 = vpop.f32.mrf.mxu0
        %v2405 = vadd.f32 0.0, %v2404
        %2406 = vdwg.mxu0
        %2407 = vmatpush.msra.mxu0 0.0
        %2408 = vmatpush.msra.mxu0 0.0
        %2409 = vmatpush.msra.mxu0 0.0
        %2410 = vmatpush.msra.mxu0 0.0
        %2411 = vmatpush.msra.mxu0 0.0
        %2412 = vmatpush.msra.mxu0 0.0
        %2413 = vmatpush.msra.mxu0 0.0
        %2414 = vmatpush.msra.mxu0 0.0
        %2415 = vmatpush.msra.mxu0 0.0
        %2416 = vmatpush.msra.mxu0 0.0
        %2417 = vmatpush.msra.mxu0 0.0
        %2418 = vmatpush.msra.mxu0 0.0
        %2419 = vmatpush.msra.mxu0 0.0
        %2420 = vmatpush.msra.mxu0 0.0
        %2421 = vmatpush.msra.mxu0 %v1072
        %2422 = vmatpush.msra.mxu0 %v1069
        %2423 = vmatmul.f32.gmra.mxu0 %v2357
        %v2424 = vpop.f32.mrf.mxu0
        %v2425 = vadd.f32 0.0, %v2424
        %2426 = vmatmul.f32.gmra.mxu0 %v2359
        %v2427 = vpop.f32.mrf.mxu0
        %v2428 = vadd.f32 0.0, %v2427
        %2429 = vdwg.mxu0
        %2430 = vmatpush.msra.mxu0 0.0
        %2431 = vmatpush.msra.mxu0 0.0
        %2432 = vmatpush.msra.mxu0 0.0
        %2433 = vmatpush.msra.mxu0 0.0
        %2434 = vmatpush.msra.mxu0 0.0
        %2435 = vmatpush.msra.mxu0 0.0
        %2436 = vmatpush.msra.mxu0 0.0
        %2437 = vmatpush.msra.mxu0 0.0
        %2438 = vmatpush.msra.mxu0 0.0
        %2439 = vmatpush.msra.mxu0 0.0
        %2440 = vmatpush.msra.mxu0 0.0
        %2441 = vmatpush.msra.mxu0 0.0
        %2442 = vmatpush.msra.mxu0 0.0
        %2443 = vmatpush.msra.mxu0 0.0
        %2444 = vmatpush.msra.mxu0 %v1065
        %2445 = vmatpush.msra.mxu0 %v1057
        %2446 = vmatmul.f32.gmra.mxu0 %v2357
        %v2447 = vpop.f32.mrf.mxu0
        %v2448 = vadd.f32 0.0, %v2447
        %2449 = vmatmul.f32.gmra.mxu0 %v2359
        %v2450 = vpop.f32.mrf.mxu0
        %v2451 = vadd.f32 0.0, %v2450
        %2452 = vdwg.mxu0
        %v2453 = vadd.f32 %v2345, %v2379
        %v2454 = vadd.f32 %v2346, %v2402
        %v2455 = vadd.f32 %v2347, %v2425
        %v2456 = vadd.f32 %v2348, %v2448
        %v2457 = vadd.f32 %v2349, %v2382
        %v2458 = vadd.f32 %v2350, %v2405
        %v2459 = vadd.f32 %v2351, %v2428
        %v2460 = vadd.f32 %v2352, %v2451
        %2461 = vrot.lane.b32.xlu0 %v1634, 32
        %v2462 = vpop.permute.xlu0 %2461
        %2463 = vrot.lane.b32.xlu0 %v1635, 32
        %v2464 = vpop.permute.xlu0 %2463
        %2465 = vrot.lane.b32.xlu0 %v470, 118
        %v2466 = vpop.permute.xlu0 %2465
        %2467 = vrot.lane.b32.xlu0 %v471, 118
        %v2468 = vpop.permute.xlu0 %2467
        %2469 = vrot.lane.b32.xlu0 %v472, 118
        %v2470 = vpop.permute.xlu0 %2469
        %2471 = vrot.lane.b32.xlu0 %v473, 118
        %v2472 = vpop.permute.xlu0 %2471
        %2473 = vrot.lane.b32.xlu0 %v475, 118
        %v2474 = vpop.permute.xlu0 %2473
        %2475 = vrot.lane.b32.xlu0 %v476, 118
        %v2476 = vpop.permute.xlu0 %2475
        %2477 = vrot.lane.b32.xlu0 %v477, 118
        %v2478 = vpop.permute.xlu0 %2477
        %2479 = vrot.lane.b32.xlu0 %v478, 118
        %v2480 = vpop.permute.xlu0 %2479
        %vm2481 = vcmask 965632
        %v2482 = vsel %vm2481, %v2466, %v2468
        %v2483 = vsel %vm2481, %v2468, %v2470
        %v2484 = vsel %vm2481, %v2470, %v2472
        %v2485 = vsel %vm2481, %v2474, %v2476
        %v2486 = vsel %vm2481, %v2476, %v2478
        %v2487 = vsel %vm2481, %v2478, %v2480
        %v2496 = vsel %vm532, %v2462, 0
        %v2498 = vsel %vm532, %v2464, 0
        %2500 = vmatpush.msra.mxu0 0.0
        %2501 = vmatpush.msra.mxu0 0.0
        %2502 = vmatpush.msra.mxu0 0.0
        %2503 = vmatpush.msra.mxu0 0.0
        %2504 = vmatpush.msra.mxu0 0.0
        %2505 = vmatpush.msra.mxu0 0.0
        %2506 = vmatpush.msra.mxu0 0.0
        %2507 = vmatpush.msra.mxu0 0.0
        %2508 = vmatpush.msra.mxu0 0.0
        %2509 = vmatpush.msra.mxu0 0.0
        %2510 = vmatpush.msra.mxu0 0.0
        %2511 = vmatpush.msra.mxu0 0.0
        %2512 = vmatpush.msra.mxu0 0.0
        %2513 = vmatpush.msra.mxu0 0.0
        %2514 = vmatpush.msra.mxu0 %v2485
        %2515 = vmatpush.msra.mxu0 %v2482
        %2516 = vmatmul.f32.gmra.mxu0 %v2496
        %v2517 = vpop.f32.mrf.mxu0
        %v2518 = vadd.f32 0.0, %v2517
        %2519 = vmatmul.f32.gmra.mxu0 %v2498
        %v2520 = vpop.f32.mrf.mxu0
        %v2521 = vadd.f32 0.0, %v2520
        %2522 = vdwg.mxu0
        %2523 = vmatpush.msra.mxu0 0.0
        %2524 = vmatpush.msra.mxu0 0.0
        %2525 = vmatpush.msra.mxu0 0.0
        %2526 = vmatpush.msra.mxu0 0.0
        %2527 = vmatpush.msra.mxu0 0.0
        %2528 = vmatpush.msra.mxu0 0.0
        %2529 = vmatpush.msra.mxu0 0.0
        %2530 = vmatpush.msra.mxu0 0.0
        %2531 = vmatpush.msra.mxu0 0.0
        %2532 = vmatpush.msra.mxu0 0.0
        %2533 = vmatpush.msra.mxu0 0.0
        %2534 = vmatpush.msra.mxu0 0.0
        %2535 = vmatpush.msra.mxu0 0.0
        %2536 = vmatpush.msra.mxu0 0.0
        %2537 = vmatpush.msra.mxu0 %v2486
        %2538 = vmatpush.msra.mxu0 %v2483
        %2539 = vmatmul.f32.gmra.mxu0 %v2496
        %v2540 = vpop.f32.mrf.mxu0
        %v2541 = vadd.f32 0.0, %v2540
        %2542 = vmatmul.f32.gmra.mxu0 %v2498
        %v2543 = vpop.f32.mrf.mxu0
        %v2544 = vadd.f32 0.0, %v2543
        %2545 = vdwg.mxu0
        %2546 = vmatpush.msra.mxu0 0.0
        %2547 = vmatpush.msra.mxu0 0.0
        %2548 = vmatpush.msra.mxu0 0.0
        %2549 = vmatpush.msra.mxu0 0.0
        %2550 = vmatpush.msra.mxu0 0.0
        %2551 = vmatpush.msra.mxu0 0.0
        %2552 = vmatpush.msra.mxu0 0.0
        %2553 = vmatpush.msra.mxu0 0.0
        %2554 = vmatpush.msra.mxu0 0.0
        %2555 = vmatpush.msra.mxu0 0.0
        %2556 = vmatpush.msra.mxu0 0.0
        %2557 = vmatpush.msra.mxu0 0.0
        %2558 = vmatpush.msra.mxu0 0.0
        %2559 = vmatpush.msra.mxu0 0.0
        %2560 = vmatpush.msra.mxu0 %v2487
        %2561 = vmatpush.msra.mxu0 %v2484
        %2562 = vmatmul.f32.gmra.mxu0 %v2496
        %v2563 = vpop.f32.mrf.mxu0
        %v2564 = vadd.f32 0.0, %v2563
        %2565 = vmatmul.f32.gmra.mxu0 %v2498
        %v2566 = vpop.f32.mrf.mxu0
        %v2567 = vadd.f32 0.0, %v2566
        %2568 = vdwg.mxu0
        %2569 = vmatpush.msra.mxu0 0.0
        %2570 = vmatpush.msra.mxu0 0.0
        %2571 = vmatpush.msra.mxu0 0.0
        %2572 = vmatpush.msra.mxu0 0.0
        %2573 = vmatpush.msra.mxu0 0.0
        %2574 = vmatpush.msra.mxu0 0.0
        %2575 = vmatpush.msra.mxu0 0.0
        %2576 = vmatpush.msra.mxu0 0.0
        %2577 = vmatpush.msra.mxu0 0.0
        %2578 = vmatpush.msra.mxu0 0.0
        %2579 = vmatpush.msra.mxu0 0.0
        %2580 = vmatpush.msra.mxu0 0.0
        %2581 = vmatpush.msra.mxu0 0.0
        %2582 = vmatpush.msra.mxu0 0.0
        %2583 = vmatpush.msra.mxu0 %v2480
        %2584 = vmatpush.msra.mxu0 %v2472
        %2585 = vmatmul.f32.gmra.mxu0 %v2496
        %v2586 = vpop.f32.mrf.mxu0
        %v2587 = vadd.f32 0.0, %v2586
        %2588 = vmatmul.f32.gmra.mxu0 %v2498
        %v2589 = vpop.f32.mrf.mxu0
        %v2590 = vadd.f32 0.0, %v2589
        %2591 = vdwg.mxu0
        %v2592 = vadd.f32 %v2453, %v2518
        %v2593 = vadd.f32 %v2454, %v2541
        %v2594 = vadd.f32 %v2455, %v2564
        %v2595 = vadd.f32 %v2456, %v2587
        %v2596 = vadd.f32 %v2457, %v2521
        %v2597 = vadd.f32 %v2458, %v2544
        %v2598 = vadd.f32 %v2459, %v2567
        %v2599 = vadd.f32 %v2460, %v2590
        %2600 = vrot.lane.b32.xlu0 %v1634, 16
        %v2601 = vpop.permute.xlu0 %2600
        %2602 = vrot.lane.b32.xlu0 %v1635, 16
        %v2603 = vpop.permute.xlu0 %2602
        %2604 = vrot.lane.b32.xlu0 %v1324, 58
        %v2605 = vpop.permute.xlu0 %2604
        %2606 = vrot.lane.b32.xlu0 %v1325, 58
        %v2607 = vpop.permute.xlu0 %2606
        %2608 = vrot.lane.b32.xlu0 %v1326, 58
        %v2609 = vpop.permute.xlu0 %2608
        %2610 = vrot.lane.b32.xlu0 %v1327, 58
        %v2611 = vpop.permute.xlu0 %2610
        %2612 = vrot.lane.b32.xlu0 %v1328, 58
        %v2613 = vpop.permute.xlu0 %2612
        %2614 = vrot.lane.b32.xlu0 %v1329, 58
        %v2615 = vpop.permute.xlu0 %2614
        %2616 = vrot.lane.b32.xlu0 %v1330, 58
        %v2617 = vpop.permute.xlu0 %2616
        %2618 = vrot.lane.b32.xlu0 %v1331, 58
        %v2619 = vpop.permute.xlu0 %2618
        %2620 = vrot.lane.b32.xlu0 %v1332, 58
        %v2621 = vpop.permute.xlu0 %2620
        %2622 = vrot.lane.b32.xlu0 %v1333, 58
        %v2623 = vpop.permute.xlu0 %2622
        %v2624 = vsel %vm1803, %v2605, %v2607
        %v2625 = vsel %vm1803, %v2607, %v2609
        %v2626 = vsel %vm1803, %v2609, %v2611
        %v2627 = vsel %vm1803, %v2611, %v2613
        %v2628 = vsel %vm1803, %v2615, %v2617
        %v2629 = vsel %vm1803, %v2617, %v2619
        %v2630 = vsel %vm1803, %v2619, %v2621
        %v2631 = vsel %vm1803, %v2621, %v2623
        %v2640 = vsel %vm532, %v2601, 0
        %v2642 = vsel %vm532, %v2603, 0
        %2644 = vmatpush.msra.mxu0 0.0
        %2645 = vmatpush.msra.mxu0 0.0
        %2646 = vmatpush.msra.mxu0 0.0
        %2647 = vmatpush.msra.mxu0 0.0
        %2648 = vmatpush.msra.mxu0 0.0
        %2649 = vmatpush.msra.mxu0 0.0
        %2650 = vmatpush.msra.mxu0 0.0
        %2651 = vmatpush.msra.mxu0 0.0
        %2652 = vmatpush.msra.mxu0 0.0
        %2653 = vmatpush.msra.mxu0 0.0
        %2654 = vmatpush.msra.mxu0 0.0
        %2655 = vmatpush.msra.mxu0 0.0
        %2656 = vmatpush.msra.mxu0 0.0
        %2657 = vmatpush.msra.mxu0 0.0
        %2658 = vmatpush.msra.mxu0 %v2628
        %2659 = vmatpush.msra.mxu0 %v2624
        %2660 = vmatmul.f32.gmra.mxu0 %v2640
        %v2661 = vpop.f32.mrf.mxu0
        %v2662 = vadd.f32 0.0, %v2661
        %2663 = vmatmul.f32.gmra.mxu0 %v2642
        %v2664 = vpop.f32.mrf.mxu0
        %v2665 = vadd.f32 0.0, %v2664
        %2666 = vdwg.mxu0
        %2667 = vmatpush.msra.mxu0 0.0
        %2668 = vmatpush.msra.mxu0 0.0
        %2669 = vmatpush.msra.mxu0 0.0
        %2670 = vmatpush.msra.mxu0 0.0
        %2671 = vmatpush.msra.mxu0 0.0
        %2672 = vmatpush.msra.mxu0 0.0
        %2673 = vmatpush.msra.mxu0 0.0
        %2674 = vmatpush.msra.mxu0 0.0
        %2675 = vmatpush.msra.mxu0 0.0
        %2676 = vmatpush.msra.mxu0 0.0
        %2677 = vmatpush.msra.mxu0 0.0
        %2678 = vmatpush.msra.mxu0 0.0
        %2679 = vmatpush.msra.mxu0 0.0
        %2680 = vmatpush.msra.mxu0 0.0
        %2681 = vmatpush.msra.mxu0 %v2629
        %2682 = vmatpush.msra.mxu0 %v2625
        %2683 = vmatmul.f32.gmra.mxu0 %v2640
        %v2684 = vpop.f32.mrf.mxu0
        %v2685 = vadd.f32 0.0, %v2684
        %2686 = vmatmul.f32.gmra.mxu0 %v2642
        %v2687 = vpop.f32.mrf.mxu0
        %v2688 = vadd.f32 0.0, %v2687
        %2689 = vdwg.mxu0
        %2690 = vmatpush.msra.mxu0 0.0
        %2691 = vmatpush.msra.mxu0 0.0
        %2692 = vmatpush.msra.mxu0 0.0
        %2693 = vmatpush.msra.mxu0 0.0
        %2694 = vmatpush.msra.mxu0 0.0
        %2695 = vmatpush.msra.mxu0 0.0
        %2696 = vmatpush.msra.mxu0 0.0
        %2697 = vmatpush.msra.mxu0 0.0
        %2698 = vmatpush.msra.mxu0 0.0
        %2699 = vmatpush.msra.mxu0 0.0
        %2700 = vmatpush.msra.mxu0 0.0
        %2701 = vmatpush.msra.mxu0 0.0
        %2702 = vmatpush.msra.mxu0 0.0
        %2703 = vmatpush.msra.mxu0 0.0
        %2704 = vmatpush.msra.mxu0 %v2630
        %2705 = vmatpush.msra.mxu0 %v2626
        %2706 = vmatmul.f32.gmra.mxu0 %v2640
        %v2707 = vpop.f32.mrf.mxu0
        %v2708 = vadd.f32 0.0, %v2707
        %2709 = vmatmul.f32.gmra.mxu0 %v2642
        %v2710 = vpop.f32.mrf.mxu0
        %v2711 = vadd.f32 0.0, %v2710
        %2712 = vdwg.mxu0
        %2713 = vmatpush.msra.mxu0 0.0
        %2714 = vmatpush.msra.mxu0 0.0
        %2715 = vmatpush.msra.mxu0 0.0
        %2716 = vmatpush.msra.mxu0 0.0
        %2717 = vmatpush.msra.mxu0 0.0
        %2718 = vmatpush.msra.mxu0 0.0
        %2719 = vmatpush.msra.mxu0 0.0
        %2720 = vmatpush.msra.mxu0 0.0
        %2721 = vmatpush.msra.mxu0 0.0
        %2722 = vmatpush.msra.mxu0 0.0
        %2723 = vmatpush.msra.mxu0 0.0
        %2724 = vmatpush.msra.mxu0 0.0
        %2725 = vmatpush.msra.mxu0 0.0
        %2726 = vmatpush.msra.mxu0 0.0
        %2727 = vmatpush.msra.mxu0 %v2631
        %2728 = vmatpush.msra.mxu0 %v2627
        %2729 = vmatmul.f32.gmra.mxu0 %v2640
        %v2730 = vpop.f32.mrf.mxu0
        %v2731 = vadd.f32 0.0, %v2730
        %2732 = vmatmul.f32.gmra.mxu0 %v2642
        %v2733 = vpop.f32.mrf.mxu0
        %v2734 = vadd.f32 0.0, %v2733
        %2735 = vdwg.mxu0
        %v2736 = vadd.f32 %v2592, %v2662
        %v2737 = vadd.f32 %v2593, %v2685
        %v2738 = vadd.f32 %v2594, %v2708
        %v2739 = vadd.f32 %v2595, %v2731
        %v2740 = vadd.f32 %v2596, %v2665
        %v2741 = vadd.f32 %v2597, %v2688
        %v2742 = vadd.f32 %v2598, %v2711
        %v2743 = vadd.f32 %v2599, %v2734
        %v2744 = vld [vmem:[#allocation9 + $0x10] sm:$0xff]
        %v2745 = vld [vmem:[#allocation9 + $0x38] sm:$0xff]
        %2746 = vrot.lane.b32.xlu0 %v1324, 56
        %v2747 = vpop.permute.xlu0 %2746
        %2748 = vrot.lane.b32.xlu0 %v1325, 56
        %v2749 = vpop.permute.xlu0 %2748
        %2750 = vrot.lane.b32.xlu0 %v1326, 56
        %v2751 = vpop.permute.xlu0 %2750
        %2752 = vrot.lane.b32.xlu0 %v1327, 56
        %v2753 = vpop.permute.xlu0 %2752
        %2754 = vrot.lane.b32.xlu0 %v1328, 56
        %v2755 = vpop.permute.xlu0 %2754
        %2756 = vrot.lane.b32.xlu0 %v1329, 56
        %v2757 = vpop.permute.xlu0 %2756
        %2758 = vrot.lane.b32.xlu0 %v1330, 56
        %v2759 = vpop.permute.xlu0 %2758
        %2760 = vrot.lane.b32.xlu0 %v1331, 56
        %v2761 = vpop.permute.xlu0 %2760
        %2762 = vrot.lane.b32.xlu0 %v1332, 56
        %v2763 = vpop.permute.xlu0 %2762
        %2764 = vrot.lane.b32.xlu0 %v1333, 56
        %v2765 = vpop.permute.xlu0 %2764
        %v2766 = vsel %vm1948, %v2747, %v2749
        %v2767 = vsel %vm1948, %v2749, %v2751
        %v2768 = vsel %vm1948, %v2751, %v2753
        %v2769 = vsel %vm1948, %v2753, %v2755
        %v2770 = vsel %vm1948, %v2757, %v2759
        %v2771 = vsel %vm1948, %v2759, %v2761
        %v2772 = vsel %vm1948, %v2761, %v2763
        %v2773 = vsel %vm1948, %v2763, %v2765
        %v2783 = vsel %vm532, %v2744, 0
        %v2786 = vsel %vm532, %v2745, 0
        %2788 = vmatpush.msra.mxu0 0.0
        %2789 = vmatpush.msra.mxu0 0.0
        %2790 = vmatpush.msra.mxu0 0.0
        %2791 = vmatpush.msra.mxu0 0.0
        %2792 = vmatpush.msra.mxu0 0.0
        %2793 = vmatpush.msra.mxu0 0.0
        %2794 = vmatpush.msra.mxu0 0.0
        %2795 = vmatpush.msra.mxu0 0.0
        %2796 = vmatpush.msra.mxu0 0.0
        %2797 = vmatpush.msra.mxu0 0.0
        %2798 = vmatpush.msra.mxu0 0.0
        %2799 = vmatpush.msra.mxu0 0.0
        %2800 = vmatpush.msra.mxu0 0.0
        %2801 = vmatpush.msra.mxu0 0.0
        %2802 = vmatpush.msra.mxu0 %v2770
        %2803 = vmatpush.msra.mxu0 %v2766
        %2804 = vmatmul.f32.gmra.mxu0 %v2783
        %v2805 = vpop.f32.mrf.mxu0
        %v2806 = vadd.f32 0.0, %v2805
        %2807 = vmatmul.f32.gmra.mxu0 %v2786
        %v2808 = vpop.f32.mrf.mxu0
        %v2809 = vadd.f32 0.0, %v2808
        %2810 = vdwg.mxu0
        %2811 = vmatpush.msra.mxu0 0.0
        %2812 = vmatpush.msra.mxu0 0.0
        %2813 = vmatpush.msra.mxu0 0.0
        %2814 = vmatpush.msra.mxu0 0.0
        %2815 = vmatpush.msra.mxu0 0.0
        %2816 = vmatpush.msra.mxu0 0.0
        %2817 = vmatpush.msra.mxu0 0.0
        %2818 = vmatpush.msra.mxu0 0.0
        %2819 = vmatpush.msra.mxu0 0.0
        %2820 = vmatpush.msra.mxu0 0.0
        %2821 = vmatpush.msra.mxu0 0.0
        %2822 = vmatpush.msra.mxu0 0.0
        %2823 = vmatpush.msra.mxu0 0.0
        %2824 = vmatpush.msra.mxu0 0.0
        %2825 = vmatpush.msra.mxu0 %v2771
        %2826 = vmatpush.msra.mxu0 %v2767
        %2827 = vmatmul.f32.gmra.mxu0 %v2783
        %v2828 = vpop.f32.mrf.mxu0
        %v2829 = vadd.f32 0.0, %v2828
        %2830 = vmatmul.f32.gmra.mxu0 %v2786
        %v2831 = vpop.f32.mrf.mxu0
        %v2832 = vadd.f32 0.0, %v2831
        %2833 = vdwg.mxu0
        %2834 = vmatpush.msra.mxu0 0.0
        %2835 = vmatpush.msra.mxu0 0.0
        %2836 = vmatpush.msra.mxu0 0.0
        %2837 = vmatpush.msra.mxu0 0.0
        %2838 = vmatpush.msra.mxu0 0.0
        %2839 = vmatpush.msra.mxu0 0.0
        %2840 = vmatpush.msra.mxu0 0.0
        %2841 = vmatpush.msra.mxu0 0.0
        %2842 = vmatpush.msra.mxu0 0.0
        %2843 = vmatpush.msra.mxu0 0.0
        %2844 = vmatpush.msra.mxu0 0.0
        %2845 = vmatpush.msra.mxu0 0.0
        %2846 = vmatpush.msra.mxu0 0.0
        %2847 = vmatpush.msra.mxu0 0.0
        %2848 = vmatpush.msra.mxu0 %v2772
        %2849 = vmatpush.msra.mxu0 %v2768
        %2850 = vmatmul.f32.gmra.mxu0 %v2783
        %v2851 = vpop.f32.mrf.mxu0
        %v2852 = vadd.f32 0.0, %v2851
        %2853 = vmatmul.f32.gmra.mxu0 %v2786
        %v2854 = vpop.f32.mrf.mxu0
        %v2855 = vadd.f32 0.0, %v2854
        %2856 = vdwg.mxu0
        %2857 = vmatpush.msra.mxu0 0.0
        %2858 = vmatpush.msra.mxu0 0.0
        %2859 = vmatpush.msra.mxu0 0.0
        %2860 = vmatpush.msra.mxu0 0.0
        %2861 = vmatpush.msra.mxu0 0.0
        %2862 = vmatpush.msra.mxu0 0.0
        %2863 = vmatpush.msra.mxu0 0.0
        %2864 = vmatpush.msra.mxu0 0.0
        %2865 = vmatpush.msra.mxu0 0.0
        %2866 = vmatpush.msra.mxu0 0.0
        %2867 = vmatpush.msra.mxu0 0.0
        %2868 = vmatpush.msra.mxu0 0.0
        %2869 = vmatpush.msra.mxu0 0.0
        %2870 = vmatpush.msra.mxu0 0.0
        %2871 = vmatpush.msra.mxu0 %v2773
        %2872 = vmatpush.msra.mxu0 %v2769
        %2873 = vmatmul.f32.gmra.mxu0 %v2783
        %v2874 = vpop.f32.mrf.mxu0
        %v2875 = vadd.f32 0.0, %v2874
        %2876 = vmatmul.f32.gmra.mxu0 %v2786
        %v2877 = vpop.f32.mrf.mxu0
        %v2878 = vadd.f32 0.0, %v2877
        %2879 = vdwg.mxu0
        %v2880 = vadd.f32 %v2736, %v2806
        %v2881 = vadd.f32 %v2737, %v2829
        %v2882 = vadd.f32 %v2738, %v2852
        %v2883 = vadd.f32 %v2739, %v2875
        %v2884 = vadd.f32 %v2740, %v2809
        %v2885 = vadd.f32 %v2741, %v2832
        %v2886 = vadd.f32 %v2742, %v2855
        %v2887 = vadd.f32 %v2743, %v2878
        %2888 = vrot.lane.b32.xlu0 %v2744, 112
        %v2889 = vpop.permute.xlu0 %2888
        %2890 = vrot.lane.b32.xlu0 %v2745, 112
        %v2891 = vpop.permute.xlu0 %2890
        %2892 = vrot.lane.b32.xlu0 %v1324, 54
        %v2893 = vpop.permute.xlu0 %2892
        %2894 = vrot.lane.b32.xlu0 %v1325, 54
        %v2895 = vpop.permute.xlu0 %2894
        %2896 = vrot.lane.b32.xlu0 %v1326, 54
        %v2897 = vpop.permute.xlu0 %2896
        %2898 = vrot.lane.b32.xlu0 %v1327, 54
        %v2899 = vpop.permute.xlu0 %2898
        %2900 = vrot.lane.b32.xlu0 %v1328, 54
        %v2901 = vpop.permute.xlu0 %2900
        %2902 = vrot.lane.b32.xlu0 %v1329, 54
        %v2903 = vpop.permute.xlu0 %2902
        %2904 = vrot.lane.b32.xlu0 %v1330, 54
        %v2905 = vpop.permute.xlu0 %2904
        %2906 = vrot.lane.b32.xlu0 %v1331, 54
        %v2907 = vpop.permute.xlu0 %2906
        %2908 = vrot.lane.b32.xlu0 %v1332, 54
        %v2909 = vpop.permute.xlu0 %2908
        %2910 = vrot.lane.b32.xlu0 %v1333, 54
        %v2911 = vpop.permute.xlu0 %2910
        %v2912 = vsel %vm2093, %v2893, %v2895
        %v2913 = vsel %vm2093, %v2895, %v2897
        %v2914 = vsel %vm2093, %v2897, %v2899
        %v2915 = vsel %vm2093, %v2899, %v2901
        %v2916 = vsel %vm2093, %v2903, %v2905
        %v2917 = vsel %vm2093, %v2905, %v2907
        %v2918 = vsel %vm2093, %v2907, %v2909
        %v2919 = vsel %vm2093, %v2909, %v2911
        %v2928 = vsel %vm532, %v2889, 0
        %v2930 = vsel %vm532, %v2891, 0
        %2932 = vmatpush.msra.mxu0 0.0
        %2933 = vmatpush.msra.mxu0 0.0
        %2934 = vmatpush.msra.mxu0 0.0
        %2935 = vmatpush.msra.mxu0 0.0
        %2936 = vmatpush.msra.mxu0 0.0
        %2937 = vmatpush.msra.mxu0 0.0
        %2938 = vmatpush.msra.mxu0 0.0
        %2939 = vmatpush.msra.mxu0 0.0
        %2940 = vmatpush.msra.mxu0 0.0
        %2941 = vmatpush.msra.mxu0 0.0
        %2942 = vmatpush.msra.mxu0 0.0
        %2943 = vmatpush.msra.mxu0 0.0
        %2944 = vmatpush.msra.mxu0 0.0
        %2945 = vmatpush.msra.mxu0 0.0
        %2946 = vmatpush.msra.mxu0 %v2916
        %2947 = vmatpush.msra.mxu0 %v2912
        %2948 = vmatmul.f32.gmra.mxu0 %v2928
        %v2949 = vpop.f32.mrf.mxu0
        %v2950 = vadd.f32 0.0, %v2949
        %2951 = vmatmul.f32.gmra.mxu0 %v2930
        %v2952 = vpop.f32.mrf.mxu0
        %v2953 = vadd.f32 0.0, %v2952
        %2954 = vdwg.mxu0
        %2955 = vmatpush.msra.mxu0 0.0
        %2956 = vmatpush.msra.mxu0 0.0
        %2957 = vmatpush.msra.mxu0 0.0
        %2958 = vmatpush.msra.mxu0 0.0
        %2959 = vmatpush.msra.mxu0 0.0
        %2960 = vmatpush.msra.mxu0 0.0
        %2961 = vmatpush.msra.mxu0 0.0
        %2962 = vmatpush.msra.mxu0 0.0
        %2963 = vmatpush.msra.mxu0 0.0
        %2964 = vmatpush.msra.mxu0 0.0
        %2965 = vmatpush.msra.mxu0 0.0
        %2966 = vmatpush.msra.mxu0 0.0
        %2967 = vmatpush.msra.mxu0 0.0
        %2968 = vmatpush.msra.mxu0 0.0
        %2969 = vmatpush.msra.mxu0 %v2917
        %2970 = vmatpush.msra.mxu0 %v2913
        %2971 = vmatmul.f32.gmra.mxu0 %v2928
        %v2972 = vpop.f32.mrf.mxu0
        %v2973 = vadd.f32 0.0, %v2972
        %2974 = vmatmul.f32.gmra.mxu0 %v2930
        %v2975 = vpop.f32.mrf.mxu0
        %v2976 = vadd.f32 0.0, %v2975
        %2977 = vdwg.mxu0
        %2978 = vmatpush.msra.mxu0 0.0
        %2979 = vmatpush.msra.mxu0 0.0
        %2980 = vmatpush.msra.mxu0 0.0
        %2981 = vmatpush.msra.mxu0 0.0
        %2982 = vmatpush.msra.mxu0 0.0
        %2983 = vmatpush.msra.mxu0 0.0
        %2984 = vmatpush.msra.mxu0 0.0
        %2985 = vmatpush.msra.mxu0 0.0
        %2986 = vmatpush.msra.mxu0 0.0
        %2987 = vmatpush.msra.mxu0 0.0
        %2988 = vmatpush.msra.mxu0 0.0
        %2989 = vmatpush.msra.mxu0 0.0
        %2990 = vmatpush.msra.mxu0 0.0
        %2991 = vmatpush.msra.mxu0 0.0
        %2992 = vmatpush.msra.mxu0 %v2918
        %2993 = vmatpush.msra.mxu0 %v2914
        %2994 = vmatmul.f32.gmra.mxu0 %v2928
        %v2995 = vpop.f32.mrf.mxu0
        %v2996 = vadd.f32 0.0, %v2995
        %2997 = vmatmul.f32.gmra.mxu0 %v2930
        %v2998 = vpop.f32.mrf.mxu0
        %v2999 = vadd.f32 0.0, %v2998
        %3000 = vdwg.mxu0
        %3001 = vmatpush.msra.mxu0 0.0
        %3002 = vmatpush.msra.mxu0 0.0
        %3003 = vmatpush.msra.mxu0 0.0
        %3004 = vmatpush.msra.mxu0 0.0
        %3005 = vmatpush.msra.mxu0 0.0
        %3006 = vmatpush.msra.mxu0 0.0
        %3007 = vmatpush.msra.mxu0 0.0
        %3008 = vmatpush.msra.mxu0 0.0
        %3009 = vmatpush.msra.mxu0 0.0
        %3010 = vmatpush.msra.mxu0 0.0
        %3011 = vmatpush.msra.mxu0 0.0
        %3012 = vmatpush.msra.mxu0 0.0
        %3013 = vmatpush.msra.mxu0 0.0
        %3014 = vmatpush.msra.mxu0 0.0
        %3015 = vmatpush.msra.mxu0 %v2919
        %3016 = vmatpush.msra.mxu0 %v2915
        %3017 = vmatmul.f32.gmra.mxu0 %v2928
        %v3018 = vpop.f32.mrf.mxu0
        %v3019 = vadd.f32 0.0, %v3018
        %3020 = vmatmul.f32.gmra.mxu0 %v2930
        %v3021 = vpop.f32.mrf.mxu0
        %v3022 = vadd.f32 0.0, %v3021
        %3023 = vdwg.mxu0
        %v3024 = vadd.f32 %v2880, %v2950
        %v3025 = vadd.f32 %v2881, %v2973
        %v3026 = vadd.f32 %v2882, %v2996
        %v3027 = vadd.f32 %v2883, %v3019
        %v3028 = vadd.f32 %v2884, %v2953
        %v3029 = vadd.f32 %v2885, %v2976
        %v3030 = vadd.f32 %v2886, %v2999
        %v3031 = vadd.f32 %v2887, %v3022
        %v3032 = vld [vmem:[%s406 + $0x8] sm:$0xff]
        %v3033 = vld [vmem:[%s406 + $0x10] sm:$0xff]
        %v3034 = vld [vmem:[%s406 + $0x18] sm:$0xff]
        %v3035 = vld [vmem:[%s406 + $0x20] sm:$0xff]
        %v3036 = vld [vmem:[%s406 + $0x48] sm:$0xff]
        %v3037 = vld [vmem:[%s406 + $0x50] sm:$0xff]
        %v3038 = vld [vmem:[%s406 + $0x58] sm:$0xff]
        %v3039 = vld [vmem:[%s406 + $0x60] sm:$0xff]
        %3040 = vrot.lane.b32.xlu0 %v2744, 96
        %v3041 = vpop.permute.xlu0 %3040
        %3042 = vrot.lane.b32.xlu0 %v2745, 96
        %v3043 = vpop.permute.xlu0 %3042
        %3052 = vrot.lane.b32.xlu0 %v3032, 124
        %v3053 = vpop.permute.xlu0 %3052
        %3054 = vrot.lane.b32.xlu0 %v3033, 124
        %v3055 = vpop.permute.xlu0 %3054
        %3056 = vrot.lane.b32.xlu0 %v3034, 124
        %v3057 = vpop.permute.xlu0 %3056
        %3058 = vrot.lane.b32.xlu0 %v3035, 124
        %v3059 = vpop.permute.xlu0 %3058
        %3060 = vrot.lane.b32.xlu0 %v3036, 124
        %v3061 = vpop.permute.xlu0 %3060
        %3062 = vrot.lane.b32.xlu0 %v3037, 124
        %v3063 = vpop.permute.xlu0 %3062
        %3064 = vrot.lane.b32.xlu0 %v3038, 124
        %v3065 = vpop.permute.xlu0 %3064
        %3066 = vrot.lane.b32.xlu0 %v3039, 124
        %v3067 = vpop.permute.xlu0 %3066
        %vm3068 = vcmask 1014784
        %v3069 = vsel %vm3068, %v3053, %v3055
        %v3070 = vsel %vm3068, %v3055, %v3057
        %v3071 = vsel %vm3068, %v3057, %v3059
        %v3072 = vsel %vm3068, %v3061, %v3063
        %v3073 = vsel %vm3068, %v3063, %v3065
        %v3074 = vsel %vm3068, %v3065, %v3067
        %v3083 = vsel %vm532, %v3041, 0
        %v3085 = vsel %vm532, %v3043, 0
        %3087 = vmatpush.msra.mxu0 0.0
        %3088 = vmatpush.msra.mxu0 0.0
        %3089 = vmatpush.msra.mxu0 0.0
        %3090 = vmatpush.msra.mxu0 0.0
        %3091 = vmatpush.msra.mxu0 0.0
        %3092 = vmatpush.msra.mxu0 0.0
        %3093 = vmatpush.msra.mxu0 0.0
        %3094 = vmatpush.msra.mxu0 0.0
        %3095 = vmatpush.msra.mxu0 0.0
        %3096 = vmatpush.msra.mxu0 0.0
        %3097 = vmatpush.msra.mxu0 0.0
        %3098 = vmatpush.msra.mxu0 0.0
        %3099 = vmatpush.msra.mxu0 0.0
        %3100 = vmatpush.msra.mxu0 0.0
        %3101 = vmatpush.msra.mxu0 %v3072
        %3102 = vmatpush.msra.mxu0 %v3069
        %3103 = vmatmul.f32.gmra.mxu0 %v3083
        %v3104 = vpop.f32.mrf.mxu0
        %v3105 = vadd.f32 0.0, %v3104
        %3106 = vmatmul.f32.gmra.mxu0 %v3085
        %v3107 = vpop.f32.mrf.mxu0
        %v3108 = vadd.f32 0.0, %v3107
        %3109 = vdwg.mxu0
        %3110 = vmatpush.msra.mxu0 0.0
        %3111 = vmatpush.msra.mxu0 0.0
        %3112 = vmatpush.msra.mxu0 0.0
        %3113 = vmatpush.msra.mxu0 0.0
        %3114 = vmatpush.msra.mxu0 0.0
        %3115 = vmatpush.msra.mxu0 0.0
        %3116 = vmatpush.msra.mxu0 0.0
        %3117 = vmatpush.msra.mxu0 0.0
        %3118 = vmatpush.msra.mxu0 0.0
        %3119 = vmatpush.msra.mxu0 0.0
        %3120 = vmatpush.msra.mxu0 0.0
        %3121 = vmatpush.msra.mxu0 0.0
        %3122 = vmatpush.msra.mxu0 0.0
        %3123 = vmatpush.msra.mxu0 0.0
        %3124 = vmatpush.msra.mxu0 %v3073
        %3125 = vmatpush.msra.mxu0 %v3070
        %3126 = vmatmul.f32.gmra.mxu0 %v3083
        %v3127 = vpop.f32.mrf.mxu0
        %v3128 = vadd.f32 0.0, %v3127
        %3129 = vmatmul.f32.gmra.mxu0 %v3085
        %v3130 = vpop.f32.mrf.mxu0
        %v3131 = vadd.f32 0.0, %v3130
        %3132 = vdwg.mxu0
        %3133 = vmatpush.msra.mxu0 0.0
        %3134 = vmatpush.msra.mxu0 0.0
        %3135 = vmatpush.msra.mxu0 0.0
        %3136 = vmatpush.msra.mxu0 0.0
        %3137 = vmatpush.msra.mxu0 0.0
        %3138 = vmatpush.msra.mxu0 0.0
        %3139 = vmatpush.msra.mxu0 0.0
        %3140 = vmatpush.msra.mxu0 0.0
        %3141 = vmatpush.msra.mxu0 0.0
        %3142 = vmatpush.msra.mxu0 0.0
        %3143 = vmatpush.msra.mxu0 0.0
        %3144 = vmatpush.msra.mxu0 0.0
        %3145 = vmatpush.msra.mxu0 0.0
        %3146 = vmatpush.msra.mxu0 0.0
        %3147 = vmatpush.msra.mxu0 %v3074
        %3148 = vmatpush.msra.mxu0 %v3071
        %3149 = vmatmul.f32.gmra.mxu0 %v3083
        %v3150 = vpop.f32.mrf.mxu0
        %v3151 = vadd.f32 0.0, %v3150
        %3152 = vmatmul.f32.gmra.mxu0 %v3085
        %v3153 = vpop.f32.mrf.mxu0
        %v3154 = vadd.f32 0.0, %v3153
        %3155 = vdwg.mxu0
        %3156 = vmatpush.msra.mxu0 0.0
        %3157 = vmatpush.msra.mxu0 0.0
        %3158 = vmatpush.msra.mxu0 0.0
        %3159 = vmatpush.msra.mxu0 0.0
        %3160 = vmatpush.msra.mxu0 0.0
        %3161 = vmatpush.msra.mxu0 0.0
        %3162 = vmatpush.msra.mxu0 0.0
        %3163 = vmatpush.msra.mxu0 0.0
        %3164 = vmatpush.msra.mxu0 0.0
        %3165 = vmatpush.msra.mxu0 0.0
        %3166 = vmatpush.msra.mxu0 0.0
        %3167 = vmatpush.msra.mxu0 0.0
        %3168 = vmatpush.msra.mxu0 0.0
        %3169 = vmatpush.msra.mxu0 0.0
        %3170 = vmatpush.msra.mxu0 %v3067
        %3171 = vmatpush.msra.mxu0 %v3059
        %3172 = vmatmul.f32.gmra.mxu0 %v3083
        %v3173 = vpop.f32.mrf.mxu0
        %v3174 = vadd.f32 0.0, %v3173
        %3175 = vmatmul.f32.gmra.mxu0 %v3085
        %v3176 = vpop.f32.mrf.mxu0
        %v3177 = vadd.f32 0.0, %v3176
        %3178 = vdwg.mxu0
        %v3179 = vadd.f32 %v3024, %v3105
        %v3180 = vadd.f32 %v3025, %v3128
        %v3181 = vadd.f32 %v3026, %v3151
        %v3182 = vadd.f32 %v3027, %v3174
        %v3183 = vadd.f32 %v3028, %v3108
        %v3184 = vadd.f32 %v3029, %v3131
        %v3185 = vadd.f32 %v3030, %v3154
        %v3186 = vadd.f32 %v3031, %v3177
        %3187 = vrot.lane.b32.xlu0 %v2744, 80
        %v3188 = vpop.permute.xlu0 %3187
        %3189 = vrot.lane.b32.xlu0 %v2745, 80
        %v3190 = vpop.permute.xlu0 %3189
        %3191 = vrot.lane.b32.xlu0 %v3032, 120
        %v3192 = vpop.permute.xlu0 %3191
        %3193 = vrot.lane.b32.xlu0 %v3033, 120
        %v3194 = vpop.permute.xlu0 %3193
        %3195 = vrot.lane.b32.xlu0 %v3034, 120
        %v3196 = vpop.permute.xlu0 %3195
        %3197 = vrot.lane.b32.xlu0 %v3035, 120
        %v3198 = vpop.permute.xlu0 %3197
        %3199 = vrot.lane.b32.xlu0 %v3036, 120
        %v3200 = vpop.permute.xlu0 %3199
        %3201 = vrot.lane.b32.xlu0 %v3037, 120
        %v3202 = vpop.permute.xlu0 %3201
        %3203 = vrot.lane.b32.xlu0 %v3038, 120
        %v3204 = vpop.permute.xlu0 %3203
        %3205 = vrot.lane.b32.xlu0 %v3039, 120
        %v3206 = vpop.permute.xlu0 %3205
        %v3207 = vsel %vm1066, %v3192, %v3194
        %v3208 = vsel %vm1066, %v3194, %v3196
        %v3209 = vsel %vm1066, %v3196, %v3198
        %v3210 = vsel %vm1066, %v3200, %v3202
        %v3211 = vsel %vm1066, %v3202, %v3204
        %v3212 = vsel %vm1066, %v3204, %v3206
        %v3221 = vsel %vm532, %v3188, 0
        %v3223 = vsel %vm532, %v3190, 0
        %3225 = vmatpush.msra.mxu0 0.0
        %3226 = vmatpush.msra.mxu0 0.0
        %3227 = vmatpush.msra.mxu0 0.0
        %3228 = vmatpush.msra.mxu0 0.0
        %3229 = vmatpush.msra.mxu0 0.0
        %3230 = vmatpush.msra.mxu0 0.0
        %3231 = vmatpush.msra.mxu0 0.0
        %3232 = vmatpush.msra.mxu0 0.0
        %3233 = vmatpush.msra.mxu0 0.0
        %3234 = vmatpush.msra.mxu0 0.0
        %3235 = vmatpush.msra.mxu0 0.0
        %3236 = vmatpush.msra.mxu0 0.0
        %3237 = vmatpush.msra.mxu0 0.0
        %3238 = vmatpush.msra.mxu0 0.0
        %3239 = vmatpush.msra.mxu0 %v3210
        %3240 = vmatpush.msra.mxu0 %v3207
        %3241 = vmatmul.f32.gmra.mxu0 %v3221
        %v3242 = vpop.f32.mrf.mxu0
        %v3243 = vadd.f32 0.0, %v3242
        %3244 = vmatmul.f32.gmra.mxu0 %v3223
        %v3245 = vpop.f32.mrf.mxu0
        %v3246 = vadd.f32 0.0, %v3245
        %3247 = vdwg.mxu0
        %3248 = vmatpush.msra.mxu0 0.0
        %3249 = vmatpush.msra.mxu0 0.0
        %3250 = vmatpush.msra.mxu0 0.0
        %3251 = vmatpush.msra.mxu0 0.0
        %3252 = vmatpush.msra.mxu0 0.0
        %3253 = vmatpush.msra.mxu0 0.0
        %3254 = vmatpush.msra.mxu0 0.0
        %3255 = vmatpush.msra.mxu0 0.0
        %3256 = vmatpush.msra.mxu0 0.0
        %3257 = vmatpush.msra.mxu0 0.0
        %3258 = vmatpush.msra.mxu0 0.0
        %3259 = vmatpush.msra.mxu0 0.0
        %3260 = vmatpush.msra.mxu0 0.0
        %3261 = vmatpush.msra.mxu0 0.0
        %3262 = vmatpush.msra.mxu0 %v3211
        %3263 = vmatpush.msra.mxu0 %v3208
        %3264 = vmatmul.f32.gmra.mxu0 %v3221
        %v3265 = vpop.f32.mrf.mxu0
        %v3266 = vadd.f32 0.0, %v3265
        %3267 = vmatmul.f32.gmra.mxu0 %v3223
        %v3268 = vpop.f32.mrf.mxu0
        %v3269 = vadd.f32 0.0, %v3268
        %3270 = vdwg.mxu0
        %3271 = vmatpush.msra.mxu0 0.0
        %3272 = vmatpush.msra.mxu0 0.0
        %3273 = vmatpush.msra.mxu0 0.0
        %3274 = vmatpush.msra.mxu0 0.0
        %3275 = vmatpush.msra.mxu0 0.0
        %3276 = vmatpush.msra.mxu0 0.0
        %3277 = vmatpush.msra.mxu0 0.0
        %3278 = vmatpush.msra.mxu0 0.0
        %3279 = vmatpush.msra.mxu0 0.0
        %3280 = vmatpush.msra.mxu0 0.0
        %3281 = vmatpush.msra.mxu0 0.0
        %3282 = vmatpush.msra.mxu0 0.0
        %3283 = vmatpush.msra.mxu0 0.0
        %3284 = vmatpush.msra.mxu0 0.0
        %3285 = vmatpush.msra.mxu0 %v3212
        %3286 = vmatpush.msra.mxu0 %v3209
        %3287 = vmatmul.f32.gmra.mxu0 %v3221
        %v3288 = vpop.f32.mrf.mxu0
        %v3289 = vadd.f32 0.0, %v3288
        %3290 = vmatmul.f32.gmra.mxu0 %v3223
        %v3291 = vpop.f32.mrf.mxu0
        %v3292 = vadd.f32 0.0, %v3291
        %3293 = vdwg.mxu0
        %3294 = vmatpush.msra.mxu0 0.0
        %3295 = vmatpush.msra.mxu0 0.0
        %3296 = vmatpush.msra.mxu0 0.0
        %3297 = vmatpush.msra.mxu0 0.0
        %3298 = vmatpush.msra.mxu0 0.0
        %3299 = vmatpush.msra.mxu0 0.0
        %3300 = vmatpush.msra.mxu0 0.0
        %3301 = vmatpush.msra.mxu0 0.0
        %3302 = vmatpush.msra.mxu0 0.0
        %3303 = vmatpush.msra.mxu0 0.0
        %3304 = vmatpush.msra.mxu0 0.0
        %3305 = vmatpush.msra.mxu0 0.0
        %3306 = vmatpush.msra.mxu0 0.0
        %3307 = vmatpush.msra.mxu0 0.0
        %3308 = vmatpush.msra.mxu0 %v3206
        %3309 = vmatpush.msra.mxu0 %v3198
        %3310 = vmatmul.f32.gmra.mxu0 %v3221
        %v3311 = vpop.f32.mrf.mxu0
        %v3312 = vadd.f32 0.0, %v3311
        %3313 = vmatmul.f32.gmra.mxu0 %v3223
        %v3314 = vpop.f32.mrf.mxu0
        %v3315 = vadd.f32 0.0, %v3314
        %3316 = vdwg.mxu0
        %v3317 = vadd.f32 %v3179, %v3243
        %v3318 = vadd.f32 %v3180, %v3266
        %v3319 = vadd.f32 %v3181, %v3289
        %v3320 = vadd.f32 %v3182, %v3312
        %v3321 = vadd.f32 %v3183, %v3246
        %v3322 = vadd.f32 %v3184, %v3269
        %v3323 = vadd.f32 %v3185, %v3292
        %v3324 = vadd.f32 %v3186, %v3315
        %3325 = vrot.lane.b32.xlu0 %v2744, 64
        %v3326 = vpop.permute.xlu0 %3325
        %3327 = vrot.lane.b32.xlu0 %v2745, 64
        %v3328 = vpop.permute.xlu0 %3327
        %3329 = vrot.lane.b32.xlu0 %v3032, 116
        %v3330 = vpop.permute.xlu0 %3329
        %3331 = vrot.lane.b32.xlu0 %v3033, 116
        %v3332 = vpop.permute.xlu0 %3331
        %3333 = vrot.lane.b32.xlu0 %v3034, 116
        %v3334 = vpop.permute.xlu0 %3333
        %3335 = vrot.lane.b32.xlu0 %v3035, 116
        %v3336 = vpop.permute.xlu0 %3335
        %3337 = vrot.lane.b32.xlu0 %v3036, 116
        %v3338 = vpop.permute.xlu0 %3337
        %3339 = vrot.lane.b32.xlu0 %v3037, 116
        %v3340 = vpop.permute.xlu0 %3339
        %3341 = vrot.lane.b32.xlu0 %v3038, 116
        %v3342 = vpop.permute.xlu0 %3341
        %3343 = vrot.lane.b32.xlu0 %v3039, 116
        %v3344 = vpop.permute.xlu0 %3343
        %vm3345 = vcmask 949248
        %v3346 = vsel %vm3345, %v3330, %v3332
        %v3347 = vsel %vm3345, %v3332, %v3334
        %v3348 = vsel %vm3345, %v3334, %v3336
        %v3349 = vsel %vm3345, %v3338, %v3340
        %v3350 = vsel %vm3345, %v3340, %v3342
        %v3351 = vsel %vm3345, %v3342, %v3344
        %v3360 = vsel %vm532, %v3326, 0
        %v3362 = vsel %vm532, %v3328, 0
        %3364 = vmatpush.msra.mxu0 0.0
        %3365 = vmatpush.msra.mxu0 0.0
        %3366 = vmatpush.msra.mxu0 0.0
        %3367 = vmatpush.msra.mxu0 0.0
        %3368 = vmatpush.msra.mxu0 0.0
        %3369 = vmatpush.msra.mxu0 0.0
        %3370 = vmatpush.msra.mxu0 0.0
        %3371 = vmatpush.msra.mxu0 0.0
        %3372 = vmatpush.msra.mxu0 0.0
        %3373 = vmatpush.msra.mxu0 0.0
        %3374 = vmatpush.msra.mxu0 0.0
        %3375 = vmatpush.msra.mxu0 0.0
        %3376 = vmatpush.msra.mxu0 0.0
        %3377 = vmatpush.msra.mxu0 0.0
        %3378 = vmatpush.msra.mxu0 %v3349
        %3379 = vmatpush.msra.mxu0 %v3346
        %3380 = vmatmul.f32.gmra.mxu0 %v3360
        %v3381 = vpop.f32.mrf.mxu0
        %v3382 = vadd.f32 0.0, %v3381
        %3383 = vmatmul.f32.gmra.mxu0 %v3362
        %v3384 = vpop.f32.mrf.mxu0
        %v3385 = vadd.f32 0.0, %v3384
        %3386 = vdwg.mxu0
        %3387 = vmatpush.msra.mxu0 0.0
        %3388 = vmatpush.msra.mxu0 0.0
        %3389 = vmatpush.msra.mxu0 0.0
        %3390 = vmatpush.msra.mxu0 0.0
        %3391 = vmatpush.msra.mxu0 0.0
        %3392 = vmatpush.msra.mxu0 0.0
        %3393 = vmatpush.msra.mxu0 0.0
        %3394 = vmatpush.msra.mxu0 0.0
        %3395 = vmatpush.msra.mxu0 0.0
        %3396 = vmatpush.msra.mxu0 0.0
        %3397 = vmatpush.msra.mxu0 0.0
        %3398 = vmatpush.msra.mxu0 0.0
        %3399 = vmatpush.msra.mxu0 0.0
        %3400 = vmatpush.msra.mxu0 0.0
        %3401 = vmatpush.msra.mxu0 %v3350
        %3402 = vmatpush.msra.mxu0 %v3347
        %3403 = vmatmul.f32.gmra.mxu0 %v3360
        %v3404 = vpop.f32.mrf.mxu0
        %v3405 = vadd.f32 0.0, %v3404
        %3406 = vmatmul.f32.gmra.mxu0 %v3362
        %v3407 = vpop.f32.mrf.mxu0
        %v3408 = vadd.f32 0.0, %v3407
        %3409 = vdwg.mxu0
        %3410 = vmatpush.msra.mxu0 0.0
        %3411 = vmatpush.msra.mxu0 0.0
        %3412 = vmatpush.msra.mxu0 0.0
        %3413 = vmatpush.msra.mxu0 0.0
        %3414 = vmatpush.msra.mxu0 0.0
        %3415 = vmatpush.msra.mxu0 0.0
        %3416 = vmatpush.msra.mxu0 0.0
        %3417 = vmatpush.msra.mxu0 0.0
        %3418 = vmatpush.msra.mxu0 0.0
        %3419 = vmatpush.msra.mxu0 0.0
        %3420 = vmatpush.msra.mxu0 0.0
        %3421 = vmatpush.msra.mxu0 0.0
        %3422 = vmatpush.msra.mxu0 0.0
        %3423 = vmatpush.msra.mxu0 0.0
        %3424 = vmatpush.msra.mxu0 %v3351
        %3425 = vmatpush.msra.mxu0 %v3348
        %3426 = vmatmul.f32.gmra.mxu0 %v3360
        %v3427 = vpop.f32.mrf.mxu0
        %v3428 = vadd.f32 0.0, %v3427
        %3429 = vmatmul.f32.gmra.mxu0 %v3362
        %v3430 = vpop.f32.mrf.mxu0
        %v3431 = vadd.f32 0.0, %v3430
        %3432 = vdwg.mxu0
        %3433 = vmatpush.msra.mxu0 0.0
        %3434 = vmatpush.msra.mxu0 0.0
        %3435 = vmatpush.msra.mxu0 0.0
        %3436 = vmatpush.msra.mxu0 0.0
        %3437 = vmatpush.msra.mxu0 0.0
        %3438 = vmatpush.msra.mxu0 0.0
        %3439 = vmatpush.msra.mxu0 0.0
        %3440 = vmatpush.msra.mxu0 0.0
        %3441 = vmatpush.msra.mxu0 0.0
        %3442 = vmatpush.msra.mxu0 0.0
        %3443 = vmatpush.msra.mxu0 0.0
        %3444 = vmatpush.msra.mxu0 0.0
        %3445 = vmatpush.msra.mxu0 0.0
        %3446 = vmatpush.msra.mxu0 0.0
        %3447 = vmatpush.msra.mxu0 %v3344
        %3448 = vmatpush.msra.mxu0 %v3336
        %3449 = vmatmul.f32.gmra.mxu0 %v3360
        %v3450 = vpop.f32.mrf.mxu0
        %v3451 = vadd.f32 0.0, %v3450
        %3452 = vmatmul.f32.gmra.mxu0 %v3362
        %v3453 = vpop.f32.mrf.mxu0
        %v3454 = vadd.f32 0.0, %v3453
        %3455 = vdwg.mxu0
        %v3456 = vadd.f32 %v3317, %v3382
        %v3457 = vadd.f32 %v3318, %v3405
        %v3458 = vadd.f32 %v3319, %v3428
        %v3459 = vadd.f32 %v3320, %v3451
        %v3460 = vadd.f32 %v3321, %v3385
        %v3461 = vadd.f32 %v3322, %v3408
        %v3462 = vadd.f32 %v3323, %v3431
        %v3463 = vadd.f32 %v3324, %v3454
        %3464 = vrot.lane.b32.xlu0 %v2744, 48
        %v3465 = vpop.permute.xlu0 %3464
        %3466 = vrot.lane.b32.xlu0 %v2745, 48
        %v3467 = vpop.permute.xlu0 %3466
        %3468 = vrot.lane.b32.xlu0 %v470, 124
        %v3469 = vpop.permute.xlu0 %3468
        %3470 = vrot.lane.b32.xlu0 %v471, 124
        %v3471 = vpop.permute.xlu0 %3470
        %3472 = vrot.lane.b32.xlu0 %v472, 124
        %v3473 = vpop.permute.xlu0 %3472
        %3474 = vrot.lane.b32.xlu0 %v473, 124
        %v3475 = vpop.permute.xlu0 %3474
        %3476 = vrot.lane.b32.xlu0 %v475, 124
        %v3477 = vpop.permute.xlu0 %3476
        %3478 = vrot.lane.b32.xlu0 %v476, 124
        %v3479 = vpop.permute.xlu0 %3478
        %3480 = vrot.lane.b32.xlu0 %v477, 124
        %v3481 = vpop.permute.xlu0 %3480
        %3482 = vrot.lane.b32.xlu0 %v478, 124
        %v3483 = vpop.permute.xlu0 %3482
        %v3484 = vsel %vm3068, %v3469, %v3471
        %v3485 = vsel %vm3068, %v3471, %v3473
        %v3486 = vsel %vm3068, %v3473, %v3475
        %v3487 = vsel %vm3068, %v3477, %v3479
        %v3488 = vsel %vm3068, %v3479, %v3481
        %v3489 = vsel %vm3068, %v3481, %v3483
        %v3498 = vsel %vm532, %v3465, 0
        %v3500 = vsel %vm532, %v3467, 0
        %3502 = vmatpush.msra.mxu0 0.0
        %3503 = vmatpush.msra.mxu0 0.0
        %3504 = vmatpush.msra.mxu0 0.0
        %3505 = vmatpush.msra.mxu0 0.0
        %3506 = vmatpush.msra.mxu0 0.0
        %3507 = vmatpush.msra.mxu0 0.0
        %3508 = vmatpush.msra.mxu0 0.0
        %3509 = vmatpush.msra.mxu0 0.0
        %3510 = vmatpush.msra.mxu0 0.0
        %3511 = vmatpush.msra.mxu0 0.0
        %3512 = vmatpush.msra.mxu0 0.0
        %3513 = vmatpush.msra.mxu0 0.0
        %3514 = vmatpush.msra.mxu0 0.0
        %3515 = vmatpush.msra.mxu0 0.0
        %3516 = vmatpush.msra.mxu0 %v3487
        %3517 = vmatpush.msra.mxu0 %v3484
        %3518 = vmatmul.f32.gmra.mxu0 %v3498
        %v3519 = vpop.f32.mrf.mxu0
        %v3520 = vadd.f32 0.0, %v3519
        %3521 = vmatmul.f32.gmra.mxu0 %v3500
        %v3522 = vpop.f32.mrf.mxu0
        %v3523 = vadd.f32 0.0, %v3522
        %3524 = vdwg.mxu0
        %3525 = vmatpush.msra.mxu0 0.0
        %3526 = vmatpush.msra.mxu0 0.0
        %3527 = vmatpush.msra.mxu0 0.0
        %3528 = vmatpush.msra.mxu0 0.0
        %3529 = vmatpush.msra.mxu0 0.0
        %3530 = vmatpush.msra.mxu0 0.0
        %3531 = vmatpush.msra.mxu0 0.0
        %3532 = vmatpush.msra.mxu0 0.0
        %3533 = vmatpush.msra.mxu0 0.0
        %3534 = vmatpush.msra.mxu0 0.0
        %3535 = vmatpush.msra.mxu0 0.0
        %3536 = vmatpush.msra.mxu0 0.0
        %3537 = vmatpush.msra.mxu0 0.0
        %3538 = vmatpush.msra.mxu0 0.0
        %3539 = vmatpush.msra.mxu0 %v3488
        %3540 = vmatpush.msra.mxu0 %v3485
        %3541 = vmatmul.f32.gmra.mxu0 %v3498
        %v3542 = vpop.f32.mrf.mxu0
        %v3543 = vadd.f32 0.0, %v3542
        %3544 = vmatmul.f32.gmra.mxu0 %v3500
        %v3545 = vpop.f32.mrf.mxu0
        %v3546 = vadd.f32 0.0, %v3545
        %3547 = vdwg.mxu0
        %3548 = vmatpush.msra.mxu0 0.0
        %3549 = vmatpush.msra.mxu0 0.0
        %3550 = vmatpush.msra.mxu0 0.0
        %3551 = vmatpush.msra.mxu0 0.0
        %3552 = vmatpush.msra.mxu0 0.0
        %3553 = vmatpush.msra.mxu0 0.0
        %3554 = vmatpush.msra.mxu0 0.0
        %3555 = vmatpush.msra.mxu0 0.0
        %3556 = vmatpush.msra.mxu0 0.0
        %3557 = vmatpush.msra.mxu0 0.0
        %3558 = vmatpush.msra.mxu0 0.0
        %3559 = vmatpush.msra.mxu0 0.0
        %3560 = vmatpush.msra.mxu0 0.0
        %3561 = vmatpush.msra.mxu0 0.0
        %3562 = vmatpush.msra.mxu0 %v3489
        %3563 = vmatpush.msra.mxu0 %v3486
        %3564 = vmatmul.f32.gmra.mxu0 %v3498
        %v3565 = vpop.f32.mrf.mxu0
        %v3566 = vadd.f32 0.0, %v3565
        %3567 = vmatmul.f32.gmra.mxu0 %v3500
        %v3568 = vpop.f32.mrf.mxu0
        %v3569 = vadd.f32 0.0, %v3568
        %3570 = vdwg.mxu0
        %3571 = vmatpush.msra.mxu0 0.0
        %3572 = vmatpush.msra.mxu0 0.0
        %3573 = vmatpush.msra.mxu0 0.0
        %3574 = vmatpush.msra.mxu0 0.0
        %3575 = vmatpush.msra.mxu0 0.0
        %3576 = vmatpush.msra.mxu0 0.0
        %3577 = vmatpush.msra.mxu0 0.0
        %3578 = vmatpush.msra.mxu0 0.0
        %3579 = vmatpush.msra.mxu0 0.0
        %3580 = vmatpush.msra.mxu0 0.0
        %3581 = vmatpush.msra.mxu0 0.0
        %3582 = vmatpush.msra.mxu0 0.0
        %3583 = vmatpush.msra.mxu0 0.0
        %3584 = vmatpush.msra.mxu0 0.0
        %3585 = vmatpush.msra.mxu0 %v3483
        %3586 = vmatpush.msra.mxu0 %v3475
        %3587 = vmatmul.f32.gmra.mxu0 %v3498
        %v3588 = vpop.f32.mrf.mxu0
        %v3589 = vadd.f32 0.0, %v3588
        %3590 = vmatmul.f32.gmra.mxu0 %v3500
        %v3591 = vpop.f32.mrf.mxu0
        %v3592 = vadd.f32 0.0, %v3591
        %3593 = vdwg.mxu0
        %v3594 = vadd.f32 %v3456, %v3520
        %v3595 = vadd.f32 %v3457, %v3543
        %v3596 = vadd.f32 %v3458, %v3566
        %v3597 = vadd.f32 %v3459, %v3589
        %v3598 = vadd.f32 %v3460, %v3523
        %v3599 = vadd.f32 %v3461, %v3546
        %v3600 = vadd.f32 %v3462, %v3569
        %v3601 = vadd.f32 %v3463, %v3592
        %3602 = vrot.lane.b32.xlu0 %v2744, 32
        %v3603 = vpop.permute.xlu0 %3602
        %3604 = vrot.lane.b32.xlu0 %v2745, 32
        %v3605 = vpop.permute.xlu0 %3604
        %v3606 = vsel %vm532, %v3603, 0
        %v3608 = vsel %vm532, %v3605, 0
        %3610 = vmatpush.msra.mxu0 0.0
        %3611 = vmatpush.msra.mxu0 0.0
        %3612 = vmatpush.msra.mxu0 0.0
        %3613 = vmatpush.msra.mxu0 0.0
        %3614 = vmatpush.msra.mxu0 0.0
        %3615 = vmatpush.msra.mxu0 0.0
        %3616 = vmatpush.msra.mxu0 0.0
        %3617 = vmatpush.msra.mxu0 0.0
        %3618 = vmatpush.msra.mxu0 0.0
        %3619 = vmatpush.msra.mxu0 0.0
        %3620 = vmatpush.msra.mxu0 0.0
        %3621 = vmatpush.msra.mxu0 0.0
        %3622 = vmatpush.msra.mxu0 0.0
        %3623 = vmatpush.msra.mxu0 0.0
        %3624 = vmatpush.msra.mxu0 %v1070
        %3625 = vmatpush.msra.mxu0 %v1067
        %3626 = vmatmul.f32.gmra.mxu0 %v3606
        %v3627 = vpop.f32.mrf.mxu0
        %v3628 = vadd.f32 0.0, %v3627
        %3629 = vmatmul.f32.gmra.mxu0 %v3608
        %v3630 = vpop.f32.mrf.mxu0
        %v3631 = vadd.f32 0.0, %v3630
        %3632 = vdwg.mxu0
        %3633 = vmatpush.msra.mxu0 0.0
        %3634 = vmatpush.msra.mxu0 0.0
        %3635 = vmatpush.msra.mxu0 0.0
        %3636 = vmatpush.msra.mxu0 0.0
        %3637 = vmatpush.msra.mxu0 0.0
        %3638 = vmatpush.msra.mxu0 0.0
        %3639 = vmatpush.msra.mxu0 0.0
        %3640 = vmatpush.msra.mxu0 0.0
        %3641 = vmatpush.msra.mxu0 0.0
        %3642 = vmatpush.msra.mxu0 0.0
        %3643 = vmatpush.msra.mxu0 0.0
        %3644 = vmatpush.msra.mxu0 0.0
        %3645 = vmatpush.msra.mxu0 0.0
        %3646 = vmatpush.msra.mxu0 0.0
        %3647 = vmatpush.msra.mxu0 %v1071
        %3648 = vmatpush.msra.mxu0 %v1068
        %3649 = vmatmul.f32.gmra.mxu0 %v3606
        %v3650 = vpop.f32.mrf.mxu0
        %v3651 = vadd.f32 0.0, %v3650
        %3652 = vmatmul.f32.gmra.mxu0 %v3608
        %v3653 = vpop.f32.mrf.mxu0
        %v3654 = vadd.f32 0.0, %v3653
        %3655 = vdwg.mxu0
        %3656 = vmatpush.msra.mxu0 0.0
        %3657 = vmatpush.msra.mxu0 0.0
        %3658 = vmatpush.msra.mxu0 0.0
        %3659 = vmatpush.msra.mxu0 0.0
        %3660 = vmatpush.msra.mxu0 0.0
        %3661 = vmatpush.msra.mxu0 0.0
        %3662 = vmatpush.msra.mxu0 0.0
        %3663 = vmatpush.msra.mxu0 0.0
        %3664 = vmatpush.msra.mxu0 0.0
        %3665 = vmatpush.msra.mxu0 0.0
        %3666 = vmatpush.msra.mxu0 0.0
        %3667 = vmatpush.msra.mxu0 0.0
        %3668 = vmatpush.msra.mxu0 0.0
        %3669 = vmatpush.msra.mxu0 0.0
        %3670 = vmatpush.msra.mxu0 %v1072
        %3671 = vmatpush.msra.mxu0 %v1069
        %3672 = vmatmul.f32.gmra.mxu0 %v3606
        %v3673 = vpop.f32.mrf.mxu0
        %v3674 = vadd.f32 0.0, %v3673
        %3675 = vmatmul.f32.gmra.mxu0 %v3608
        %v3676 = vpop.f32.mrf.mxu0
        %v3677 = vadd.f32 0.0, %v3676
        %3678 = vdwg.mxu0
        %3679 = vmatpush.msra.mxu0 0.0
        %3680 = vmatpush.msra.mxu0 0.0
        %3681 = vmatpush.msra.mxu0 0.0
        %3682 = vmatpush.msra.mxu0 0.0
        %3683 = vmatpush.msra.mxu0 0.0
        %3684 = vmatpush.msra.mxu0 0.0
        %3685 = vmatpush.msra.mxu0 0.0
        %3686 = vmatpush.msra.mxu0 0.0
        %3687 = vmatpush.msra.mxu0 0.0
        %3688 = vmatpush.msra.mxu0 0.0
        %3689 = vmatpush.msra.mxu0 0.0
        %3690 = vmatpush.msra.mxu0 0.0
        %3691 = vmatpush.msra.mxu0 0.0
        %3692 = vmatpush.msra.mxu0 0.0
        %3693 = vmatpush.msra.mxu0 %v1065
        %3694 = vmatpush.msra.mxu0 %v1057
        %3695 = vmatmul.f32.gmra.mxu0 %v3606
        %v3696 = vpop.f32.mrf.mxu0
        %v3697 = vadd.f32 0.0, %v3696
        %3698 = vmatmul.f32.gmra.mxu0 %v3608
        %v3699 = vpop.f32.mrf.mxu0
        %v3700 = vadd.f32 0.0, %v3699
        %3701 = vdwg.mxu0
        %v3702 = vadd.f32 %v3594, %v3628
        %v3703 = vadd.f32 %v3595, %v3651
        %v3704 = vadd.f32 %v3596, %v3674
        %v3705 = vadd.f32 %v3597, %v3697
        %v3706 = vadd.f32 %v3598, %v3631
        %v3707 = vadd.f32 %v3599, %v3654
        %v3708 = vadd.f32 %v3600, %v3677
        %v3709 = vadd.f32 %v3601, %v3700
        %3710 = vrot.lane.b32.xlu0 %v2744, 16
        %v3711 = vpop.permute.xlu0 %3710
        %3712 = vrot.lane.b32.xlu0 %v2745, 16
        %v3713 = vpop.permute.xlu0 %3712
        %3714 = vrot.lane.b32.xlu0 %v470, 116
        %v3715 = vpop.permute.xlu0 %3714
        %3716 = vrot.lane.b32.xlu0 %v471, 116
        %v3717 = vpop.permute.xlu0 %3716
        %3718 = vrot.lane.b32.xlu0 %v472, 116
        %v3719 = vpop.permute.xlu0 %3718
        %3720 = vrot.lane.b32.xlu0 %v473, 116
        %v3721 = vpop.permute.xlu0 %3720
        %3722 = vrot.lane.b32.xlu0 %v475, 116
        %v3723 = vpop.permute.xlu0 %3722
        %3724 = vrot.lane.b32.xlu0 %v476, 116
        %v3725 = vpop.permute.xlu0 %3724
        %3726 = vrot.lane.b32.xlu0 %v477, 116
        %v3727 = vpop.permute.xlu0 %3726
        %3728 = vrot.lane.b32.xlu0 %v478, 116
        %v3729 = vpop.permute.xlu0 %3728
        %v3730 = vsel %vm3345, %v3715, %v3717
        %v3731 = vsel %vm3345, %v3717, %v3719
        %v3732 = vsel %vm3345, %v3719, %v3721
        %v3733 = vsel %vm3345, %v3723, %v3725
        %v3734 = vsel %vm3345, %v3725, %v3727
        %v3735 = vsel %vm3345, %v3727, %v3729
        %v3744 = vsel %vm532, %v3711, 0
        %v3746 = vsel %vm532, %v3713, 0
        %3748 = vmatpush.msra.mxu0 0.0
        %3749 = vmatpush.msra.mxu0 0.0
        %3750 = vmatpush.msra.mxu0 0.0
        %3751 = vmatpush.msra.mxu0 0.0
        %3752 = vmatpush.msra.mxu0 0.0
        %3753 = vmatpush.msra.mxu0 0.0
        %3754 = vmatpush.msra.mxu0 0.0
        %3755 = vmatpush.msra.mxu0 0.0
        %3756 = vmatpush.msra.mxu0 0.0
        %3757 = vmatpush.msra.mxu0 0.0
        %3758 = vmatpush.msra.mxu0 0.0
        %3759 = vmatpush.msra.mxu0 0.0
        %3760 = vmatpush.msra.mxu0 0.0
        %3761 = vmatpush.msra.mxu0 0.0
        %3762 = vmatpush.msra.mxu0 %v3733
        %3763 = vmatpush.msra.mxu0 %v3730
        %3764 = vmatmul.f32.gmra.mxu0 %v3744
        %v3765 = vpop.f32.mrf.mxu0
        %v3766 = vadd.f32 0.0, %v3765
        %3767 = vmatmul.f32.gmra.mxu0 %v3746
        %v3768 = vpop.f32.mrf.mxu0
        %v3769 = vadd.f32 0.0, %v3768
        %3770 = vdwg.mxu0
        %3771 = vmatpush.msra.mxu0 0.0
        %3772 = vmatpush.msra.mxu0 0.0
        %3773 = vmatpush.msra.mxu0 0.0
        %3774 = vmatpush.msra.mxu0 0.0
        %3775 = vmatpush.msra.mxu0 0.0
        %3776 = vmatpush.msra.mxu0 0.0
        %3777 = vmatpush.msra.mxu0 0.0
        %3778 = vmatpush.msra.mxu0 0.0
        %3779 = vmatpush.msra.mxu0 0.0
        %3780 = vmatpush.msra.mxu0 0.0
        %3781 = vmatpush.msra.mxu0 0.0
        %3782 = vmatpush.msra.mxu0 0.0
        %3783 = vmatpush.msra.mxu0 0.0
        %3784 = vmatpush.msra.mxu0 0.0
        %3785 = vmatpush.msra.mxu0 %v3734
        %3786 = vmatpush.msra.mxu0 %v3731
        %3787 = vmatmul.f32.gmra.mxu0 %v3744
        %v3788 = vpop.f32.mrf.mxu0
        %v3789 = vadd.f32 0.0, %v3788
        %3790 = vmatmul.f32.gmra.mxu0 %v3746
        %v3791 = vpop.f32.mrf.mxu0
        %v3792 = vadd.f32 0.0, %v3791
        %3793 = vdwg.mxu0
        %3794 = vmatpush.msra.mxu0 0.0
        %3795 = vmatpush.msra.mxu0 0.0
        %3796 = vmatpush.msra.mxu0 0.0
        %3797 = vmatpush.msra.mxu0 0.0
        %3798 = vmatpush.msra.mxu0 0.0
        %3799 = vmatpush.msra.mxu0 0.0
        %3800 = vmatpush.msra.mxu0 0.0
        %3801 = vmatpush.msra.mxu0 0.0
        %3802 = vmatpush.msra.mxu0 0.0
        %3803 = vmatpush.msra.mxu0 0.0
        %3804 = vmatpush.msra.mxu0 0.0
        %3805 = vmatpush.msra.mxu0 0.0
        %3806 = vmatpush.msra.mxu0 0.0
        %3807 = vmatpush.msra.mxu0 0.0
        %3808 = vmatpush.msra.mxu0 %v3735
        %3809 = vmatpush.msra.mxu0 %v3732
        %3810 = vmatmul.f32.gmra.mxu0 %v3744
        %v3811 = vpop.f32.mrf.mxu0
        %v3812 = vadd.f32 0.0, %v3811
        %3813 = vmatmul.f32.gmra.mxu0 %v3746
        %v3814 = vpop.f32.mrf.mxu0
        %v3815 = vadd.f32 0.0, %v3814
        %3816 = vdwg.mxu0
        %3817 = vmatpush.msra.mxu0 0.0
        %3818 = vmatpush.msra.mxu0 0.0
        %3819 = vmatpush.msra.mxu0 0.0
        %3820 = vmatpush.msra.mxu0 0.0
        %3821 = vmatpush.msra.mxu0 0.0
        %3822 = vmatpush.msra.mxu0 0.0
        %3823 = vmatpush.msra.mxu0 0.0
        %3824 = vmatpush.msra.mxu0 0.0
        %3825 = vmatpush.msra.mxu0 0.0
        %3826 = vmatpush.msra.mxu0 0.0
        %3827 = vmatpush.msra.mxu0 0.0
        %3828 = vmatpush.msra.mxu0 0.0
        %3829 = vmatpush.msra.mxu0 0.0
        %3830 = vmatpush.msra.mxu0 0.0
        %3831 = vmatpush.msra.mxu0 %v3729
        %3832 = vmatpush.msra.mxu0 %v3721
        %3833 = vmatmul.f32.gmra.mxu0 %v3744
        %v3834 = vpop.f32.mrf.mxu0
        %v3835 = vadd.f32 0.0, %v3834
        %3836 = vmatmul.f32.gmra.mxu0 %v3746
        %v3837 = vpop.f32.mrf.mxu0
        %v3838 = vadd.f32 0.0, %v3837
        %3839 = vdwg.mxu0
        %v3840 = vadd.f32 %v3702, %v3766
        %v3841 = vadd.f32 %v3703, %v3789
        %v3842 = vadd.f32 %v3704, %v3812
        %v3843 = vadd.f32 %v3705, %v3835
        %v3844 = vadd.f32 %v3706, %v3769
        %v3845 = vadd.f32 %v3707, %v3792
        %v3846 = vadd.f32 %v3708, %v3815
        %v3847 = vadd.f32 %v3709, %v3838
        %v3848 = vld [vmem:[#allocation9 + $0x18] sm:$0xff]
        %v3849 = vld [vmem:[#allocation9 + $0x40] sm:$0xff]
        %3850 = vrot.lane.b32.xlu0 %v1325, 124
        %v3851 = vpop.permute.xlu0 %3850
        %3852 = vrot.lane.b32.xlu0 %v1326, 124
        %v3853 = vpop.permute.xlu0 %3852
        %3854 = vrot.lane.b32.xlu0 %v1327, 124
        %v3855 = vpop.permute.xlu0 %3854
        %3856 = vrot.lane.b32.xlu0 %v1328, 124
        %v3857 = vpop.permute.xlu0 %3856
        %3858 = vrot.lane.b32.xlu0 %v1330, 124
        %v3859 = vpop.permute.xlu0 %3858
        %3860 = vrot.lane.b32.xlu0 %v1331, 124
        %v3861 = vpop.permute.xlu0 %3860
        %3862 = vrot.lane.b32.xlu0 %v1332, 124
        %v3863 = vpop.permute.xlu0 %3862
        %3864 = vrot.lane.b32.xlu0 %v1333, 124
        %v3865 = vpop.permute.xlu0 %3864
        %v3866 = vsel %vm3068, %v3851, %v3853
        %v3867 = vsel %vm3068, %v3853, %v3855
        %v3868 = vsel %vm3068, %v3855, %v3857
        %v3869 = vsel %vm3068, %v3859, %v3861
        %v3870 = vsel %vm3068, %v3861, %v3863
        %v3871 = vsel %vm3068, %v3863, %v3865
        %v3881 = vsel %vm532, %v3848, 0
        %v3884 = vsel %vm532, %v3849, 0
        %3886 = vmatpush.msra.mxu0 0.0
        %3887 = vmatpush.msra.mxu0 0.0
        %3888 = vmatpush.msra.mxu0 0.0
        %3889 = vmatpush.msra.mxu0 0.0
        %3890 = vmatpush.msra.mxu0 0.0
        %3891 = vmatpush.msra.mxu0 0.0
        %3892 = vmatpush.msra.mxu0 0.0
        %3893 = vmatpush.msra.mxu0 0.0
        %3894 = vmatpush.msra.mxu0 0.0
        %3895 = vmatpush.msra.mxu0 0.0
        %3896 = vmatpush.msra.mxu0 0.0
        %3897 = vmatpush.msra.mxu0 0.0
        %3898 = vmatpush.msra.mxu0 0.0
        %3899 = vmatpush.msra.mxu0 0.0
        %3900 = vmatpush.msra.mxu0 %v3869
        %3901 = vmatpush.msra.mxu0 %v3866
        %3902 = vmatmul.f32.gmra.mxu0 %v3881
        %v3903 = vpop.f32.mrf.mxu0
        %v3904 = vadd.f32 0.0, %v3903
        %3905 = vmatmul.f32.gmra.mxu0 %v3884
        %v3906 = vpop.f32.mrf.mxu0
        %v3907 = vadd.f32 0.0, %v3906
        %3908 = vdwg.mxu0
        %3909 = vmatpush.msra.mxu0 0.0
        %3910 = vmatpush.msra.mxu0 0.0
        %3911 = vmatpush.msra.mxu0 0.0
        %3912 = vmatpush.msra.mxu0 0.0
        %3913 = vmatpush.msra.mxu0 0.0
        %3914 = vmatpush.msra.mxu0 0.0
        %3915 = vmatpush.msra.mxu0 0.0
        %3916 = vmatpush.msra.mxu0 0.0
        %3917 = vmatpush.msra.mxu0 0.0
        %3918 = vmatpush.msra.mxu0 0.0
        %3919 = vmatpush.msra.mxu0 0.0
        %3920 = vmatpush.msra.mxu0 0.0
        %3921 = vmatpush.msra.mxu0 0.0
        %3922 = vmatpush.msra.mxu0 0.0
        %3923 = vmatpush.msra.mxu0 %v3870
        %3924 = vmatpush.msra.mxu0 %v3867
        %3925 = vmatmul.f32.gmra.mxu0 %v3881
        %v3926 = vpop.f32.mrf.mxu0
        %v3927 = vadd.f32 0.0, %v3926
        %3928 = vmatmul.f32.gmra.mxu0 %v3884
        %v3929 = vpop.f32.mrf.mxu0
        %v3930 = vadd.f32 0.0, %v3929
        %3931 = vdwg.mxu0
        %3932 = vmatpush.msra.mxu0 0.0
        %3933 = vmatpush.msra.mxu0 0.0
        %3934 = vmatpush.msra.mxu0 0.0
        %3935 = vmatpush.msra.mxu0 0.0
        %3936 = vmatpush.msra.mxu0 0.0
        %3937 = vmatpush.msra.mxu0 0.0
        %3938 = vmatpush.msra.mxu0 0.0
        %3939 = vmatpush.msra.mxu0 0.0
        %3940 = vmatpush.msra.mxu0 0.0
        %3941 = vmatpush.msra.mxu0 0.0
        %3942 = vmatpush.msra.mxu0 0.0
        %3943 = vmatpush.msra.mxu0 0.0
        %3944 = vmatpush.msra.mxu0 0.0
        %3945 = vmatpush.msra.mxu0 0.0
        %3946 = vmatpush.msra.mxu0 %v3871
        %3947 = vmatpush.msra.mxu0 %v3868
        %3948 = vmatmul.f32.gmra.mxu0 %v3881
        %v3949 = vpop.f32.mrf.mxu0
        %v3950 = vadd.f32 0.0, %v3949
        %3951 = vmatmul.f32.gmra.mxu0 %v3884
        %v3952 = vpop.f32.mrf.mxu0
        %v3953 = vadd.f32 0.0, %v3952
        %3954 = vdwg.mxu0
        %3955 = vmatpush.msra.mxu0 0.0
        %3956 = vmatpush.msra.mxu0 0.0
        %3957 = vmatpush.msra.mxu0 0.0
        %3958 = vmatpush.msra.mxu0 0.0
        %3959 = vmatpush.msra.mxu0 0.0
        %3960 = vmatpush.msra.mxu0 0.0
        %3961 = vmatpush.msra.mxu0 0.0
        %3962 = vmatpush.msra.mxu0 0.0
        %3963 = vmatpush.msra.mxu0 0.0
        %3964 = vmatpush.msra.mxu0 0.0
        %3965 = vmatpush.msra.mxu0 0.0
        %3966 = vmatpush.msra.mxu0 0.0
        %3967 = vmatpush.msra.mxu0 0.0
        %3968 = vmatpush.msra.mxu0 0.0
        %3969 = vmatpush.msra.mxu0 %v3865
        %3970 = vmatpush.msra.mxu0 %v3857
        %3971 = vmatmul.f32.gmra.mxu0 %v3881
        %v3972 = vpop.f32.mrf.mxu0
        %v3973 = vadd.f32 0.0, %v3972
        %3974 = vmatmul.f32.gmra.mxu0 %v3884
        %v3975 = vpop.f32.mrf.mxu0
        %v3976 = vadd.f32 0.0, %v3975
        %3977 = vdwg.mxu0
        %v3978 = vadd.f32 %v3840, %v3904
        %v3979 = vadd.f32 %v3841, %v3927
        %v3980 = vadd.f32 %v3842, %v3950
        %v3981 = vadd.f32 %v3843, %v3973
        %v3982 = vadd.f32 %v3844, %v3907
        %v3983 = vadd.f32 %v3845, %v3930
        %v3984 = vadd.f32 %v3846, %v3953
        %v3985 = vadd.f32 %v3847, %v3976
        %3986 = vrot.lane.b32.xlu0 %v3848, 112
        %v3987 = vpop.permute.xlu0 %3986
        %3988 = vrot.lane.b32.xlu0 %v3849, 112
        %v3989 = vpop.permute.xlu0 %3988
        %3990 = vrot.lane.b32.xlu0 %v1325, 120
        %v3991 = vpop.permute.xlu0 %3990
        %3992 = vrot.lane.b32.xlu0 %v1326, 120
        %v3993 = vpop.permute.xlu0 %3992
        %3994 = vrot.lane.b32.xlu0 %v1327, 120
        %v3995 = vpop.permute.xlu0 %3994
        %3996 = vrot.lane.b32.xlu0 %v1328, 120
        %v3997 = vpop.permute.xlu0 %3996
        %3998 = vrot.lane.b32.xlu0 %v1330, 120
        %v3999 = vpop.permute.xlu0 %3998
        %4000 = vrot.lane.b32.xlu0 %v1331, 120
        %v4001 = vpop.permute.xlu0 %4000
        %4002 = vrot.lane.b32.xlu0 %v1332, 120
        %v4003 = vpop.permute.xlu0 %4002
        %4004 = vrot.lane.b32.xlu0 %v1333, 120
        %v4005 = vpop.permute.xlu0 %4004
        %v4006 = vsel %vm1066, %v3991, %v3993
        %v4007 = vsel %vm1066, %v3993, %v3995
        %v4008 = vsel %vm1066, %v3995, %v3997
        %v4009 = vsel %vm1066, %v3999, %v4001
        %v4010 = vsel %vm1066, %v4001, %v4003
        %v4011 = vsel %vm1066, %v4003, %v4005
        %v4020 = vsel %vm532, %v3987, 0
        %v4022 = vsel %vm532, %v3989, 0
        %4024 = vmatpush.msra.mxu0 0.0
        %4025 = vmatpush.msra.mxu0 0.0
        %4026 = vmatpush.msra.mxu0 0.0
        %4027 = vmatpush.msra.mxu0 0.0
        %4028 = vmatpush.msra.mxu0 0.0
        %4029 = vmatpush.msra.mxu0 0.0
        %4030 = vmatpush.msra.mxu0 0.0
        %4031 = vmatpush.msra.mxu0 0.0
        %4032 = vmatpush.msra.mxu0 0.0
        %4033 = vmatpush.msra.mxu0 0.0
        %4034 = vmatpush.msra.mxu0 0.0
        %4035 = vmatpush.msra.mxu0 0.0
        %4036 = vmatpush.msra.mxu0 0.0
        %4037 = vmatpush.msra.mxu0 0.0
        %4038 = vmatpush.msra.mxu0 %v4009
        %4039 = vmatpush.msra.mxu0 %v4006
        %4040 = vmatmul.f32.gmra.mxu0 %v4020
        %v4041 = vpop.f32.mrf.mxu0
        %v4042 = vadd.f32 0.0, %v4041
        %4043 = vmatmul.f32.gmra.mxu0 %v4022
        %v4044 = vpop.f32.mrf.mxu0
        %v4045 = vadd.f32 0.0, %v4044
        %4046 = vdwg.mxu0
        %4047 = vmatpush.msra.mxu0 0.0
        %4048 = vmatpush.msra.mxu0 0.0
        %4049 = vmatpush.msra.mxu0 0.0
        %4050 = vmatpush.msra.mxu0 0.0
        %4051 = vmatpush.msra.mxu0 0.0
        %4052 = vmatpush.msra.mxu0 0.0
        %4053 = vmatpush.msra.mxu0 0.0
        %4054 = vmatpush.msra.mxu0 0.0
        %4055 = vmatpush.msra.mxu0 0.0
        %4056 = vmatpush.msra.mxu0 0.0
        %4057 = vmatpush.msra.mxu0 0.0
        %4058 = vmatpush.msra.mxu0 0.0
        %4059 = vmatpush.msra.mxu0 0.0
        %4060 = vmatpush.msra.mxu0 0.0
        %4061 = vmatpush.msra.mxu0 %v4010
        %4062 = vmatpush.msra.mxu0 %v4007
        %4063 = vmatmul.f32.gmra.mxu0 %v4020
        %v4064 = vpop.f32.mrf.mxu0
        %v4065 = vadd.f32 0.0, %v4064
        %4066 = vmatmul.f32.gmra.mxu0 %v4022
        %v4067 = vpop.f32.mrf.mxu0
        %v4068 = vadd.f32 0.0, %v4067
        %4069 = vdwg.mxu0
        %4070 = vmatpush.msra.mxu0 0.0
        %4071 = vmatpush.msra.mxu0 0.0
        %4072 = vmatpush.msra.mxu0 0.0
        %4073 = vmatpush.msra.mxu0 0.0
        %4074 = vmatpush.msra.mxu0 0.0
        %4075 = vmatpush.msra.mxu0 0.0
        %4076 = vmatpush.msra.mxu0 0.0
        %4077 = vmatpush.msra.mxu0 0.0
        %4078 = vmatpush.msra.mxu0 0.0
        %4079 = vmatpush.msra.mxu0 0.0
        %4080 = vmatpush.msra.mxu0 0.0
        %4081 = vmatpush.msra.mxu0 0.0
        %4082 = vmatpush.msra.mxu0 0.0
        %4083 = vmatpush.msra.mxu0 0.0
        %4084 = vmatpush.msra.mxu0 %v4011
        %4085 = vmatpush.msra.mxu0 %v4008
        %4086 = vmatmul.f32.gmra.mxu0 %v4020
        %v4087 = vpop.f32.mrf.mxu0
        %v4088 = vadd.f32 0.0, %v4087
        %4089 = vmatmul.f32.gmra.mxu0 %v4022
        %v4090 = vpop.f32.mrf.mxu0
        %v4091 = vadd.f32 0.0, %v4090
        %4092 = vdwg.mxu0
        %4093 = vmatpush.msra.mxu0 0.0
        %4094 = vmatpush.msra.mxu0 0.0
        %4095 = vmatpush.msra.mxu0 0.0
        %4096 = vmatpush.msra.mxu0 0.0
        %4097 = vmatpush.msra.mxu0 0.0
        %4098 = vmatpush.msra.mxu0 0.0
        %4099 = vmatpush.msra.mxu0 0.0
        %4100 = vmatpush.msra.mxu0 0.0
        %4101 = vmatpush.msra.mxu0 0.0
        %4102 = vmatpush.msra.mxu0 0.0
        %4103 = vmatpush.msra.mxu0 0.0
        %4104 = vmatpush.msra.mxu0 0.0
        %4105 = vmatpush.msra.mxu0 0.0
        %4106 = vmatpush.msra.mxu0 0.0
        %4107 = vmatpush.msra.mxu0 %v4005
        %4108 = vmatpush.msra.mxu0 %v3997
        %4109 = vmatmul.f32.gmra.mxu0 %v4020
        %v4110 = vpop.f32.mrf.mxu0
        %v4111 = vadd.f32 0.0, %v4110
        %4112 = vmatmul.f32.gmra.mxu0 %v4022
        %v4113 = vpop.f32.mrf.mxu0
        %v4114 = vadd.f32 0.0, %v4113
        %4115 = vdwg.mxu0
        %v4116 = vadd.f32 %v3978, %v4042
        %v4117 = vadd.f32 %v3979, %v4065
        %v4118 = vadd.f32 %v3980, %v4088
        %v4119 = vadd.f32 %v3981, %v4111
        %v4120 = vadd.f32 %v3982, %v4045
        %v4121 = vadd.f32 %v3983, %v4068
        %v4122 = vadd.f32 %v3984, %v4091
        %v4123 = vadd.f32 %v3985, %v4114
        %4124 = vrot.lane.b32.xlu0 %v3848, 96
        %v4125 = vpop.permute.xlu0 %4124
        %4126 = vrot.lane.b32.xlu0 %v3849, 96
        %v4127 = vpop.permute.xlu0 %4126
        %4128 = vrot.lane.b32.xlu0 %v1325, 116
        %v4129 = vpop.permute.xlu0 %4128
        %4130 = vrot.lane.b32.xlu0 %v1326, 116
        %v4131 = vpop.permute.xlu0 %4130
        %4132 = vrot.lane.b32.xlu0 %v1327, 116
        %v4133 = vpop.permute.xlu0 %4132
        %4134 = vrot.lane.b32.xlu0 %v1328, 116
        %v4135 = vpop.permute.xlu0 %4134
        %4136 = vrot.lane.b32.xlu0 %v1330, 116
        %v4137 = vpop.permute.xlu0 %4136
        %4138 = vrot.lane.b32.xlu0 %v1331, 116
        %v4139 = vpop.permute.xlu0 %4138
        %4140 = vrot.lane.b32.xlu0 %v1332, 116
        %v4141 = vpop.permute.xlu0 %4140
        %4142 = vrot.lane.b32.xlu0 %v1333, 116
        %v4143 = vpop.permute.xlu0 %4142
        %v4144 = vsel %vm3345, %v4129, %v4131
        %v4145 = vsel %vm3345, %v4131, %v4133
        %v4146 = vsel %vm3345, %v4133, %v4135
        %v4147 = vsel %vm3345, %v4137, %v4139
        %v4148 = vsel %vm3345, %v4139, %v4141
        %v4149 = vsel %vm3345, %v4141, %v4143
        %v4158 = vsel %vm532, %v4125, 0
        %v4160 = vsel %vm532, %v4127, 0
        %4162 = vmatpush.msra.mxu0 0.0
        %4163 = vmatpush.msra.mxu0 0.0
        %4164 = vmatpush.msra.mxu0 0.0
        %4165 = vmatpush.msra.mxu0 0.0
        %4166 = vmatpush.msra.mxu0 0.0
        %4167 = vmatpush.msra.mxu0 0.0
        %4168 = vmatpush.msra.mxu0 0.0
        %4169 = vmatpush.msra.mxu0 0.0
        %4170 = vmatpush.msra.mxu0 0.0
        %4171 = vmatpush.msra.mxu0 0.0
        %4172 = vmatpush.msra.mxu0 0.0
        %4173 = vmatpush.msra.mxu0 0.0
        %4174 = vmatpush.msra.mxu0 0.0
        %4175 = vmatpush.msra.mxu0 0.0
        %4176 = vmatpush.msra.mxu0 %v4147
        %4177 = vmatpush.msra.mxu0 %v4144
        %4178 = vmatmul.f32.gmra.mxu0 %v4158
        %v4179 = vpop.f32.mrf.mxu0
        %v4180 = vadd.f32 0.0, %v4179
        %4181 = vmatmul.f32.gmra.mxu0 %v4160
        %v4182 = vpop.f32.mrf.mxu0
        %v4183 = vadd.f32 0.0, %v4182
        %4184 = vdwg.mxu0
        %4185 = vmatpush.msra.mxu0 0.0
        %4186 = vmatpush.msra.mxu0 0.0
        %4187 = vmatpush.msra.mxu0 0.0
        %4188 = vmatpush.msra.mxu0 0.0
        %4189 = vmatpush.msra.mxu0 0.0
        %4190 = vmatpush.msra.mxu0 0.0
        %4191 = vmatpush.msra.mxu0 0.0
        %4192 = vmatpush.msra.mxu0 0.0
        %4193 = vmatpush.msra.mxu0 0.0
        %4194 = vmatpush.msra.mxu0 0.0
        %4195 = vmatpush.msra.mxu0 0.0
        %4196 = vmatpush.msra.mxu0 0.0
        %4197 = vmatpush.msra.mxu0 0.0
        %4198 = vmatpush.msra.mxu0 0.0
        %4199 = vmatpush.msra.mxu0 %v4148
        %4200 = vmatpush.msra.mxu0 %v4145
        %4201 = vmatmul.f32.gmra.mxu0 %v4158
        %v4202 = vpop.f32.mrf.mxu0
        %v4203 = vadd.f32 0.0, %v4202
        %4204 = vmatmul.f32.gmra.mxu0 %v4160
        %v4205 = vpop.f32.mrf.mxu0
        %v4206 = vadd.f32 0.0, %v4205
        %4207 = vdwg.mxu0
        %4208 = vmatpush.msra.mxu0 0.0
        %4209 = vmatpush.msra.mxu0 0.0
        %4210 = vmatpush.msra.mxu0 0.0
        %4211 = vmatpush.msra.mxu0 0.0
        %4212 = vmatpush.msra.mxu0 0.0
        %4213 = vmatpush.msra.mxu0 0.0
        %4214 = vmatpush.msra.mxu0 0.0
        %4215 = vmatpush.msra.mxu0 0.0
        %4216 = vmatpush.msra.mxu0 0.0
        %4217 = vmatpush.msra.mxu0 0.0
        %4218 = vmatpush.msra.mxu0 0.0
        %4219 = vmatpush.msra.mxu0 0.0
        %4220 = vmatpush.msra.mxu0 0.0
        %4221 = vmatpush.msra.mxu0 0.0
        %4222 = vmatpush.msra.mxu0 %v4149
        %4223 = vmatpush.msra.mxu0 %v4146
        %4224 = vmatmul.f32.gmra.mxu0 %v4158
        %v4225 = vpop.f32.mrf.mxu0
        %v4226 = vadd.f32 0.0, %v4225
        %4227 = vmatmul.f32.gmra.mxu0 %v4160
        %v4228 = vpop.f32.mrf.mxu0
        %v4229 = vadd.f32 0.0, %v4228
        %4230 = vdwg.mxu0
        %4231 = vmatpush.msra.mxu0 0.0
        %4232 = vmatpush.msra.mxu0 0.0
        %4233 = vmatpush.msra.mxu0 0.0
        %4234 = vmatpush.msra.mxu0 0.0
        %4235 = vmatpush.msra.mxu0 0.0
        %4236 = vmatpush.msra.mxu0 0.0
        %4237 = vmatpush.msra.mxu0 0.0
        %4238 = vmatpush.msra.mxu0 0.0
        %4239 = vmatpush.msra.mxu0 0.0
        %4240 = vmatpush.msra.mxu0 0.0
        %4241 = vmatpush.msra.mxu0 0.0
        %4242 = vmatpush.msra.mxu0 0.0
        %4243 = vmatpush.msra.mxu0 0.0
        %4244 = vmatpush.msra.mxu0 0.0
        %4245 = vmatpush.msra.mxu0 %v4143
        %4246 = vmatpush.msra.mxu0 %v4135
        %4247 = vmatmul.f32.gmra.mxu0 %v4158
        %v4248 = vpop.f32.mrf.mxu0
        %v4249 = vadd.f32 0.0, %v4248
        %4250 = vmatmul.f32.gmra.mxu0 %v4160
        %v4251 = vpop.f32.mrf.mxu0
        %v4252 = vadd.f32 0.0, %v4251
        %4253 = vdwg.mxu0
        %v4254 = vadd.f32 %v4116, %v4180
        %v4255 = vadd.f32 %v4117, %v4203
        %v4256 = vadd.f32 %v4118, %v4226
        %v4257 = vadd.f32 %v4119, %v4249
        %v4258 = vadd.f32 %v4120, %v4183
        %v4259 = vadd.f32 %v4121, %v4206
        %v4260 = vadd.f32 %v4122, %v4229
        %v4261 = vadd.f32 %v4123, %v4252
        %v4262 = vld [vmem:[%s406] sm:$0xff]
        %v4263 = vld [vmem:[%s406 + $0x8] sm:$0xff]
        %v4264 = vld [vmem:[%s406 + $0x10] sm:$0xff]
        %v4265 = vld [vmem:[%s406 + $0x18] sm:$0xff]
        %v4266 = vld [vmem:[%s406 + $0x40] sm:$0xff]
        %v4267 = vld [vmem:[%s406 + $0x48] sm:$0xff]
        %v4268 = vld [vmem:[%s406 + $0x50] sm:$0xff]
        %v4269 = vld [vmem:[%s406 + $0x58] sm:$0xff]
        %4270 = vrot.lane.b32.xlu0 %v3848, 80
        %v4271 = vpop.permute.xlu0 %4270
        %4272 = vrot.lane.b32.xlu0 %v3849, 80
        %v4273 = vpop.permute.xlu0 %4272
        %v4274 = vsel %vm532, %v4271, 0
        %v4276 = vsel %vm532, %v4273, 0
        %4278 = vmatpush.msra.mxu0 0.0
        %4279 = vmatpush.msra.mxu0 0.0
        %4280 = vmatpush.msra.mxu0 0.0
        %4281 = vmatpush.msra.mxu0 0.0
        %4282 = vmatpush.msra.mxu0 0.0
        %4283 = vmatpush.msra.mxu0 0.0
        %4284 = vmatpush.msra.mxu0 0.0
        %4285 = vmatpush.msra.mxu0 0.0
        %4286 = vmatpush.msra.mxu0 0.0
        %4287 = vmatpush.msra.mxu0 0.0
        %4288 = vmatpush.msra.mxu0 0.0
        %4289 = vmatpush.msra.mxu0 0.0
        %4290 = vmatpush.msra.mxu0 0.0
        %4291 = vmatpush.msra.mxu0 0.0
        %4292 = vmatpush.msra.mxu0 %v4266
        %4293 = vmatpush.msra.mxu0 %v4262
        %4294 = vmatmul.f32.gmra.mxu0 %v4274
        %v4295 = vpop.f32.mrf.mxu0
        %v4296 = vadd.f32 0.0, %v4295
        %4297 = vmatmul.f32.gmra.mxu0 %v4276
        %v4298 = vpop.f32.mrf.mxu0
        %v4299 = vadd.f32 0.0, %v4298
        %4300 = vdwg.mxu0
        %4301 = vmatpush.msra.mxu0 0.0
        %4302 = vmatpush.msra.mxu0 0.0
        %4303 = vmatpush.msra.mxu0 0.0
        %4304 = vmatpush.msra.mxu0 0.0
        %4305 = vmatpush.msra.mxu0 0.0
        %4306 = vmatpush.msra.mxu0 0.0
        %4307 = vmatpush.msra.mxu0 0.0
        %4308 = vmatpush.msra.mxu0 0.0
        %4309 = vmatpush.msra.mxu0 0.0
        %4310 = vmatpush.msra.mxu0 0.0
        %4311 = vmatpush.msra.mxu0 0.0
        %4312 = vmatpush.msra.mxu0 0.0
        %4313 = vmatpush.msra.mxu0 0.0
        %4314 = vmatpush.msra.mxu0 0.0
        %4315 = vmatpush.msra.mxu0 %v4267
        %4316 = vmatpush.msra.mxu0 %v4263
        %4317 = vmatmul.f32.gmra.mxu0 %v4274
        %v4318 = vpop.f32.mrf.mxu0
        %v4319 = vadd.f32 0.0, %v4318
        %4320 = vmatmul.f32.gmra.mxu0 %v4276
        %v4321 = vpop.f32.mrf.mxu0
        %v4322 = vadd.f32 0.0, %v4321
        %4323 = vdwg.mxu0
        %4324 = vmatpush.msra.mxu0 0.0
        %4325 = vmatpush.msra.mxu0 0.0
        %4326 = vmatpush.msra.mxu0 0.0
        %4327 = vmatpush.msra.mxu0 0.0
        %4328 = vmatpush.msra.mxu0 0.0
        %4329 = vmatpush.msra.mxu0 0.0
        %4330 = vmatpush.msra.mxu0 0.0
        %4331 = vmatpush.msra.mxu0 0.0
        %4332 = vmatpush.msra.mxu0 0.0
        %4333 = vmatpush.msra.mxu0 0.0
        %4334 = vmatpush.msra.mxu0 0.0
        %4335 = vmatpush.msra.mxu0 0.0
        %4336 = vmatpush.msra.mxu0 0.0
        %4337 = vmatpush.msra.mxu0 0.0
        %4338 = vmatpush.msra.mxu0 %v4268
        %4339 = vmatpush.msra.mxu0 %v4264
        %4340 = vmatmul.f32.gmra.mxu0 %v4274
        %v4341 = vpop.f32.mrf.mxu0
        %v4342 = vadd.f32 0.0, %v4341
        %4343 = vmatmul.f32.gmra.mxu0 %v4276
        %v4344 = vpop.f32.mrf.mxu0
        %v4345 = vadd.f32 0.0, %v4344
        %4346 = vdwg.mxu0
        %4347 = vmatpush.msra.mxu0 0.0
        %4348 = vmatpush.msra.mxu0 0.0
        %4349 = vmatpush.msra.mxu0 0.0
        %4350 = vmatpush.msra.mxu0 0.0
        %4351 = vmatpush.msra.mxu0 0.0
        %4352 = vmatpush.msra.mxu0 0.0
        %4353 = vmatpush.msra.mxu0 0.0
        %4354 = vmatpush.msra.mxu0 0.0
        %4355 = vmatpush.msra.mxu0 0.0
        %4356 = vmatpush.msra.mxu0 0.0
        %4357 = vmatpush.msra.mxu0 0.0
        %4358 = vmatpush.msra.mxu0 0.0
        %4359 = vmatpush.msra.mxu0 0.0
        %4360 = vmatpush.msra.mxu0 0.0
        %4361 = vmatpush.msra.mxu0 %v4269
        %4362 = vmatpush.msra.mxu0 %v4265
        %4363 = vmatmul.f32.gmra.mxu0 %v4274
        %v4364 = vpop.f32.mrf.mxu0
        %v4365 = vadd.f32 0.0, %v4364
        %4366 = vmatmul.f32.gmra.mxu0 %v4276
        %v4367 = vpop.f32.mrf.mxu0
        %v4368 = vadd.f32 0.0, %v4367
        %4369 = vdwg.mxu0
        %v4370 = vadd.f32 %v4254, %v4296
        %v4371 = vadd.f32 %v4255, %v4319
        %v4372 = vadd.f32 %v4256, %v4342
        %v4373 = vadd.f32 %v4257, %v4365
        %v4374 = vadd.f32 %v4258, %v4299
        %v4375 = vadd.f32 %v4259, %v4322
        %v4376 = vadd.f32 %v4260, %v4345
        %v4377 = vadd.f32 %v4261, %v4368
        %4378 = vrot.lane.b32.xlu0 %v3848, 64
        %v4379 = vpop.permute.xlu0 %4378
        %4380 = vrot.lane.b32.xlu0 %v3849, 64
        %v4381 = vpop.permute.xlu0 %4380
        %4390 = vrot.lane.b32.xlu0 %v4262, 120
        %v4391 = vpop.permute.xlu0 %4390
        %4392 = vrot.lane.b32.xlu0 %v4263, 120
        %v4393 = vpop.permute.xlu0 %4392
        %4394 = vrot.lane.b32.xlu0 %v4264, 120
        %v4395 = vpop.permute.xlu0 %4394
        %4396 = vrot.lane.b32.xlu0 %v4265, 120
        %v4397 = vpop.permute.xlu0 %4396
        %4398 = vrot.lane.b32.xlu0 %v4266, 120
        %v4399 = vpop.permute.xlu0 %4398
        %4400 = vrot.lane.b32.xlu0 %v4267, 120
        %v4401 = vpop.permute.xlu0 %4400
        %4402 = vrot.lane.b32.xlu0 %v4268, 120
        %v4403 = vpop.permute.xlu0 %4402
        %4404 = vrot.lane.b32.xlu0 %v4269, 120
        %v4405 = vpop.permute.xlu0 %4404
        %v4406 = vsel %vm1066, %v4391, %v4393
        %v4407 = vsel %vm1066, %v4393, %v4395
        %v4408 = vsel %vm1066, %v4395, %v4397
        %v4409 = vsel %vm1066, %v4399, %v4401
        %v4410 = vsel %vm1066, %v4401, %v4403
        %v4411 = vsel %vm1066, %v4403, %v4405
        %v4420 = vsel %vm532, %v4379, 0
        %v4422 = vsel %vm532, %v4381, 0
        %4424 = vmatpush.msra.mxu0 0.0
        %4425 = vmatpush.msra.mxu0 0.0
        %4426 = vmatpush.msra.mxu0 0.0
        %4427 = vmatpush.msra.mxu0 0.0
        %4428 = vmatpush.msra.mxu0 0.0
        %4429 = vmatpush.msra.mxu0 0.0
        %4430 = vmatpush.msra.mxu0 0.0
        %4431 = vmatpush.msra.mxu0 0.0
        %4432 = vmatpush.msra.mxu0 0.0
        %4433 = vmatpush.msra.mxu0 0.0
        %4434 = vmatpush.msra.mxu0 0.0
        %4435 = vmatpush.msra.mxu0 0.0
        %4436 = vmatpush.msra.mxu0 0.0
        %4437 = vmatpush.msra.mxu0 0.0
        %4438 = vmatpush.msra.mxu0 %v4409
        %4439 = vmatpush.msra.mxu0 %v4406
        %4440 = vmatmul.f32.gmra.mxu0 %v4420
        %v4441 = vpop.f32.mrf.mxu0
        %v4442 = vadd.f32 0.0, %v4441
        %4443 = vmatmul.f32.gmra.mxu0 %v4422
        %v4444 = vpop.f32.mrf.mxu0
        %v4445 = vadd.f32 0.0, %v4444
        %4446 = vdwg.mxu0
        %4447 = vmatpush.msra.mxu0 0.0
        %4448 = vmatpush.msra.mxu0 0.0
        %4449 = vmatpush.msra.mxu0 0.0
        %4450 = vmatpush.msra.mxu0 0.0
        %4451 = vmatpush.msra.mxu0 0.0
        %4452 = vmatpush.msra.mxu0 0.0
        %4453 = vmatpush.msra.mxu0 0.0
        %4454 = vmatpush.msra.mxu0 0.0
        %4455 = vmatpush.msra.mxu0 0.0
        %4456 = vmatpush.msra.mxu0 0.0
        %4457 = vmatpush.msra.mxu0 0.0
        %4458 = vmatpush.msra.mxu0 0.0
        %4459 = vmatpush.msra.mxu0 0.0
        %4460 = vmatpush.msra.mxu0 0.0
        %4461 = vmatpush.msra.mxu0 %v4410
        %4462 = vmatpush.msra.mxu0 %v4407
        %4463 = vmatmul.f32.gmra.mxu0 %v4420
        %v4464 = vpop.f32.mrf.mxu0
        %v4465 = vadd.f32 0.0, %v4464
        %4466 = vmatmul.f32.gmra.mxu0 %v4422
        %v4467 = vpop.f32.mrf.mxu0
        %v4468 = vadd.f32 0.0, %v4467
        %4469 = vdwg.mxu0
        %4470 = vmatpush.msra.mxu0 0.0
        %4471 = vmatpush.msra.mxu0 0.0
        %4472 = vmatpush.msra.mxu0 0.0
        %4473 = vmatpush.msra.mxu0 0.0
        %4474 = vmatpush.msra.mxu0 0.0
        %4475 = vmatpush.msra.mxu0 0.0
        %4476 = vmatpush.msra.mxu0 0.0
        %4477 = vmatpush.msra.mxu0 0.0
        %4478 = vmatpush.msra.mxu0 0.0
        %4479 = vmatpush.msra.mxu0 0.0
        %4480 = vmatpush.msra.mxu0 0.0
        %4481 = vmatpush.msra.mxu0 0.0
        %4482 = vmatpush.msra.mxu0 0.0
        %4483 = vmatpush.msra.mxu0 0.0
        %4484 = vmatpush.msra.mxu0 %v4411
        %4485 = vmatpush.msra.mxu0 %v4408
        %4486 = vmatmul.f32.gmra.mxu0 %v4420
        %v4487 = vpop.f32.mrf.mxu0
        %v4488 = vadd.f32 0.0, %v4487
        %4489 = vmatmul.f32.gmra.mxu0 %v4422
        %v4490 = vpop.f32.mrf.mxu0
        %v4491 = vadd.f32 0.0, %v4490
        %4492 = vdwg.mxu0
        %4493 = vmatpush.msra.mxu0 0.0
        %4494 = vmatpush.msra.mxu0 0.0
        %4495 = vmatpush.msra.mxu0 0.0
        %4496 = vmatpush.msra.mxu0 0.0
        %4497 = vmatpush.msra.mxu0 0.0
        %4498 = vmatpush.msra.mxu0 0.0
        %4499 = vmatpush.msra.mxu0 0.0
        %4500 = vmatpush.msra.mxu0 0.0
        %4501 = vmatpush.msra.mxu0 0.0
        %4502 = vmatpush.msra.mxu0 0.0
        %4503 = vmatpush.msra.mxu0 0.0
        %4504 = vmatpush.msra.mxu0 0.0
        %4505 = vmatpush.msra.mxu0 0.0
        %4506 = vmatpush.msra.mxu0 0.0
        %4507 = vmatpush.msra.mxu0 %v4405
        %4508 = vmatpush.msra.mxu0 %v4397
        %4509 = vmatmul.f32.gmra.mxu0 %v4420
        %v4510 = vpop.f32.mrf.mxu0
        %v4511 = vadd.f32 0.0, %v4510
        %4512 = vmatmul.f32.gmra.mxu0 %v4422
        %v4513 = vpop.f32.mrf.mxu0
        %v4514 = vadd.f32 0.0, %v4513
        %4515 = vdwg.mxu0
        %v4516 = vadd.f32 %v4370, %v4442
        %v4517 = vadd.f32 %v4371, %v4465
        %v4518 = vadd.f32 %v4372, %v4488
        %v4519 = vadd.f32 %v4373, %v4511
        %v4520 = vadd.f32 %v4374, %v4445
        %v4521 = vadd.f32 %v4375, %v4468
        %v4522 = vadd.f32 %v4376, %v4491
        %v4523 = vadd.f32 %v4377, %v4514
        %4524 = vrot.lane.b32.xlu0 %v3848, 48
        %v4525 = vpop.permute.xlu0 %4524
        %4526 = vrot.lane.b32.xlu0 %v3849, 48
        %v4527 = vpop.permute.xlu0 %4526
        %4528 = vrot.lane.b32.xlu0 %v4262, 112
        %v4529 = vpop.permute.xlu0 %4528
        %4530 = vrot.lane.b32.xlu0 %v4263, 112
        %v4531 = vpop.permute.xlu0 %4530
        %4532 = vrot.lane.b32.xlu0 %v4264, 112
        %v4533 = vpop.permute.xlu0 %4532
        %4534 = vrot.lane.b32.xlu0 %v4265, 112
        %v4535 = vpop.permute.xlu0 %4534
        %4536 = vrot.lane.b32.xlu0 %v4266, 112
        %v4537 = vpop.permute.xlu0 %4536
        %4538 = vrot.lane.b32.xlu0 %v4267, 112
        %v4539 = vpop.permute.xlu0 %4538
        %4540 = vrot.lane.b32.xlu0 %v4268, 112
        %v4541 = vpop.permute.xlu0 %4540
        %4542 = vrot.lane.b32.xlu0 %v4269, 112
        %v4543 = vpop.permute.xlu0 %4542
        %vm4544 = vcmask 916480
        %v4545 = vsel %vm4544, %v4529, %v4531
        %v4546 = vsel %vm4544, %v4531, %v4533
        %v4547 = vsel %vm4544, %v4533, %v4535
        %v4548 = vsel %vm4544, %v4537, %v4539
        %v4549 = vsel %vm4544, %v4539, %v4541
        %v4550 = vsel %vm4544, %v4541, %v4543
        %v4559 = vsel %vm532, %v4525, 0
        %v4561 = vsel %vm532, %v4527, 0
        %4563 = vmatpush.msra.mxu0 0.0
        %4564 = vmatpush.msra.mxu0 0.0
        %4565 = vmatpush.msra.mxu0 0.0
        %4566 = vmatpush.msra.mxu0 0.0
        %4567 = vmatpush.msra.mxu0 0.0
        %4568 = vmatpush.msra.mxu0 0.0
        %4569 = vmatpush.msra.mxu0 0.0
        %4570 = vmatpush.msra.mxu0 0.0
        %4571 = vmatpush.msra.mxu0 0.0
        %4572 = vmatpush.msra.mxu0 0.0
        %4573 = vmatpush.msra.mxu0 0.0
        %4574 = vmatpush.msra.mxu0 0.0
        %4575 = vmatpush.msra.mxu0 0.0
        %4576 = vmatpush.msra.mxu0 0.0
        %4577 = vmatpush.msra.mxu0 %v4548
        %4578 = vmatpush.msra.mxu0 %v4545
        %4579 = vmatmul.f32.gmra.mxu0 %v4559
        %v4580 = vpop.f32.mrf.mxu0
        %v4581 = vadd.f32 0.0, %v4580
        %4582 = vmatmul.f32.gmra.mxu0 %v4561
        %v4583 = vpop.f32.mrf.mxu0
        %v4584 = vadd.f32 0.0, %v4583
        %4585 = vdwg.mxu0
        %4586 = vmatpush.msra.mxu0 0.0
        %4587 = vmatpush.msra.mxu0 0.0
        %4588 = vmatpush.msra.mxu0 0.0
        %4589 = vmatpush.msra.mxu0 0.0
        %4590 = vmatpush.msra.mxu0 0.0
        %4591 = vmatpush.msra.mxu0 0.0
        %4592 = vmatpush.msra.mxu0 0.0
        %4593 = vmatpush.msra.mxu0 0.0
        %4594 = vmatpush.msra.mxu0 0.0
        %4595 = vmatpush.msra.mxu0 0.0
        %4596 = vmatpush.msra.mxu0 0.0
        %4597 = vmatpush.msra.mxu0 0.0
        %4598 = vmatpush.msra.mxu0 0.0
        %4599 = vmatpush.msra.mxu0 0.0
        %4600 = vmatpush.msra.mxu0 %v4549
        %4601 = vmatpush.msra.mxu0 %v4546
        %4602 = vmatmul.f32.gmra.mxu0 %v4559
        %v4603 = vpop.f32.mrf.mxu0
        %v4604 = vadd.f32 0.0, %v4603
        %4605 = vmatmul.f32.gmra.mxu0 %v4561
        %v4606 = vpop.f32.mrf.mxu0
        %v4607 = vadd.f32 0.0, %v4606
        %4608 = vdwg.mxu0
        %4609 = vmatpush.msra.mxu0 0.0
        %4610 = vmatpush.msra.mxu0 0.0
        %4611 = vmatpush.msra.mxu0 0.0
        %4612 = vmatpush.msra.mxu0 0.0
        %4613 = vmatpush.msra.mxu0 0.0
        %4614 = vmatpush.msra.mxu0 0.0
        %4615 = vmatpush.msra.mxu0 0.0
        %4616 = vmatpush.msra.mxu0 0.0
        %4617 = vmatpush.msra.mxu0 0.0
        %4618 = vmatpush.msra.mxu0 0.0
        %4619 = vmatpush.msra.mxu0 0.0
        %4620 = vmatpush.msra.mxu0 0.0
        %4621 = vmatpush.msra.mxu0 0.0
        %4622 = vmatpush.msra.mxu0 0.0
        %4623 = vmatpush.msra.mxu0 %v4550
        %4624 = vmatpush.msra.mxu0 %v4547
        %4625 = vmatmul.f32.gmra.mxu0 %v4559
        %v4626 = vpop.f32.mrf.mxu0
        %v4627 = vadd.f32 0.0, %v4626
        %4628 = vmatmul.f32.gmra.mxu0 %v4561
        %v4629 = vpop.f32.mrf.mxu0
        %v4630 = vadd.f32 0.0, %v4629
        %4631 = vdwg.mxu0
        %4632 = vmatpush.msra.mxu0 0.0
        %4633 = vmatpush.msra.mxu0 0.0
        %4634 = vmatpush.msra.mxu0 0.0
        %4635 = vmatpush.msra.mxu0 0.0
        %4636 = vmatpush.msra.mxu0 0.0
        %4637 = vmatpush.msra.mxu0 0.0
        %4638 = vmatpush.msra.mxu0 0.0
        %4639 = vmatpush.msra.mxu0 0.0
        %4640 = vmatpush.msra.mxu0 0.0
        %4641 = vmatpush.msra.mxu0 0.0
        %4642 = vmatpush.msra.mxu0 0.0
        %4643 = vmatpush.msra.mxu0 0.0
        %4644 = vmatpush.msra.mxu0 0.0
        %4645 = vmatpush.msra.mxu0 0.0
        %4646 = vmatpush.msra.mxu0 %v4543
        %4647 = vmatpush.msra.mxu0 %v4535
        %4648 = vmatmul.f32.gmra.mxu0 %v4559
        %v4649 = vpop.f32.mrf.mxu0
        %v4650 = vadd.f32 0.0, %v4649
        %4651 = vmatmul.f32.gmra.mxu0 %v4561
        %v4652 = vpop.f32.mrf.mxu0
        %v4653 = vadd.f32 0.0, %v4652
        %4654 = vdwg.mxu0
        %v4655 = vadd.f32 %v4516, %v4581
        %v4656 = vadd.f32 %v4517, %v4604
        %v4657 = vadd.f32 %v4518, %v4627
        %v4658 = vadd.f32 %v4519, %v4650
        %v4659 = vadd.f32 %v4520, %v4584
        %v4660 = vadd.f32 %v4521, %v4607
        %v4661 = vadd.f32 %v4522, %v4630
        %v4662 = vadd.f32 %v4523, %v4653
        %4663 = vrot.lane.b32.xlu0 %v3848, 32
        %v4664 = vpop.permute.xlu0 %4663
        %4665 = vrot.lane.b32.xlu0 %v3849, 32
        %v4666 = vpop.permute.xlu0 %4665
        %v4667 = vsel %vm532, %v4664, 0
        %v4669 = vsel %vm532, %v4666, 0
        %4671 = vmatpush.msra.mxu0 0.0
        %4672 = vmatpush.msra.mxu0 0.0
        %4673 = vmatpush.msra.mxu0 0.0
        %4674 = vmatpush.msra.mxu0 0.0
        %4675 = vmatpush.msra.mxu0 0.0
        %4676 = vmatpush.msra.mxu0 0.0
        %4677 = vmatpush.msra.mxu0 0.0
        %4678 = vmatpush.msra.mxu0 0.0
        %4679 = vmatpush.msra.mxu0 0.0
        %4680 = vmatpush.msra.mxu0 0.0
        %4681 = vmatpush.msra.mxu0 0.0
        %4682 = vmatpush.msra.mxu0 0.0
        %4683 = vmatpush.msra.mxu0 0.0
        %4684 = vmatpush.msra.mxu0 0.0
        %4685 = vmatpush.msra.mxu0 %v475
        %4686 = vmatpush.msra.mxu0 %v470
        %4687 = vmatmul.f32.gmra.mxu0 %v4667
        %v4688 = vpop.f32.mrf.mxu0
        %v4689 = vadd.f32 0.0, %v4688
        %4690 = vmatmul.f32.gmra.mxu0 %v4669
        %v4691 = vpop.f32.mrf.mxu0
        %v4692 = vadd.f32 0.0, %v4691
        %4693 = vdwg.mxu0
        %4694 = vmatpush.msra.mxu0 0.0
        %4695 = vmatpush.msra.mxu0 0.0
        %4696 = vmatpush.msra.mxu0 0.0
        %4697 = vmatpush.msra.mxu0 0.0
        %4698 = vmatpush.msra.mxu0 0.0
        %4699 = vmatpush.msra.mxu0 0.0
        %4700 = vmatpush.msra.mxu0 0.0
        %4701 = vmatpush.msra.mxu0 0.0
        %4702 = vmatpush.msra.mxu0 0.0
        %4703 = vmatpush.msra.mxu0 0.0
        %4704 = vmatpush.msra.mxu0 0.0
        %4705 = vmatpush.msra.mxu0 0.0
        %4706 = vmatpush.msra.mxu0 0.0
        %4707 = vmatpush.msra.mxu0 0.0
        %4708 = vmatpush.msra.mxu0 %v476
        %4709 = vmatpush.msra.mxu0 %v471
        %4710 = vmatmul.f32.gmra.mxu0 %v4667
        %v4711 = vpop.f32.mrf.mxu0
        %v4712 = vadd.f32 0.0, %v4711
        %4713 = vmatmul.f32.gmra.mxu0 %v4669
        %v4714 = vpop.f32.mrf.mxu0
        %v4715 = vadd.f32 0.0, %v4714
        %4716 = vdwg.mxu0
        %4717 = vmatpush.msra.mxu0 0.0
        %4718 = vmatpush.msra.mxu0 0.0
        %4719 = vmatpush.msra.mxu0 0.0
        %4720 = vmatpush.msra.mxu0 0.0
        %4721 = vmatpush.msra.mxu0 0.0
        %4722 = vmatpush.msra.mxu0 0.0
        %4723 = vmatpush.msra.mxu0 0.0
        %4724 = vmatpush.msra.mxu0 0.0
        %4725 = vmatpush.msra.mxu0 0.0
        %4726 = vmatpush.msra.mxu0 0.0
        %4727 = vmatpush.msra.mxu0 0.0
        %4728 = vmatpush.msra.mxu0 0.0
        %4729 = vmatpush.msra.mxu0 0.0
        %4730 = vmatpush.msra.mxu0 0.0
        %4731 = vmatpush.msra.mxu0 %v477
        %4732 = vmatpush.msra.mxu0 %v472
        %4733 = vmatmul.f32.gmra.mxu0 %v4667
        %v4734 = vpop.f32.mrf.mxu0
        %v4735 = vadd.f32 0.0, %v4734
        %4736 = vmatmul.f32.gmra.mxu0 %v4669
        %v4737 = vpop.f32.mrf.mxu0
        %v4738 = vadd.f32 0.0, %v4737
        %4739 = vdwg.mxu0
        %4740 = vmatpush.msra.mxu0 0.0
        %4741 = vmatpush.msra.mxu0 0.0
        %4742 = vmatpush.msra.mxu0 0.0
        %4743 = vmatpush.msra.mxu0 0.0
        %4744 = vmatpush.msra.mxu0 0.0
        %4745 = vmatpush.msra.mxu0 0.0
        %4746 = vmatpush.msra.mxu0 0.0
        %4747 = vmatpush.msra.mxu0 0.0
        %4748 = vmatpush.msra.mxu0 0.0
        %4749 = vmatpush.msra.mxu0 0.0
        %4750 = vmatpush.msra.mxu0 0.0
        %4751 = vmatpush.msra.mxu0 0.0
        %4752 = vmatpush.msra.mxu0 0.0
        %4753 = vmatpush.msra.mxu0 0.0
        %4754 = vmatpush.msra.mxu0 %v478
        %4755 = vmatpush.msra.mxu0 %v473
        %4756 = vmatmul.f32.gmra.mxu0 %v4667
        %v4757 = vpop.f32.mrf.mxu0
        %v4758 = vadd.f32 0.0, %v4757
        %4759 = vmatmul.f32.gmra.mxu0 %v4669
        %v4760 = vpop.f32.mrf.mxu0
        %v4761 = vadd.f32 0.0, %v4760
        %4762 = vdwg.mxu0
        %v4763 = vadd.f32 %v4655, %v4689
        %v4764 = vadd.f32 %v4656, %v4712
        %v4765 = vadd.f32 %v4657, %v4735
        %v4766 = vadd.f32 %v4658, %v4758
        %v4767 = vadd.f32 %v4659, %v4692
        %v4768 = vadd.f32 %v4660, %v4715
        %v4769 = vadd.f32 %v4661, %v4738
        %v4770 = vadd.f32 %v4662, %v4761
        %4771 = vrot.lane.b32.xlu0 %v3848, 16
        %v4772 = vpop.permute.xlu0 %4771
        %4773 = vrot.lane.b32.xlu0 %v3849, 16
        %v4774 = vpop.permute.xlu0 %4773
        %v4775 = vsel %vm532, %v4772, 0
        %v4777 = vsel %vm532, %v4774, 0
        %4779 = vmatpush.msra.mxu0 0.0
        %4780 = vmatpush.msra.mxu0 0.0
        %4781 = vmatpush.msra.mxu0 0.0
        %4782 = vmatpush.msra.mxu0 0.0
        %4783 = vmatpush.msra.mxu0 0.0
        %4784 = vmatpush.msra.mxu0 0.0
        %4785 = vmatpush.msra.mxu0 0.0
        %4786 = vmatpush.msra.mxu0 0.0
        %4787 = vmatpush.msra.mxu0 0.0
        %4788 = vmatpush.msra.mxu0 0.0
        %4789 = vmatpush.msra.mxu0 0.0
        %4790 = vmatpush.msra.mxu0 0.0
        %4791 = vmatpush.msra.mxu0 0.0
        %4792 = vmatpush.msra.mxu0 0.0
        %4793 = vmatpush.msra.mxu0 %v1070
        %4794 = vmatpush.msra.mxu0 %v1067
        %4795 = vmatmul.f32.gmra.mxu0 %v4775
        %v4796 = vpop.f32.mrf.mxu0
        %v4797 = vadd.f32 0.0, %v4796
        %4798 = vmatmul.f32.gmra.mxu0 %v4777
        %v4799 = vpop.f32.mrf.mxu0
        %v4800 = vadd.f32 0.0, %v4799
        %4801 = vdwg.mxu0
        %4802 = vmatpush.msra.mxu0 0.0
        %4803 = vmatpush.msra.mxu0 0.0
        %4804 = vmatpush.msra.mxu0 0.0
        %4805 = vmatpush.msra.mxu0 0.0
        %4806 = vmatpush.msra.mxu0 0.0
        %4807 = vmatpush.msra.mxu0 0.0
        %4808 = vmatpush.msra.mxu0 0.0
        %4809 = vmatpush.msra.mxu0 0.0
        %4810 = vmatpush.msra.mxu0 0.0
        %4811 = vmatpush.msra.mxu0 0.0
        %4812 = vmatpush.msra.mxu0 0.0
        %4813 = vmatpush.msra.mxu0 0.0
        %4814 = vmatpush.msra.mxu0 0.0
        %4815 = vmatpush.msra.mxu0 0.0
        %4816 = vmatpush.msra.mxu0 %v1071
        %4817 = vmatpush.msra.mxu0 %v1068
        %4818 = vmatmul.f32.gmra.mxu0 %v4775
        %v4819 = vpop.f32.mrf.mxu0
        %v4820 = vadd.f32 0.0, %v4819
        %4821 = vmatmul.f32.gmra.mxu0 %v4777
        %v4822 = vpop.f32.mrf.mxu0
        %v4823 = vadd.f32 0.0, %v4822
        %4824 = vdwg.mxu0
        %4825 = vmatpush.msra.mxu0 0.0
        %4826 = vmatpush.msra.mxu0 0.0
        %4827 = vmatpush.msra.mxu0 0.0
        %4828 = vmatpush.msra.mxu0 0.0
        %4829 = vmatpush.msra.mxu0 0.0
        %4830 = vmatpush.msra.mxu0 0.0
        %4831 = vmatpush.msra.mxu0 0.0
        %4832 = vmatpush.msra.mxu0 0.0
        %4833 = vmatpush.msra.mxu0 0.0
        %4834 = vmatpush.msra.mxu0 0.0
        %4835 = vmatpush.msra.mxu0 0.0
        %4836 = vmatpush.msra.mxu0 0.0
        %4837 = vmatpush.msra.mxu0 0.0
        %4838 = vmatpush.msra.mxu0 0.0
        %4839 = vmatpush.msra.mxu0 %v1072
        %4840 = vmatpush.msra.mxu0 %v1069
        %4841 = vmatmul.f32.gmra.mxu0 %v4775
        %v4842 = vpop.f32.mrf.mxu0
        %v4843 = vadd.f32 0.0, %v4842
        %4844 = vmatmul.f32.gmra.mxu0 %v4777
        %v4845 = vpop.f32.mrf.mxu0
        %v4846 = vadd.f32 0.0, %v4845
        %4847 = vdwg.mxu0
        %4848 = vmatpush.msra.mxu0 0.0
        %4849 = vmatpush.msra.mxu0 0.0
        %4850 = vmatpush.msra.mxu0 0.0
        %4851 = vmatpush.msra.mxu0 0.0
        %4852 = vmatpush.msra.mxu0 0.0
        %4853 = vmatpush.msra.mxu0 0.0
        %4854 = vmatpush.msra.mxu0 0.0
        %4855 = vmatpush.msra.mxu0 0.0
        %4856 = vmatpush.msra.mxu0 0.0
        %4857 = vmatpush.msra.mxu0 0.0
        %4858 = vmatpush.msra.mxu0 0.0
        %4859 = vmatpush.msra.mxu0 0.0
        %4860 = vmatpush.msra.mxu0 0.0
        %4861 = vmatpush.msra.mxu0 0.0
        %4862 = vmatpush.msra.mxu0 %v1065
        %4863 = vmatpush.msra.mxu0 %v1057
        %4864 = vmatmul.f32.gmra.mxu0 %v4775
        %v4865 = vpop.f32.mrf.mxu0
        %v4866 = vadd.f32 0.0, %v4865
        %4867 = vmatmul.f32.gmra.mxu0 %v4777
        %v4868 = vpop.f32.mrf.mxu0
        %v4869 = vadd.f32 0.0, %v4868
        %4870 = vdwg.mxu0
        %v4871 = vadd.f32 %v4763, %v4797
        %v4872 = vadd.f32 %v4764, %v4820
        %v4873 = vadd.f32 %v4765, %v4843
        %v4874 = vadd.f32 %v4766, %v4866
        %v4875 = vadd.f32 %v4767, %v4800
        %v4876 = vadd.f32 %v4768, %v4823
        %v4877 = vadd.f32 %v4769, %v4846
        %v4878 = vadd.f32 %v4770, %v4869
        %v4879 = vld [vmem:[#allocation9 + $0x20] sm:$0xff]
        %v4880 = vld [vmem:[#allocation9 + $0x48] sm:$0xff]
        %4881 = vrot.lane.b32.xlu0 %v470, 112
        %v4882 = vpop.permute.xlu0 %4881
        %4883 = vrot.lane.b32.xlu0 %v471, 112
        %v4884 = vpop.permute.xlu0 %4883
        %4885 = vrot.lane.b32.xlu0 %v472, 112
        %v4886 = vpop.permute.xlu0 %4885
        %4887 = vrot.lane.b32.xlu0 %v473, 112
        %v4888 = vpop.permute.xlu0 %4887
        %4889 = vrot.lane.b32.xlu0 %v475, 112
        %v4890 = vpop.permute.xlu0 %4889
        %4891 = vrot.lane.b32.xlu0 %v476, 112
        %v4892 = vpop.permute.xlu0 %4891
        %4893 = vrot.lane.b32.xlu0 %v477, 112
        %v4894 = vpop.permute.xlu0 %4893
        %4895 = vrot.lane.b32.xlu0 %v478, 112
        %v4896 = vpop.permute.xlu0 %4895
        %v4897 = vsel %vm4544, %v4882, %v4884
        %v4898 = vsel %vm4544, %v4884, %v4886
        %v4899 = vsel %vm4544, %v4886, %v4888
        %v4900 = vsel %vm4544, %v4890, %v4892
        %v4901 = vsel %vm4544, %v4892, %v4894
        %v4902 = vsel %vm4544, %v4894, %v4896
        %v4912 = vsel %vm532, %v4879, 0
        %v4915 = vsel %vm532, %v4880, 0
        %4917 = vmatpush.msra.mxu0 0.0
        %4918 = vmatpush.msra.mxu0 0.0
        %4919 = vmatpush.msra.mxu0 0.0
        %4920 = vmatpush.msra.mxu0 0.0
        %4921 = vmatpush.msra.mxu0 0.0
        %4922 = vmatpush.msra.mxu0 0.0
        %4923 = vmatpush.msra.mxu0 0.0
        %4924 = vmatpush.msra.mxu0 0.0
        %4925 = vmatpush.msra.mxu0 0.0
        %4926 = vmatpush.msra.mxu0 0.0
        %4927 = vmatpush.msra.mxu0 0.0
        %4928 = vmatpush.msra.mxu0 0.0
        %4929 = vmatpush.msra.mxu0 0.0
        %4930 = vmatpush.msra.mxu0 0.0
        %4931 = vmatpush.msra.mxu0 %v4900
        %4932 = vmatpush.msra.mxu0 %v4897
        %4933 = vmatmul.f32.gmra.mxu0 %v4912
        %v4934 = vpop.f32.mrf.mxu0
        %v4935 = vadd.f32 0.0, %v4934
        %4936 = vmatmul.f32.gmra.mxu0 %v4915
        %v4937 = vpop.f32.mrf.mxu0
        %v4938 = vadd.f32 0.0, %v4937
        %4939 = vdwg.mxu0
        %4940 = vmatpush.msra.mxu0 0.0
        %4941 = vmatpush.msra.mxu0 0.0
        %4942 = vmatpush.msra.mxu0 0.0
        %4943 = vmatpush.msra.mxu0 0.0
        %4944 = vmatpush.msra.mxu0 0.0
        %4945 = vmatpush.msra.mxu0 0.0
        %4946 = vmatpush.msra.mxu0 0.0
        %4947 = vmatpush.msra.mxu0 0.0
        %4948 = vmatpush.msra.mxu0 0.0
        %4949 = vmatpush.msra.mxu0 0.0
        %4950 = vmatpush.msra.mxu0 0.0
        %4951 = vmatpush.msra.mxu0 0.0
        %4952 = vmatpush.msra.mxu0 0.0
        %4953 = vmatpush.msra.mxu0 0.0
        %4954 = vmatpush.msra.mxu0 %v4901
        %4955 = vmatpush.msra.mxu0 %v4898
        %4956 = vmatmul.f32.gmra.mxu0 %v4912
        %v4957 = vpop.f32.mrf.mxu0
        %v4958 = vadd.f32 0.0, %v4957
        %4959 = vmatmul.f32.gmra.mxu0 %v4915
        %v4960 = vpop.f32.mrf.mxu0
        %v4961 = vadd.f32 0.0, %v4960
        %4962 = vdwg.mxu0
        %4963 = vmatpush.msra.mxu0 0.0
        %4964 = vmatpush.msra.mxu0 0.0
        %4965 = vmatpush.msra.mxu0 0.0
        %4966 = vmatpush.msra.mxu0 0.0
        %4967 = vmatpush.msra.mxu0 0.0
        %4968 = vmatpush.msra.mxu0 0.0
        %4969 = vmatpush.msra.mxu0 0.0
        %4970 = vmatpush.msra.mxu0 0.0
        %4971 = vmatpush.msra.mxu0 0.0
        %4972 = vmatpush.msra.mxu0 0.0
        %4973 = vmatpush.msra.mxu0 0.0
        %4974 = vmatpush.msra.mxu0 0.0
        %4975 = vmatpush.msra.mxu0 0.0
        %4976 = vmatpush.msra.mxu0 0.0
        %4977 = vmatpush.msra.mxu0 %v4902
        %4978 = vmatpush.msra.mxu0 %v4899
        %4979 = vmatmul.f32.gmra.mxu0 %v4912
        %v4980 = vpop.f32.mrf.mxu0
        %v4981 = vadd.f32 0.0, %v4980
        %4982 = vmatmul.f32.gmra.mxu0 %v4915
        %v4983 = vpop.f32.mrf.mxu0
        %v4984 = vadd.f32 0.0, %v4983
        %4985 = vdwg.mxu0
        %4986 = vmatpush.msra.mxu0 0.0
        %4987 = vmatpush.msra.mxu0 0.0
        %4988 = vmatpush.msra.mxu0 0.0
        %4989 = vmatpush.msra.mxu0 0.0
        %4990 = vmatpush.msra.mxu0 0.0
        %4991 = vmatpush.msra.mxu0 0.0
        %4992 = vmatpush.msra.mxu0 0.0
        %4993 = vmatpush.msra.mxu0 0.0
        %4994 = vmatpush.msra.mxu0 0.0
        %4995 = vmatpush.msra.mxu0 0.0
        %4996 = vmatpush.msra.mxu0 0.0
        %4997 = vmatpush.msra.mxu0 0.0
        %4998 = vmatpush.msra.mxu0 0.0
        %4999 = vmatpush.msra.mxu0 0.0
        %5000 = vmatpush.msra.mxu0 %v4896
        %5001 = vmatpush.msra.mxu0 %v4888
        %5002 = vmatmul.f32.gmra.mxu0 %v4912
        %v5003 = vpop.f32.mrf.mxu0
        %v5004 = vadd.f32 0.0, %v5003
        %5005 = vmatmul.f32.gmra.mxu0 %v4915
        %v5006 = vpop.f32.mrf.mxu0
        %v5007 = vadd.f32 0.0, %v5006
        %5008 = vdwg.mxu0
        %v5009 = vadd.f32 %v4871, %v4935
        %v5010 = vadd.f32 %v4872, %v4958
        %v5011 = vadd.f32 %v4873, %v4981
        %v5012 = vadd.f32 %v4874, %v5004
        %v5013 = vadd.f32 %v4875, %v4938
        %v5014 = vadd.f32 %v4876, %v4961
        %v5015 = vadd.f32 %v4877, %v4984
        %v5016 = vadd.f32 %v4878, %v5007
        %v5017 = vld [vmem:[%s406 + $0x20] sm:$0xff]
        %v5018 = vld [vmem:[%s406 + $0x28] sm:$0xff]
        %v5019 = vld [vmem:[%s406 + $0x30] sm:$0xff]
        %v5020 = vld [vmem:[%s406 + $0x38] sm:$0xff]
        %v5021 = vld [vmem:[%s406 + $0x60] sm:$0xff]
        %v5022 = vld [vmem:[%s406 + $0x68] sm:$0xff]
        %v5023 = vld [vmem:[%s406 + $0x70] sm:$0xff]
        %v5024 = vld [vmem:[%s406 + $0x78] sm:$0xff]
        %5025 = vrot.lane.b32.xlu0 %v4879, 112
        %v5026 = vpop.permute.xlu0 %5025
        %5027 = vrot.lane.b32.xlu0 %v4880, 112
        %v5028 = vpop.permute.xlu0 %5027
        %v5029 = vsel %vm532, %v5026, 0
        %v5031 = vsel %vm532, %v5028, 0
        %5033 = vmatpush.msra.mxu0 0.0
        %5034 = vmatpush.msra.mxu0 0.0
        %5035 = vmatpush.msra.mxu0 0.0
        %5036 = vmatpush.msra.mxu0 0.0
        %5037 = vmatpush.msra.mxu0 0.0
        %5038 = vmatpush.msra.mxu0 0.0
        %5039 = vmatpush.msra.mxu0 0.0
        %5040 = vmatpush.msra.mxu0 0.0
        %5041 = vmatpush.msra.mxu0 0.0
        %5042 = vmatpush.msra.mxu0 0.0
        %5043 = vmatpush.msra.mxu0 0.0
        %5044 = vmatpush.msra.mxu0 0.0
        %5045 = vmatpush.msra.mxu0 0.0
        %5046 = vmatpush.msra.mxu0 0.0
        %5047 = vmatpush.msra.mxu0 %v5021
        %5048 = vmatpush.msra.mxu0 %v5017
        %5049 = vmatmul.f32.gmra.mxu0 %v5029
        %v5050 = vpop.f32.mrf.mxu0
        %v5051 = vadd.f32 0.0, %v5050
        %5052 = vmatmul.f32.gmra.mxu0 %v5031
        %v5053 = vpop.f32.mrf.mxu0
        %v5054 = vadd.f32 0.0, %v5053
        %5055 = vdwg.mxu0
        %5056 = vmatpush.msra.mxu0 0.0
        %5057 = vmatpush.msra.mxu0 0.0
        %5058 = vmatpush.msra.mxu0 0.0
        %5059 = vmatpush.msra.mxu0 0.0
        %5060 = vmatpush.msra.mxu0 0.0
        %5061 = vmatpush.msra.mxu0 0.0
        %5062 = vmatpush.msra.mxu0 0.0
        %5063 = vmatpush.msra.mxu0 0.0
        %5064 = vmatpush.msra.mxu0 0.0
        %5065 = vmatpush.msra.mxu0 0.0
        %5066 = vmatpush.msra.mxu0 0.0
        %5067 = vmatpush.msra.mxu0 0.0
        %5068 = vmatpush.msra.mxu0 0.0
        %5069 = vmatpush.msra.mxu0 0.0
        %5070 = vmatpush.msra.mxu0 %v5022
        %5071 = vmatpush.msra.mxu0 %v5018
        %5072 = vmatmul.f32.gmra.mxu0 %v5029
        %v5073 = vpop.f32.mrf.mxu0
        %v5074 = vadd.f32 0.0, %v5073
        %5075 = vmatmul.f32.gmra.mxu0 %v5031
        %v5076 = vpop.f32.mrf.mxu0
        %v5077 = vadd.f32 0.0, %v5076
        %5078 = vdwg.mxu0
        %5079 = vmatpush.msra.mxu0 0.0
        %5080 = vmatpush.msra.mxu0 0.0
        %5081 = vmatpush.msra.mxu0 0.0
        %5082 = vmatpush.msra.mxu0 0.0
        %5083 = vmatpush.msra.mxu0 0.0
        %5084 = vmatpush.msra.mxu0 0.0
        %5085 = vmatpush.msra.mxu0 0.0
        %5086 = vmatpush.msra.mxu0 0.0
        %5087 = vmatpush.msra.mxu0 0.0
        %5088 = vmatpush.msra.mxu0 0.0
        %5089 = vmatpush.msra.mxu0 0.0
        %5090 = vmatpush.msra.mxu0 0.0
        %5091 = vmatpush.msra.mxu0 0.0
        %5092 = vmatpush.msra.mxu0 0.0
        %5093 = vmatpush.msra.mxu0 %v5023
        %5094 = vmatpush.msra.mxu0 %v5019
        %5095 = vmatmul.f32.gmra.mxu0 %v5029
        %v5096 = vpop.f32.mrf.mxu0
        %v5097 = vadd.f32 0.0, %v5096
        %5098 = vmatmul.f32.gmra.mxu0 %v5031
        %v5099 = vpop.f32.mrf.mxu0
        %v5100 = vadd.f32 0.0, %v5099
        %5101 = vdwg.mxu0
        %5102 = vmatpush.msra.mxu0 0.0
        %5103 = vmatpush.msra.mxu0 0.0
        %5104 = vmatpush.msra.mxu0 0.0
        %5105 = vmatpush.msra.mxu0 0.0
        %5106 = vmatpush.msra.mxu0 0.0
        %5107 = vmatpush.msra.mxu0 0.0
        %5108 = vmatpush.msra.mxu0 0.0
        %5109 = vmatpush.msra.mxu0 0.0
        %5110 = vmatpush.msra.mxu0 0.0
        %5111 = vmatpush.msra.mxu0 0.0
        %5112 = vmatpush.msra.mxu0 0.0
        %5113 = vmatpush.msra.mxu0 0.0
        %5114 = vmatpush.msra.mxu0 0.0
        %5115 = vmatpush.msra.mxu0 0.0
        %5116 = vmatpush.msra.mxu0 %v5024
        %5117 = vmatpush.msra.mxu0 %v5020
        %5118 = vmatmul.f32.gmra.mxu0 %v5029
        %v5119 = vpop.f32.mrf.mxu0
        %v5120 = vadd.f32 0.0, %v5119
        %5121 = vmatmul.f32.gmra.mxu0 %v5031
        %v5122 = vpop.f32.mrf.mxu0
        %v5123 = vadd.f32 0.0, %v5122
        %5124 = vdwg.mxu0
        %v5125 = vadd.f32 %v5009, %v5051
        %v5126 = vadd.f32 %v5010, %v5074
        %v5127 = vadd.f32 %v5011, %v5097
        %v5128 = vadd.f32 %v5012, %v5120
        %v5129 = vadd.f32 %v5013, %v5054
        %v5130 = vadd.f32 %v5014, %v5077
        %v5131 = vadd.f32 %v5015, %v5100
        %v5132 = vadd.f32 %v5016, %v5123
        %5133 = vrot.lane.b32.xlu0 %v4879, 96
        %v5134 = vpop.permute.xlu0 %5133
        %5135 = vrot.lane.b32.xlu0 %v4880, 96
        %v5136 = vpop.permute.xlu0 %5135
        %5145 = vrot.lane.b32.xlu0 %v5017, 120
        %v5146 = vpop.permute.xlu0 %5145
        %5147 = vrot.lane.b32.xlu0 %v5018, 120
        %v5148 = vpop.permute.xlu0 %5147
        %5149 = vrot.lane.b32.xlu0 %v5019, 120
        %v5150 = vpop.permute.xlu0 %5149
        %5151 = vrot.lane.b32.xlu0 %v5020, 120
        %v5152 = vpop.permute.xlu0 %5151
        %5153 = vrot.lane.b32.xlu0 %v5021, 120
        %v5154 = vpop.permute.xlu0 %5153
        %5155 = vrot.lane.b32.xlu0 %v5022, 120
        %v5156 = vpop.permute.xlu0 %5155
        %5157 = vrot.lane.b32.xlu0 %v5023, 120
        %v5158 = vpop.permute.xlu0 %5157
        %5159 = vrot.lane.b32.xlu0 %v5024, 120
        %v5160 = vpop.permute.xlu0 %5159
        %v5161 = vsel %vm1066, %v5146, %v5148
        %v5162 = vsel %vm1066, %v5148, %v5150
        %v5163 = vsel %vm1066, %v5150, %v5152
        %v5164 = vsel %vm1066, %v5154, %v5156
        %v5165 = vsel %vm1066, %v5156, %v5158
        %v5166 = vsel %vm1066, %v5158, %v5160
        %v5175 = vsel %vm532, %v5134, 0
        %v5177 = vsel %vm532, %v5136, 0
        %5179 = vmatpush.msra.mxu0 0.0
        %5180 = vmatpush.msra.mxu0 0.0
        %5181 = vmatpush.msra.mxu0 0.0
        %5182 = vmatpush.msra.mxu0 0.0
        %5183 = vmatpush.msra.mxu0 0.0
        %5184 = vmatpush.msra.mxu0 0.0
        %5185 = vmatpush.msra.mxu0 0.0
        %5186 = vmatpush.msra.mxu0 0.0
        %5187 = vmatpush.msra.mxu0 0.0
        %5188 = vmatpush.msra.mxu0 0.0
        %5189 = vmatpush.msra.mxu0 0.0
        %5190 = vmatpush.msra.mxu0 0.0
        %5191 = vmatpush.msra.mxu0 0.0
        %5192 = vmatpush.msra.mxu0 0.0
        %5193 = vmatpush.msra.mxu0 %v5164
        %5194 = vmatpush.msra.mxu0 %v5161
        %5195 = vmatmul.f32.gmra.mxu0 %v5175
        %v5196 = vpop.f32.mrf.mxu0
        %v5197 = vadd.f32 0.0, %v5196
        %5198 = vmatmul.f32.gmra.mxu0 %v5177
        %v5199 = vpop.f32.mrf.mxu0
        %v5200 = vadd.f32 0.0, %v5199
        %5201 = vdwg.mxu0
        %5202 = vmatpush.msra.mxu0 0.0
        %5203 = vmatpush.msra.mxu0 0.0
        %5204 = vmatpush.msra.mxu0 0.0
        %5205 = vmatpush.msra.mxu0 0.0
        %5206 = vmatpush.msra.mxu0 0.0
        %5207 = vmatpush.msra.mxu0 0.0
        %5208 = vmatpush.msra.mxu0 0.0
        %5209 = vmatpush.msra.mxu0 0.0
        %5210 = vmatpush.msra.mxu0 0.0
        %5211 = vmatpush.msra.mxu0 0.0
        %5212 = vmatpush.msra.mxu0 0.0
        %5213 = vmatpush.msra.mxu0 0.0
        %5214 = vmatpush.msra.mxu0 0.0
        %5215 = vmatpush.msra.mxu0 0.0
        %5216 = vmatpush.msra.mxu0 %v5165
        %5217 = vmatpush.msra.mxu0 %v5162
        %5218 = vmatmul.f32.gmra.mxu0 %v5175
        %v5219 = vpop.f32.mrf.mxu0
        %v5220 = vadd.f32 0.0, %v5219
        %5221 = vmatmul.f32.gmra.mxu0 %v5177
        %v5222 = vpop.f32.mrf.mxu0
        %v5223 = vadd.f32 0.0, %v5222
        %5224 = vdwg.mxu0
        %5225 = vmatpush.msra.mxu0 0.0
        %5226 = vmatpush.msra.mxu0 0.0
        %5227 = vmatpush.msra.mxu0 0.0
        %5228 = vmatpush.msra.mxu0 0.0
        %5229 = vmatpush.msra.mxu0 0.0
        %5230 = vmatpush.msra.mxu0 0.0
        %5231 = vmatpush.msra.mxu0 0.0
        %5232 = vmatpush.msra.mxu0 0.0
        %5233 = vmatpush.msra.mxu0 0.0
        %5234 = vmatpush.msra.mxu0 0.0
        %5235 = vmatpush.msra.mxu0 0.0
        %5236 = vmatpush.msra.mxu0 0.0
        %5237 = vmatpush.msra.mxu0 0.0
        %5238 = vmatpush.msra.mxu0 0.0
        %5239 = vmatpush.msra.mxu0 %v5166
        %5240 = vmatpush.msra.mxu0 %v5163
        %5241 = vmatmul.f32.gmra.mxu0 %v5175
        %v5242 = vpop.f32.mrf.mxu0
        %v5243 = vadd.f32 0.0, %v5242
        %5244 = vmatmul.f32.gmra.mxu0 %v5177
        %v5245 = vpop.f32.mrf.mxu0
        %v5246 = vadd.f32 0.0, %v5245
        %5247 = vdwg.mxu0
        %5248 = vmatpush.msra.mxu0 0.0
        %5249 = vmatpush.msra.mxu0 0.0
        %5250 = vmatpush.msra.mxu0 0.0
        %5251 = vmatpush.msra.mxu0 0.0
        %5252 = vmatpush.msra.mxu0 0.0
        %5253 = vmatpush.msra.mxu0 0.0
        %5254 = vmatpush.msra.mxu0 0.0
        %5255 = vmatpush.msra.mxu0 0.0
        %5256 = vmatpush.msra.mxu0 0.0
        %5257 = vmatpush.msra.mxu0 0.0
        %5258 = vmatpush.msra.mxu0 0.0
        %5259 = vmatpush.msra.mxu0 0.0
        %5260 = vmatpush.msra.mxu0 0.0
        %5261 = vmatpush.msra.mxu0 0.0
        %5262 = vmatpush.msra.mxu0 %v5160
        %5263 = vmatpush.msra.mxu0 %v5152
        %5264 = vmatmul.f32.gmra.mxu0 %v5175
        %v5265 = vpop.f32.mrf.mxu0
        %v5266 = vadd.f32 0.0, %v5265
        %5267 = vmatmul.f32.gmra.mxu0 %v5177
        %v5268 = vpop.f32.mrf.mxu0
        %v5269 = vadd.f32 0.0, %v5268
        %5270 = vdwg.mxu0
        %v5271 = vadd.f32 %v5125, %v5197
        %v5272 = vadd.f32 %v5126, %v5220
        %v5273 = vadd.f32 %v5127, %v5243
        %v5274 = vadd.f32 %v5128, %v5266
        %v5275 = vadd.f32 %v5129, %v5200
        %v5276 = vadd.f32 %v5130, %v5223
        %v5277 = vadd.f32 %v5131, %v5246
        %v5278 = vadd.f32 %v5132, %v5269
        %5279 = vrot.lane.b32.xlu0 %v4879, 80
        %v5280 = vpop.permute.xlu0 %5279
        %5281 = vrot.lane.b32.xlu0 %v4880, 80
        %v5282 = vpop.permute.xlu0 %5281
        %5283 = vrot.lane.b32.xlu0 %v5017, 112
        %v5284 = vpop.permute.xlu0 %5283
        %5285 = vrot.lane.b32.xlu0 %v5018, 112
        %v5286 = vpop.permute.xlu0 %5285
        %5287 = vrot.lane.b32.xlu0 %v5019, 112
        %v5288 = vpop.permute.xlu0 %5287
        %5289 = vrot.lane.b32.xlu0 %v5020, 112
        %v5290 = vpop.permute.xlu0 %5289
        %5291 = vrot.lane.b32.xlu0 %v5021, 112
        %v5292 = vpop.permute.xlu0 %5291
        %5293 = vrot.lane.b32.xlu0 %v5022, 112
        %v5294 = vpop.permute.xlu0 %5293
        %5295 = vrot.lane.b32.xlu0 %v5023, 112
        %v5296 = vpop.permute.xlu0 %5295
        %5297 = vrot.lane.b32.xlu0 %v5024, 112
        %v5298 = vpop.permute.xlu0 %5297
        %v5299 = vsel %vm4544, %v5284, %v5286
        %v5300 = vsel %vm4544, %v5286, %v5288
        %v5301 = vsel %vm4544, %v5288, %v5290
        %v5302 = vsel %vm4544, %v5292, %v5294
        %v5303 = vsel %vm4544, %v5294, %v5296
        %v5304 = vsel %vm4544, %v5296, %v5298
        %v5313 = vsel %vm532, %v5280, 0
        %v5315 = vsel %vm532, %v5282, 0
        %5317 = vmatpush.msra.mxu0 0.0
        %5318 = vmatpush.msra.mxu0 0.0
        %5319 = vmatpush.msra.mxu0 0.0
        %5320 = vmatpush.msra.mxu0 0.0
        %5321 = vmatpush.msra.mxu0 0.0
        %5322 = vmatpush.msra.mxu0 0.0
        %5323 = vmatpush.msra.mxu0 0.0
        %5324 = vmatpush.msra.mxu0 0.0
        %5325 = vmatpush.msra.mxu0 0.0
        %5326 = vmatpush.msra.mxu0 0.0
        %5327 = vmatpush.msra.mxu0 0.0
        %5328 = vmatpush.msra.mxu0 0.0
        %5329 = vmatpush.msra.mxu0 0.0
        %5330 = vmatpush.msra.mxu0 0.0
        %5331 = vmatpush.msra.mxu0 %v5302
        %5332 = vmatpush.msra.mxu0 %v5299
        %5333 = vmatmul.f32.gmra.mxu0 %v5313
        %v5334 = vpop.f32.mrf.mxu0
        %v5335 = vadd.f32 0.0, %v5334
        %5336 = vmatmul.f32.gmra.mxu0 %v5315
        %v5337 = vpop.f32.mrf.mxu0
        %v5338 = vadd.f32 0.0, %v5337
        %5339 = vdwg.mxu0
        %5340 = vmatpush.msra.mxu0 0.0
        %5341 = vmatpush.msra.mxu0 0.0
        %5342 = vmatpush.msra.mxu0 0.0
        %5343 = vmatpush.msra.mxu0 0.0
        %5344 = vmatpush.msra.mxu0 0.0
        %5345 = vmatpush.msra.mxu0 0.0
        %5346 = vmatpush.msra.mxu0 0.0
        %5347 = vmatpush.msra.mxu0 0.0
        %5348 = vmatpush.msra.mxu0 0.0
        %5349 = vmatpush.msra.mxu0 0.0
        %5350 = vmatpush.msra.mxu0 0.0
        %5351 = vmatpush.msra.mxu0 0.0
        %5352 = vmatpush.msra.mxu0 0.0
        %5353 = vmatpush.msra.mxu0 0.0
        %5354 = vmatpush.msra.mxu0 %v5303
        %5355 = vmatpush.msra.mxu0 %v5300
        %5356 = vmatmul.f32.gmra.mxu0 %v5313
        %v5357 = vpop.f32.mrf.mxu0
        %v5358 = vadd.f32 0.0, %v5357
        %5359 = vmatmul.f32.gmra.mxu0 %v5315
        %v5360 = vpop.f32.mrf.mxu0
        %v5361 = vadd.f32 0.0, %v5360
        %5362 = vdwg.mxu0
        %5363 = vmatpush.msra.mxu0 0.0
        %5364 = vmatpush.msra.mxu0 0.0
        %5365 = vmatpush.msra.mxu0 0.0
        %5366 = vmatpush.msra.mxu0 0.0
        %5367 = vmatpush.msra.mxu0 0.0
        %5368 = vmatpush.msra.mxu0 0.0
        %5369 = vmatpush.msra.mxu0 0.0
        %5370 = vmatpush.msra.mxu0 0.0
        %5371 = vmatpush.msra.mxu0 0.0
        %5372 = vmatpush.msra.mxu0 0.0
        %5373 = vmatpush.msra.mxu0 0.0
        %5374 = vmatpush.msra.mxu0 0.0
        %5375 = vmatpush.msra.mxu0 0.0
        %5376 = vmatpush.msra.mxu0 0.0
        %5377 = vmatpush.msra.mxu0 %v5304
        %5378 = vmatpush.msra.mxu0 %v5301
        %5379 = vmatmul.f32.gmra.mxu0 %v5313
        %v5380 = vpop.f32.mrf.mxu0
        %v5381 = vadd.f32 0.0, %v5380
        %5382 = vmatmul.f32.gmra.mxu0 %v5315
        %v5383 = vpop.f32.mrf.mxu0
        %v5384 = vadd.f32 0.0, %v5383
        %5385 = vdwg.mxu0
        %5386 = vmatpush.msra.mxu0 0.0
        %5387 = vmatpush.msra.mxu0 0.0
        %5388 = vmatpush.msra.mxu0 0.0
        %5389 = vmatpush.msra.mxu0 0.0
        %5390 = vmatpush.msra.mxu0 0.0
        %5391 = vmatpush.msra.mxu0 0.0
        %5392 = vmatpush.msra.mxu0 0.0
        %5393 = vmatpush.msra.mxu0 0.0
        %5394 = vmatpush.msra.mxu0 0.0
        %5395 = vmatpush.msra.mxu0 0.0
        %5396 = vmatpush.msra.mxu0 0.0
        %5397 = vmatpush.msra.mxu0 0.0
        %5398 = vmatpush.msra.mxu0 0.0
        %5399 = vmatpush.msra.mxu0 0.0
        %5400 = vmatpush.msra.mxu0 %v5298
        %5401 = vmatpush.msra.mxu0 %v5290
        %5402 = vmatmul.f32.gmra.mxu0 %v5313
        %v5403 = vpop.f32.mrf.mxu0
        %v5404 = vadd.f32 0.0, %v5403
        %5405 = vmatmul.f32.gmra.mxu0 %v5315
        %v5406 = vpop.f32.mrf.mxu0
        %v5407 = vadd.f32 0.0, %v5406
        %5408 = vdwg.mxu0
        %v5409 = vadd.f32 %v5271, %v5335
        %v5410 = vadd.f32 %v5272, %v5358
        %v5411 = vadd.f32 %v5273, %v5381
        %v5412 = vadd.f32 %v5274, %v5404
        %v5413 = vadd.f32 %v5275, %v5338
        %v5414 = vadd.f32 %v5276, %v5361
        %v5415 = vadd.f32 %v5277, %v5384
        %v5416 = vadd.f32 %v5278, %v5407
        %v5417 = vld [vmem:[%s4] sm:$0xff]
        %v5418 = vld [vmem:[%s4 + $0x8] sm:$0xff]
        %5420 = vset.pattern.permute.xlu0 0
        %5421 = vperm.xlu0 %5420, %v5417
        %v5422 = vpop.permute.xlu0 %5421
        %5425 = vset.pattern.permute.xlu0 0
        %5426 = vperm.xlu0 %5425, %v5418
        %v5427 = vpop.permute.xlu0 %5426
        %v5429 = vadd.f32 %v5409, %v5422
        %v5430 = vadd.f32 %v5410, %v5422
        %v5431 = vadd.f32 %v5411, %v5422
        %v5432 = vadd.f32 %v5412, %v5422
        %v5433 = vadd.f32 %v5413, %v5427
        %v5434 = vadd.f32 %v5414, %v5427
        %v5435 = vadd.f32 %v5415, %v5427
        %v5436 = vadd.f32 %v5416, %v5427
        %vm5437 = vcmp.ge.f32.partialorder %v5429, 0.0
        %vm5438 = vcmp.ge.f32.partialorder %v5430, 0.0
        %vm5439 = vcmp.ge.f32.partialorder %v5431, 0.0
        %vm5440 = vcmp.ge.f32.partialorder %v5432, 0.0
        %vm5441 = vcmp.ge.f32.partialorder %v5433, 0.0
        %vm5442 = vcmp.ge.f32.partialorder %v5434, 0.0
        %vm5443 = vcmp.ge.f32.partialorder %v5435, 0.0
        %vm5444 = vcmp.ge.f32.partialorder %v5436, 0.0
        %v5445 = vstv %s466
        %v5446 = vmul.f32 %v5445, %v5429
        %v5447 = vmul.f32 %v5445, %v5430
        %v5448 = vmul.f32 %v5445, %v5431
        %v5449 = vmul.f32 %v5445, %v5432
        %v5450 = vmul.f32 %v5445, %v5433
        %v5451 = vmul.f32 %v5445, %v5434
        %v5452 = vmul.f32 %v5445, %v5435
        %v5453 = vmul.f32 %v5445, %v5436
        %v5454 = vsel %vm5437, %v5429, %v5446
        %v5455 = vsel %vm5438, %v5430, %v5447
        %v5456 = vsel %vm5439, %v5431, %v5448
        %v5457 = vsel %vm5440, %v5432, %v5449
        %v5458 = vsel %vm5441, %v5433, %v5450
        %v5459 = vsel %vm5442, %v5434, %v5451
        %v5460 = vsel %vm5443, %v5435, %v5452
        %v5461 = vsel %vm5444, %v5436, %v5453
        %v5462 = vlaneseq
        %v5463 = vand.u32 %v5462, 127
        %v5464 = vadd.s32 %v5463, 128
        %v5465 = vadd.s32 %v5463, 256
        %v5466 = vadd.s32 %v5463, 384
        %vm5467 = vcmp.lt.s32.totalorder %v5463, 0
        %v5468 = vsub.s32 0, %v5463
        %v5469 = vsel %vm5467, %v5468, %v5463
        %v5470 = vshrl.u32 %v5469, 5
        %v5471 = vand.u32 %v5469, 31
        %v5472 = vsub.s32 0, %v5471
        %v5473 = vsel %vm5467, %v5472, %v5471
        %vm5474 = vcmp.lt.s32.totalorder %v5464, 0
        %v5475 = vsub.s32 0, %v5464
        %v5476 = vsel %vm5474, %v5475, %v5464
        %v5477 = vshrl.u32 %v5476, 5
        %v5478 = vand.u32 %v5476, 31
        %v5479 = vsub.s32 0, %v5478
        %v5480 = vsel %vm5474, %v5479, %v5478
        %vm5481 = vcmp.lt.s32.totalorder %v5465, 0
        %v5482 = vsub.s32 0, %v5465
        %v5483 = vsel %vm5481, %v5482, %v5465
        %v5484 = vshrl.u32 %v5483, 5
        %v5485 = vand.u32 %v5483, 31
        %v5486 = vsub.s32 0, %v5485
        %v5487 = vsel %vm5481, %v5486, %v5485
        %vm5488 = vcmp.lt.s32.totalorder %v5466, 0
        %v5489 = vsub.s32 0, %v5466
        %v5490 = vsel %vm5488, %v5489, %v5466
        %v5491 = vshrl.u32 %v5490, 5
        %v5492 = vand.u32 %v5490, 31
        %v5493 = vsub.s32 0, %v5492
        %v5494 = vsel %vm5488, %v5493, %v5492
        %vm5495 = vcmp.ne.s32.totalorder %v5473, 0
        %vm5496 = vcmp.ne.s32.totalorder %v5480, 0
        %vm5497 = vcmp.ne.s32.totalorder %v5487, 0
        %vm5498 = vcmp.ne.s32.totalorder %v5494, 0
        %vm5499 = vcmp.lt.s32.totalorder %v5473, 0
        %vm5500 = vcmp.lt.s32.totalorder %v5480, 0
        %vm5501 = vcmp.lt.s32.totalorder %v5487, 0
        %vm5502 = vcmp.lt.s32.totalorder %v5494, 0
        %vm5503 = vmand %vm5499, %vm5495
        %vm5504 = vmand %vm5500, %vm5496
        %vm5505 = vmand %vm5501, %vm5497
        %vm5506 = vmand %vm5502, %vm5498
        %v5507 = vadd.s32 %v5473, 32
        %v5508 = vadd.s32 %v5480, 32
        %v5509 = vadd.s32 %v5487, 32
        %v5510 = vadd.s32 %v5494, 32
        %v5511 = vsel %vm5503, %v5507, %v5473
        %v5512 = vsel %vm5504, %v5508, %v5480
        %v5513 = vsel %vm5505, %v5509, %v5487
        %v5514 = vsel %vm5506, %v5510, %v5494
        %vm5515 = vcmp.lt.s32.totalorder %v5511, 16
        %vm5516 = vcmp.lt.s32.totalorder %v5512, 16
        %vm5517 = vcmp.lt.s32.totalorder %v5513, 16
        %vm5518 = vcmp.lt.s32.totalorder %v5514, 16
        %v5519 = vsel %vm5515, %v5454, 0.0
        %v5520 = vsel %vm5516, %v5455, 0.0
        %v5521 = vsel %vm5517, %v5456, 0.0
        %v5522 = vsel %vm5518, %v5457, 0.0
        %v5523 = vsel %vm5515, %v5458, 0.0
        %v5524 = vsel %vm5516, %v5459, 0.0
        %v5525 = vsel %vm5517, %v5460, 0.0
        %v5526 = vsel %vm5518, %v5461, 0.0
        %5527 = vst [vmem:[#allocation2] sm:$0xff] 0.0
        %5528 = vst [vmem:[#allocation2 + $0x8] sm:$0xff] 0.0
        %5529 = vst [vmem:[#allocation2 + $0x10] sm:$0xff] 0.0
        %5530 = vst [vmem:[#allocation2 + $0x18] sm:$0xff] 0.0
        %vm5531 = vcmask 523264
        %5532 = vst.msk [vmem:[#allocation2 + $0x20] sm:$0xff] %vm5531, 0.0
        %5533 = vst [vmem:[#allocation2 + $0x28] sm:$0xff] 0.0
        %5534 = vst [vmem:[#allocation2 + $0x30] sm:$0xff] 0.0
        %5535 = vst [vmem:[#allocation2 + $0x38] sm:$0xff] 0.0
        %5536 = vst [vmem:[#allocation2 + $0x40] sm:$0xff] 0.0
        %5537 = vst.msk [vmem:[#allocation2 + $0x48] sm:$0xff] %vm5531, 0.0
        %5546 = vrot.lane.b32.xlu0 %v5519, 40
        %v5547 = vpop.permute.xlu0 %5546
        %5548 = vrot.lane.b32.xlu0 %v5520, 40
        %v5549 = vpop.permute.xlu0 %5548
        %5550 = vrot.lane.b32.xlu0 %v5521, 40
        %v5551 = vpop.permute.xlu0 %5550
        %5552 = vrot.lane.b32.xlu0 %v5522, 40
        %v5553 = vpop.permute.xlu0 %5552
        %5554 = vrot.lane.b32.xlu0 %v5523, 40
        %v5555 = vpop.permute.xlu0 %5554
        %5556 = vrot.lane.b32.xlu0 %v5524, 40
        %v5557 = vpop.permute.xlu0 %5556
        %5558 = vrot.lane.b32.xlu0 %v5525, 40
        %v5559 = vpop.permute.xlu0 %5558
        %5560 = vrot.lane.b32.xlu0 %v5526, 40
        %v5561 = vpop.permute.xlu0 %5560
        %vm5562 = vcmask 326656
        %v5563 = vsel %vm5562, %v5547, %v5549
        %v5564 = vsel %vm5562, %v5549, %v5551
        %v5565 = vsel %vm5562, %v5551, %v5553
        %v5566 = vsel %vm5562, %v5555, %v5557
        %v5567 = vsel %vm5562, %v5557, %v5559
        %v5568 = vsel %vm5562, %v5559, %v5561
        %vm5579 = vcmask 1047872
        %5580 = vst.msk [vmem:[#allocation2] sm:$0xff] %vm5579, %v5547
        %5581 = vst [vmem:[#allocation2 + $0x8] sm:$0xff] %v5563
        %5582 = vst [vmem:[#allocation2 + $0x10] sm:$0xff] %v5564
        %5583 = vst [vmem:[#allocation2 + $0x18] sm:$0xff] %v5565
        %5584 = vst.msk [vmem:[#allocation2 + $0x20] sm:$0xff] %vm515, %v5553
        %5585 = vst.msk [vmem:[#allocation2 + $0x28] sm:$0xff] %vm5579, %v5555
        %5586 = vst [vmem:[#allocation2 + $0x30] sm:$0xff] %v5566
        %5587 = vst [vmem:[#allocation2 + $0x38] sm:$0xff] %v5567
        %5588 = vst [vmem:[#allocation2 + $0x40] sm:$0xff] %v5568
        %5589 = vst.msk [vmem:[#allocation2 + $0x48] sm:$0xff] %vm515, %v5561
        %v5590 = vld [vmem:[%s5] sm:$0xff]
        %v5591 = vld [vmem:[%s5 + $0x10] sm:$0xff]
        %v5592 = vld [vmem:[#allocation2] sm:$0xff]
        %v5593 = vld [vmem:[#allocation2 + $0x8] sm:$0xff]
        %v5594 = vld [vmem:[#allocation2 + $0x10] sm:$0xff]
        %v5595 = vld [vmem:[#allocation2 + $0x18] sm:$0xff]
        %v5596 = vld [vmem:[#allocation2 + $0x28] sm:$0xff]
        %v5597 = vld [vmem:[#allocation2 + $0x30] sm:$0xff]
        %v5598 = vld [vmem:[#allocation2 + $0x38] sm:$0xff]
        %v5599 = vld [vmem:[#allocation2 + $0x40] sm:$0xff]
        %5602 = vrot.lane.b32.xlu0 %v5590, 112
        %v5603 = vpop.permute.xlu0 %5602
        %5604 = vrot.lane.b32.xlu0 %v5591, 112
        %v5605 = vpop.permute.xlu0 %5604
        %5614 = vrot.lane.b32.xlu0 %v5592, 120
        %v5615 = vpop.permute.xlu0 %5614
        %5616 = vrot.lane.b32.xlu0 %v5593, 120
        %v5617 = vpop.permute.xlu0 %5616
        %5618 = vrot.lane.b32.xlu0 %v5594, 120
        %v5619 = vpop.permute.xlu0 %5618
        %5620 = vrot.lane.b32.xlu0 %v5595, 120
        %v5621 = vpop.permute.xlu0 %5620
        %5622 = vrot.lane.b32.xlu0 %v5596, 120
        %v5623 = vpop.permute.xlu0 %5622
        %5624 = vrot.lane.b32.xlu0 %v5597, 120
        %v5625 = vpop.permute.xlu0 %5624
        %5626 = vrot.lane.b32.xlu0 %v5598, 120
        %v5627 = vpop.permute.xlu0 %5626
        %5628 = vrot.lane.b32.xlu0 %v5599, 120
        %v5629 = vpop.permute.xlu0 %5628
        %v5630 = vsel %vm1066, %v5615, %v5617
        %v5631 = vsel %vm1066, %v5617, %v5619
        %v5632 = vsel %vm1066, %v5619, %v5621
        %v5633 = vsel %vm1066, %v5623, %v5625
        %v5634 = vsel %vm1066, %v5625, %v5627
        %v5635 = vsel %vm1066, %v5627, %v5629
        %v5644 = vsel %vm532, %v5603, 0
        %v5646 = vsel %vm532, %v5605, 0
        %5648 = vmatpush.msra.mxu0 0.0
        %5649 = vmatpush.msra.mxu0 0.0
        %5650 = vmatpush.msra.mxu0 0.0
        %5651 = vmatpush.msra.mxu0 0.0
        %5652 = vmatpush.msra.mxu0 0.0
        %5653 = vmatpush.msra.mxu0 0.0
        %5654 = vmatpush.msra.mxu0 0.0
        %5655 = vmatpush.msra.mxu0 0.0
        %5656 = vmatpush.msra.mxu0 0.0
        %5657 = vmatpush.msra.mxu0 0.0
        %5658 = vmatpush.msra.mxu0 0.0
        %5659 = vmatpush.msra.mxu0 0.0
        %5660 = vmatpush.msra.mxu0 0.0
        %5661 = vmatpush.msra.mxu0 0.0
        %5662 = vmatpush.msra.mxu0 %v5633
        %5663 = vmatpush.msra.mxu0 %v5630
        %5664 = vmatmul.f32.gmra.mxu0 %v5644
        %v5665 = vpop.f32.mrf.mxu0
        %v5666 = vadd.f32 0.0, %v5665
        %5667 = vmatmul.f32.gmra.mxu0 %v5646
        %v5668 = vpop.f32.mrf.mxu0
        %v5669 = vadd.f32 0.0, %v5668
        %5670 = vdwg.mxu0
        %5671 = vmatpush.msra.mxu0 0.0
        %5672 = vmatpush.msra.mxu0 0.0
        %5673 = vmatpush.msra.mxu0 0.0
        %5674 = vmatpush.msra.mxu0 0.0
        %5675 = vmatpush.msra.mxu0 0.0
        %5676 = vmatpush.msra.mxu0 0.0
        %5677 = vmatpush.msra.mxu0 0.0
        %5678 = vmatpush.msra.mxu0 0.0
        %5679 = vmatpush.msra.mxu0 0.0
        %5680 = vmatpush.msra.mxu0 0.0
        %5681 = vmatpush.msra.mxu0 0.0
        %5682 = vmatpush.msra.mxu0 0.0
        %5683 = vmatpush.msra.mxu0 0.0
        %5684 = vmatpush.msra.mxu0 0.0
        %5685 = vmatpush.msra.mxu0 %v5634
        %5686 = vmatpush.msra.mxu0 %v5631
        %5687 = vmatmul.f32.gmra.mxu0 %v5644
        %v5688 = vpop.f32.mrf.mxu0
        %v5689 = vadd.f32 0.0, %v5688
        %5690 = vmatmul.f32.gmra.mxu0 %v5646
        %v5691 = vpop.f32.mrf.mxu0
        %v5692 = vadd.f32 0.0, %v5691
        %5693 = vdwg.mxu0
        %5694 = vmatpush.msra.mxu0 0.0
        %5695 = vmatpush.msra.mxu0 0.0
        %5696 = vmatpush.msra.mxu0 0.0
        %5697 = vmatpush.msra.mxu0 0.0
        %5698 = vmatpush.msra.mxu0 0.0
        %5699 = vmatpush.msra.mxu0 0.0
        %5700 = vmatpush.msra.mxu0 0.0
        %5701 = vmatpush.msra.mxu0 0.0
        %5702 = vmatpush.msra.mxu0 0.0
        %5703 = vmatpush.msra.mxu0 0.0
        %5704 = vmatpush.msra.mxu0 0.0
        %5705 = vmatpush.msra.mxu0 0.0
        %5706 = vmatpush.msra.mxu0 0.0
        %5707 = vmatpush.msra.mxu0 0.0
        %5708 = vmatpush.msra.mxu0 %v5635
        %5709 = vmatpush.msra.mxu0 %v5632
        %5710 = vmatmul.f32.gmra.mxu0 %v5644
        %v5711 = vpop.f32.mrf.mxu0
        %v5712 = vadd.f32 0.0, %v5711
        %5713 = vmatmul.f32.gmra.mxu0 %v5646
        %v5714 = vpop.f32.mrf.mxu0
        %v5715 = vadd.f32 0.0, %v5714
        %5716 = vdwg.mxu0
        %5717 = vmatpush.msra.mxu0 0.0
        %5718 = vmatpush.msra.mxu0 0.0
        %5719 = vmatpush.msra.mxu0 0.0
        %5720 = vmatpush.msra.mxu0 0.0
        %5721 = vmatpush.msra.mxu0 0.0
        %5722 = vmatpush.msra.mxu0 0.0
        %5723 = vmatpush.msra.mxu0 0.0
        %5724 = vmatpush.msra.mxu0 0.0
        %5725 = vmatpush.msra.mxu0 0.0
        %5726 = vmatpush.msra.mxu0 0.0
        %5727 = vmatpush.msra.mxu0 0.0
        %5728 = vmatpush.msra.mxu0 0.0
        %5729 = vmatpush.msra.mxu0 0.0
        %5730 = vmatpush.msra.mxu0 0.0
        %5731 = vmatpush.msra.mxu0 %v5629
        %5732 = vmatpush.msra.mxu0 %v5621
        %5733 = vmatmul.f32.gmra.mxu0 %v5644
        %v5734 = vpop.f32.mrf.mxu0
        %v5735 = vadd.f32 0.0, %v5734
        %5736 = vmatmul.f32.gmra.mxu0 %v5646
        %v5737 = vpop.f32.mrf.mxu0
        %v5738 = vadd.f32 0.0, %v5737
        %5739 = vdwg.mxu0
        %5740 = vrot.lane.b32.xlu0 %v5592, 121
        %v5741 = vpop.permute.xlu0 %5740
        %5742 = vrot.lane.b32.xlu0 %v5593, 121
        %v5743 = vpop.permute.xlu0 %5742
        %5744 = vrot.lane.b32.xlu0 %v5594, 121
        %v5745 = vpop.permute.xlu0 %5744
        %5746 = vrot.lane.b32.xlu0 %v5595, 121
        %v5747 = vpop.permute.xlu0 %5746
        %5748 = vrot.lane.b32.xlu0 %v5596, 121
        %v5749 = vpop.permute.xlu0 %5748
        %5750 = vrot.lane.b32.xlu0 %v5597, 121
        %v5751 = vpop.permute.xlu0 %5750
        %5752 = vrot.lane.b32.xlu0 %v5598, 121
        %v5753 = vpop.permute.xlu0 %5752
        %5754 = vrot.lane.b32.xlu0 %v5599, 121
        %v5755 = vpop.permute.xlu0 %5754
        %v5756 = vsel %vm927, %v5741, %v5743
        %v5757 = vsel %vm927, %v5743, %v5745
        %v5758 = vsel %vm927, %v5745, %v5747
        %v5759 = vsel %vm927, %v5749, %v5751
        %v5760 = vsel %vm927, %v5751, %v5753
        %v5761 = vsel %vm927, %v5753, %v5755
        %v5770 = vsel %vm532, %v5590, 0
        %v5772 = vsel %vm532, %v5591, 0
        %5774 = vmatpush.msra.mxu0 0.0
        %5775 = vmatpush.msra.mxu0 0.0
        %5776 = vmatpush.msra.mxu0 0.0
        %5777 = vmatpush.msra.mxu0 0.0
        %5778 = vmatpush.msra.mxu0 0.0
        %5779 = vmatpush.msra.mxu0 0.0
        %5780 = vmatpush.msra.mxu0 0.0
        %5781 = vmatpush.msra.mxu0 0.0
        %5782 = vmatpush.msra.mxu0 0.0
        %5783 = vmatpush.msra.mxu0 0.0
        %5784 = vmatpush.msra.mxu0 0.0
        %5785 = vmatpush.msra.mxu0 0.0
        %5786 = vmatpush.msra.mxu0 0.0
        %5787 = vmatpush.msra.mxu0 0.0
        %5788 = vmatpush.msra.mxu0 %v5759
        %5789 = vmatpush.msra.mxu0 %v5756
        %5790 = vmatmul.f32.gmra.mxu0 %v5770
        %v5791 = vpop.f32.mrf.mxu0
        %v5792 = vadd.f32 %v5666, %v5791
        %5793 = vmatmul.f32.gmra.mxu0 %v5772
        %v5794 = vpop.f32.mrf.mxu0
        %v5795 = vadd.f32 %v5669, %v5794
        %5796 = vdwg.mxu0
        %5797 = vmatpush.msra.mxu0 0.0
        %5798 = vmatpush.msra.mxu0 0.0
        %5799 = vmatpush.msra.mxu0 0.0
        %5800 = vmatpush.msra.mxu0 0.0
        %5801 = vmatpush.msra.mxu0 0.0
        %5802 = vmatpush.msra.mxu0 0.0
        %5803 = vmatpush.msra.mxu0 0.0
        %5804 = vmatpush.msra.mxu0 0.0
        %5805 = vmatpush.msra.mxu0 0.0
        %5806 = vmatpush.msra.mxu0 0.0
        %5807 = vmatpush.msra.mxu0 0.0
        %5808 = vmatpush.msra.mxu0 0.0
        %5809 = vmatpush.msra.mxu0 0.0
        %5810 = vmatpush.msra.mxu0 0.0
        %5811 = vmatpush.msra.mxu0 %v5760
        %5812 = vmatpush.msra.mxu0 %v5757
        %5813 = vmatmul.f32.gmra.mxu0 %v5770
        %v5814 = vpop.f32.mrf.mxu0
        %v5815 = vadd.f32 %v5689, %v5814
        %5816 = vmatmul.f32.gmra.mxu0 %v5772
        %v5817 = vpop.f32.mrf.mxu0
        %v5818 = vadd.f32 %v5692, %v5817
        %5819 = vdwg.mxu0
        %5820 = vmatpush.msra.mxu0 0.0
        %5821 = vmatpush.msra.mxu0 0.0
        %5822 = vmatpush.msra.mxu0 0.0
        %5823 = vmatpush.msra.mxu0 0.0
        %5824 = vmatpush.msra.mxu0 0.0
        %5825 = vmatpush.msra.mxu0 0.0
        %5826 = vmatpush.msra.mxu0 0.0
        %5827 = vmatpush.msra.mxu0 0.0
        %5828 = vmatpush.msra.mxu0 0.0
        %5829 = vmatpush.msra.mxu0 0.0
        %5830 = vmatpush.msra.mxu0 0.0
        %5831 = vmatpush.msra.mxu0 0.0
        %5832 = vmatpush.msra.mxu0 0.0
        %5833 = vmatpush.msra.mxu0 0.0
        %5834 = vmatpush.msra.mxu0 %v5761
        %5835 = vmatpush.msra.mxu0 %v5758
        %5836 = vmatmul.f32.gmra.mxu0 %v5770
        %v5837 = vpop.f32.mrf.mxu0
        %v5838 = vadd.f32 %v5712, %v5837
        %5839 = vmatmul.f32.gmra.mxu0 %v5772
        %v5840 = vpop.f32.mrf.mxu0
        %v5841 = vadd.f32 %v5715, %v5840
        %5842 = vdwg.mxu0
        %5843 = vmatpush.msra.mxu0 0.0
        %5844 = vmatpush.msra.mxu0 0.0
        %5845 = vmatpush.msra.mxu0 0.0
        %5846 = vmatpush.msra.mxu0 0.0
        %5847 = vmatpush.msra.mxu0 0.0
        %5848 = vmatpush.msra.mxu0 0.0
        %5849 = vmatpush.msra.mxu0 0.0
        %5850 = vmatpush.msra.mxu0 0.0
        %5851 = vmatpush.msra.mxu0 0.0
        %5852 = vmatpush.msra.mxu0 0.0
        %5853 = vmatpush.msra.mxu0 0.0
        %5854 = vmatpush.msra.mxu0 0.0
        %5855 = vmatpush.msra.mxu0 0.0
        %5856 = vmatpush.msra.mxu0 0.0
        %5857 = vmatpush.msra.mxu0 %v5755
        %5858 = vmatpush.msra.mxu0 %v5747
        %5859 = vmatmul.f32.gmra.mxu0 %v5770
        %v5860 = vpop.f32.mrf.mxu0
        %v5861 = vadd.f32 %v5735, %v5860
        %5862 = vmatmul.f32.gmra.mxu0 %v5772
        %v5863 = vpop.f32.mrf.mxu0
        %v5864 = vadd.f32 %v5738, %v5863
        %5865 = vdwg.mxu0
        %5866 = vrot.lane.b32.xlu0 %v5590, 96
        %v5867 = vpop.permute.xlu0 %5866
        %5868 = vrot.lane.b32.xlu0 %v5591, 96
        %v5869 = vpop.permute.xlu0 %5868
        %5870 = vrot.lane.b32.xlu0 %v5592, 119
        %v5871 = vpop.permute.xlu0 %5870
        %5872 = vrot.lane.b32.xlu0 %v5593, 119
        %v5873 = vpop.permute.xlu0 %5872
        %5874 = vrot.lane.b32.xlu0 %v5594, 119
        %v5875 = vpop.permute.xlu0 %5874
        %5876 = vrot.lane.b32.xlu0 %v5595, 119
        %v5877 = vpop.permute.xlu0 %5876
        %5878 = vrot.lane.b32.xlu0 %v5596, 119
        %v5879 = vpop.permute.xlu0 %5878
        %5880 = vrot.lane.b32.xlu0 %v5597, 119
        %v5881 = vpop.permute.xlu0 %5880
        %5882 = vrot.lane.b32.xlu0 %v5598, 119
        %v5883 = vpop.permute.xlu0 %5882
        %5884 = vrot.lane.b32.xlu0 %v5599, 119
        %v5885 = vpop.permute.xlu0 %5884
        %v5886 = vsel %vm1205, %v5871, %v5873
        %v5887 = vsel %vm1205, %v5873, %v5875
        %v5888 = vsel %vm1205, %v5875, %v5877
        %v5889 = vsel %vm1205, %v5879, %v5881
        %v5890 = vsel %vm1205, %v5881, %v5883
        %v5891 = vsel %vm1205, %v5883, %v5885
        %v5900 = vsel %vm532, %v5867, 0
        %v5902 = vsel %vm532, %v5869, 0
        %5904 = vmatpush.msra.mxu0 0.0
        %5905 = vmatpush.msra.mxu0 0.0
        %5906 = vmatpush.msra.mxu0 0.0
        %5907 = vmatpush.msra.mxu0 0.0
        %5908 = vmatpush.msra.mxu0 0.0
        %5909 = vmatpush.msra.mxu0 0.0
        %5910 = vmatpush.msra.mxu0 0.0
        %5911 = vmatpush.msra.mxu0 0.0
        %5912 = vmatpush.msra.mxu0 0.0
        %5913 = vmatpush.msra.mxu0 0.0
        %5914 = vmatpush.msra.mxu0 0.0
        %5915 = vmatpush.msra.mxu0 0.0
        %5916 = vmatpush.msra.mxu0 0.0
        %5917 = vmatpush.msra.mxu0 0.0
        %5918 = vmatpush.msra.mxu0 %v5889
        %5919 = vmatpush.msra.mxu0 %v5886
        %5920 = vmatmul.f32.gmra.mxu0 %v5900
        %v5921 = vpop.f32.mrf.mxu0
        %v5922 = vadd.f32 0.0, %v5921
        %5923 = vmatmul.f32.gmra.mxu0 %v5902
        %v5924 = vpop.f32.mrf.mxu0
        %v5925 = vadd.f32 0.0, %v5924
        %5926 = vdwg.mxu0
        %5927 = vmatpush.msra.mxu0 0.0
        %5928 = vmatpush.msra.mxu0 0.0
        %5929 = vmatpush.msra.mxu0 0.0
        %5930 = vmatpush.msra.mxu0 0.0
        %5931 = vmatpush.msra.mxu0 0.0
        %5932 = vmatpush.msra.mxu0 0.0
        %5933 = vmatpush.msra.mxu0 0.0
        %5934 = vmatpush.msra.mxu0 0.0
        %5935 = vmatpush.msra.mxu0 0.0
        %5936 = vmatpush.msra.mxu0 0.0
        %5937 = vmatpush.msra.mxu0 0.0
        %5938 = vmatpush.msra.mxu0 0.0
        %5939 = vmatpush.msra.mxu0 0.0
        %5940 = vmatpush.msra.mxu0 0.0
        %5941 = vmatpush.msra.mxu0 %v5890
        %5942 = vmatpush.msra.mxu0 %v5887
        %5943 = vmatmul.f32.gmra.mxu0 %v5900
        %v5944 = vpop.f32.mrf.mxu0
        %v5945 = vadd.f32 0.0, %v5944
        %5946 = vmatmul.f32.gmra.mxu0 %v5902
        %v5947 = vpop.f32.mrf.mxu0
        %v5948 = vadd.f32 0.0, %v5947
        %5949 = vdwg.mxu0
        %5950 = vmatpush.msra.mxu0 0.0
        %5951 = vmatpush.msra.mxu0 0.0
        %5952 = vmatpush.msra.mxu0 0.0
        %5953 = vmatpush.msra.mxu0 0.0
        %5954 = vmatpush.msra.mxu0 0.0
        %5955 = vmatpush.msra.mxu0 0.0
        %5956 = vmatpush.msra.mxu0 0.0
        %5957 = vmatpush.msra.mxu0 0.0
        %5958 = vmatpush.msra.mxu0 0.0
        %5959 = vmatpush.msra.mxu0 0.0
        %5960 = vmatpush.msra.mxu0 0.0
        %5961 = vmatpush.msra.mxu0 0.0
        %5962 = vmatpush.msra.mxu0 0.0
        %5963 = vmatpush.msra.mxu0 0.0
        %5964 = vmatpush.msra.mxu0 %v5891
        %5965 = vmatpush.msra.mxu0 %v5888
        %5966 = vmatmul.f32.gmra.mxu0 %v5900
        %v5967 = vpop.f32.mrf.mxu0
        %v5968 = vadd.f32 0.0, %v5967
        %5969 = vmatmul.f32.gmra.mxu0 %v5902
        %v5970 = vpop.f32.mrf.mxu0
        %v5971 = vadd.f32 0.0, %v5970
        %5972 = vdwg.mxu0
        %5973 = vmatpush.msra.mxu0 0.0
        %5974 = vmatpush.msra.mxu0 0.0
        %5975 = vmatpush.msra.mxu0 0.0
        %5976 = vmatpush.msra.mxu0 0.0
        %5977 = vmatpush.msra.mxu0 0.0
        %5978 = vmatpush.msra.mxu0 0.0
        %5979 = vmatpush.msra.mxu0 0.0
        %5980 = vmatpush.msra.mxu0 0.0
        %5981 = vmatpush.msra.mxu0 0.0
        %5982 = vmatpush.msra.mxu0 0.0
        %5983 = vmatpush.msra.mxu0 0.0
        %5984 = vmatpush.msra.mxu0 0.0
        %5985 = vmatpush.msra.mxu0 0.0
        %5986 = vmatpush.msra.mxu0 0.0
        %5987 = vmatpush.msra.mxu0 %v5885
        %5988 = vmatpush.msra.mxu0 %v5877
        %5989 = vmatmul.f32.gmra.mxu0 %v5900
        %v5990 = vpop.f32.mrf.mxu0
        %v5991 = vadd.f32 0.0, %v5990
        %5992 = vmatmul.f32.gmra.mxu0 %v5902
        %v5993 = vpop.f32.mrf.mxu0
        %v5994 = vadd.f32 0.0, %v5993
        %5995 = vdwg.mxu0
        %v5996 = vadd.f32 %v5792, %v5922
        %v5997 = vadd.f32 %v5815, %v5945
        %v5998 = vadd.f32 %v5838, %v5968
        %v5999 = vadd.f32 %v5861, %v5991
        %v6000 = vadd.f32 %v5795, %v5925
        %v6001 = vadd.f32 %v5818, %v5948
        %v6002 = vadd.f32 %v5841, %v5971
        %v6003 = vadd.f32 %v5864, %v5994
        %v6004 = vld [vmem:[#allocation2] sm:$0xff]
        %v6005 = vld [vmem:[#allocation2 + $0x8] sm:$0xff]
        %v6006 = vld [vmem:[#allocation2 + $0x10] sm:$0xff]
        %v6007 = vld [vmem:[#allocation2 + $0x18] sm:$0xff]
        %v6008 = vld [vmem:[#allocation2 + $0x20] sm:$0xff]
        %v6009 = vld [vmem:[#allocation2 + $0x28] sm:$0xff]
        %v6010 = vld [vmem:[#allocation2 + $0x30] sm:$0xff]
        %v6011 = vld [vmem:[#allocation2 + $0x38] sm:$0xff]
        %v6012 = vld [vmem:[#allocation2 + $0x40] sm:$0xff]
        %v6013 = vld [vmem:[#allocation2 + $0x48] sm:$0xff]
        %6014 = vrot.lane.b32.xlu0 %v5590, 80
        %v6015 = vpop.permute.xlu0 %6014
        %6016 = vrot.lane.b32.xlu0 %v5591, 80
        %v6017 = vpop.permute.xlu0 %6016
        %6028 = vrot.lane.b32.xlu0 %v6004, 89
        %v6029 = vpop.permute.xlu0 %6028
        %6030 = vrot.lane.b32.xlu0 %v6005, 89
        %v6031 = vpop.permute.xlu0 %6030
        %6032 = vrot.lane.b32.xlu0 %v6006, 89
        %v6033 = vpop.permute.xlu0 %6032
        %6034 = vrot.lane.b32.xlu0 %v6007, 89
        %v6035 = vpop.permute.xlu0 %6034
        %6036 = vrot.lane.b32.xlu0 %v6008, 89
        %v6037 = vpop.permute.xlu0 %6036
        %6038 = vrot.lane.b32.xlu0 %v6009, 89
        %v6039 = vpop.permute.xlu0 %6038
        %6040 = vrot.lane.b32.xlu0 %v6010, 89
        %v6041 = vpop.permute.xlu0 %6040
        %6042 = vrot.lane.b32.xlu0 %v6011, 89
        %v6043 = vpop.permute.xlu0 %6042
        %6044 = vrot.lane.b32.xlu0 %v6012, 89
        %v6045 = vpop.permute.xlu0 %6044
        %6046 = vrot.lane.b32.xlu0 %v6013, 89
        %v6047 = vpop.permute.xlu0 %6046
        %v6048 = vsel %vm1368, %v6029, %v6031
        %v6049 = vsel %vm1368, %v6031, %v6033
        %v6050 = vsel %vm1368, %v6033, %v6035
        %v6051 = vsel %vm1368, %v6035, %v6037
        %v6052 = vsel %vm1368, %v6039, %v6041
        %v6053 = vsel %vm1368, %v6041, %v6043
        %v6054 = vsel %vm1368, %v6043, %v6045
        %v6055 = vsel %vm1368, %v6045, %v6047
        %v6064 = vsel %vm532, %v6015, 0
        %v6066 = vsel %vm532, %v6017, 0
        %6068 = vmatpush.msra.mxu0 0.0
        %6069 = vmatpush.msra.mxu0 0.0
        %6070 = vmatpush.msra.mxu0 0.0
        %6071 = vmatpush.msra.mxu0 0.0
        %6072 = vmatpush.msra.mxu0 0.0
        %6073 = vmatpush.msra.mxu0 0.0
        %6074 = vmatpush.msra.mxu0 0.0
        %6075 = vmatpush.msra.mxu0 0.0
        %6076 = vmatpush.msra.mxu0 0.0
        %6077 = vmatpush.msra.mxu0 0.0
        %6078 = vmatpush.msra.mxu0 0.0
        %6079 = vmatpush.msra.mxu0 0.0
        %6080 = vmatpush.msra.mxu0 0.0
        %6081 = vmatpush.msra.mxu0 0.0
        %6082 = vmatpush.msra.mxu0 %v6052
        %6083 = vmatpush.msra.mxu0 %v6048
        %6084 = vmatmul.f32.gmra.mxu0 %v6064
        %v6085 = vpop.f32.mrf.mxu0
        %v6086 = vadd.f32 0.0, %v6085
        %6087 = vmatmul.f32.gmra.mxu0 %v6066
        %v6088 = vpop.f32.mrf.mxu0
        %v6089 = vadd.f32 0.0, %v6088
        %6090 = vdwg.mxu0
        %6091 = vmatpush.msra.mxu0 0.0
        %6092 = vmatpush.msra.mxu0 0.0
        %6093 = vmatpush.msra.mxu0 0.0
        %6094 = vmatpush.msra.mxu0 0.0
        %6095 = vmatpush.msra.mxu0 0.0
        %6096 = vmatpush.msra.mxu0 0.0
        %6097 = vmatpush.msra.mxu0 0.0
        %6098 = vmatpush.msra.mxu0 0.0
        %6099 = vmatpush.msra.mxu0 0.0
        %6100 = vmatpush.msra.mxu0 0.0
        %6101 = vmatpush.msra.mxu0 0.0
        %6102 = vmatpush.msra.mxu0 0.0
        %6103 = vmatpush.msra.mxu0 0.0
        %6104 = vmatpush.msra.mxu0 0.0
        %6105 = vmatpush.msra.mxu0 %v6053
        %6106 = vmatpush.msra.mxu0 %v6049
        %6107 = vmatmul.f32.gmra.mxu0 %v6064
        %v6108 = vpop.f32.mrf.mxu0
        %v6109 = vadd.f32 0.0, %v6108
        %6110 = vmatmul.f32.gmra.mxu0 %v6066
        %v6111 = vpop.f32.mrf.mxu0
        %v6112 = vadd.f32 0.0, %v6111
        %6113 = vdwg.mxu0
        %6114 = vmatpush.msra.mxu0 0.0
        %6115 = vmatpush.msra.mxu0 0.0
        %6116 = vmatpush.msra.mxu0 0.0
        %6117 = vmatpush.msra.mxu0 0.0
        %6118 = vmatpush.msra.mxu0 0.0
        %6119 = vmatpush.msra.mxu0 0.0
        %6120 = vmatpush.msra.mxu0 0.0
        %6121 = vmatpush.msra.mxu0 0.0
        %6122 = vmatpush.msra.mxu0 0.0
        %6123 = vmatpush.msra.mxu0 0.0
        %6124 = vmatpush.msra.mxu0 0.0
        %6125 = vmatpush.msra.mxu0 0.0
        %6126 = vmatpush.msra.mxu0 0.0
        %6127 = vmatpush.msra.mxu0 0.0
        %6128 = vmatpush.msra.mxu0 %v6054
        %6129 = vmatpush.msra.mxu0 %v6050
        %6130 = vmatmul.f32.gmra.mxu0 %v6064
        %v6131 = vpop.f32.mrf.mxu0
        %v6132 = vadd.f32 0.0, %v6131
        %6133 = vmatmul.f32.gmra.mxu0 %v6066
        %v6134 = vpop.f32.mrf.mxu0
        %v6135 = vadd.f32 0.0, %v6134
        %6136 = vdwg.mxu0
        %6137 = vmatpush.msra.mxu0 0.0
        %6138 = vmatpush.msra.mxu0 0.0
        %6139 = vmatpush.msra.mxu0 0.0
        %6140 = vmatpush.msra.mxu0 0.0
        %6141 = vmatpush.msra.mxu0 0.0
        %6142 = vmatpush.msra.mxu0 0.0
        %6143 = vmatpush.msra.mxu0 0.0
        %6144 = vmatpush.msra.mxu0 0.0
        %6145 = vmatpush.msra.mxu0 0.0
        %6146 = vmatpush.msra.mxu0 0.0
        %6147 = vmatpush.msra.mxu0 0.0
        %6148 = vmatpush.msra.mxu0 0.0
        %6149 = vmatpush.msra.mxu0 0.0
        %6150 = vmatpush.msra.mxu0 0.0
        %6151 = vmatpush.msra.mxu0 %v6055
        %6152 = vmatpush.msra.mxu0 %v6051
        %6153 = vmatmul.f32.gmra.mxu0 %v6064
        %v6154 = vpop.f32.mrf.mxu0
        %v6155 = vadd.f32 0.0, %v6154
        %6156 = vmatmul.f32.gmra.mxu0 %v6066
        %v6157 = vpop.f32.mrf.mxu0
        %v6158 = vadd.f32 0.0, %v6157
        %6159 = vdwg.mxu0
        %v6160 = vadd.f32 %v5996, %v6086
        %v6161 = vadd.f32 %v5997, %v6109
        %v6162 = vadd.f32 %v5998, %v6132
        %v6163 = vadd.f32 %v5999, %v6155
        %v6164 = vadd.f32 %v6000, %v6089
        %v6165 = vadd.f32 %v6001, %v6112
        %v6166 = vadd.f32 %v6002, %v6135
        %v6167 = vadd.f32 %v6003, %v6158
        %6168 = vrot.lane.b32.xlu0 %v5590, 64
        %v6169 = vpop.permute.xlu0 %6168
        %6170 = vrot.lane.b32.xlu0 %v5591, 64
        %v6171 = vpop.permute.xlu0 %6170
        %6172 = vrot.lane.b32.xlu0 %v6004, 88
        %v6173 = vpop.permute.xlu0 %6172
        %6174 = vrot.lane.b32.xlu0 %v6005, 88
        %v6175 = vpop.permute.xlu0 %6174
        %6176 = vrot.lane.b32.xlu0 %v6006, 88
        %v6177 = vpop.permute.xlu0 %6176
        %6178 = vrot.lane.b32.xlu0 %v6007, 88
        %v6179 = vpop.permute.xlu0 %6178
        %6180 = vrot.lane.b32.xlu0 %v6008, 88
        %v6181 = vpop.permute.xlu0 %6180
        %6182 = vrot.lane.b32.xlu0 %v6009, 88
        %v6183 = vpop.permute.xlu0 %6182
        %6184 = vrot.lane.b32.xlu0 %v6010, 88
        %v6185 = vpop.permute.xlu0 %6184
        %6186 = vrot.lane.b32.xlu0 %v6011, 88
        %v6187 = vpop.permute.xlu0 %6186
        %6188 = vrot.lane.b32.xlu0 %v6012, 88
        %v6189 = vpop.permute.xlu0 %6188
        %6190 = vrot.lane.b32.xlu0 %v6013, 88
        %v6191 = vpop.permute.xlu0 %6190
        %v6192 = vsel %vm1513, %v6173, %v6175
        %v6193 = vsel %vm1513, %v6175, %v6177
        %v6194 = vsel %vm1513, %v6177, %v6179
        %v6195 = vsel %vm1513, %v6179, %v6181
        %v6196 = vsel %vm1513, %v6183, %v6185
        %v6197 = vsel %vm1513, %v6185, %v6187
        %v6198 = vsel %vm1513, %v6187, %v6189
        %v6199 = vsel %vm1513, %v6189, %v6191
        %v6208 = vsel %vm532, %v6169, 0
        %v6210 = vsel %vm532, %v6171, 0
        %6212 = vmatpush.msra.mxu0 0.0
        %6213 = vmatpush.msra.mxu0 0.0
        %6214 = vmatpush.msra.mxu0 0.0
        %6215 = vmatpush.msra.mxu0 0.0
        %6216 = vmatpush.msra.mxu0 0.0
        %6217 = vmatpush.msra.mxu0 0.0
        %6218 = vmatpush.msra.mxu0 0.0
        %6219 = vmatpush.msra.mxu0 0.0
        %6220 = vmatpush.msra.mxu0 0.0
        %6221 = vmatpush.msra.mxu0 0.0
        %6222 = vmatpush.msra.mxu0 0.0
        %6223 = vmatpush.msra.mxu0 0.0
        %6224 = vmatpush.msra.mxu0 0.0
        %6225 = vmatpush.msra.mxu0 0.0
        %6226 = vmatpush.msra.mxu0 %v6196
        %6227 = vmatpush.msra.mxu0 %v6192
        %6228 = vmatmul.f32.gmra.mxu0 %v6208
        %v6229 = vpop.f32.mrf.mxu0
        %v6230 = vadd.f32 0.0, %v6229
        %6231 = vmatmul.f32.gmra.mxu0 %v6210
        %v6232 = vpop.f32.mrf.mxu0
        %v6233 = vadd.f32 0.0, %v6232
        %6234 = vdwg.mxu0
        %6235 = vmatpush.msra.mxu0 0.0
        %6236 = vmatpush.msra.mxu0 0.0
        %6237 = vmatpush.msra.mxu0 0.0
        %6238 = vmatpush.msra.mxu0 0.0
        %6239 = vmatpush.msra.mxu0 0.0
        %6240 = vmatpush.msra.mxu0 0.0
        %6241 = vmatpush.msra.mxu0 0.0
        %6242 = vmatpush.msra.mxu0 0.0
        %6243 = vmatpush.msra.mxu0 0.0
        %6244 = vmatpush.msra.mxu0 0.0
        %6245 = vmatpush.msra.mxu0 0.0
        %6246 = vmatpush.msra.mxu0 0.0
        %6247 = vmatpush.msra.mxu0 0.0
        %6248 = vmatpush.msra.mxu0 0.0
        %6249 = vmatpush.msra.mxu0 %v6197
        %6250 = vmatpush.msra.mxu0 %v6193
        %6251 = vmatmul.f32.gmra.mxu0 %v6208
        %v6252 = vpop.f32.mrf.mxu0
        %v6253 = vadd.f32 0.0, %v6252
        %6254 = vmatmul.f32.gmra.mxu0 %v6210
        %v6255 = vpop.f32.mrf.mxu0
        %v6256 = vadd.f32 0.0, %v6255
        %6257 = vdwg.mxu0
        %6258 = vmatpush.msra.mxu0 0.0
        %6259 = vmatpush.msra.mxu0 0.0
        %6260 = vmatpush.msra.mxu0 0.0
        %6261 = vmatpush.msra.mxu0 0.0
        %6262 = vmatpush.msra.mxu0 0.0
        %6263 = vmatpush.msra.mxu0 0.0
        %6264 = vmatpush.msra.mxu0 0.0
        %6265 = vmatpush.msra.mxu0 0.0
        %6266 = vmatpush.msra.mxu0 0.0
        %6267 = vmatpush.msra.mxu0 0.0
        %6268 = vmatpush.msra.mxu0 0.0
        %6269 = vmatpush.msra.mxu0 0.0
        %6270 = vmatpush.msra.mxu0 0.0
        %6271 = vmatpush.msra.mxu0 0.0
        %6272 = vmatpush.msra.mxu0 %v6198
        %6273 = vmatpush.msra.mxu0 %v6194
        %6274 = vmatmul.f32.gmra.mxu0 %v6208
        %v6275 = vpop.f32.mrf.mxu0
        %v6276 = vadd.f32 0.0, %v6275
        %6277 = vmatmul.f32.gmra.mxu0 %v6210
        %v6278 = vpop.f32.mrf.mxu0
        %v6279 = vadd.f32 0.0, %v6278
        %6280 = vdwg.mxu0
        %6281 = vmatpush.msra.mxu0 0.0
        %6282 = vmatpush.msra.mxu0 0.0
        %6283 = vmatpush.msra.mxu0 0.0
        %6284 = vmatpush.msra.mxu0 0.0
        %6285 = vmatpush.msra.mxu0 0.0
        %6286 = vmatpush.msra.mxu0 0.0
        %6287 = vmatpush.msra.mxu0 0.0
        %6288 = vmatpush.msra.mxu0 0.0
        %6289 = vmatpush.msra.mxu0 0.0
        %6290 = vmatpush.msra.mxu0 0.0
        %6291 = vmatpush.msra.mxu0 0.0
        %6292 = vmatpush.msra.mxu0 0.0
        %6293 = vmatpush.msra.mxu0 0.0
        %6294 = vmatpush.msra.mxu0 0.0
        %6295 = vmatpush.msra.mxu0 %v6199
        %6296 = vmatpush.msra.mxu0 %v6195
        %6297 = vmatmul.f32.gmra.mxu0 %v6208
        %v6298 = vpop.f32.mrf.mxu0
        %v6299 = vadd.f32 0.0, %v6298
        %6300 = vmatmul.f32.gmra.mxu0 %v6210
        %v6301 = vpop.f32.mrf.mxu0
        %v6302 = vadd.f32 0.0, %v6301
        %6303 = vdwg.mxu0
        %v6304 = vadd.f32 %v6160, %v6230
        %v6305 = vadd.f32 %v6161, %v6253
        %v6306 = vadd.f32 %v6162, %v6276
        %v6307 = vadd.f32 %v6163, %v6299
        %v6308 = vadd.f32 %v6164, %v6233
        %v6309 = vadd.f32 %v6165, %v6256
        %v6310 = vadd.f32 %v6166, %v6279
        %v6311 = vadd.f32 %v6167, %v6302
        %6312 = vrot.lane.b32.xlu0 %v5590, 48
        %v6313 = vpop.permute.xlu0 %6312
        %6314 = vrot.lane.b32.xlu0 %v5591, 48
        %v6315 = vpop.permute.xlu0 %6314
        %6316 = vrot.lane.b32.xlu0 %v6004, 87
        %v6317 = vpop.permute.xlu0 %6316
        %6318 = vrot.lane.b32.xlu0 %v6005, 87
        %v6319 = vpop.permute.xlu0 %6318
        %6320 = vrot.lane.b32.xlu0 %v6006, 87
        %v6321 = vpop.permute.xlu0 %6320
        %6322 = vrot.lane.b32.xlu0 %v6007, 87
        %v6323 = vpop.permute.xlu0 %6322
        %6324 = vrot.lane.b32.xlu0 %v6008, 87
        %v6325 = vpop.permute.xlu0 %6324
        %6326 = vrot.lane.b32.xlu0 %v6009, 87
        %v6327 = vpop.permute.xlu0 %6326
        %6328 = vrot.lane.b32.xlu0 %v6010, 87
        %v6329 = vpop.permute.xlu0 %6328
        %6330 = vrot.lane.b32.xlu0 %v6011, 87
        %v6331 = vpop.permute.xlu0 %6330
        %6332 = vrot.lane.b32.xlu0 %v6012, 87
        %v6333 = vpop.permute.xlu0 %6332
        %6334 = vrot.lane.b32.xlu0 %v6013, 87
        %v6335 = vpop.permute.xlu0 %6334
        %v6336 = vsel %vm1656, %v6317, %v6319
        %v6337 = vsel %vm1656, %v6319, %v6321
        %v6338 = vsel %vm1656, %v6321, %v6323
        %v6339 = vsel %vm1656, %v6323, %v6325
        %v6340 = vsel %vm1656, %v6327, %v6329
        %v6341 = vsel %vm1656, %v6329, %v6331
        %v6342 = vsel %vm1656, %v6331, %v6333
        %v6343 = vsel %vm1656, %v6333, %v6335
        %v6352 = vsel %vm532, %v6313, 0
        %v6354 = vsel %vm532, %v6315, 0
        %6356 = vmatpush.msra.mxu0 0.0
        %6357 = vmatpush.msra.mxu0 0.0
        %6358 = vmatpush.msra.mxu0 0.0
        %6359 = vmatpush.msra.mxu0 0.0
        %6360 = vmatpush.msra.mxu0 0.0
        %6361 = vmatpush.msra.mxu0 0.0
        %6362 = vmatpush.msra.mxu0 0.0
        %6363 = vmatpush.msra.mxu0 0.0
        %6364 = vmatpush.msra.mxu0 0.0
        %6365 = vmatpush.msra.mxu0 0.0
        %6366 = vmatpush.msra.mxu0 0.0
        %6367 = vmatpush.msra.mxu0 0.0
        %6368 = vmatpush.msra.mxu0 0.0
        %6369 = vmatpush.msra.mxu0 0.0
        %6370 = vmatpush.msra.mxu0 %v6340
        %6371 = vmatpush.msra.mxu0 %v6336
        %6372 = vmatmul.f32.gmra.mxu0 %v6352
        %v6373 = vpop.f32.mrf.mxu0
        %v6374 = vadd.f32 0.0, %v6373
        %6375 = vmatmul.f32.gmra.mxu0 %v6354
        %v6376 = vpop.f32.mrf.mxu0
        %v6377 = vadd.f32 0.0, %v6376
        %6378 = vdwg.mxu0
        %6379 = vmatpush.msra.mxu0 0.0
        %6380 = vmatpush.msra.mxu0 0.0
        %6381 = vmatpush.msra.mxu0 0.0
        %6382 = vmatpush.msra.mxu0 0.0
        %6383 = vmatpush.msra.mxu0 0.0
        %6384 = vmatpush.msra.mxu0 0.0
        %6385 = vmatpush.msra.mxu0 0.0
        %6386 = vmatpush.msra.mxu0 0.0
        %6387 = vmatpush.msra.mxu0 0.0
        %6388 = vmatpush.msra.mxu0 0.0
        %6389 = vmatpush.msra.mxu0 0.0
        %6390 = vmatpush.msra.mxu0 0.0
        %6391 = vmatpush.msra.mxu0 0.0
        %6392 = vmatpush.msra.mxu0 0.0
        %6393 = vmatpush.msra.mxu0 %v6341
        %6394 = vmatpush.msra.mxu0 %v6337
        %6395 = vmatmul.f32.gmra.mxu0 %v6352
        %v6396 = vpop.f32.mrf.mxu0
        %v6397 = vadd.f32 0.0, %v6396
        %6398 = vmatmul.f32.gmra.mxu0 %v6354
        %v6399 = vpop.f32.mrf.mxu0
        %v6400 = vadd.f32 0.0, %v6399
        %6401 = vdwg.mxu0
        %6402 = vmatpush.msra.mxu0 0.0
        %6403 = vmatpush.msra.mxu0 0.0
        %6404 = vmatpush.msra.mxu0 0.0
        %6405 = vmatpush.msra.mxu0 0.0
        %6406 = vmatpush.msra.mxu0 0.0
        %6407 = vmatpush.msra.mxu0 0.0
        %6408 = vmatpush.msra.mxu0 0.0
        %6409 = vmatpush.msra.mxu0 0.0
        %6410 = vmatpush.msra.mxu0 0.0
        %6411 = vmatpush.msra.mxu0 0.0
        %6412 = vmatpush.msra.mxu0 0.0
        %6413 = vmatpush.msra.mxu0 0.0
        %6414 = vmatpush.msra.mxu0 0.0
        %6415 = vmatpush.msra.mxu0 0.0
        %6416 = vmatpush.msra.mxu0 %v6342
        %6417 = vmatpush.msra.mxu0 %v6338
        %6418 = vmatmul.f32.gmra.mxu0 %v6352
        %v6419 = vpop.f32.mrf.mxu0
        %v6420 = vadd.f32 0.0, %v6419
        %6421 = vmatmul.f32.gmra.mxu0 %v6354
        %v6422 = vpop.f32.mrf.mxu0
        %v6423 = vadd.f32 0.0, %v6422
        %6424 = vdwg.mxu0
        %6425 = vmatpush.msra.mxu0 0.0
        %6426 = vmatpush.msra.mxu0 0.0
        %6427 = vmatpush.msra.mxu0 0.0
        %6428 = vmatpush.msra.mxu0 0.0
        %6429 = vmatpush.msra.mxu0 0.0
        %6430 = vmatpush.msra.mxu0 0.0
        %6431 = vmatpush.msra.mxu0 0.0
        %6432 = vmatpush.msra.mxu0 0.0
        %6433 = vmatpush.msra.mxu0 0.0
        %6434 = vmatpush.msra.mxu0 0.0
        %6435 = vmatpush.msra.mxu0 0.0
        %6436 = vmatpush.msra.mxu0 0.0
        %6437 = vmatpush.msra.mxu0 0.0
        %6438 = vmatpush.msra.mxu0 0.0
        %6439 = vmatpush.msra.mxu0 %v6343
        %6440 = vmatpush.msra.mxu0 %v6339
        %6441 = vmatmul.f32.gmra.mxu0 %v6352
        %v6442 = vpop.f32.mrf.mxu0
        %v6443 = vadd.f32 0.0, %v6442
        %6444 = vmatmul.f32.gmra.mxu0 %v6354
        %v6445 = vpop.f32.mrf.mxu0
        %v6446 = vadd.f32 0.0, %v6445
        %6447 = vdwg.mxu0
        %v6448 = vadd.f32 %v6304, %v6374
        %v6449 = vadd.f32 %v6305, %v6397
        %v6450 = vadd.f32 %v6306, %v6420
        %v6451 = vadd.f32 %v6307, %v6443
        %v6452 = vadd.f32 %v6308, %v6377
        %v6453 = vadd.f32 %v6309, %v6400
        %v6454 = vadd.f32 %v6310, %v6423
        %v6455 = vadd.f32 %v6311, %v6446
        %6456 = vrot.lane.b32.xlu0 %v5590, 32
        %v6457 = vpop.permute.xlu0 %6456
        %6458 = vrot.lane.b32.xlu0 %v5591, 32
        %v6459 = vpop.permute.xlu0 %6458
        %6460 = vrot.lane.b32.xlu0 %v6004, 57
        %v6461 = vpop.permute.xlu0 %6460
        %6462 = vrot.lane.b32.xlu0 %v6005, 57
        %v6463 = vpop.permute.xlu0 %6462
        %6464 = vrot.lane.b32.xlu0 %v6006, 57
        %v6465 = vpop.permute.xlu0 %6464
        %6466 = vrot.lane.b32.xlu0 %v6007, 57
        %v6467 = vpop.permute.xlu0 %6466
        %6468 = vrot.lane.b32.xlu0 %v6008, 57
        %v6469 = vpop.permute.xlu0 %6468
        %6470 = vrot.lane.b32.xlu0 %v6009, 57
        %v6471 = vpop.permute.xlu0 %6470
        %6472 = vrot.lane.b32.xlu0 %v6010, 57
        %v6473 = vpop.permute.xlu0 %6472
        %6474 = vrot.lane.b32.xlu0 %v6011, 57
        %v6475 = vpop.permute.xlu0 %6474
        %6476 = vrot.lane.b32.xlu0 %v6012, 57
        %v6477 = vpop.permute.xlu0 %6476
        %6478 = vrot.lane.b32.xlu0 %v6013, 57
        %v6479 = vpop.permute.xlu0 %6478
        %vm6480 = vcmask 465920
        %v6481 = vsel %vm6480, %v6461, %v6463
        %v6482 = vsel %vm6480, %v6463, %v6465
        %v6483 = vsel %vm6480, %v6465, %v6467
        %v6484 = vsel %vm6480, %v6467, %v6469
        %v6485 = vsel %vm6480, %v6471, %v6473
        %v6486 = vsel %vm6480, %v6473, %v6475
        %v6487 = vsel %vm6480, %v6475, %v6477
        %v6488 = vsel %vm6480, %v6477, %v6479
        %v6497 = vsel %vm532, %v6457, 0
        %v6499 = vsel %vm532, %v6459, 0
        %6501 = vmatpush.msra.mxu0 0.0
        %6502 = vmatpush.msra.mxu0 0.0
        %6503 = vmatpush.msra.mxu0 0.0
        %6504 = vmatpush.msra.mxu0 0.0
        %6505 = vmatpush.msra.mxu0 0.0
        %6506 = vmatpush.msra.mxu0 0.0
        %6507 = vmatpush.msra.mxu0 0.0
        %6508 = vmatpush.msra.mxu0 0.0
        %6509 = vmatpush.msra.mxu0 0.0
        %6510 = vmatpush.msra.mxu0 0.0
        %6511 = vmatpush.msra.mxu0 0.0
        %6512 = vmatpush.msra.mxu0 0.0
        %6513 = vmatpush.msra.mxu0 0.0
        %6514 = vmatpush.msra.mxu0 0.0
        %6515 = vmatpush.msra.mxu0 %v6485
        %6516 = vmatpush.msra.mxu0 %v6481
        %6517 = vmatmul.f32.gmra.mxu0 %v6497
        %v6518 = vpop.f32.mrf.mxu0
        %v6519 = vadd.f32 0.0, %v6518
        %6520 = vmatmul.f32.gmra.mxu0 %v6499
        %v6521 = vpop.f32.mrf.mxu0
        %v6522 = vadd.f32 0.0, %v6521
        %6523 = vdwg.mxu0
        %6524 = vmatpush.msra.mxu0 0.0
        %6525 = vmatpush.msra.mxu0 0.0
        %6526 = vmatpush.msra.mxu0 0.0
        %6527 = vmatpush.msra.mxu0 0.0
        %6528 = vmatpush.msra.mxu0 0.0
        %6529 = vmatpush.msra.mxu0 0.0
        %6530 = vmatpush.msra.mxu0 0.0
        %6531 = vmatpush.msra.mxu0 0.0
        %6532 = vmatpush.msra.mxu0 0.0
        %6533 = vmatpush.msra.mxu0 0.0
        %6534 = vmatpush.msra.mxu0 0.0
        %6535 = vmatpush.msra.mxu0 0.0
        %6536 = vmatpush.msra.mxu0 0.0
        %6537 = vmatpush.msra.mxu0 0.0
        %6538 = vmatpush.msra.mxu0 %v6486
        %6539 = vmatpush.msra.mxu0 %v6482
        %6540 = vmatmul.f32.gmra.mxu0 %v6497
        %v6541 = vpop.f32.mrf.mxu0
        %v6542 = vadd.f32 0.0, %v6541
        %6543 = vmatmul.f32.gmra.mxu0 %v6499
        %v6544 = vpop.f32.mrf.mxu0
        %v6545 = vadd.f32 0.0, %v6544
        %6546 = vdwg.mxu0
        %6547 = vmatpush.msra.mxu0 0.0
        %6548 = vmatpush.msra.mxu0 0.0
        %6549 = vmatpush.msra.mxu0 0.0
        %6550 = vmatpush.msra.mxu0 0.0
        %6551 = vmatpush.msra.mxu0 0.0
        %6552 = vmatpush.msra.mxu0 0.0
        %6553 = vmatpush.msra.mxu0 0.0
        %6554 = vmatpush.msra.mxu0 0.0
        %6555 = vmatpush.msra.mxu0 0.0
        %6556 = vmatpush.msra.mxu0 0.0
        %6557 = vmatpush.msra.mxu0 0.0
        %6558 = vmatpush.msra.mxu0 0.0
        %6559 = vmatpush.msra.mxu0 0.0
        %6560 = vmatpush.msra.mxu0 0.0
        %6561 = vmatpush.msra.mxu0 %v6487
        %6562 = vmatpush.msra.mxu0 %v6483
        %6563 = vmatmul.f32.gmra.mxu0 %v6497
        %v6564 = vpop.f32.mrf.mxu0
        %v6565 = vadd.f32 0.0, %v6564
        %6566 = vmatmul.f32.gmra.mxu0 %v6499
        %v6567 = vpop.f32.mrf.mxu0
        %v6568 = vadd.f32 0.0, %v6567
        %6569 = vdwg.mxu0
        %6570 = vmatpush.msra.mxu0 0.0
        %6571 = vmatpush.msra.mxu0 0.0
        %6572 = vmatpush.msra.mxu0 0.0
        %6573 = vmatpush.msra.mxu0 0.0
        %6574 = vmatpush.msra.mxu0 0.0
        %6575 = vmatpush.msra.mxu0 0.0
        %6576 = vmatpush.msra.mxu0 0.0
        %6577 = vmatpush.msra.mxu0 0.0
        %6578 = vmatpush.msra.mxu0 0.0
        %6579 = vmatpush.msra.mxu0 0.0
        %6580 = vmatpush.msra.mxu0 0.0
        %6581 = vmatpush.msra.mxu0 0.0
        %6582 = vmatpush.msra.mxu0 0.0
        %6583 = vmatpush.msra.mxu0 0.0
        %6584 = vmatpush.msra.mxu0 %v6488
        %6585 = vmatpush.msra.mxu0 %v6484
        %6586 = vmatmul.f32.gmra.mxu0 %v6497
        %v6587 = vpop.f32.mrf.mxu0
        %v6588 = vadd.f32 0.0, %v6587
        %6589 = vmatmul.f32.gmra.mxu0 %v6499
        %v6590 = vpop.f32.mrf.mxu0
        %v6591 = vadd.f32 0.0, %v6590
        %6592 = vdwg.mxu0
        %v6593 = vadd.f32 %v6448, %v6519
        %v6594 = vadd.f32 %v6449, %v6542
        %v6595 = vadd.f32 %v6450, %v6565
        %v6596 = vadd.f32 %v6451, %v6588
        %v6597 = vadd.f32 %v6452, %v6522
        %v6598 = vadd.f32 %v6453, %v6545
        %v6599 = vadd.f32 %v6454, %v6568
        %v6600 = vadd.f32 %v6455, %v6591
        %6601 = vrot.lane.b32.xlu0 %v5590, 16
        %v6602 = vpop.permute.xlu0 %6601
        %6603 = vrot.lane.b32.xlu0 %v5591, 16
        %v6604 = vpop.permute.xlu0 %6603
        %6605 = vrot.lane.b32.xlu0 %v6004, 56
        %v6606 = vpop.permute.xlu0 %6605
        %6607 = vrot.lane.b32.xlu0 %v6005, 56
        %v6608 = vpop.permute.xlu0 %6607
        %6609 = vrot.lane.b32.xlu0 %v6006, 56
        %v6610 = vpop.permute.xlu0 %6609
        %6611 = vrot.lane.b32.xlu0 %v6007, 56
        %v6612 = vpop.permute.xlu0 %6611
        %6613 = vrot.lane.b32.xlu0 %v6008, 56
        %v6614 = vpop.permute.xlu0 %6613
        %6615 = vrot.lane.b32.xlu0 %v6009, 56
        %v6616 = vpop.permute.xlu0 %6615
        %6617 = vrot.lane.b32.xlu0 %v6010, 56
        %v6618 = vpop.permute.xlu0 %6617
        %6619 = vrot.lane.b32.xlu0 %v6011, 56
        %v6620 = vpop.permute.xlu0 %6619
        %6621 = vrot.lane.b32.xlu0 %v6012, 56
        %v6622 = vpop.permute.xlu0 %6621
        %6623 = vrot.lane.b32.xlu0 %v6013, 56
        %v6624 = vpop.permute.xlu0 %6623
        %v6625 = vsel %vm1948, %v6606, %v6608
        %v6626 = vsel %vm1948, %v6608, %v6610
        %v6627 = vsel %vm1948, %v6610, %v6612
        %v6628 = vsel %vm1948, %v6612, %v6614
        %v6629 = vsel %vm1948, %v6616, %v6618
        %v6630 = vsel %vm1948, %v6618, %v6620
        %v6631 = vsel %vm1948, %v6620, %v6622
        %v6632 = vsel %vm1948, %v6622, %v6624
        %v6641 = vsel %vm532, %v6602, 0
        %v6643 = vsel %vm532, %v6604, 0
        %6645 = vmatpush.msra.mxu0 0.0
        %6646 = vmatpush.msra.mxu0 0.0
        %6647 = vmatpush.msra.mxu0 0.0
        %6648 = vmatpush.msra.mxu0 0.0
        %6649 = vmatpush.msra.mxu0 0.0
        %6650 = vmatpush.msra.mxu0 0.0
        %6651 = vmatpush.msra.mxu0 0.0
        %6652 = vmatpush.msra.mxu0 0.0
        %6653 = vmatpush.msra.mxu0 0.0
        %6654 = vmatpush.msra.mxu0 0.0
        %6655 = vmatpush.msra.mxu0 0.0
        %6656 = vmatpush.msra.mxu0 0.0
        %6657 = vmatpush.msra.mxu0 0.0
        %6658 = vmatpush.msra.mxu0 0.0
        %6659 = vmatpush.msra.mxu0 %v6629
        %6660 = vmatpush.msra.mxu0 %v6625
        %6661 = vmatmul.f32.gmra.mxu0 %v6641
        %v6662 = vpop.f32.mrf.mxu0
        %v6663 = vadd.f32 0.0, %v6662
        %6664 = vmatmul.f32.gmra.mxu0 %v6643
        %v6665 = vpop.f32.mrf.mxu0
        %v6666 = vadd.f32 0.0, %v6665
        %6667 = vdwg.mxu0
        %6668 = vmatpush.msra.mxu0 0.0
        %6669 = vmatpush.msra.mxu0 0.0
        %6670 = vmatpush.msra.mxu0 0.0
        %6671 = vmatpush.msra.mxu0 0.0
        %6672 = vmatpush.msra.mxu0 0.0
        %6673 = vmatpush.msra.mxu0 0.0
        %6674 = vmatpush.msra.mxu0 0.0
        %6675 = vmatpush.msra.mxu0 0.0
        %6676 = vmatpush.msra.mxu0 0.0
        %6677 = vmatpush.msra.mxu0 0.0
        %6678 = vmatpush.msra.mxu0 0.0
        %6679 = vmatpush.msra.mxu0 0.0
        %6680 = vmatpush.msra.mxu0 0.0
        %6681 = vmatpush.msra.mxu0 0.0
        %6682 = vmatpush.msra.mxu0 %v6630
        %6683 = vmatpush.msra.mxu0 %v6626
        %6684 = vmatmul.f32.gmra.mxu0 %v6641
        %v6685 = vpop.f32.mrf.mxu0
        %v6686 = vadd.f32 0.0, %v6685
        %6687 = vmatmul.f32.gmra.mxu0 %v6643
        %v6688 = vpop.f32.mrf.mxu0
        %v6689 = vadd.f32 0.0, %v6688
        %6690 = vdwg.mxu0
        %6691 = vmatpush.msra.mxu0 0.0
        %6692 = vmatpush.msra.mxu0 0.0
        %6693 = vmatpush.msra.mxu0 0.0
        %6694 = vmatpush.msra.mxu0 0.0
        %6695 = vmatpush.msra.mxu0 0.0
        %6696 = vmatpush.msra.mxu0 0.0
        %6697 = vmatpush.msra.mxu0 0.0
        %6698 = vmatpush.msra.mxu0 0.0
        %6699 = vmatpush.msra.mxu0 0.0
        %6700 = vmatpush.msra.mxu0 0.0
        %6701 = vmatpush.msra.mxu0 0.0
        %6702 = vmatpush.msra.mxu0 0.0
        %6703 = vmatpush.msra.mxu0 0.0
        %6704 = vmatpush.msra.mxu0 0.0
        %6705 = vmatpush.msra.mxu0 %v6631
        %6706 = vmatpush.msra.mxu0 %v6627
        %6707 = vmatmul.f32.gmra.mxu0 %v6641
        %v6708 = vpop.f32.mrf.mxu0
        %v6709 = vadd.f32 0.0, %v6708
        %6710 = vmatmul.f32.gmra.mxu0 %v6643
        %v6711 = vpop.f32.mrf.mxu0
        %v6712 = vadd.f32 0.0, %v6711
        %6713 = vdwg.mxu0
        %6714 = vmatpush.msra.mxu0 0.0
        %6715 = vmatpush.msra.mxu0 0.0
        %6716 = vmatpush.msra.mxu0 0.0
        %6717 = vmatpush.msra.mxu0 0.0
        %6718 = vmatpush.msra.mxu0 0.0
        %6719 = vmatpush.msra.mxu0 0.0
        %6720 = vmatpush.msra.mxu0 0.0
        %6721 = vmatpush.msra.mxu0 0.0
        %6722 = vmatpush.msra.mxu0 0.0
        %6723 = vmatpush.msra.mxu0 0.0
        %6724 = vmatpush.msra.mxu0 0.0
        %6725 = vmatpush.msra.mxu0 0.0
        %6726 = vmatpush.msra.mxu0 0.0
        %6727 = vmatpush.msra.mxu0 0.0
        %6728 = vmatpush.msra.mxu0 %v6632
        %6729 = vmatpush.msra.mxu0 %v6628
        %6730 = vmatmul.f32.gmra.mxu0 %v6641
        %v6731 = vpop.f32.mrf.mxu0
        %v6732 = vadd.f32 0.0, %v6731
        %6733 = vmatmul.f32.gmra.mxu0 %v6643
        %v6734 = vpop.f32.mrf.mxu0
        %v6735 = vadd.f32 0.0, %v6734
        %6736 = vdwg.mxu0
        %v6737 = vadd.f32 %v6593, %v6663
        %v6738 = vadd.f32 %v6594, %v6686
        %v6739 = vadd.f32 %v6595, %v6709
        %v6740 = vadd.f32 %v6596, %v6732
        %v6741 = vadd.f32 %v6597, %v6666
        %v6742 = vadd.f32 %v6598, %v6689
        %v6743 = vadd.f32 %v6599, %v6712
        %v6744 = vadd.f32 %v6600, %v6735
        %v6745 = vld [vmem:[%s5 + $0x8] sm:$0xff]
        %v6746 = vld [vmem:[%s5 + $0x18] sm:$0xff]
        %6747 = vrot.lane.b32.xlu0 %v6004, 55
        %v6748 = vpop.permute.xlu0 %6747
        %6749 = vrot.lane.b32.xlu0 %v6005, 55
        %v6750 = vpop.permute.xlu0 %6749
        %6751 = vrot.lane.b32.xlu0 %v6006, 55
        %v6752 = vpop.permute.xlu0 %6751
        %6753 = vrot.lane.b32.xlu0 %v6007, 55
        %v6754 = vpop.permute.xlu0 %6753
        %6755 = vrot.lane.b32.xlu0 %v6008, 55
        %v6756 = vpop.permute.xlu0 %6755
        %6757 = vrot.lane.b32.xlu0 %v6009, 55
        %v6758 = vpop.permute.xlu0 %6757
        %6759 = vrot.lane.b32.xlu0 %v6010, 55
        %v6760 = vpop.permute.xlu0 %6759
        %6761 = vrot.lane.b32.xlu0 %v6011, 55
        %v6762 = vpop.permute.xlu0 %6761
        %6763 = vrot.lane.b32.xlu0 %v6012, 55
        %v6764 = vpop.permute.xlu0 %6763
        %6765 = vrot.lane.b32.xlu0 %v6013, 55
        %v6766 = vpop.permute.xlu0 %6765
        %vm6767 = vcmask 449536
        %v6768 = vsel %vm6767, %v6748, %v6750
        %v6769 = vsel %vm6767, %v6750, %v6752
        %v6770 = vsel %vm6767, %v6752, %v6754
        %v6771 = vsel %vm6767, %v6754, %v6756
        %v6772 = vsel %vm6767, %v6758, %v6760
        %v6773 = vsel %vm6767, %v6760, %v6762
        %v6774 = vsel %vm6767, %v6762, %v6764
        %v6775 = vsel %vm6767, %v6764, %v6766
        %v6785 = vsel %vm532, %v6745, 0
        %v6788 = vsel %vm532, %v6746, 0
        %6790 = vmatpush.msra.mxu0 0.0
        %6791 = vmatpush.msra.mxu0 0.0
        %6792 = vmatpush.msra.mxu0 0.0
        %6793 = vmatpush.msra.mxu0 0.0
        %6794 = vmatpush.msra.mxu0 0.0
        %6795 = vmatpush.msra.mxu0 0.0
        %6796 = vmatpush.msra.mxu0 0.0
        %6797 = vmatpush.msra.mxu0 0.0
        %6798 = vmatpush.msra.mxu0 0.0
        %6799 = vmatpush.msra.mxu0 0.0
        %6800 = vmatpush.msra.mxu0 0.0
        %6801 = vmatpush.msra.mxu0 0.0
        %6802 = vmatpush.msra.mxu0 0.0
        %6803 = vmatpush.msra.mxu0 0.0
        %6804 = vmatpush.msra.mxu0 %v6772
        %6805 = vmatpush.msra.mxu0 %v6768
        %6806 = vmatmul.f32.gmra.mxu0 %v6785
        %v6807 = vpop.f32.mrf.mxu0
        %v6808 = vadd.f32 0.0, %v6807
        %6809 = vmatmul.f32.gmra.mxu0 %v6788
        %v6810 = vpop.f32.mrf.mxu0
        %v6811 = vadd.f32 0.0, %v6810
        %6812 = vdwg.mxu0
        %6813 = vmatpush.msra.mxu0 0.0
        %6814 = vmatpush.msra.mxu0 0.0
        %6815 = vmatpush.msra.mxu0 0.0
        %6816 = vmatpush.msra.mxu0 0.0
        %6817 = vmatpush.msra.mxu0 0.0
        %6818 = vmatpush.msra.mxu0 0.0
        %6819 = vmatpush.msra.mxu0 0.0
        %6820 = vmatpush.msra.mxu0 0.0
        %6821 = vmatpush.msra.mxu0 0.0
        %6822 = vmatpush.msra.mxu0 0.0
        %6823 = vmatpush.msra.mxu0 0.0
        %6824 = vmatpush.msra.mxu0 0.0
        %6825 = vmatpush.msra.mxu0 0.0
        %6826 = vmatpush.msra.mxu0 0.0
        %6827 = vmatpush.msra.mxu0 %v6773
        %6828 = vmatpush.msra.mxu0 %v6769
        %6829 = vmatmul.f32.gmra.mxu0 %v6785
        %v6830 = vpop.f32.mrf.mxu0
        %v6831 = vadd.f32 0.0, %v6830
        %6832 = vmatmul.f32.gmra.mxu0 %v6788
        %v6833 = vpop.f32.mrf.mxu0
        %v6834 = vadd.f32 0.0, %v6833
        %6835 = vdwg.mxu0
        %6836 = vmatpush.msra.mxu0 0.0
        %6837 = vmatpush.msra.mxu0 0.0
        %6838 = vmatpush.msra.mxu0 0.0
        %6839 = vmatpush.msra.mxu0 0.0
        %6840 = vmatpush.msra.mxu0 0.0
        %6841 = vmatpush.msra.mxu0 0.0
        %6842 = vmatpush.msra.mxu0 0.0
        %6843 = vmatpush.msra.mxu0 0.0
        %6844 = vmatpush.msra.mxu0 0.0
        %6845 = vmatpush.msra.mxu0 0.0
        %6846 = vmatpush.msra.mxu0 0.0
        %6847 = vmatpush.msra.mxu0 0.0
        %6848 = vmatpush.msra.mxu0 0.0
        %6849 = vmatpush.msra.mxu0 0.0
        %6850 = vmatpush.msra.mxu0 %v6774
        %6851 = vmatpush.msra.mxu0 %v6770
        %6852 = vmatmul.f32.gmra.mxu0 %v6785
        %v6853 = vpop.f32.mrf.mxu0
        %v6854 = vadd.f32 0.0, %v6853
        %6855 = vmatmul.f32.gmra.mxu0 %v6788
        %v6856 = vpop.f32.mrf.mxu0
        %v6857 = vadd.f32 0.0, %v6856
        %6858 = vdwg.mxu0
        %6859 = vmatpush.msra.mxu0 0.0
        %6860 = vmatpush.msra.mxu0 0.0
        %6861 = vmatpush.msra.mxu0 0.0
        %6862 = vmatpush.msra.mxu0 0.0
        %6863 = vmatpush.msra.mxu0 0.0
        %6864 = vmatpush.msra.mxu0 0.0
        %6865 = vmatpush.msra.mxu0 0.0
        %6866 = vmatpush.msra.mxu0 0.0
        %6867 = vmatpush.msra.mxu0 0.0
        %6868 = vmatpush.msra.mxu0 0.0
        %6869 = vmatpush.msra.mxu0 0.0
        %6870 = vmatpush.msra.mxu0 0.0
        %6871 = vmatpush.msra.mxu0 0.0
        %6872 = vmatpush.msra.mxu0 0.0
        %6873 = vmatpush.msra.mxu0 %v6775
        %6874 = vmatpush.msra.mxu0 %v6771
        %6875 = vmatmul.f32.gmra.mxu0 %v6785
        %v6876 = vpop.f32.mrf.mxu0
        %v6877 = vadd.f32 0.0, %v6876
        %6878 = vmatmul.f32.gmra.mxu0 %v6788
        %v6879 = vpop.f32.mrf.mxu0
        %v6880 = vadd.f32 0.0, %v6879
        %6881 = vdwg.mxu0
        %v6882 = vadd.f32 %v6737, %v6808
        %v6883 = vadd.f32 %v6738, %v6831
        %v6884 = vadd.f32 %v6739, %v6854
        %v6885 = vadd.f32 %v6740, %v6877
        %v6886 = vadd.f32 %v6741, %v6811
        %v6887 = vadd.f32 %v6742, %v6834
        %v6888 = vadd.f32 %v6743, %v6857
        %v6889 = vadd.f32 %v6744, %v6880
        %v6890 = vld [vmem:[%s6] sm:$0xff]
        %v6891 = vld [vmem:[%s6 + $0x8] sm:$0xff]
        %6893 = vset.pattern.permute.xlu0 0
        %6894 = vperm.xlu0 %6893, %v6890
        %v6895 = vpop.permute.xlu0 %6894
        %6898 = vset.pattern.permute.xlu0 0
        %6899 = vperm.xlu0 %6898, %v6891
        %v6900 = vpop.permute.xlu0 %6899
        %v6902 = vadd.f32 %v6882, %v6895
        %v6903 = vadd.f32 %v6883, %v6895
        %v6904 = vadd.f32 %v6884, %v6895
        %v6905 = vadd.f32 %v6885, %v6895
        %v6906 = vadd.f32 %v6886, %v6900
        %v6907 = vadd.f32 %v6887, %v6900
        %v6908 = vadd.f32 %v6888, %v6900
        %v6909 = vadd.f32 %v6889, %v6900
        %v6910 = vld [vmem:[%s7] sm:$0xff]
        %v6911 = vld [vmem:[%s7 + $0x8] sm:$0xff]
        %v6912 = vld [vmem:[%s8] sm:$0xff]
        %v6913 = vld [vmem:[%s8 + $0x8] sm:$0xff]
        %6915 = vset.pattern.permute.xlu0 0
        %6916 = vperm.xlu0 %6915, %v6912
        %v6917 = vpop.permute.xlu0 %6916
        %6920 = vset.pattern.permute.xlu0 0
        %6921 = vperm.xlu0 %6920, %v6913
        %v6922 = vpop.permute.xlu0 %6921
        %v6925 = vsel %vm532, %v6910, 0
        %v6928 = vsel %vm532, %v6911, 0
        %6930 = vmatpush.msra.mxu0 0.0
        %6931 = vmatpush.msra.mxu0 0.0
        %6932 = vmatpush.msra.mxu0 0.0
        %6933 = vmatpush.msra.mxu0 0.0
        %6934 = vmatpush.msra.mxu0 0.0
        %6935 = vmatpush.msra.mxu0 0.0
        %6936 = vmatpush.msra.mxu0 0.0
        %6937 = vmatpush.msra.mxu0 0.0
        %6938 = vmatpush.msra.mxu0 0.0
        %6939 = vmatpush.msra.mxu0 0.0
        %6940 = vmatpush.msra.mxu0 0.0
        %6941 = vmatpush.msra.mxu0 0.0
        %6942 = vmatpush.msra.mxu0 0.0
        %6943 = vmatpush.msra.mxu0 0.0
        %6944 = vmatpush.msra.mxu0 %v6906
        %6945 = vmatpush.msra.mxu0 %v6902
        %6946 = vmatmul.f32.gmra.mxu0 %v6925
        %v6947 = vpop.f32.mrf.mxu0
        %v6948 = vadd.f32 %v6917, %v6947
        %6949 = vmatmul.f32.gmra.mxu0 %v6928
        %v6950 = vpop.f32.mrf.mxu0
        %v6951 = vadd.f32 %v6922, %v6950
        %6952 = vdwg.mxu0
        %6953 = vmatpush.msra.mxu0 0.0
        %6954 = vmatpush.msra.mxu0 0.0
        %6955 = vmatpush.msra.mxu0 0.0
        %6956 = vmatpush.msra.mxu0 0.0
        %6957 = vmatpush.msra.mxu0 0.0
        %6958 = vmatpush.msra.mxu0 0.0
        %6959 = vmatpush.msra.mxu0 0.0
        %6960 = vmatpush.msra.mxu0 0.0
        %6961 = vmatpush.msra.mxu0 0.0
        %6962 = vmatpush.msra.mxu0 0.0
        %6963 = vmatpush.msra.mxu0 0.0
        %6964 = vmatpush.msra.mxu0 0.0
        %6965 = vmatpush.msra.mxu0 0.0
        %6966 = vmatpush.msra.mxu0 0.0
        %6967 = vmatpush.msra.mxu0 %v6907
        %6968 = vmatpush.msra.mxu0 %v6903
        %6969 = vmatmul.f32.gmra.mxu0 %v6925
        %v6970 = vpop.f32.mrf.mxu0
        %v6971 = vadd.f32 %v6917, %v6970
        %6972 = vmatmul.f32.gmra.mxu0 %v6928
        %v6973 = vpop.f32.mrf.mxu0
        %v6974 = vadd.f32 %v6922, %v6973
        %6975 = vdwg.mxu0
        %6976 = vmatpush.msra.mxu0 0.0
        %6977 = vmatpush.msra.mxu0 0.0
        %6978 = vmatpush.msra.mxu0 0.0
        %6979 = vmatpush.msra.mxu0 0.0
        %6980 = vmatpush.msra.mxu0 0.0
        %6981 = vmatpush.msra.mxu0 0.0
        %6982 = vmatpush.msra.mxu0 0.0
        %6983 = vmatpush.msra.mxu0 0.0
        %6984 = vmatpush.msra.mxu0 0.0
        %6985 = vmatpush.msra.mxu0 0.0
        %6986 = vmatpush.msra.mxu0 0.0
        %6987 = vmatpush.msra.mxu0 0.0
        %6988 = vmatpush.msra.mxu0 0.0
        %6989 = vmatpush.msra.mxu0 0.0
        %6990 = vmatpush.msra.mxu0 %v6908
        %6991 = vmatpush.msra.mxu0 %v6904
        %6992 = vmatmul.f32.gmra.mxu0 %v6925
        %v6993 = vpop.f32.mrf.mxu0
        %v6994 = vadd.f32 %v6917, %v6993
        %6995 = vmatmul.f32.gmra.mxu0 %v6928
        %v6996 = vpop.f32.mrf.mxu0
        %v6997 = vadd.f32 %v6922, %v6996
        %6998 = vdwg.mxu0
        %6999 = vmatpush.msra.mxu0 0.0
        %7000 = vmatpush.msra.mxu0 0.0
        %7001 = vmatpush.msra.mxu0 0.0
        %7002 = vmatpush.msra.mxu0 0.0
        %7003 = vmatpush.msra.mxu0 0.0
        %7004 = vmatpush.msra.mxu0 0.0
        %7005 = vmatpush.msra.mxu0 0.0
        %7006 = vmatpush.msra.mxu0 0.0
        %7007 = vmatpush.msra.mxu0 0.0
        %7008 = vmatpush.msra.mxu0 0.0
        %7009 = vmatpush.msra.mxu0 0.0
        %7010 = vmatpush.msra.mxu0 0.0
        %7011 = vmatpush.msra.mxu0 0.0
        %7012 = vmatpush.msra.mxu0 0.0
        %7013 = vmatpush.msra.mxu0 %v6909
        %7014 = vmatpush.msra.mxu0 %v6905
        %7015 = vmatmul.f32.gmra.mxu0 %v6925
        %v7016 = vpop.f32.mrf.mxu0
        %v7017 = vadd.f32 %v6917, %v7016
        %7018 = vmatmul.f32.gmra.mxu0 %v6928
        %v7019 = vpop.f32.mrf.mxu0
        %v7020 = vadd.f32 %v6922, %v7019
        %7021 = vdwg.mxu0
        %v7022 = vld [vmem:[%s406 + $0x10] sm:$0xff]
        %v7023 = vld [vmem:[%s406 + $0x18] sm:$0xff]
        %v7024 = vld [vmem:[%s406 + $0x20] sm:$0xff]
        %v7025 = vld [vmem:[%s406 + $0x28] sm:$0xff]
        %v7026 = vld [vmem:[%s406 + $0x50] sm:$0xff]
        %v7027 = vld [vmem:[%s406 + $0x58] sm:$0xff]
        %v7028 = vld [vmem:[%s406 + $0x60] sm:$0xff]
        %v7029 = vld [vmem:[%s406 + $0x68] sm:$0xff]
        %v7030 = vld [vmem:[%s416 + $0x10] sm:$0xff]
        %v7031 = vld [vmem:[%s416 + $0x18] sm:$0xff]
        %v7032 = vld [vmem:[%s416 + $0x20] sm:$0xff]
        %v7033 = vld [vmem:[%s416 + $0x28] sm:$0xff]
        %v7034 = vld [vmem:[%s416 + $0x50] sm:$0xff]
        %v7035 = vld [vmem:[%s416 + $0x58] sm:$0xff]
        %v7036 = vld [vmem:[%s416 + $0x60] sm:$0xff]
        %v7037 = vld [vmem:[%s416 + $0x68] sm:$0xff]
        %v7038 = vld [vmem:[%s9] sm:$0xff]
        %v7039 = vld [vmem:[%s9 + $0x8] sm:$0xff]
        %7042 = vrot.lane.b32.xlu0 %v7038, 112
        %v7043 = vpop.permute.xlu0 %7042
        %7044 = vrot.lane.b32.xlu0 %v7039, 112
        %v7045 = vpop.permute.xlu0 %7044
        %7054 = vrot.lane.b32.xlu0 %v7030, 120
        %v7055 = vpop.permute.xlu0 %7054
        %7056 = vrot.lane.b32.xlu0 %v7031, 120
        %v7057 = vpop.permute.xlu0 %7056
        %7058 = vrot.lane.b32.xlu0 %v7032, 120
        %v7059 = vpop.permute.xlu0 %7058
        %7060 = vrot.lane.b32.xlu0 %v7033, 120
        %v7061 = vpop.permute.xlu0 %7060
        %7062 = vrot.lane.b32.xlu0 %v7034, 120
        %v7063 = vpop.permute.xlu0 %7062
        %7064 = vrot.lane.b32.xlu0 %v7035, 120
        %v7065 = vpop.permute.xlu0 %7064
        %7066 = vrot.lane.b32.xlu0 %v7036, 120
        %v7067 = vpop.permute.xlu0 %7066
        %7068 = vrot.lane.b32.xlu0 %v7037, 120
        %v7069 = vpop.permute.xlu0 %7068
        %v7070 = vsel %vm1066, %v7055, %v7057
        %v7071 = vsel %vm1066, %v7057, %v7059
        %v7072 = vsel %vm1066, %v7059, %v7061
        %v7073 = vsel %vm1066, %v7063, %v7065
        %v7074 = vsel %vm1066, %v7065, %v7067
        %v7075 = vsel %vm1066, %v7067, %v7069
        %v7084 = vsel %vm532, %v7043, 0
        %v7086 = vsel %vm532, %v7045, 0
        %7088 = vmatpush.msra.mxu0 0.0
        %7089 = vmatpush.msra.mxu0 0.0
        %7090 = vmatpush.msra.mxu0 0.0
        %7091 = vmatpush.msra.mxu0 0.0
        %7092 = vmatpush.msra.mxu0 0.0
        %7093 = vmatpush.msra.mxu0 0.0
        %7094 = vmatpush.msra.mxu0 0.0
        %7095 = vmatpush.msra.mxu0 0.0
        %7096 = vmatpush.msra.mxu0 0.0
        %7097 = vmatpush.msra.mxu0 0.0
        %7098 = vmatpush.msra.mxu0 0.0
        %7099 = vmatpush.msra.mxu0 0.0
        %7100 = vmatpush.msra.mxu0 0.0
        %7101 = vmatpush.msra.mxu0 0.0
        %7102 = vmatpush.msra.mxu0 %v7073
        %7103 = vmatpush.msra.mxu0 %v7070
        %7104 = vmatmul.f32.gmra.mxu0 %v7084
        %v7105 = vpop.f32.mrf.mxu0
        %v7106 = vadd.f32 0.0, %v7105
        %7107 = vmatmul.f32.gmra.mxu0 %v7086
        %v7108 = vpop.f32.mrf.mxu0
        %v7109 = vadd.f32 0.0, %v7108
        %7110 = vdwg.mxu0
        %7111 = vmatpush.msra.mxu0 0.0
        %7112 = vmatpush.msra.mxu0 0.0
        %7113 = vmatpush.msra.mxu0 0.0
        %7114 = vmatpush.msra.mxu0 0.0
        %7115 = vmatpush.msra.mxu0 0.0
        %7116 = vmatpush.msra.mxu0 0.0
        %7117 = vmatpush.msra.mxu0 0.0
        %7118 = vmatpush.msra.mxu0 0.0
        %7119 = vmatpush.msra.mxu0 0.0
        %7120 = vmatpush.msra.mxu0 0.0
        %7121 = vmatpush.msra.mxu0 0.0
        %7122 = vmatpush.msra.mxu0 0.0
        %7123 = vmatpush.msra.mxu0 0.0
        %7124 = vmatpush.msra.mxu0 0.0
        %7125 = vmatpush.msra.mxu0 %v7074
        %7126 = vmatpush.msra.mxu0 %v7071
        %7127 = vmatmul.f32.gmra.mxu0 %v7084
        %v7128 = vpop.f32.mrf.mxu0
        %v7129 = vadd.f32 0.0, %v7128
        %7130 = vmatmul.f32.gmra.mxu0 %v7086
        %v7131 = vpop.f32.mrf.mxu0
        %v7132 = vadd.f32 0.0, %v7131
        %7133 = vdwg.mxu0
        %7134 = vmatpush.msra.mxu0 0.0
        %7135 = vmatpush.msra.mxu0 0.0
        %7136 = vmatpush.msra.mxu0 0.0
        %7137 = vmatpush.msra.mxu0 0.0
        %7138 = vmatpush.msra.mxu0 0.0
        %7139 = vmatpush.msra.mxu0 0.0
        %7140 = vmatpush.msra.mxu0 0.0
        %7141 = vmatpush.msra.mxu0 0.0
        %7142 = vmatpush.msra.mxu0 0.0
        %7143 = vmatpush.msra.mxu0 0.0
        %7144 = vmatpush.msra.mxu0 0.0
        %7145 = vmatpush.msra.mxu0 0.0
        %7146 = vmatpush.msra.mxu0 0.0
        %7147 = vmatpush.msra.mxu0 0.0
        %7148 = vmatpush.msra.mxu0 %v7075
        %7149 = vmatpush.msra.mxu0 %v7072
        %7150 = vmatmul.f32.gmra.mxu0 %v7084
        %v7151 = vpop.f32.mrf.mxu0
        %v7152 = vadd.f32 0.0, %v7151
        %7153 = vmatmul.f32.gmra.mxu0 %v7086
        %v7154 = vpop.f32.mrf.mxu0
        %v7155 = vadd.f32 0.0, %v7154
        %7156 = vdwg.mxu0
        %7157 = vmatpush.msra.mxu0 0.0
        %7158 = vmatpush.msra.mxu0 0.0
        %7159 = vmatpush.msra.mxu0 0.0
        %7160 = vmatpush.msra.mxu0 0.0
        %7161 = vmatpush.msra.mxu0 0.0
        %7162 = vmatpush.msra.mxu0 0.0
        %7163 = vmatpush.msra.mxu0 0.0
        %7164 = vmatpush.msra.mxu0 0.0
        %7165 = vmatpush.msra.mxu0 0.0
        %7166 = vmatpush.msra.mxu0 0.0
        %7167 = vmatpush.msra.mxu0 0.0
        %7168 = vmatpush.msra.mxu0 0.0
        %7169 = vmatpush.msra.mxu0 0.0
        %7170 = vmatpush.msra.mxu0 0.0
        %7171 = vmatpush.msra.mxu0 %v7069
        %7172 = vmatpush.msra.mxu0 %v7061
        %7173 = vmatmul.f32.gmra.mxu0 %v7084
        %v7174 = vpop.f32.mrf.mxu0
        %v7175 = vadd.f32 0.0, %v7174
        %7176 = vmatmul.f32.gmra.mxu0 %v7086
        %v7177 = vpop.f32.mrf.mxu0
        %v7178 = vadd.f32 0.0, %v7177
        %7179 = vdwg.mxu0
        %7188 = vrot.lane.b32.xlu0 %v7022, 120
        %v7189 = vpop.permute.xlu0 %7188
        %7190 = vrot.lane.b32.xlu0 %v7023, 120
        %v7191 = vpop.permute.xlu0 %7190
        %7192 = vrot.lane.b32.xlu0 %v7024, 120
        %v7193 = vpop.permute.xlu0 %7192
        %7194 = vrot.lane.b32.xlu0 %v7025, 120
        %v7195 = vpop.permute.xlu0 %7194
        %7196 = vrot.lane.b32.xlu0 %v7026, 120
        %v7197 = vpop.permute.xlu0 %7196
        %7198 = vrot.lane.b32.xlu0 %v7027, 120
        %v7199 = vpop.permute.xlu0 %7198
        %7200 = vrot.lane.b32.xlu0 %v7028, 120
        %v7201 = vpop.permute.xlu0 %7200
        %7202 = vrot.lane.b32.xlu0 %v7029, 120
        %v7203 = vpop.permute.xlu0 %7202
        %v7204 = vsel %vm1066, %v7189, %v7191
        %v7205 = vsel %vm1066, %v7191, %v7193
        %v7206 = vsel %vm1066, %v7193, %v7195
        %v7207 = vsel %vm1066, %v7197, %v7199
        %v7208 = vsel %vm1066, %v7199, %v7201
        %v7209 = vsel %vm1066, %v7201, %v7203
        %v7218 = vsel %vm532, %v7038, 0
        %v7220 = vsel %vm532, %v7039, 0
        %7222 = vmatpush.msra.mxu0 0.0
        %7223 = vmatpush.msra.mxu0 0.0
        %7224 = vmatpush.msra.mxu0 0.0
        %7225 = vmatpush.msra.mxu0 0.0
        %7226 = vmatpush.msra.mxu0 0.0
        %7227 = vmatpush.msra.mxu0 0.0
        %7228 = vmatpush.msra.mxu0 0.0
        %7229 = vmatpush.msra.mxu0 0.0
        %7230 = vmatpush.msra.mxu0 0.0
        %7231 = vmatpush.msra.mxu0 0.0
        %7232 = vmatpush.msra.mxu0 0.0
        %7233 = vmatpush.msra.mxu0 0.0
        %7234 = vmatpush.msra.mxu0 0.0
        %7235 = vmatpush.msra.mxu0 0.0
        %7236 = vmatpush.msra.mxu0 %v7207
        %7237 = vmatpush.msra.mxu0 %v7204
        %7238 = vmatmul.f32.gmra.mxu0 %v7218
        %v7239 = vpop.f32.mrf.mxu0
        %v7240 = vadd.f32 %v7106, %v7239
        %7241 = vmatmul.f32.gmra.mxu0 %v7220
        %v7242 = vpop.f32.mrf.mxu0
        %v7243 = vadd.f32 %v7109, %v7242
        %7244 = vdwg.mxu0
        %7245 = vmatpush.msra.mxu0 0.0
        %7246 = vmatpush.msra.mxu0 0.0
        %7247 = vmatpush.msra.mxu0 0.0
        %7248 = vmatpush.msra.mxu0 0.0
        %7249 = vmatpush.msra.mxu0 0.0
        %7250 = vmatpush.msra.mxu0 0.0
        %7251 = vmatpush.msra.mxu0 0.0
        %7252 = vmatpush.msra.mxu0 0.0
        %7253 = vmatpush.msra.mxu0 0.0
        %7254 = vmatpush.msra.mxu0 0.0
        %7255 = vmatpush.msra.mxu0 0.0
        %7256 = vmatpush.msra.mxu0 0.0
        %7257 = vmatpush.msra.mxu0 0.0
        %7258 = vmatpush.msra.mxu0 0.0
        %7259 = vmatpush.msra.mxu0 %v7208
        %7260 = vmatpush.msra.mxu0 %v7205
        %7261 = vmatmul.f32.gmra.mxu0 %v7218
        %v7262 = vpop.f32.mrf.mxu0
        %v7263 = vadd.f32 %v7129, %v7262
        %7264 = vmatmul.f32.gmra.mxu0 %v7220
        %v7265 = vpop.f32.mrf.mxu0
        %v7266 = vadd.f32 %v7132, %v7265
        %7267 = vdwg.mxu0
        %7268 = vmatpush.msra.mxu0 0.0
        %7269 = vmatpush.msra.mxu0 0.0
        %7270 = vmatpush.msra.mxu0 0.0
        %7271 = vmatpush.msra.mxu0 0.0
        %7272 = vmatpush.msra.mxu0 0.0
        %7273 = vmatpush.msra.mxu0 0.0
        %7274 = vmatpush.msra.mxu0 0.0
        %7275 = vmatpush.msra.mxu0 0.0
        %7276 = vmatpush.msra.mxu0 0.0
        %7277 = vmatpush.msra.mxu0 0.0
        %7278 = vmatpush.msra.mxu0 0.0
        %7279 = vmatpush.msra.mxu0 0.0
        %7280 = vmatpush.msra.mxu0 0.0
        %7281 = vmatpush.msra.mxu0 0.0
        %7282 = vmatpush.msra.mxu0 %v7209
        %7283 = vmatpush.msra.mxu0 %v7206
        %7284 = vmatmul.f32.gmra.mxu0 %v7218
        %v7285 = vpop.f32.mrf.mxu0
        %v7286 = vadd.f32 %v7152, %v7285
        %7287 = vmatmul.f32.gmra.mxu0 %v7220
        %v7288 = vpop.f32.mrf.mxu0
        %v7289 = vadd.f32 %v7155, %v7288
        %7290 = vdwg.mxu0
        %7291 = vmatpush.msra.mxu0 0.0
        %7292 = vmatpush.msra.mxu0 0.0
        %7293 = vmatpush.msra.mxu0 0.0
        %7294 = vmatpush.msra.mxu0 0.0
        %7295 = vmatpush.msra.mxu0 0.0
        %7296 = vmatpush.msra.mxu0 0.0
        %7297 = vmatpush.msra.mxu0 0.0
        %7298 = vmatpush.msra.mxu0 0.0
        %7299 = vmatpush.msra.mxu0 0.0
        %7300 = vmatpush.msra.mxu0 0.0
        %7301 = vmatpush.msra.mxu0 0.0
        %7302 = vmatpush.msra.mxu0 0.0
        %7303 = vmatpush.msra.mxu0 0.0
        %7304 = vmatpush.msra.mxu0 0.0
        %7305 = vmatpush.msra.mxu0 %v7203
        %7306 = vmatpush.msra.mxu0 %v7195
        %7307 = vmatmul.f32.gmra.mxu0 %v7218
        %v7308 = vpop.f32.mrf.mxu0
        %v7309 = vadd.f32 %v7175, %v7308
        %7310 = vmatmul.f32.gmra.mxu0 %v7220
        %v7311 = vpop.f32.mrf.mxu0
        %v7312 = vadd.f32 %v7178, %v7311
        %7313 = vdwg.mxu0
        %v7314 = vadd.f32 %v7022, %v7030
        %v7315 = vadd.f32 %v7023, %v7031
        %v7316 = vadd.f32 %v7024, %v7032
        %v7317 = vadd.f32 %v7025, %v7033
        %v7318 = vadd.f32 %v7026, %v7034
        %v7319 = vadd.f32 %v7027, %v7035
        %v7320 = vadd.f32 %v7028, %v7036
        %v7321 = vadd.f32 %v7029, %v7037
        %7322 = vrot.lane.b32.xlu0 %v7038, 96
        %v7323 = vpop.permute.xlu0 %7322
        %7324 = vrot.lane.b32.xlu0 %v7039, 96
        %v7325 = vpop.permute.xlu0 %7324
        %7334 = vrot.lane.b32.xlu0 %v7314, 120
        %v7335 = vpop.permute.xlu0 %7334
        %7336 = vrot.lane.b32.xlu0 %v7315, 120
        %v7337 = vpop.permute.xlu0 %7336
        %7338 = vrot.lane.b32.xlu0 %v7316, 120
        %v7339 = vpop.permute.xlu0 %7338
        %7340 = vrot.lane.b32.xlu0 %v7317, 120
        %v7341 = vpop.permute.xlu0 %7340
        %7342 = vrot.lane.b32.xlu0 %v7318, 120
        %v7343 = vpop.permute.xlu0 %7342
        %7344 = vrot.lane.b32.xlu0 %v7319, 120
        %v7345 = vpop.permute.xlu0 %7344
        %7346 = vrot.lane.b32.xlu0 %v7320, 120
        %v7347 = vpop.permute.xlu0 %7346
        %7348 = vrot.lane.b32.xlu0 %v7321, 120
        %v7349 = vpop.permute.xlu0 %7348
        %v7350 = vsel %vm1066, %v7335, %v7337
        %v7351 = vsel %vm1066, %v7337, %v7339
        %v7352 = vsel %vm1066, %v7339, %v7341
        %v7353 = vsel %vm1066, %v7343, %v7345
        %v7354 = vsel %vm1066, %v7345, %v7347
        %v7355 = vsel %vm1066, %v7347, %v7349
        %v7364 = vsel %vm532, %v7323, 0
        %v7366 = vsel %vm532, %v7325, 0
        %7368 = vmatpush.msra.mxu0 0.0
        %7369 = vmatpush.msra.mxu0 0.0
        %7370 = vmatpush.msra.mxu0 0.0
        %7371 = vmatpush.msra.mxu0 0.0
        %7372 = vmatpush.msra.mxu0 0.0
        %7373 = vmatpush.msra.mxu0 0.0
        %7374 = vmatpush.msra.mxu0 0.0
        %7375 = vmatpush.msra.mxu0 0.0
        %7376 = vmatpush.msra.mxu0 0.0
        %7377 = vmatpush.msra.mxu0 0.0
        %7378 = vmatpush.msra.mxu0 0.0
        %7379 = vmatpush.msra.mxu0 0.0
        %7380 = vmatpush.msra.mxu0 0.0
        %7381 = vmatpush.msra.mxu0 0.0
        %7382 = vmatpush.msra.mxu0 %v7353
        %7383 = vmatpush.msra.mxu0 %v7350
        %7384 = vmatmul.f32.gmra.mxu0 %v7364
        %v7385 = vpop.f32.mrf.mxu0
        %v7386 = vadd.f32 0.0, %v7385
        %7387 = vmatmul.f32.gmra.mxu0 %v7366
        %v7388 = vpop.f32.mrf.mxu0
        %v7389 = vadd.f32 0.0, %v7388
        %7390 = vdwg.mxu0
        %7391 = vmatpush.msra.mxu0 0.0
        %7392 = vmatpush.msra.mxu0 0.0
        %7393 = vmatpush.msra.mxu0 0.0
        %7394 = vmatpush.msra.mxu0 0.0
        %7395 = vmatpush.msra.mxu0 0.0
        %7396 = vmatpush.msra.mxu0 0.0
        %7397 = vmatpush.msra.mxu0 0.0
        %7398 = vmatpush.msra.mxu0 0.0
        %7399 = vmatpush.msra.mxu0 0.0
        %7400 = vmatpush.msra.mxu0 0.0
        %7401 = vmatpush.msra.mxu0 0.0
        %7402 = vmatpush.msra.mxu0 0.0
        %7403 = vmatpush.msra.mxu0 0.0
        %7404 = vmatpush.msra.mxu0 0.0
        %7405 = vmatpush.msra.mxu0 %v7354
        %7406 = vmatpush.msra.mxu0 %v7351
        %7407 = vmatmul.f32.gmra.mxu0 %v7364
        %v7408 = vpop.f32.mrf.mxu0
        %v7409 = vadd.f32 0.0, %v7408
        %7410 = vmatmul.f32.gmra.mxu0 %v7366
        %v7411 = vpop.f32.mrf.mxu0
        %v7412 = vadd.f32 0.0, %v7411
        %7413 = vdwg.mxu0
        %7414 = vmatpush.msra.mxu0 0.0
        %7415 = vmatpush.msra.mxu0 0.0
        %7416 = vmatpush.msra.mxu0 0.0
        %7417 = vmatpush.msra.mxu0 0.0
        %7418 = vmatpush.msra.mxu0 0.0
        %7419 = vmatpush.msra.mxu0 0.0
        %7420 = vmatpush.msra.mxu0 0.0
        %7421 = vmatpush.msra.mxu0 0.0
        %7422 = vmatpush.msra.mxu0 0.0
        %7423 = vmatpush.msra.mxu0 0.0
        %7424 = vmatpush.msra.mxu0 0.0
        %7425 = vmatpush.msra.mxu0 0.0
        %7426 = vmatpush.msra.mxu0 0.0
        %7427 = vmatpush.msra.mxu0 0.0
        %7428 = vmatpush.msra.mxu0 %v7355
        %7429 = vmatpush.msra.mxu0 %v7352
        %7430 = vmatmul.f32.gmra.mxu0 %v7364
        %v7431 = vpop.f32.mrf.mxu0
        %v7432 = vadd.f32 0.0, %v7431
        %7433 = vmatmul.f32.gmra.mxu0 %v7366
        %v7434 = vpop.f32.mrf.mxu0
        %v7435 = vadd.f32 0.0, %v7434
        %7436 = vdwg.mxu0
        %7437 = vmatpush.msra.mxu0 0.0
        %7438 = vmatpush.msra.mxu0 0.0
        %7439 = vmatpush.msra.mxu0 0.0
        %7440 = vmatpush.msra.mxu0 0.0
        %7441 = vmatpush.msra.mxu0 0.0
        %7442 = vmatpush.msra.mxu0 0.0
        %7443 = vmatpush.msra.mxu0 0.0
        %7444 = vmatpush.msra.mxu0 0.0
        %7445 = vmatpush.msra.mxu0 0.0
        %7446 = vmatpush.msra.mxu0 0.0
        %7447 = vmatpush.msra.mxu0 0.0
        %7448 = vmatpush.msra.mxu0 0.0
        %7449 = vmatpush.msra.mxu0 0.0
        %7450 = vmatpush.msra.mxu0 0.0
        %7451 = vmatpush.msra.mxu0 %v7349
        %7452 = vmatpush.msra.mxu0 %v7341
        %7453 = vmatmul.f32.gmra.mxu0 %v7364
        %v7454 = vpop.f32.mrf.mxu0
        %v7455 = vadd.f32 0.0, %v7454
        %7456 = vmatmul.f32.gmra.mxu0 %v7366
        %v7457 = vpop.f32.mrf.mxu0
        %v7458 = vadd.f32 0.0, %v7457
        %7459 = vdwg.mxu0
        %v7460 = vadd.f32 %v7240, %v7386
        %v7461 = vadd.f32 %v7263, %v7409
        %v7462 = vadd.f32 %v7286, %v7432
        %v7463 = vadd.f32 %v7309, %v7455
        %v7464 = vadd.f32 %v7243, %v7389
        %v7465 = vadd.f32 %v7266, %v7412
        %v7466 = vadd.f32 %v7289, %v7435
        %v7467 = vadd.f32 %v7312, %v7458
        %7468 = vrot.lane.b32.xlu0 %v7038, 80
        %v7469 = vpop.permute.xlu0 %7468
        %7470 = vrot.lane.b32.xlu0 %v7039, 80
        %v7471 = vpop.permute.xlu0 %7470
        %v7472 = vsel %vm532, %v7469, 0
        %v7474 = vsel %vm532, %v7471, 0
        %7476 = vmatpush.msra.mxu0 0.0
        %7477 = vmatpush.msra.mxu0 0.0
        %7478 = vmatpush.msra.mxu0 0.0
        %7479 = vmatpush.msra.mxu0 0.0
        %7480 = vmatpush.msra.mxu0 0.0
        %7481 = vmatpush.msra.mxu0 0.0
        %7482 = vmatpush.msra.mxu0 0.0
        %7483 = vmatpush.msra.mxu0 0.0
        %7484 = vmatpush.msra.mxu0 0.0
        %7485 = vmatpush.msra.mxu0 0.0
        %7486 = vmatpush.msra.mxu0 0.0
        %7487 = vmatpush.msra.mxu0 0.0
        %7488 = vmatpush.msra.mxu0 0.0
        %7489 = vmatpush.msra.mxu0 0.0
        %7490 = vmatpush.msra.mxu0 %v6951
        %7491 = vmatpush.msra.mxu0 %v6948
        %7492 = vmatmul.f32.gmra.mxu0 %v7472
        %v7493 = vpop.f32.mrf.mxu0
        %v7494 = vadd.f32 0.0, %v7493
        %7495 = vmatmul.f32.gmra.mxu0 %v7474
        %v7496 = vpop.f32.mrf.mxu0
        %v7497 = vadd.f32 0.0, %v7496
        %7498 = vdwg.mxu0
        %7499 = vmatpush.msra.mxu0 0.0
        %7500 = vmatpush.msra.mxu0 0.0
        %7501 = vmatpush.msra.mxu0 0.0
        %7502 = vmatpush.msra.mxu0 0.0
        %7503 = vmatpush.msra.mxu0 0.0
        %7504 = vmatpush.msra.mxu0 0.0
        %7505 = vmatpush.msra.mxu0 0.0
        %7506 = vmatpush.msra.mxu0 0.0
        %7507 = vmatpush.msra.mxu0 0.0
        %7508 = vmatpush.msra.mxu0 0.0
        %7509 = vmatpush.msra.mxu0 0.0
        %7510 = vmatpush.msra.mxu0 0.0
        %7511 = vmatpush.msra.mxu0 0.0
        %7512 = vmatpush.msra.mxu0 0.0
        %7513 = vmatpush.msra.mxu0 %v6974
        %7514 = vmatpush.msra.mxu0 %v6971
        %7515 = vmatmul.f32.gmra.mxu0 %v7472
        %v7516 = vpop.f32.mrf.mxu0
        %v7517 = vadd.f32 0.0, %v7516
        %7518 = vmatmul.f32.gmra.mxu0 %v7474
        %v7519 = vpop.f32.mrf.mxu0
        %v7520 = vadd.f32 0.0, %v7519
        %7521 = vdwg.mxu0
        %7522 = vmatpush.msra.mxu0 0.0
        %7523 = vmatpush.msra.mxu0 0.0
        %7524 = vmatpush.msra.mxu0 0.0
        %7525 = vmatpush.msra.mxu0 0.0
        %7526 = vmatpush.msra.mxu0 0.0
        %7527 = vmatpush.msra.mxu0 0.0
        %7528 = vmatpush.msra.mxu0 0.0
        %7529 = vmatpush.msra.mxu0 0.0
        %7530 = vmatpush.msra.mxu0 0.0
        %7531 = vmatpush.msra.mxu0 0.0
        %7532 = vmatpush.msra.mxu0 0.0
        %7533 = vmatpush.msra.mxu0 0.0
        %7534 = vmatpush.msra.mxu0 0.0
        %7535 = vmatpush.msra.mxu0 0.0
        %7536 = vmatpush.msra.mxu0 %v6997
        %7537 = vmatpush.msra.mxu0 %v6994
        %7538 = vmatmul.f32.gmra.mxu0 %v7472
        %v7539 = vpop.f32.mrf.mxu0
        %v7540 = vadd.f32 0.0, %v7539
        %7541 = vmatmul.f32.gmra.mxu0 %v7474
        %v7542 = vpop.f32.mrf.mxu0
        %v7543 = vadd.f32 0.0, %v7542
        %7544 = vdwg.mxu0
        %7545 = vmatpush.msra.mxu0 0.0
        %7546 = vmatpush.msra.mxu0 0.0
        %7547 = vmatpush.msra.mxu0 0.0
        %7548 = vmatpush.msra.mxu0 0.0
        %7549 = vmatpush.msra.mxu0 0.0
        %7550 = vmatpush.msra.mxu0 0.0
        %7551 = vmatpush.msra.mxu0 0.0
        %7552 = vmatpush.msra.mxu0 0.0
        %7553 = vmatpush.msra.mxu0 0.0
        %7554 = vmatpush.msra.mxu0 0.0
        %7555 = vmatpush.msra.mxu0 0.0
        %7556 = vmatpush.msra.mxu0 0.0
        %7557 = vmatpush.msra.mxu0 0.0
        %7558 = vmatpush.msra.mxu0 0.0
        %7559 = vmatpush.msra.mxu0 %v7020
        %7560 = vmatpush.msra.mxu0 %v7017
        %7561 = vmatmul.f32.gmra.mxu0 %v7472
        %v7562 = vpop.f32.mrf.mxu0
        %v7563 = vadd.f32 0.0, %v7562
        %7564 = vmatmul.f32.gmra.mxu0 %v7474
        %v7565 = vpop.f32.mrf.mxu0
        %v7566 = vadd.f32 0.0, %v7565
        %7567 = vdwg.mxu0
        %v7568 = vadd.f32 %v7460, %v7494
        %v7569 = vadd.f32 %v7461, %v7517
        %v7570 = vadd.f32 %v7462, %v7540
        %v7571 = vadd.f32 %v7463, %v7563
        %v7572 = vadd.f32 %v7464, %v7497
        %v7573 = vadd.f32 %v7465, %v7520
        %v7574 = vadd.f32 %v7466, %v7543
        %v7575 = vadd.f32 %v7467, %v7566
        %v7576 = vld [vmem:[%s10] sm:$0xff]
        %v7577 = vld [vmem:[%s10 + $0x8] sm:$0xff]
        %7579 = vset.pattern.permute.xlu0 0
        %7580 = vperm.xlu0 %7579, %v7576
        %v7581 = vpop.permute.xlu0 %7580
        %7584 = vset.pattern.permute.xlu0 0
        %7585 = vperm.xlu0 %7584, %v7577
        %v7586 = vpop.permute.xlu0 %7585
        %v7588 = vadd.f32 %v7568, %v7581
        %v7589 = vadd.f32 %v7569, %v7581
        %v7590 = vadd.f32 %v7570, %v7581
        %v7591 = vadd.f32 %v7571, %v7581
        %v7592 = vadd.f32 %v7572, %v7586
        %v7593 = vadd.f32 %v7573, %v7586
        %v7594 = vadd.f32 %v7574, %v7586
        %v7595 = vadd.f32 %v7575, %v7586
        %7596 = vst.msk [vmem:[%s465] sm:$0xff] %vm532, %v7588
        %7597 = vst.msk [vmem:[%s465 + $0x10] sm:$0xff] %vm532, %v7592
        %7600 = vrot.lane.b32.xlu0 %v7588, 112
        %v7601 = vpop.permute.xlu0 %7600
        %7602 = vrot.lane.b32.xlu0 %v7592, 112
        %v7603 = vpop.permute.xlu0 %7602
        %vm7606 = vcmask 261248
        %7607 = vst.msk [vmem:[%s465] sm:$0xff] %vm7606, %v7601
        %7608 = vst.msk [vmem:[%s465 + $0x10] sm:$0xff] %vm7606, %v7603
        %7609 = vrot.lane.b32.xlu0 %v7588, 96
        %v7610 = vpop.permute.xlu0 %7609
        %7611 = vrot.lane.b32.xlu0 %v7592, 96
        %v7612 = vpop.permute.xlu0 %7611
        %vm7615 = vcmask 392448
        %7616 = vst.msk [vmem:[%s465] sm:$0xff] %vm7615, %v7610
        %7617 = vst.msk [vmem:[%s465 + $0x10] sm:$0xff] %vm7615, %v7612
        %7618 = vrot.lane.b32.xlu0 %v7588, 80
        %v7619 = vpop.permute.xlu0 %7618
        %7620 = vrot.lane.b32.xlu0 %v7592, 80
        %v7621 = vpop.permute.xlu0 %7620
        %vm7624 = vcmask 523648
        %7625 = vst.msk [vmem:[%s465] sm:$0xff] %vm7624, %v7619
        %7626 = vst.msk [vmem:[%s465 + $0x10] sm:$0xff] %vm7624, %v7621
        %7629 = vrot.lane.b32.xlu0 %v7589, 64
        %v7630 = vpop.permute.xlu0 %7629
        %7631 = vrot.lane.b32.xlu0 %v7593, 64
        %v7632 = vpop.permute.xlu0 %7631
        %vm7635 = vcmask 654848
        %7636 = vst.msk [vmem:[%s465] sm:$0xff] %vm7635, %v7630
        %7637 = vst.msk [vmem:[%s465 + $0x10] sm:$0xff] %vm7635, %v7632
        %7638 = vrot.lane.b32.xlu0 %v7589, 48
        %v7639 = vpop.permute.xlu0 %7638
        %7640 = vrot.lane.b32.xlu0 %v7593, 48
        %v7641 = vpop.permute.xlu0 %7640
        %vm7644 = vcmask 786048
        %7645 = vst.msk [vmem:[%s465] sm:$0xff] %vm7644, %v7639
        %7646 = vst.msk [vmem:[%s465 + $0x10] sm:$0xff] %vm7644, %v7641
        %7647 = vrot.lane.b32.xlu0 %v7589, 32
        %v7648 = vpop.permute.xlu0 %7647
        %7649 = vrot.lane.b32.xlu0 %v7593, 32
        %v7650 = vpop.permute.xlu0 %7649
        %vm7653 = vcmask 917248
        %7654 = vst.msk [vmem:[%s465] sm:$0xff] %vm7653, %v7648
        %7655 = vst.msk [vmem:[%s465 + $0x10] sm:$0xff] %vm7653, %v7650
        %7656 = vrot.lane.b32.xlu0 %v7589, 16
        %v7657 = vpop.permute.xlu0 %7656
        %7658 = vrot.lane.b32.xlu0 %v7593, 16
        %v7659 = vpop.permute.xlu0 %7658
        %vm7662 = vcmask 1048448
        %7663 = vst.msk [vmem:[%s465] sm:$0xff] %vm7662, %v7657
        %7664 = vst.msk [vmem:[%s465 + $0x10] sm:$0xff] %vm7662, %v7659
        %7665 = vst.msk [vmem:[%s465 + $0x8] sm:$0xff] %vm532, %v7590
        %7666 = vst.msk [vmem:[%s465 + $0x18] sm:$0xff] %vm532, %v7594
        %7669 = vrot.lane.b32.xlu0 %v7590, 112
        %v7670 = vpop.permute.xlu0 %7669
        %7671 = vrot.lane.b32.xlu0 %v7594, 112
        %v7672 = vpop.permute.xlu0 %7671
        %7675 = vst.msk [vmem:[%s465 + $0x8] sm:$0xff] %vm7606, %v7670
        %7676 = vst.msk [vmem:[%s465 + $0x18] sm:$0xff] %vm7606, %v7672
        %7677 = vrot.lane.b32.xlu0 %v7590, 96
        %v7678 = vpop.permute.xlu0 %7677
        %7679 = vrot.lane.b32.xlu0 %v7594, 96
        %v7680 = vpop.permute.xlu0 %7679
        %7683 = vst.msk [vmem:[%s465 + $0x8] sm:$0xff] %vm7615, %v7678
        %7684 = vst.msk [vmem:[%s465 + $0x18] sm:$0xff] %vm7615, %v7680
        %7685 = vrot.lane.b32.xlu0 %v7590, 80
        %v7686 = vpop.permute.xlu0 %7685
        %7687 = vrot.lane.b32.xlu0 %v7594, 80
        %v7688 = vpop.permute.xlu0 %7687
        %7691 = vst.msk [vmem:[%s465 + $0x8] sm:$0xff] %vm7624, %v7686
        %7692 = vst.msk [vmem:[%s465 + $0x18] sm:$0xff] %vm7624, %v7688
        %7695 = vrot.lane.b32.xlu0 %v7591, 64
        %v7696 = vpop.permute.xlu0 %7695
        %7697 = vrot.lane.b32.xlu0 %v7595, 64
        %v7698 = vpop.permute.xlu0 %7697
        %7701 = vst.msk [vmem:[%s465 + $0x8] sm:$0xff] %vm7635, %v7696
        %7702 = vst.msk [vmem:[%s465 + $0x18] sm:$0xff] %vm7635, %v7698
        %7703 = vrot.lane.b32.xlu0 %v7591, 48
        %v7704 = vpop.permute.xlu0 %7703
        %7705 = vrot.lane.b32.xlu0 %v7595, 48
        %v7706 = vpop.permute.xlu0 %7705
        %7709 = vst.msk [vmem:[%s465 + $0x8] sm:$0xff] %vm7644, %v7704
        %7710 = vst.msk [vmem:[%s465 + $0x18] sm:$0xff] %vm7644, %v7706
        %7711 = vrot.lane.b32.xlu0 %v7591, 32
        %v7712 = vpop.permute.xlu0 %7711
        %7713 = vrot.lane.b32.xlu0 %v7595, 32
        %v7714 = vpop.permute.xlu0 %7713
        %7717 = vst.msk [vmem:[%s465 + $0x8] sm:$0xff] %vm7653, %v7712
        %7718 = vst.msk [vmem:[%s465 + $0x18] sm:$0xff] %vm7653, %v7714
        %7719 = vrot.lane.b32.xlu0 %v7591, 16
        %v7720 = vpop.permute.xlu0 %7719
        %7721 = vrot.lane.b32.xlu0 %v7595, 16
        %v7722 = vpop.permute.xlu0 %7721
        %7725 = vst.msk [vmem:[%s465 + $0x8] sm:$0xff] %vm7662, %v7720
        %7726 = vst.msk [vmem:[%s465 + $0x18] sm:$0xff] %vm7662, %v7722
        %s7727 = sand.u32 %s281, 1
        %s7728 = scalar_lea.sflag [#allocation6], %s7727
        %s7729 = sand.u32 %s281, 1
        %s7730 = smul.addr %s7729, 32
        %s7731 = scalar_lea.vmem [#allocation10], %s7730
        // Predicated region
        $region77: #{tpu_custom_call.1} parent=63 // pred_check
          %p7732 = pneg %p291
        $region78: #{tpu_custom_call.1} parent=63 // pred_check_branch
          %7734 = sbr.rel (%p7732) target = $region80
        $region79: #{tpu_custom_call.1} parent=63 // pred_region
          %7736 = vsyncadd %s7728, 0
          %s7737 = smul.addr %s32, 4
          %s7738 = smul.addr %s7737, 8
          %s7739 = scalar_lea.hbm %s11, %s7738
          %s7740 = sshll.u32 %s7731, 4
          %s7741 = int_to_ptr.vmem [resolvable:$true] %s7740
          %s7742 = sshll.u32 %s7739, 4
          %s7743 = int_to_ptr.hbm [resolvable:$true] %s7742
          %7748 = dma.vmem_to_hbm [thread:$0]  %s7741, 512, %s7743, %s7728, 256, 256, 16
        $region80: #{tpu_custom_call.1} parent=63 // pred_fallthru
          _
      $region64: #{tpu_custom_call.1} parent=5 // pred_fallthru
        _
      %p7749 = scmp.le.s32.totalorder 2, %s27
      // Predicated region
      $region81: #{tpu_custom_call.1} parent=5 // pred_check
        %p7750 = pneg %p7749
      $region82: #{tpu_custom_call.1} parent=5 // pred_check_branch
        %7752 = sbr.rel (%p7750) target = $region84
      $region83: #{tpu_custom_call.1} parent=5 // pred_region
        %s7753 = ssub.s32 %s27, 2
        // Predicated region
        $region85: #{tpu_custom_call.1} parent=83 // pred_check
          %p7754 = pneg %p297
        $region86: #{tpu_custom_call.1} parent=83 // pred_check_branch
          %7756 = sbr.rel (%p7754) target = $region88
        $region87: #{tpu_custom_call.1} parent=83 // pred_region
          %s7757 = sand.u32 %s282, 1
          %s7758 = scalar_lea.sflag [#allocation6], %s7757
          %s7759 = sand.u32 %s282, 1
          %s7760 = smul.addr %s7759, 32
          %s7761 = scalar_lea.vmem [#allocation10], %s7760
          %7763 = dma.done %s7758, 512
        $region88: #{tpu_custom_call.1} parent=83 // pred_fallthru
          _
      $region84: #{tpu_custom_call.1} parent=5 // pred_fallthru
        _
    $region6: #{tpu_custom_call.1} parent=1 // loop_footer
      %s31 = sadd.s32 1, %s27
    $region7: #{tpu_custom_call.1} parent=1 // loop_footer_branch
      %26 = sbr.rel target = $region3
    $region8: #{tpu_custom_call.1} parent=1 // loop_exit
      _
    %7764 = vsyncpa [#allocation5], 1
    %s7765 = scalar_lea.sflag [#allocation5], 1
    %7766 = vsyncpa %s7765, 1
    %7767 = vsyncpa [#allocation8], 1
    %s7768 = scalar_lea.sflag [#allocation8], 1
    %7769 = vsyncpa %s7768, 1
    %7770 = vsyncpa [#allocation6], 1
    %s7771 = scalar_lea.sflag [#allocation6], 1
    %7772 = vsyncpa %s7771, 1

</llo_original>
